<compile_context>
chip_gen: v7x
topology: tpu7x:2x2x1
jax: 0.10.0
libtpu: 0.0.40
codegen_flags: <defaults>
</compile_context>

<pallas_src>
import functools

import jax
import jax.numpy as jnp
from jax.experimental import pallas as pl
from jax.experimental.pallas import tpu as pltpu


def _input_mapping_kernel(x_ref, bt_ref, o_ref):
    # x_ref : (TB, in_dim)       current batch tile of coordinates
    # bt_ref: (in_dim, M)        Fourier matrix, pre-transposed, VMEM-resident
    # o_ref : (TB, 2*M)          output tile: [sin(x_proj) | cos(x_proj)]
    x = x_ref[...].astype(jnp.float32)
    bt = bt_ref[...].astype(jnp.float32)
    tb, in_dim = x.shape
    m = bt.shape[1]

    if in_dim <= 8:
        # Tiny K (2-3 coords): exact f32 broadcast multiply-adds on the VPU.
        x_proj = jnp.zeros((tb, m), jnp.float32)
        for k in range(in_dim):  # static Python loop, unrolled at trace time
            x_proj = x_proj + x[:, k:k + 1] * bt[k:k + 1, :]
    else:
        # Larger K: MXU matmul with f32 accumulation.
        x_proj = jnp.dot(x, bt, preferred_element_type=jnp.float32)

    s = jnp.sin(x_proj).astype(o_ref.dtype)
    c = jnp.cos(x_proj).astype(o_ref.dtype)

    if m % 128 == 0:
        # Two static, lane-aligned, unmasked half-block stores.
        o_ref[:, :m] = s
        o_ref[:, m:] = c
    else:
        # Non-lane-aligned split: one full-width store instead of masked halves.
        o_ref[...] = jnp.concatenate([s, c], axis=-1)


def input_mapping_forward(x, B_mat, *, tile_rows=None,
                          vmem_budget_bytes=32 * 1024 * 1024):
    """Pallas TPU forward of input_mapping: cat([sin(x @ B.T), cos(x @ B.T)], -1).

    x     : (..., in_dim)            float array of coordinates
    B_mat : (mapping_size, in_dim)   same layout as the PyTorch buffer self.B
    returns (..., 2 * mapping_size)
    """
    *lead, in_dim = x.shape
    mapping, in_dim_b = B_mat.shape
    assert in_dim_b == in_dim, "B must have shape (mapping_size, in_dim)"
    two_m = 2 * mapping

    n = 1
    for d in lead:
        n *= int(d)
    x2 = x.reshape(n, in_dim)

    # Pre-transpose once to (in_dim, mapping); tiny, and folded under jit.
    bt = B_mat.T.astype(jnp.float32)

    # --- batch tile: largest block that fits a conservative 32 MiB budget
    # (B matrix single-resident; x/out double-buffered by the pipeline).
    if tile_rows is None:
        weight_bytes = in_dim * mapping * 4
        per_row_bytes = 2 * (in_dim + two_m) * 4
        tb = (vmem_budget_bytes - weight_bytes) // max(per_row_bytes, 1)
        tb = int(max(8, min(tb, 2048)))
    else:
        tb = int(tile_rows)
    tb = max(8, (tb // 8) * 8)              # sublane-aligned rows
    n_min = -(-n // 8) * 8
    tb = min(tb, n_min)
    n_pad = -(-n // tb) * tb                # pad rows to a multiple of the tile
    if n_pad != n:
        x2 = jnp.pad(x2, ((0, n_pad - n), (0, 0)))

    grid = (n_pad // tb,)

    cost = pl.CostEstimate(
        flops=2 * n_pad * in_dim * mapping,
        transcendentals=2 * n_pad * mapping,            # sin + cos
        bytes_accessed=4 * (n_pad * in_dim + in_dim * mapping + n_pad * two_m),
    )

    out = pl.pallas_call(
        _input_mapping_kernel,
        out_shape=jax.ShapeDtypeStruct((n_pad, two_m), x.dtype),
        grid_spec=pltpu.PrefetchScalarGridSpec(
            num_scalar_prefetch=0,
            grid=grid,
            in_specs=[
                # streamed batch tile of coordinates
                pl.BlockSpec((tb, in_dim), lambda i: (i, 0)),
                # Fourier matrix: constant block index -> stays VMEM-resident
                pl.BlockSpec((in_dim, mapping), lambda i: (0, 0)),
            ],
            out_specs=pl.BlockSpec((tb, two_m), lambda i: (i, 0)),
        ),
        compiler_params=pltpu.CompilerParams(
            # batch rows are independent -> shard across TCs on v7x megacore
            dimension_semantics=("parallel",),
            vmem_limit_bytes=48 * 1024 * 1024,
        ),
        cost_estimate=cost,
    )(x2, bt)

    out = out[:n]
    return out.reshape(*lead, two_m)


if __name__ == "__main__":
    key = jax.random.PRNGKey(0)
    k_x, k_b = jax.random.split(key)

    # Small demo shapes consistent with the module: 2-D coordinates mapped to
    # 128 Fourier features (output width 256 -> lane-dense), 1024 points.
    batch, in_dim, mapping_size = 1024, 2, 128
    scale = 10.0

    x = jax.random.uniform(k_x, (batch, in_dim), dtype=jnp.float32)
    B_mat = scale * jax.random.normal(k_b, (mapping_size, in_dim),
                                      dtype=jnp.float32)

    # tile_rows=256 exercises a multi-step pipelined grid even at demo size.
    fwd = jax.jit(functools.partial(input_mapping_forward, tile_rows=256))
    out = jax.block_until_ready(fwd(x, B_mat))

    # Pure-JAX reference (f32 projection).
    x_proj_ref = jnp.dot(x, B_mat.T, precision=jax.lax.Precision.HIGHEST)
    ref = jnp.concatenate([jnp.sin(x_proj_ref), jnp.cos(x_proj_ref)], axis=-1)

    assert out.shape == (batch, 2 * mapping_size)
    max_err = float(jnp.max(jnp.abs(out - ref)))
    assert jnp.allclose(out, ref, atol=1e-4, rtol=1e-4), max_err

    print("KERNEL_OK")
</pallas_src>

<mosaic_0001>
module attributes {stable_mosaic.version = 11 : i64} {
  func.func @_input_mapping_kernel(%arg0: i32, %arg1: memref<256x2xf32, #tpu.memory_space<vmem>>, %arg2: memref<2x128xf32, #tpu.memory_space<vmem>>, %arg3: memref<256x256xf32, #tpu.memory_space<vmem>>) attributes {dimension_semantics = [#tpu.dimension_semantics<parallel>], iteration_bounds = array<i64: 4>, scalar_prefetch = 0 : i64, scratch_operands = 0 : i64, tpu.core_type = #tpu.core_type<tc>, window_params = [{transform_indices = @transform_0, window_bounds = array<i64: 256, 2>}, {pipeline_mode = #tpu.pipeline_mode<synchronous>, transform_indices = @transform_1, window_bounds = array<i64: 2, 128>}, {transform_indices = @transform_2, window_bounds = array<i64: 256, 256>}]} {
    %c0 = arith.constant 0 : index
    %c0_0 = arith.constant 0 : index
    %0 = vector.load %arg1[%c0, %c0_0] : memref<256x2xf32, #tpu.memory_space<vmem>>, vector<256x2xf32>
    %c0_1 = arith.constant 0 : index
    %c0_2 = arith.constant 0 : index
    %1 = vector.load %arg2[%c0_1, %c0_2] : memref<2x128xf32, #tpu.memory_space<vmem>>, vector<2x128xf32>
    %cst = arith.constant 0.000000e+00 : f32
    %2 = vector.broadcast %cst : f32 to vector<256x128xf32>
    %3 = vector.extract_strided_slice %0 {offsets = [0, 0], sizes = [256, 1], strides = [1, 1]} : vector<256x2xf32> to vector<256x1xf32>
    %4 = vector.extract_strided_slice %1 {offsets = [0, 0], sizes = [1, 128], strides = [1, 1]} : vector<2x128xf32> to vector<1x128xf32>
    %5 = vector.broadcast %3 : vector<256x1xf32> to vector<256x128xf32>
    %6 = vector.broadcast %4 : vector<1x128xf32> to vector<256x128xf32>
    %7 = arith.mulf %5, %6 : vector<256x128xf32>
    %8 = arith.addf %2, %7 : vector<256x128xf32>
    %9 = vector.extract_strided_slice %0 {offsets = [0, 1], sizes = [256, 1], strides = [1, 1]} : vector<256x2xf32> to vector<256x1xf32>
    %10 = vector.extract_strided_slice %1 {offsets = [1, 0], sizes = [1, 128], strides = [1, 1]} : vector<2x128xf32> to vector<1x128xf32>
    %11 = vector.broadcast %9 : vector<256x1xf32> to vector<256x128xf32>
    %12 = vector.broadcast %10 : vector<1x128xf32> to vector<256x128xf32>
    %13 = arith.mulf %11, %12 : vector<256x128xf32>
    %14 = arith.addf %8, %13 : vector<256x128xf32>
    %15 = math.sin %14 : vector<256x128xf32>
    %16 = math.cos %14 : vector<256x128xf32>
    %c0_3 = arith.constant 0 : index
    %c0_4 = arith.constant 0 : index
    %17 = vector.load %arg3[%c0_3, %c0_4] : memref<256x256xf32, #tpu.memory_space<vmem>>, vector<256x128xf32>
    tpu.vector_store %arg3[%c0_3, %c0_4], %15 {strides = array<i32>} : memref<256x256xf32, #tpu.memory_space<vmem>>, vector<256x128xf32>,
    %c0_5 = arith.constant 0 : index
    %c128 = arith.constant 128 : index
    %18 = vector.load %arg3[%c0_5, %c128] : memref<256x256xf32, #tpu.memory_space<vmem>>, vector<256x128xf32>
    tpu.vector_store %arg3[%c0_5, %c128], %16 {strides = array<i32>} : memref<256x256xf32, #tpu.memory_space<vmem>>, vector<256x128xf32>,
    return
  }
  func.func @transform_0(%arg0: i32) -> (i32, i32) {
    %c0_i32 = arith.constant 0 : i32
    %c0_i32_0 = arith.constant 0 : i32
    return %arg0, %c0_i32 : i32, i32
  }
  func.func @transform_1(%arg0: i32) -> (i32, i32) {
    %c0_i32 = arith.constant 0 : i32
    %c0_i32_0 = arith.constant 0 : i32
    %c0_i32_1 = arith.constant 0 : i32
    return %c0_i32, %c0_i32_0 : i32, i32
  }
  func.func @transform_2(%arg0: i32) -> (i32, i32) {
    %c0_i32 = arith.constant 0 : i32
    %c0_i32_0 = arith.constant 0 : i32
    return %arg0, %c0_i32 : i32, i32
  }
}

</mosaic_0001>

<llo_original>
// kernel: input_mapping_forward.1
$region0: #{input_mapping_forward.1}
  #allocation0 [shape = 'u32[]', space=smem, size = 0x4, offset = 0x4, fixed_abs, tag = 'smem constant byte address 0x4 - core index']
  #allocation1 [shape = 'u32[144,128]{1,0:T(1,128)}', space=vmem, size = 0x12000, scoped, tag = 'internal scratch']
  %s0 = inlined_call_operand.vmem [shape: f32[1024,2], index: 0, kind: input, shape index: {}]
  %s1 = inlined_call_operand.vmem [shape: f32[2,128], index: 1, kind: input, shape index: {}]
  %s2 = inlined_call_operand.hbm [shape: f32[1024,256], index: 2, kind: output, shape index: {}]
  %s3 = sld [smem:[#allocation0]]
  $region41: #{input_mapping_forward.1} parent=0
    _
  %s5 = ssub.s32 1, %s3
  %s6 = scalar_select 0, %s5, %s3
  $region1: #{input_mapping_forward.1} parent=0
    #allocation2 [shape = 'u8[524288]{0}', space=vmem, size = 0x80000, scoped, tag = 'output window, operand 0']
    #allocation3 [shape = 's32[2]{0}', space=sflag, size = 0x8, scoped, tag = 'scoped memory for input_mapping_forward.1']
    %7 = vsyncpa [#allocation3], 0
    %s8 = scalar_lea.sflag [#allocation3], 1
    %9 = vsyncpa %s8, 0
    loop: start=0, step=1, limit=6
    $region2: #{input_mapping_forward.1} parent=1 // loop_pre_header
      _
    $region3: #{input_mapping_forward.1} parent=1 // loop_header
      %s11 = sphi 0, %s15
      %p12 = scmp.ge.s32.totalorder %s11, 6
      %s21 = sphi 0, %s23
      %s24 = sphi 0, %s21
      %s25 = sphi 0, %s24
      %s41 = sphi 0, %s25
      %s45 = sphi 0, %s45
      %s47 = sphi 0, %s45
      %s48 = sphi 0, %s47
      %s62 = sphi 0, %s48
      %s68 = sphi 0, %s70
      %s71 = sphi 0, %s68
      %s72 = sphi 0, %s71
      %s88 = sphi 0, %s72
    $region4: #{input_mapping_forward.1} parent=1 // loop_header_branch
      %14 = sbr.rel (%p12) target = $region8
    $region5: #{input_mapping_forward.1} parent=1 // loop_body
      %s16 = ssub.s32 %s11, 1
      %s17 = ssub.s32 %s11, 2
      %s18 = sadd.s32 %s11, 1
      %s19 = ssub.s32 %s11, %s18
      %p20 = scmp.eq.s32.totalorder %s19, 0
      %s22 = sadd.s32 %s21, 1
      %s23 = scalar_select %p20, %s21, %s22
      %p26 = pneg %p20
      %p27 = scmp.eq.s32.totalorder %s11, 3
      %p28 = por %p26, %p27
      %p29 = scmp.ne.s32.totalorder %s21, %s24
      %p30 = scmp.eq.s32.totalorder %s11, 0
      %p31 = por %p29, %p30
      %p32 = scmp.ne.s32.totalorder %s21, %s24
      %p33 = scmp.eq.s32.totalorder %s16, 3
      %p34 = por %p32, %p33
      %p35 = scmp.ne.s32.totalorder %s24, %s25
      %p36 = scmp.eq.s32.totalorder %s16, 0
      %p37 = por %p35, %p36
      %p38 = scmp.ne.s32.totalorder %s24, %s25
      %p39 = scmp.eq.s32.totalorder %s17, 3
      %p40 = por %p38, %p39
      %p42 = scmp.ne.s32.totalorder %s25, %s41
      %p43 = scmp.eq.s32.totalorder %s17, 0
      %p44 = por %p42, %p43
      %s46 = sadd.s32 %s45, 1
      %p49 = scmp.eq.s32.totalorder %s11, 3
      %p50 = scmp.ne.s32.totalorder %s45, %s47
      %p51 = scmp.eq.s32.totalorder %s11, 0
      %p52 = por %p50, %p51
      %p53 = scmp.ne.s32.totalorder %s45, %s47
      %p54 = scmp.eq.s32.totalorder %s16, 3
      %p55 = por %p53, %p54
      %p56 = scmp.ne.s32.totalorder %s47, %s48
      %p57 = scmp.eq.s32.totalorder %s16, 0
      %p58 = por %p56, %p57
      %p59 = scmp.ne.s32.totalorder %s47, %s48
      %p60 = scmp.eq.s32.totalorder %s17, 3
      %p61 = por %p59, %p60
      %p63 = scmp.ne.s32.totalorder %s48, %s62
      %p64 = scmp.eq.s32.totalorder %s17, 0
      %p65 = por %p63, %p64
      %s66 = ssub.s32 %s11, %s18
      %p67 = scmp.eq.s32.totalorder %s66, 0
      %s69 = sadd.s32 %s68, 1
      %s70 = scalar_select %p67, %s68, %s69
      %p73 = pneg %p67
      %p74 = scmp.eq.s32.totalorder %s11, 3
      %p75 = por %p73, %p74
      %p76 = scmp.ne.s32.totalorder %s68, %s71
      %p77 = scmp.eq.s32.totalorder %s11, 0
      %p78 = por %p76, %p77
      %p79 = scmp.ne.s32.totalorder %s68, %s71
      %p80 = scmp.eq.s32.totalorder %s16, 3
      %p81 = por %p79, %p80
      %p82 = scmp.ne.s32.totalorder %s71, %s72
      %p83 = scmp.eq.s32.totalorder %s16, 0
      %p84 = por %p82, %p83
      %p85 = scmp.ne.s32.totalorder %s71, %s72
      %p86 = scmp.eq.s32.totalorder %s17, 3
      %p87 = por %p85, %p86
      %p89 = scmp.ne.s32.totalorder %s72, %s88
      %p90 = scmp.eq.s32.totalorder %s17, 0
      %p91 = por %p89, %p90
      %p92 = scmp.le.s32.totalorder 1, %s11
      %p93 = scmp.lt.s32.totalorder %s11, 5
      %p94 = pnand %p92, %p93
      %p95 = pneg %p94
      // Predicated region
      $region9: #{input_mapping_forward.1} parent=5 // pred_check
        _
      $region10: #{input_mapping_forward.1} parent=5 // pred_check_branch
        %97 = sbr.rel (%p94) target = $region12
      $region11: #{input_mapping_forward.1} parent=5 // pred_region
        %s98 = ssub.s32 %s11, 1
        // Predicated region
        $region13: #{input_mapping_forward.1} parent=11 // pred_check
          %p99 = pneg %p58
        $region14: #{input_mapping_forward.1} parent=11 // pred_check_branch
          %101 = sbr.rel (%p99) target = $region16
        $region15: #{input_mapping_forward.1} parent=11 // pred_region
          _
        $region16: #{input_mapping_forward.1} parent=11 // pred_fallthru
          _
      $region12: #{input_mapping_forward.1} parent=5 // pred_fallthru
        _
      %p102 = scmp.lt.s32.totalorder %s11, 4
      // Predicated region
      $region17: #{input_mapping_forward.1} parent=5 // pred_check
        %p103 = pneg %p102
      $region18: #{input_mapping_forward.1} parent=5 // pred_check_branch
        %105 = sbr.rel (%p103) target = $region20
      $region19: #{input_mapping_forward.1} parent=5 // pred_region
        // Predicated region
        $region21: #{input_mapping_forward.1} parent=19 // pred_check
          %p106 = pneg %p31
        $region22: #{input_mapping_forward.1} parent=19 // pred_check_branch
          %108 = sbr.rel (%p106) target = $region24
        $region23: #{input_mapping_forward.1} parent=19 // pred_region
          %s109 = smul.u32 32, %s11
          %p110 = scmp.lt.s32.totalorder %s109, 127
          %s111 = scalar_select %p110, %s109, 127
          %s112 = smul.addr %s111, 8
          %s113 = scalar_lea.vmem %s0, %s112
          %s114 = smul.u32 32, %s11
        $region24: #{input_mapping_forward.1} parent=19 // pred_fallthru
          _
      $region20: #{input_mapping_forward.1} parent=5 // pred_fallthru
        _
      %p115 = scmp.le.s32.totalorder 1, %s11
      %p116 = scmp.lt.s32.totalorder %s11, 5
      %p117 = pnand %p115, %p116
      %p118 = pneg %p117
      // Predicated region
      $region25: #{input_mapping_forward.1} parent=5 // pred_check
        _
      $region26: #{input_mapping_forward.1} parent=5 // pred_check_branch
        %120 = sbr.rel (%p117) target = $region28
      $region27: #{input_mapping_forward.1} parent=5 // pred_region
        %s121 = ssub.s32 %s11, 1
        %s122 = smul.u32 32, %s16
        %p123 = scmp.lt.s32.totalorder %s122, 127
        %s124 = scalar_select %p123, %s122, 127
        %s125 = smul.addr %s124, 8
        %s126 = scalar_lea.vmem %s0, %s125
        %p127 = pneg %p37
        %p128 = pneg %p34
        %p129 = pneg %p58
        %p130 = pneg %p55
        %p131 = pneg %p84
        %p132 = pneg %p81
        %s133 = sand.u32 %s71, 1
        %s134 = scalar_lea.sflag [#allocation3], %s133
        %s135 = sand.u32 %s71, 1
        %s136 = smul.addr %s135, 512
        %s137 = scalar_lea.vmem [#allocation2], %s136
        %s138 = smul.u32 32, %s16
        %p139 = scmp.lt.s32.totalorder %s138, 127
        %s140 = scalar_select %p139, %s138, 127
        %s141 = smul.addr %s140, 8
        %s142 = scalar_lea.vmem %s0, %s141
        %s143 = smul.u32 32, %s16
        %s144 = smul.u32 32, %s16
        %v145 = vld [vmem:[%s142] sm:$0xff]
        %v146 = vld [vmem:[%s142 + $0x8] sm:$0xff]
        %v147 = vld [vmem:[%s142 + $0x10] sm:$0xff]
        %v148 = vld [vmem:[%s142 + $0x18] sm:$0xff]
        %v149 = vld [vmem:[%s142 + $0x20] sm:$0xff]
        %v150 = vld [vmem:[%s142 + $0x28] sm:$0xff]
        %v151 = vld [vmem:[%s142 + $0x30] sm:$0xff]
        %v152 = vld [vmem:[%s142 + $0x38] sm:$0xff]
        %v153 = vld [vmem:[%s142 + $0x40] sm:$0xff]
        %v154 = vld [vmem:[%s142 + $0x48] sm:$0xff]
        %v155 = vld [vmem:[%s142 + $0x50] sm:$0xff]
        %v156 = vld [vmem:[%s142 + $0x58] sm:$0xff]
        %v157 = vld [vmem:[%s142 + $0x60] sm:$0xff]
        %v158 = vld [vmem:[%s142 + $0x68] sm:$0xff]
        %v159 = vld [vmem:[%s142 + $0x70] sm:$0xff]
        %v160 = vld [vmem:[%s142 + $0x78] sm:$0xff]
        %v161 = vld [vmem:[%s142 + $0x80] sm:$0xff]
        %v162 = vld [vmem:[%s142 + $0x88] sm:$0xff]
        %v163 = vld [vmem:[%s142 + $0x90] sm:$0xff]
        %v164 = vld [vmem:[%s142 + $0x98] sm:$0xff]
        %v165 = vld [vmem:[%s142 + $0xa0] sm:$0xff]
        %v166 = vld [vmem:[%s142 + $0xa8] sm:$0xff]
        %v167 = vld [vmem:[%s142 + $0xb0] sm:$0xff]
        %v168 = vld [vmem:[%s142 + $0xb8] sm:$0xff]
        %v169 = vld [vmem:[%s142 + $0xc0] sm:$0xff]
        %v170 = vld [vmem:[%s142 + $0xc8] sm:$0xff]
        %v171 = vld [vmem:[%s142 + $0xd0] sm:$0xff]
        %v172 = vld [vmem:[%s142 + $0xd8] sm:$0xff]
        %v173 = vld [vmem:[%s142 + $0xe0] sm:$0xff]
        %v174 = vld [vmem:[%s142 + $0xe8] sm:$0xff]
        %v175 = vld [vmem:[%s142 + $0xf0] sm:$0xff]
        %v176 = vld [vmem:[%s142 + $0xf8] sm:$0xff]
        %v177 = vld [vmem:[%s1] sm:$0x3]
        %179 = vset.pattern.permute.xlu0 0
        %180 = vperm.xlu0 %179, %v145
        %v181 = vpop.permute.xlu0 %180
        %184 = vset.pattern.permute.xlu0 0
        %185 = vperm.xlu0 %184, %v146
        %v186 = vpop.permute.xlu0 %185
        %189 = vset.pattern.permute.xlu0 0
        %190 = vperm.xlu0 %189, %v147
        %v191 = vpop.permute.xlu0 %190
        %194 = vset.pattern.permute.xlu0 0
        %195 = vperm.xlu0 %194, %v148
        %v196 = vpop.permute.xlu0 %195
        %199 = vset.pattern.permute.xlu0 0
        %200 = vperm.xlu0 %199, %v149
        %v201 = vpop.permute.xlu0 %200
        %204 = vset.pattern.permute.xlu0 0
        %205 = vperm.xlu0 %204, %v150
        %v206 = vpop.permute.xlu0 %205
        %209 = vset.pattern.permute.xlu0 0
        %210 = vperm.xlu0 %209, %v151
        %v211 = vpop.permute.xlu0 %210
        %214 = vset.pattern.permute.xlu0 0
        %215 = vperm.xlu0 %214, %v152
        %v216 = vpop.permute.xlu0 %215
        %219 = vset.pattern.permute.xlu0 0
        %220 = vperm.xlu0 %219, %v153
        %v221 = vpop.permute.xlu0 %220
        %224 = vset.pattern.permute.xlu0 0
        %225 = vperm.xlu0 %224, %v154
        %v226 = vpop.permute.xlu0 %225
        %229 = vset.pattern.permute.xlu0 0
        %230 = vperm.xlu0 %229, %v155
        %v231 = vpop.permute.xlu0 %230
        %234 = vset.pattern.permute.xlu0 0
        %235 = vperm.xlu0 %234, %v156
        %v236 = vpop.permute.xlu0 %235
        %239 = vset.pattern.permute.xlu0 0
        %240 = vperm.xlu0 %239, %v157
        %v241 = vpop.permute.xlu0 %240
        %244 = vset.pattern.permute.xlu0 0
        %245 = vperm.xlu0 %244, %v158
        %v246 = vpop.permute.xlu0 %245
        %249 = vset.pattern.permute.xlu0 0
        %250 = vperm.xlu0 %249, %v159
        %v251 = vpop.permute.xlu0 %250
        %254 = vset.pattern.permute.xlu0 0
        %255 = vperm.xlu0 %254, %v160
        %v256 = vpop.permute.xlu0 %255
        %259 = vset.pattern.permute.xlu0 0
        %260 = vperm.xlu0 %259, %v161
        %v261 = vpop.permute.xlu0 %260
        %264 = vset.pattern.permute.xlu0 0
        %265 = vperm.xlu0 %264, %v162
        %v266 = vpop.permute.xlu0 %265
        %269 = vset.pattern.permute.xlu0 0
        %270 = vperm.xlu0 %269, %v163
        %v271 = vpop.permute.xlu0 %270
        %274 = vset.pattern.permute.xlu0 0
        %275 = vperm.xlu0 %274, %v164
        %v276 = vpop.permute.xlu0 %275
        %279 = vset.pattern.permute.xlu0 0
        %280 = vperm.xlu0 %279, %v165
        %v281 = vpop.permute.xlu0 %280
        %284 = vset.pattern.permute.xlu0 0
        %285 = vperm.xlu0 %284, %v166
        %v286 = vpop.permute.xlu0 %285
        %289 = vset.pattern.permute.xlu0 0
        %290 = vperm.xlu0 %289, %v167
        %v291 = vpop.permute.xlu0 %290
        %294 = vset.pattern.permute.xlu0 0
        %295 = vperm.xlu0 %294, %v168
        %v296 = vpop.permute.xlu0 %295
        %299 = vset.pattern.permute.xlu0 0
        %300 = vperm.xlu0 %299, %v169
        %v301 = vpop.permute.xlu0 %300
        %304 = vset.pattern.permute.xlu0 0
        %305 = vperm.xlu0 %304, %v170
        %v306 = vpop.permute.xlu0 %305
        %309 = vset.pattern.permute.xlu0 0
        %310 = vperm.xlu0 %309, %v171
        %v311 = vpop.permute.xlu0 %310
        %314 = vset.pattern.permute.xlu0 0
        %315 = vperm.xlu0 %314, %v172
        %v316 = vpop.permute.xlu0 %315
        %319 = vset.pattern.permute.xlu0 0
        %320 = vperm.xlu0 %319, %v173
        %v321 = vpop.permute.xlu0 %320
        %324 = vset.pattern.permute.xlu0 0
        %325 = vperm.xlu0 %324, %v174
        %v326 = vpop.permute.xlu0 %325
        %329 = vset.pattern.permute.xlu0 0
        %330 = vperm.xlu0 %329, %v175
        %v331 = vpop.permute.xlu0 %330
        %334 = vset.pattern.permute.xlu0 0
        %335 = vperm.xlu0 %334, %v176
        %v336 = vpop.permute.xlu0 %335
        %v338 = vlaneseq
        %v339 = vshrl.u32 %v338, 7
        %v340 = vsub.s32 0, %v339
        %v341 = vrot.slane %v177, %v340
        %v342 = vmul.f32 %v181, %v341
        %v343 = vmul.f32 %v186, %v341
        %v344 = vmul.f32 %v191, %v341
        %v345 = vmul.f32 %v196, %v341
        %v346 = vmul.f32 %v201, %v341
        %v347 = vmul.f32 %v206, %v341
        %v348 = vmul.f32 %v211, %v341
        %v349 = vmul.f32 %v216, %v341
        %v350 = vmul.f32 %v221, %v341
        %v351 = vmul.f32 %v226, %v341
        %v352 = vmul.f32 %v231, %v341
        %v353 = vmul.f32 %v236, %v341
        %v354 = vmul.f32 %v241, %v341
        %v355 = vmul.f32 %v246, %v341
        %v356 = vmul.f32 %v251, %v341
        %v357 = vmul.f32 %v256, %v341
        %v358 = vmul.f32 %v261, %v341
        %v359 = vmul.f32 %v266, %v341
        %v360 = vmul.f32 %v271, %v341
        %v361 = vmul.f32 %v276, %v341
        %v362 = vmul.f32 %v281, %v341
        %v363 = vmul.f32 %v286, %v341
        %v364 = vmul.f32 %v291, %v341
        %v365 = vmul.f32 %v296, %v341
        %v366 = vmul.f32 %v301, %v341
        %v367 = vmul.f32 %v306, %v341
        %v368 = vmul.f32 %v311, %v341
        %v369 = vmul.f32 %v316, %v341
        %v370 = vmul.f32 %v321, %v341
        %v371 = vmul.f32 %v326, %v341
        %v372 = vmul.f32 %v331, %v341
        %v373 = vmul.f32 %v336, %v341
        %v374 = vadd.f32 %v342, 0.0
        %v375 = vadd.f32 %v343, 0.0
        %v376 = vadd.f32 %v344, 0.0
        %v377 = vadd.f32 %v345, 0.0
        %v378 = vadd.f32 %v346, 0.0
        %v379 = vadd.f32 %v347, 0.0
        %v380 = vadd.f32 %v348, 0.0
        %v381 = vadd.f32 %v349, 0.0
        %v382 = vadd.f32 %v350, 0.0
        %v383 = vadd.f32 %v351, 0.0
        %v384 = vadd.f32 %v352, 0.0
        %v385 = vadd.f32 %v353, 0.0
        %v386 = vadd.f32 %v354, 0.0
        %v387 = vadd.f32 %v355, 0.0
        %v388 = vadd.f32 %v356, 0.0
        %v389 = vadd.f32 %v357, 0.0
        %v390 = vadd.f32 %v358, 0.0
        %v391 = vadd.f32 %v359, 0.0
        %v392 = vadd.f32 %v360, 0.0
        %v393 = vadd.f32 %v361, 0.0
        %v394 = vadd.f32 %v362, 0.0
        %v395 = vadd.f32 %v363, 0.0
        %v396 = vadd.f32 %v364, 0.0
        %v397 = vadd.f32 %v365, 0.0
        %v398 = vadd.f32 %v366, 0.0
        %v399 = vadd.f32 %v367, 0.0
        %v400 = vadd.f32 %v368, 0.0
        %v401 = vadd.f32 %v369, 0.0
        %v402 = vadd.f32 %v370, 0.0
        %v403 = vadd.f32 %v371, 0.0
        %v404 = vadd.f32 %v372, 0.0
        %v405 = vadd.f32 %v373, 0.0
        %406 = vset.pattern.permute.xlu0 1
        %407 = vperm.xlu0 %406, %v145
        %v408 = vpop.permute.xlu0 %407
        %410 = vset.pattern.permute.xlu0 1
        %411 = vperm.xlu0 %410, %v146
        %v412 = vpop.permute.xlu0 %411
        %414 = vset.pattern.permute.xlu0 1
        %415 = vperm.xlu0 %414, %v147
        %v416 = vpop.permute.xlu0 %415
        %418 = vset.pattern.permute.xlu0 1
        %419 = vperm.xlu0 %418, %v148
        %v420 = vpop.permute.xlu0 %419
        %422 = vset.pattern.permute.xlu0 1
        %423 = vperm.xlu0 %422, %v149
        %v424 = vpop.permute.xlu0 %423
        %426 = vset.pattern.permute.xlu0 1
        %427 = vperm.xlu0 %426, %v150
        %v428 = vpop.permute.xlu0 %427
        %430 = vset.pattern.permute.xlu0 1
        %431 = vperm.xlu0 %430, %v151
        %v432 = vpop.permute.xlu0 %431
        %434 = vset.pattern.permute.xlu0 1
        %435 = vperm.xlu0 %434, %v152
        %v436 = vpop.permute.xlu0 %435
        %438 = vset.pattern.permute.xlu0 1
        %439 = vperm.xlu0 %438, %v153
        %v440 = vpop.permute.xlu0 %439
        %442 = vset.pattern.permute.xlu0 1
        %443 = vperm.xlu0 %442, %v154
        %v444 = vpop.permute.xlu0 %443
        %446 = vset.pattern.permute.xlu0 1
        %447 = vperm.xlu0 %446, %v155
        %v448 = vpop.permute.xlu0 %447
        %450 = vset.pattern.permute.xlu0 1
        %451 = vperm.xlu0 %450, %v156
        %v452 = vpop.permute.xlu0 %451
        %454 = vset.pattern.permute.xlu0 1
        %455 = vperm.xlu0 %454, %v157
        %v456 = vpop.permute.xlu0 %455
        %458 = vset.pattern.permute.xlu0 1
        %459 = vperm.xlu0 %458, %v158
        %v460 = vpop.permute.xlu0 %459
        %462 = vset.pattern.permute.xlu0 1
        %463 = vperm.xlu0 %462, %v159
        %v464 = vpop.permute.xlu0 %463
        %466 = vset.pattern.permute.xlu0 1
        %467 = vperm.xlu0 %466, %v160
        %v468 = vpop.permute.xlu0 %467
        %470 = vset.pattern.permute.xlu0 1
        %471 = vperm.xlu0 %470, %v161
        %v472 = vpop.permute.xlu0 %471
        %474 = vset.pattern.permute.xlu0 1
        %475 = vperm.xlu0 %474, %v162
        %v476 = vpop.permute.xlu0 %475
        %478 = vset.pattern.permute.xlu0 1
        %479 = vperm.xlu0 %478, %v163
        %v480 = vpop.permute.xlu0 %479
        %482 = vset.pattern.permute.xlu0 1
        %483 = vperm.xlu0 %482, %v164
        %v484 = vpop.permute.xlu0 %483
        %486 = vset.pattern.permute.xlu0 1
        %487 = vperm.xlu0 %486, %v165
        %v488 = vpop.permute.xlu0 %487
        %490 = vset.pattern.permute.xlu0 1
        %491 = vperm.xlu0 %490, %v166
        %v492 = vpop.permute.xlu0 %491
        %494 = vset.pattern.permute.xlu0 1
        %495 = vperm.xlu0 %494, %v167
        %v496 = vpop.permute.xlu0 %495
        %498 = vset.pattern.permute.xlu0 1
        %499 = vperm.xlu0 %498, %v168
        %v500 = vpop.permute.xlu0 %499
        %502 = vset.pattern.permute.xlu0 1
        %503 = vperm.xlu0 %502, %v169
        %v504 = vpop.permute.xlu0 %503
        %506 = vset.pattern.permute.xlu0 1
        %507 = vperm.xlu0 %506, %v170
        %v508 = vpop.permute.xlu0 %507
        %510 = vset.pattern.permute.xlu0 1
        %511 = vperm.xlu0 %510, %v171
        %v512 = vpop.permute.xlu0 %511
        %514 = vset.pattern.permute.xlu0 1
        %515 = vperm.xlu0 %514, %v172
        %v516 = vpop.permute.xlu0 %515
        %518 = vset.pattern.permute.xlu0 1
        %519 = vperm.xlu0 %518, %v173
        %v520 = vpop.permute.xlu0 %519
        %522 = vset.pattern.permute.xlu0 1
        %523 = vperm.xlu0 %522, %v174
        %v524 = vpop.permute.xlu0 %523
        %526 = vset.pattern.permute.xlu0 1
        %527 = vperm.xlu0 %526, %v175
        %v528 = vpop.permute.xlu0 %527
        %530 = vset.pattern.permute.xlu0 1
        %531 = vperm.xlu0 %530, %v176
        %v532 = vpop.permute.xlu0 %531
        %v534 = vlaneseq
        %v535 = vshrl.u32 %v534, 7
        %v536 = vsub.s32 1, %v535
        %v537 = vrot.slane %v177, %v536
        %v538 = vmul.f32 %v408, %v537
        %v539 = vmul.f32 %v412, %v537
        %v540 = vmul.f32 %v416, %v537
        %v541 = vmul.f32 %v420, %v537
        %v542 = vmul.f32 %v424, %v537
        %v543 = vmul.f32 %v428, %v537
        %v544 = vmul.f32 %v432, %v537
        %v545 = vmul.f32 %v436, %v537
        %v546 = vmul.f32 %v440, %v537
        %v547 = vmul.f32 %v444, %v537
        %v548 = vmul.f32 %v448, %v537
        %v549 = vmul.f32 %v452, %v537
        %v550 = vmul.f32 %v456, %v537
        %v551 = vmul.f32 %v460, %v537
        %v552 = vmul.f32 %v464, %v537
        %v553 = vmul.f32 %v468, %v537
        %v554 = vmul.f32 %v472, %v537
        %v555 = vmul.f32 %v476, %v537
        %v556 = vmul.f32 %v480, %v537
        %v557 = vmul.f32 %v484, %v537
        %v558 = vmul.f32 %v488, %v537
        %v559 = vmul.f32 %v492, %v537
        %v560 = vmul.f32 %v496, %v537
        %v561 = vmul.f32 %v500, %v537
        %v562 = vmul.f32 %v504, %v537
        %v563 = vmul.f32 %v508, %v537
        %v564 = vmul.f32 %v512, %v537
        %v565 = vmul.f32 %v516, %v537
        %v566 = vmul.f32 %v520, %v537
        %v567 = vmul.f32 %v524, %v537
        %v568 = vmul.f32 %v528, %v537
        %v569 = vmul.f32 %v532, %v537
        %v570 = vadd.f32 %v374, %v538
        %v571 = vadd.f32 %v375, %v539
        %v572 = vadd.f32 %v376, %v540
        %v573 = vadd.f32 %v377, %v541
        %v574 = vadd.f32 %v378, %v542
        %v575 = vadd.f32 %v379, %v543
        %v576 = vadd.f32 %v380, %v544
        %v577 = vadd.f32 %v381, %v545
        %v578 = vadd.f32 %v382, %v546
        %v579 = vadd.f32 %v383, %v547
        %v580 = vadd.f32 %v384, %v548
        %v581 = vadd.f32 %v385, %v549
        %v582 = vadd.f32 %v386, %v550
        %v583 = vadd.f32 %v387, %v551
        %v584 = vadd.f32 %v388, %v552
        %v585 = vadd.f32 %v389, %v553
        %v586 = vadd.f32 %v390, %v554
        %v587 = vadd.f32 %v391, %v555
        %v588 = vadd.f32 %v392, %v556
        %v589 = vadd.f32 %v393, %v557
        %v590 = vadd.f32 %v394, %v558
        %v591 = vadd.f32 %v395, %v559
        %v592 = vadd.f32 %v396, %v560
        %v593 = vadd.f32 %v397, %v561
        %v594 = vadd.f32 %v398, %v562
        %v595 = vadd.f32 %v399, %v563
        %v596 = vadd.f32 %v400, %v564
        %v597 = vadd.f32 %v401, %v565
        %v598 = vadd.f32 %v402, %v566
        %v599 = vadd.f32 %v403, %v567
        %v600 = vadd.f32 %v404, %v568
        %v601 = vadd.f32 %v405, %v569
        %v602 = vand.u32 2147483647, %v570
        %vm603 = vcmp.le.f32.partialorder %v602, 0.7853982
        %vm604 = vcmp.lt.s32.totalorder %v570, 0
        %v605 = vand.u32 %v570, 2139095040
        %v606 = vshrl.u32 %v605, 23
        %v607 = vsub.s32 %v606, 127
        %v608 = vand.u32 2147483647, %v570
        %v609 = vand.u32 %v608, 8388607
        %v610 = vor.u32 %v609, 8388608
        %v611 = vsub.s32 0, %v610
        %v612 = vadd.s32 %v607, 1
        %vm613 = vcmp.gt.s32.totalorder %v612, 0
        %v614 = vsel %vm613, %v612, 0
        %v615 = vshrl.u32 %v614, 5
        %v616 = vand.u32 %v614, 31
        %v617 = vsub.s32 32, %v616
        %v618 = vshrl.u32 683565275, %v617
        %v619 = vshll.u32 683565275, %v616
        %v620 = vshrl.u32 2475754826, %v617
        %v621 = vor.u32 %v619, %v620
        %v622 = vshll.u32 2475754826, %v616
        %v623 = vshrl.u32 2131351028, %v617
        %v624 = vor.u32 %v622, %v623
        %v625 = vshll.u32 2131351028, %v616
        %v626 = vshrl.u32 2102212464, %v617
        %v627 = vor.u32 %v625, %v626
        %v628 = vshll.u32 2102212464, %v616
        %v629 = vshrl.u32 920167782, %v617
        %v630 = vor.u32 %v628, %v629
        %v631 = vshll.u32 920167782, %v616
        %v632 = vshrl.u32 1326507024, %v617
        %v633 = vor.u32 %v631, %v632
        %vm634 = vcmp.lt.s32.totalorder %v615, 1
        %vm635 = vcmp.lt.s32.totalorder %v615, 2
        %vm636 = vcmp.lt.s32.totalorder %v615, 3
        %vm637 = vcmp.lt.s32.totalorder %v615, 4
        %v638 = vsel %vm634, %v618, %v621
        %v639 = vsel %vm637, %v627, 2102212464
        %v640 = vsel %vm636, %v624, %v639
        %v641 = vsel %vm635, %v638, %v640
        %v642 = vsel %vm634, %v621, %v624
        %v643 = vsel %vm637, %v630, 920167782
        %v644 = vsel %vm636, %v627, %v643
        %v645 = vsel %vm635, %v642, %v644
        %v646 = vsel %vm634, %v624, %v627
        %v647 = vsel %vm637, %v633, 1326507024
        %v648 = vsel %vm636, %v630, %v647
        %v649 = vsel %vm635, %v646, %v648
        %v650 = vshll.u32 %v610, 8
        %v651 = vmul.u32.u64.compose %v650, %v649
        %v652 = vextract.low.u32 %v651
        %v653 = vextract.high.u32 %v651
        %v654 = vmul.u32.u64.compose %v650, %v645
        %v655 = vextract.low.u32 %v654
        %v656 = vextract.high.u32 %v654
        %v657 = vmul.u32 %v650, %v641
        %v658 = vadd.s32 %v653, %v655
        %vm659 = vc.u32 %v653, %v655
        %v660 = vadd.s32 %v656, 1
        %v661 = vsel %vm659, %v660, %v656
        %v662 = vadd.s32 %v657, %v661
        %v663 = vadd.s32 %v662, 536870912
        %v664 = vshrl.u32 %v663, 30
        %v665 = vshll.u32 %v664, 30
        %v666 = vsub.s32 %v662, %v665
        %vm667 = vcmp.lt.s32.totalorder %v666, 0
        %v668 = vsub.s32 0, %v666
        %v669 = vsel %vm667, %v668, %v666
        %v670 = vclz %v669
        %v671 = vsub.s32 %v670, 2
        %vm672 = vcmp.gt.s32.totalorder 0, %v671
        %v673 = vsel %vm672, 0, %v671
        %v674 = vsub.s32 32, %v673
        %v675 = vshll.u32 %v666, %v673
        %v676 = vshrl.u32 %v658, %v674
        %v677 = vor.u32 %v675, %v676
        %v678 = vsub.s32 4294967266, %v673
        %v679 = vadd.s32 %v678, 127
        %v680 = vshll.u32 %v679, 23
        %v681 = vor.u32 4788187, %v680
        %v682 = vand.u32 2147483647, %v681
        %v684 = vcvt.s32.f32 %v677
        %v685 = vmul.f32 %v684, %v682
        %v686 = vxor.u32 %v685, 2147483648
        %v687 = vsel %vm604, %v686, %v685
        %v688 = vsub.s32 4, %v664
        %v689 = vsel %vm604, %v688, %v664
        %v690 = vsel %vm603, %v570, %v687
        %v691 = vsel %vm603, 0, %v689
        %v692 = vcosq.f32.pop %v690
        %v693 = vsinq.f32.pop %v690
        %vm694 = vweird.f32 %v570
        %v695 = vadd.s32 %v691, 3
        %v696 = vand.u32 %v695, 3
        %vm697 = vcmp.lt.s32.totalorder %v696, 2
        %vm698 = vcmp.eq.s32.totalorder %v696, 0
        %v699 = vxor.u32 %v693, 2147483648
        %v700 = vsel %vm698, %v692, %v699
        %vm701 = vcmp.eq.s32.totalorder %v696, 2
        %v702 = vxor.u32 %v692, 2147483648
        %v703 = vsel %vm701, %v702, %v693
        %v704 = vsel %vm697, %v700, %v703
        %v705 = vsel %vm694, nan, %v704
        %v706 = vand.u32 2147483647, %v571
        %vm707 = vcmp.le.f32.partialorder %v706, 0.7853982
        %vm708 = vcmp.lt.s32.totalorder %v571, 0
        %v709 = vand.u32 %v571, 2139095040
        %v710 = vshrl.u32 %v709, 23
        %v711 = vsub.s32 %v710, 127
        %v712 = vand.u32 2147483647, %v571
        %v713 = vand.u32 %v712, 8388607
        %v714 = vor.u32 %v713, 8388608
        %v715 = vsub.s32 0, %v714
        %v716 = vadd.s32 %v711, 1
        %vm717 = vcmp.gt.s32.totalorder %v716, 0
        %v718 = vsel %vm717, %v716, 0
        %v719 = vshrl.u32 %v718, 5
        %v720 = vand.u32 %v718, 31
        %v721 = vsub.s32 32, %v720
        %v722 = vshrl.u32 683565275, %v721
        %v723 = vshll.u32 683565275, %v720
        %v724 = vshrl.u32 2475754826, %v721
        %v725 = vor.u32 %v723, %v724
        %v726 = vshll.u32 2475754826, %v720
        %v727 = vshrl.u32 2131351028, %v721
        %v728 = vor.u32 %v726, %v727
        %v729 = vshll.u32 2131351028, %v720
        %v730 = vshrl.u32 2102212464, %v721
        %v731 = vor.u32 %v729, %v730
        %v732 = vshll.u32 2102212464, %v720
        %v733 = vshrl.u32 920167782, %v721
        %v734 = vor.u32 %v732, %v733
        %v735 = vshll.u32 920167782, %v720
        %v736 = vshrl.u32 1326507024, %v721
        %v737 = vor.u32 %v735, %v736
        %vm738 = vcmp.lt.s32.totalorder %v719, 1
        %vm739 = vcmp.lt.s32.totalorder %v719, 2
        %vm740 = vcmp.lt.s32.totalorder %v719, 3
        %vm741 = vcmp.lt.s32.totalorder %v719, 4
        %v742 = vsel %vm738, %v722, %v725
        %v743 = vsel %vm741, %v731, 2102212464
        %v744 = vsel %vm740, %v728, %v743
        %v745 = vsel %vm739, %v742, %v744
        %v746 = vsel %vm738, %v725, %v728
        %v747 = vsel %vm741, %v734, 920167782
        %v748 = vsel %vm740, %v731, %v747
        %v749 = vsel %vm739, %v746, %v748
        %v750 = vsel %vm738, %v728, %v731
        %v751 = vsel %vm741, %v737, 1326507024
        %v752 = vsel %vm740, %v734, %v751
        %v753 = vsel %vm739, %v750, %v752
        %v754 = vshll.u32 %v714, 8
        %v755 = vmul.u32.u64.compose %v754, %v753
        %v756 = vextract.low.u32 %v755
        %v757 = vextract.high.u32 %v755
        %v758 = vmul.u32.u64.compose %v754, %v749
        %v759 = vextract.low.u32 %v758
        %v760 = vextract.high.u32 %v758
        %v761 = vmul.u32 %v754, %v745
        %v762 = vadd.s32 %v757, %v759
        %vm763 = vc.u32 %v757, %v759
        %v764 = vadd.s32 %v760, 1
        %v765 = vsel %vm763, %v764, %v760
        %v766 = vadd.s32 %v761, %v765
        %v767 = vadd.s32 %v766, 536870912
        %v768 = vshrl.u32 %v767, 30
        %v769 = vshll.u32 %v768, 30
        %v770 = vsub.s32 %v766, %v769
        %vm771 = vcmp.lt.s32.totalorder %v770, 0
        %v772 = vsub.s32 0, %v770
        %v773 = vsel %vm771, %v772, %v770
        %v774 = vclz %v773
        %v775 = vsub.s32 %v774, 2
        %vm776 = vcmp.gt.s32.totalorder 0, %v775
        %v777 = vsel %vm776, 0, %v775
        %v778 = vsub.s32 32, %v777
        %v779 = vshll.u32 %v770, %v777
        %v780 = vshrl.u32 %v762, %v778
        %v781 = vor.u32 %v779, %v780
        %v782 = vsub.s32 4294967266, %v777
        %v783 = vadd.s32 %v782, 127
        %v784 = vshll.u32 %v783, 23
        %v785 = vor.u32 4788187, %v784
        %v786 = vand.u32 2147483647, %v785
        %v788 = vcvt.s32.f32 %v781
        %v789 = vmul.f32 %v788, %v786
        %v790 = vxor.u32 %v789, 2147483648
        %v791 = vsel %vm708, %v790, %v789
        %v792 = vsub.s32 4, %v768
        %v793 = vsel %vm708, %v792, %v768
        %v794 = vsel %vm707, %v571, %v791
        %v795 = vsel %vm707, 0, %v793
        %v796 = vcosq.f32.pop %v794
        %v797 = vsinq.f32.pop %v794
        %vm798 = vweird.f32 %v571
        %v799 = vadd.s32 %v795, 3
        %v800 = vand.u32 %v799, 3
        %vm801 = vcmp.lt.s32.totalorder %v800, 2
        %vm802 = vcmp.eq.s32.totalorder %v800, 0
        %v803 = vxor.u32 %v797, 2147483648
        %v804 = vsel %vm802, %v796, %v803
        %vm805 = vcmp.eq.s32.totalorder %v800, 2
        %v806 = vxor.u32 %v796, 2147483648
        %v807 = vsel %vm805, %v806, %v797
        %v808 = vsel %vm801, %v804, %v807
        %v809 = vsel %vm798, nan, %v808
        %v810 = vand.u32 2147483647, %v572
        %vm811 = vcmp.le.f32.partialorder %v810, 0.7853982
        %vm812 = vcmp.lt.s32.totalorder %v572, 0
        %v813 = vand.u32 %v572, 2139095040
        %v814 = vshrl.u32 %v813, 23
        %v815 = vsub.s32 %v814, 127
        %v816 = vand.u32 2147483647, %v572
        %v817 = vand.u32 %v816, 8388607
        %v818 = vor.u32 %v817, 8388608
        %v819 = vsub.s32 0, %v818
        %v820 = vadd.s32 %v815, 1
        %vm821 = vcmp.gt.s32.totalorder %v820, 0
        %v822 = vsel %vm821, %v820, 0
        %v823 = vshrl.u32 %v822, 5
        %v824 = vand.u32 %v822, 31
        %v825 = vsub.s32 32, %v824
        %v826 = vshrl.u32 683565275, %v825
        %v827 = vshll.u32 683565275, %v824
        %v828 = vshrl.u32 2475754826, %v825
        %v829 = vor.u32 %v827, %v828
        %v830 = vshll.u32 2475754826, %v824
        %v831 = vshrl.u32 2131351028, %v825
        %v832 = vor.u32 %v830, %v831
        %v833 = vshll.u32 2131351028, %v824
        %v834 = vshrl.u32 2102212464, %v825
        %v835 = vor.u32 %v833, %v834
        %v836 = vshll.u32 2102212464, %v824
        %v837 = vshrl.u32 920167782, %v825
        %v838 = vor.u32 %v836, %v837
        %v839 = vshll.u32 920167782, %v824
        %v840 = vshrl.u32 1326507024, %v825
        %v841 = vor.u32 %v839, %v840
        %vm842 = vcmp.lt.s32.totalorder %v823, 1
        %vm843 = vcmp.lt.s32.totalorder %v823, 2
        %vm844 = vcmp.lt.s32.totalorder %v823, 3
        %vm845 = vcmp.lt.s32.totalorder %v823, 4
        %v846 = vsel %vm842, %v826, %v829
        %v847 = vsel %vm845, %v835, 2102212464
        %v848 = vsel %vm844, %v832, %v847
        %v849 = vsel %vm843, %v846, %v848
        %v850 = vsel %vm842, %v829, %v832
        %v851 = vsel %vm845, %v838, 920167782
        %v852 = vsel %vm844, %v835, %v851
        %v853 = vsel %vm843, %v850, %v852
        %v854 = vsel %vm842, %v832, %v835
        %v855 = vsel %vm845, %v841, 1326507024
        %v856 = vsel %vm844, %v838, %v855
        %v857 = vsel %vm843, %v854, %v856
        %v858 = vshll.u32 %v818, 8
        %v859 = vmul.u32.u64.compose %v858, %v857
        %v860 = vextract.low.u32 %v859
        %v861 = vextract.high.u32 %v859
        %v862 = vmul.u32.u64.compose %v858, %v853
        %v863 = vextract.low.u32 %v862
        %v864 = vextract.high.u32 %v862
        %v865 = vmul.u32 %v858, %v849
        %v866 = vadd.s32 %v861, %v863
        %vm867 = vc.u32 %v861, %v863
        %v868 = vadd.s32 %v864, 1
        %v869 = vsel %vm867, %v868, %v864
        %v870 = vadd.s32 %v865, %v869
        %v871 = vadd.s32 %v870, 536870912
        %v872 = vshrl.u32 %v871, 30
        %v873 = vshll.u32 %v872, 30
        %v874 = vsub.s32 %v870, %v873
        %vm875 = vcmp.lt.s32.totalorder %v874, 0
        %v876 = vsub.s32 0, %v874
        %v877 = vsel %vm875, %v876, %v874
        %v878 = vclz %v877
        %v879 = vsub.s32 %v878, 2
        %vm880 = vcmp.gt.s32.totalorder 0, %v879
        %v881 = vsel %vm880, 0, %v879
        %v882 = vsub.s32 32, %v881
        %v883 = vshll.u32 %v874, %v881
        %v884 = vshrl.u32 %v866, %v882
        %v885 = vor.u32 %v883, %v884
        %v886 = vsub.s32 4294967266, %v881
        %v887 = vadd.s32 %v886, 127
        %v888 = vshll.u32 %v887, 23
        %v889 = vor.u32 4788187, %v888
        %v890 = vand.u32 2147483647, %v889
        %v892 = vcvt.s32.f32 %v885
        %v893 = vmul.f32 %v892, %v890
        %v894 = vxor.u32 %v893, 2147483648
        %v895 = vsel %vm812, %v894, %v893
        %v896 = vsub.s32 4, %v872
        %v897 = vsel %vm812, %v896, %v872
        %v898 = vsel %vm811, %v572, %v895
        %v899 = vsel %vm811, 0, %v897
        %v900 = vcosq.f32.pop %v898
        %v901 = vsinq.f32.pop %v898
        %vm902 = vweird.f32 %v572
        %v903 = vadd.s32 %v899, 3
        %v904 = vand.u32 %v903, 3
        %vm905 = vcmp.lt.s32.totalorder %v904, 2
        %vm906 = vcmp.eq.s32.totalorder %v904, 0
        %v907 = vxor.u32 %v901, 2147483648
        %v908 = vsel %vm906, %v900, %v907
        %vm909 = vcmp.eq.s32.totalorder %v904, 2
        %v910 = vxor.u32 %v900, 2147483648
        %v911 = vsel %vm909, %v910, %v901
        %v912 = vsel %vm905, %v908, %v911
        %v913 = vsel %vm902, nan, %v912
        %v914 = vand.u32 2147483647, %v573
        %vm915 = vcmp.le.f32.partialorder %v914, 0.7853982
        %vm916 = vcmp.lt.s32.totalorder %v573, 0
        %v917 = vand.u32 %v573, 2139095040
        %v918 = vshrl.u32 %v917, 23
        %v919 = vsub.s32 %v918, 127
        %v920 = vand.u32 2147483647, %v573
        %v921 = vand.u32 %v920, 8388607
        %v922 = vor.u32 %v921, 8388608
        %v923 = vsub.s32 0, %v922
        %v924 = vadd.s32 %v919, 1
        %vm925 = vcmp.gt.s32.totalorder %v924, 0
        %v926 = vsel %vm925, %v924, 0
        %v927 = vshrl.u32 %v926, 5
        %v928 = vand.u32 %v926, 31
        %v929 = vsub.s32 32, %v928
        %v930 = vshrl.u32 683565275, %v929
        %v931 = vshll.u32 683565275, %v928
        %v932 = vshrl.u32 2475754826, %v929
        %v933 = vor.u32 %v931, %v932
        %v934 = vshll.u32 2475754826, %v928
        %v935 = vshrl.u32 2131351028, %v929
        %v936 = vor.u32 %v934, %v935
        %v937 = vshll.u32 2131351028, %v928
        %v938 = vshrl.u32 2102212464, %v929
        %v939 = vor.u32 %v937, %v938
        %v940 = vshll.u32 2102212464, %v928
        %v941 = vshrl.u32 920167782, %v929
        %v942 = vor.u32 %v940, %v941
        %v943 = vshll.u32 920167782, %v928
        %v944 = vshrl.u32 1326507024, %v929
        %v945 = vor.u32 %v943, %v944
        %vm946 = vcmp.lt.s32.totalorder %v927, 1
        %vm947 = vcmp.lt.s32.totalorder %v927, 2
        %vm948 = vcmp.lt.s32.totalorder %v927, 3
        %vm949 = vcmp.lt.s32.totalorder %v927, 4
        %v950 = vsel %vm946, %v930, %v933
        %v951 = vsel %vm949, %v939, 2102212464
        %v952 = vsel %vm948, %v936, %v951
        %v953 = vsel %vm947, %v950, %v952
        %v954 = vsel %vm946, %v933, %v936
        %v955 = vsel %vm949, %v942, 920167782
        %v956 = vsel %vm948, %v939, %v955
        %v957 = vsel %vm947, %v954, %v956
        %v958 = vsel %vm946, %v936, %v939
        %v959 = vsel %vm949, %v945, 1326507024
        %v960 = vsel %vm948, %v942, %v959
        %v961 = vsel %vm947, %v958, %v960
        %v962 = vshll.u32 %v922, 8
        %v963 = vmul.u32.u64.compose %v962, %v961
        %v964 = vextract.low.u32 %v963
        %v965 = vextract.high.u32 %v963
        %v966 = vmul.u32.u64.compose %v962, %v957
        %v967 = vextract.low.u32 %v966
        %v968 = vextract.high.u32 %v966
        %v969 = vmul.u32 %v962, %v953
        %v970 = vadd.s32 %v965, %v967
        %vm971 = vc.u32 %v965, %v967
        %v972 = vadd.s32 %v968, 1
        %v973 = vsel %vm971, %v972, %v968
        %v974 = vadd.s32 %v969, %v973
        %v975 = vadd.s32 %v974, 536870912
        %v976 = vshrl.u32 %v975, 30
        %v977 = vshll.u32 %v976, 30
        %v978 = vsub.s32 %v974, %v977
        %vm979 = vcmp.lt.s32.totalorder %v978, 0
        %v980 = vsub.s32 0, %v978
        %v981 = vsel %vm979, %v980, %v978
        %v982 = vclz %v981
        %v983 = vsub.s32 %v982, 2
        %vm984 = vcmp.gt.s32.totalorder 0, %v983
        %v985 = vsel %vm984, 0, %v983
        %v986 = vsub.s32 32, %v985
        %v987 = vshll.u32 %v978, %v985
        %v988 = vshrl.u32 %v970, %v986
        %v989 = vor.u32 %v987, %v988
        %v990 = vsub.s32 4294967266, %v985
        %v991 = vadd.s32 %v990, 127
        %v992 = vshll.u32 %v991, 23
        %v993 = vor.u32 4788187, %v992
        %v994 = vand.u32 2147483647, %v993
        %v996 = vcvt.s32.f32 %v989
        %v997 = vmul.f32 %v996, %v994
        %v998 = vxor.u32 %v997, 2147483648
        %v999 = vsel %vm916, %v998, %v997
        %v1000 = vsub.s32 4, %v976
        %v1001 = vsel %vm916, %v1000, %v976
        %v1002 = vsel %vm915, %v573, %v999
        %v1003 = vsel %vm915, 0, %v1001
        %v1004 = vcosq.f32.pop %v1002
        %v1005 = vsinq.f32.pop %v1002
        %vm1006 = vweird.f32 %v573
        %v1007 = vadd.s32 %v1003, 3
        %v1008 = vand.u32 %v1007, 3
        %vm1009 = vcmp.lt.s32.totalorder %v1008, 2
        %vm1010 = vcmp.eq.s32.totalorder %v1008, 0
        %v1011 = vxor.u32 %v1005, 2147483648
        %v1012 = vsel %vm1010, %v1004, %v1011
        %vm1013 = vcmp.eq.s32.totalorder %v1008, 2
        %v1014 = vxor.u32 %v1004, 2147483648
        %v1015 = vsel %vm1013, %v1014, %v1005
        %v1016 = vsel %vm1009, %v1012, %v1015
        %v1017 = vsel %vm1006, nan, %v1016
        %v1018 = vand.u32 2147483647, %v574
        %vm1019 = vcmp.le.f32.partialorder %v1018, 0.7853982
        %vm1020 = vcmp.lt.s32.totalorder %v574, 0
        %v1021 = vand.u32 %v574, 2139095040
        %v1022 = vshrl.u32 %v1021, 23
        %v1023 = vsub.s32 %v1022, 127
        %v1024 = vand.u32 2147483647, %v574
        %v1025 = vand.u32 %v1024, 8388607
        %v1026 = vor.u32 %v1025, 8388608
        %v1027 = vsub.s32 0, %v1026
        %v1028 = vadd.s32 %v1023, 1
        %vm1029 = vcmp.gt.s32.totalorder %v1028, 0
        %v1030 = vsel %vm1029, %v1028, 0
        %v1031 = vshrl.u32 %v1030, 5
        %v1032 = vand.u32 %v1030, 31
        %v1033 = vsub.s32 32, %v1032
        %v1034 = vshrl.u32 683565275, %v1033
        %v1035 = vshll.u32 683565275, %v1032
        %v1036 = vshrl.u32 2475754826, %v1033
        %v1037 = vor.u32 %v1035, %v1036
        %v1038 = vshll.u32 2475754826, %v1032
        %v1039 = vshrl.u32 2131351028, %v1033
        %v1040 = vor.u32 %v1038, %v1039
        %v1041 = vshll.u32 2131351028, %v1032
        %v1042 = vshrl.u32 2102212464, %v1033
        %v1043 = vor.u32 %v1041, %v1042
        %v1044 = vshll.u32 2102212464, %v1032
        %v1045 = vshrl.u32 920167782, %v1033
        %v1046 = vor.u32 %v1044, %v1045
        %v1047 = vshll.u32 920167782, %v1032
        %v1048 = vshrl.u32 1326507024, %v1033
        %v1049 = vor.u32 %v1047, %v1048
        %vm1050 = vcmp.lt.s32.totalorder %v1031, 1
        %vm1051 = vcmp.lt.s32.totalorder %v1031, 2
        %vm1052 = vcmp.lt.s32.totalorder %v1031, 3
        %vm1053 = vcmp.lt.s32.totalorder %v1031, 4
        %v1054 = vsel %vm1050, %v1034, %v1037
        %v1055 = vsel %vm1053, %v1043, 2102212464
        %v1056 = vsel %vm1052, %v1040, %v1055
        %v1057 = vsel %vm1051, %v1054, %v1056
        %v1058 = vsel %vm1050, %v1037, %v1040
        %v1059 = vsel %vm1053, %v1046, 920167782
        %v1060 = vsel %vm1052, %v1043, %v1059
        %v1061 = vsel %vm1051, %v1058, %v1060
        %v1062 = vsel %vm1050, %v1040, %v1043
        %v1063 = vsel %vm1053, %v1049, 1326507024
        %v1064 = vsel %vm1052, %v1046, %v1063
        %v1065 = vsel %vm1051, %v1062, %v1064
        %v1066 = vshll.u32 %v1026, 8
        %v1067 = vmul.u32.u64.compose %v1066, %v1065
        %v1068 = vextract.low.u32 %v1067
        %v1069 = vextract.high.u32 %v1067
        %v1070 = vmul.u32.u64.compose %v1066, %v1061
        %v1071 = vextract.low.u32 %v1070
        %v1072 = vextract.high.u32 %v1070
        %v1073 = vmul.u32 %v1066, %v1057
        %v1074 = vadd.s32 %v1069, %v1071
        %vm1075 = vc.u32 %v1069, %v1071
        %v1076 = vadd.s32 %v1072, 1
        %v1077 = vsel %vm1075, %v1076, %v1072
        %v1078 = vadd.s32 %v1073, %v1077
        %v1079 = vadd.s32 %v1078, 536870912
        %v1080 = vshrl.u32 %v1079, 30
        %v1081 = vshll.u32 %v1080, 30
        %v1082 = vsub.s32 %v1078, %v1081
        %vm1083 = vcmp.lt.s32.totalorder %v1082, 0
        %v1084 = vsub.s32 0, %v1082
        %v1085 = vsel %vm1083, %v1084, %v1082
        %v1086 = vclz %v1085
        %v1087 = vsub.s32 %v1086, 2
        %vm1088 = vcmp.gt.s32.totalorder 0, %v1087
        %v1089 = vsel %vm1088, 0, %v1087
        %v1090 = vsub.s32 32, %v1089
        %v1091 = vshll.u32 %v1082, %v1089
        %v1092 = vshrl.u32 %v1074, %v1090
        %v1093 = vor.u32 %v1091, %v1092
        %v1094 = vsub.s32 4294967266, %v1089
        %v1095 = vadd.s32 %v1094, 127
        %v1096 = vshll.u32 %v1095, 23
        %v1097 = vor.u32 4788187, %v1096
        %v1098 = vand.u32 2147483647, %v1097
        %v1100 = vcvt.s32.f32 %v1093
        %v1101 = vmul.f32 %v1100, %v1098
        %v1102 = vxor.u32 %v1101, 2147483648
        %v1103 = vsel %vm1020, %v1102, %v1101
        %v1104 = vsub.s32 4, %v1080
        %v1105 = vsel %vm1020, %v1104, %v1080
        %v1106 = vsel %vm1019, %v574, %v1103
        %v1107 = vsel %vm1019, 0, %v1105
        %v1108 = vcosq.f32.pop %v1106
        %v1109 = vsinq.f32.pop %v1106
        %vm1110 = vweird.f32 %v574
        %v1111 = vadd.s32 %v1107, 3
        %v1112 = vand.u32 %v1111, 3
        %vm1113 = vcmp.lt.s32.totalorder %v1112, 2
        %vm1114 = vcmp.eq.s32.totalorder %v1112, 0
        %v1115 = vxor.u32 %v1109, 2147483648
        %v1116 = vsel %vm1114, %v1108, %v1115
        %vm1117 = vcmp.eq.s32.totalorder %v1112, 2
        %v1118 = vxor.u32 %v1108, 2147483648
        %v1119 = vsel %vm1117, %v1118, %v1109
        %v1120 = vsel %vm1113, %v1116, %v1119
        %v1121 = vsel %vm1110, nan, %v1120
        %v1122 = vand.u32 2147483647, %v575
        %vm1123 = vcmp.le.f32.partialorder %v1122, 0.7853982
        %vm1124 = vcmp.lt.s32.totalorder %v575, 0
        %v1125 = vand.u32 %v575, 2139095040
        %v1126 = vshrl.u32 %v1125, 23
        %v1127 = vsub.s32 %v1126, 127
        %v1128 = vand.u32 2147483647, %v575
        %v1129 = vand.u32 %v1128, 8388607
        %v1130 = vor.u32 %v1129, 8388608
        %v1131 = vsub.s32 0, %v1130
        %v1132 = vadd.s32 %v1127, 1
        %vm1133 = vcmp.gt.s32.totalorder %v1132, 0
        %v1134 = vsel %vm1133, %v1132, 0
        %v1135 = vshrl.u32 %v1134, 5
        %v1136 = vand.u32 %v1134, 31
        %v1137 = vsub.s32 32, %v1136
        %v1138 = vshrl.u32 683565275, %v1137
        %v1139 = vshll.u32 683565275, %v1136
        %v1140 = vshrl.u32 2475754826, %v1137
        %v1141 = vor.u32 %v1139, %v1140
        %v1142 = vshll.u32 2475754826, %v1136
        %v1143 = vshrl.u32 2131351028, %v1137
        %v1144 = vor.u32 %v1142, %v1143
        %v1145 = vshll.u32 2131351028, %v1136
        %v1146 = vshrl.u32 2102212464, %v1137
        %v1147 = vor.u32 %v1145, %v1146
        %v1148 = vshll.u32 2102212464, %v1136
        %v1149 = vshrl.u32 920167782, %v1137
        %v1150 = vor.u32 %v1148, %v1149
        %v1151 = vshll.u32 920167782, %v1136
        %v1152 = vshrl.u32 1326507024, %v1137
        %v1153 = vor.u32 %v1151, %v1152
        %vm1154 = vcmp.lt.s32.totalorder %v1135, 1
        %vm1155 = vcmp.lt.s32.totalorder %v1135, 2
        %vm1156 = vcmp.lt.s32.totalorder %v1135, 3
        %vm1157 = vcmp.lt.s32.totalorder %v1135, 4
        %v1158 = vsel %vm1154, %v1138, %v1141
        %v1159 = vsel %vm1157, %v1147, 2102212464
        %v1160 = vsel %vm1156, %v1144, %v1159
        %v1161 = vsel %vm1155, %v1158, %v1160
        %v1162 = vsel %vm1154, %v1141, %v1144
        %v1163 = vsel %vm1157, %v1150, 920167782
        %v1164 = vsel %vm1156, %v1147, %v1163
        %v1165 = vsel %vm1155, %v1162, %v1164
        %v1166 = vsel %vm1154, %v1144, %v1147
        %v1167 = vsel %vm1157, %v1153, 1326507024
        %v1168 = vsel %vm1156, %v1150, %v1167
        %v1169 = vsel %vm1155, %v1166, %v1168
        %v1170 = vshll.u32 %v1130, 8
        %v1171 = vmul.u32.u64.compose %v1170, %v1169
        %v1172 = vextract.low.u32 %v1171
        %v1173 = vextract.high.u32 %v1171
        %v1174 = vmul.u32.u64.compose %v1170, %v1165
        %v1175 = vextract.low.u32 %v1174
        %v1176 = vextract.high.u32 %v1174
        %v1177 = vmul.u32 %v1170, %v1161
        %v1178 = vadd.s32 %v1173, %v1175
        %vm1179 = vc.u32 %v1173, %v1175
        %v1180 = vadd.s32 %v1176, 1
        %v1181 = vsel %vm1179, %v1180, %v1176
        %v1182 = vadd.s32 %v1177, %v1181
        %v1183 = vadd.s32 %v1182, 536870912
        %v1184 = vshrl.u32 %v1183, 30
        %v1185 = vshll.u32 %v1184, 30
        %v1186 = vsub.s32 %v1182, %v1185
        %vm1187 = vcmp.lt.s32.totalorder %v1186, 0
        %v1188 = vsub.s32 0, %v1186
        %v1189 = vsel %vm1187, %v1188, %v1186
        %v1190 = vclz %v1189
        %v1191 = vsub.s32 %v1190, 2
        %vm1192 = vcmp.gt.s32.totalorder 0, %v1191
        %v1193 = vsel %vm1192, 0, %v1191
        %v1194 = vsub.s32 32, %v1193
        %v1195 = vshll.u32 %v1186, %v1193
        %v1196 = vshrl.u32 %v1178, %v1194
        %v1197 = vor.u32 %v1195, %v1196
        %v1198 = vsub.s32 4294967266, %v1193
        %v1199 = vadd.s32 %v1198, 127
        %v1200 = vshll.u32 %v1199, 23
        %v1201 = vor.u32 4788187, %v1200
        %v1202 = vand.u32 2147483647, %v1201
        %v1204 = vcvt.s32.f32 %v1197
        %v1205 = vmul.f32 %v1204, %v1202
        %v1206 = vxor.u32 %v1205, 2147483648
        %v1207 = vsel %vm1124, %v1206, %v1205
        %v1208 = vsub.s32 4, %v1184
        %v1209 = vsel %vm1124, %v1208, %v1184
        %v1210 = vsel %vm1123, %v575, %v1207
        %v1211 = vsel %vm1123, 0, %v1209
        %v1212 = vcosq.f32.pop %v1210
        %v1213 = vsinq.f32.pop %v1210
        %vm1214 = vweird.f32 %v575
        %v1215 = vadd.s32 %v1211, 3
        %v1216 = vand.u32 %v1215, 3
        %vm1217 = vcmp.lt.s32.totalorder %v1216, 2
        %vm1218 = vcmp.eq.s32.totalorder %v1216, 0
        %v1219 = vxor.u32 %v1213, 2147483648
        %v1220 = vsel %vm1218, %v1212, %v1219
        %vm1221 = vcmp.eq.s32.totalorder %v1216, 2
        %v1222 = vxor.u32 %v1212, 2147483648
        %v1223 = vsel %vm1221, %v1222, %v1213
        %v1224 = vsel %vm1217, %v1220, %v1223
        %v1225 = vsel %vm1214, nan, %v1224
        %v1226 = vand.u32 2147483647, %v576
        %vm1227 = vcmp.le.f32.partialorder %v1226, 0.7853982
        %vm1228 = vcmp.lt.s32.totalorder %v576, 0
        %v1229 = vand.u32 %v576, 2139095040
        %v1230 = vshrl.u32 %v1229, 23
        %v1231 = vsub.s32 %v1230, 127
        %v1232 = vand.u32 2147483647, %v576
        %v1233 = vand.u32 %v1232, 8388607
        %v1234 = vor.u32 %v1233, 8388608
        %v1235 = vsub.s32 0, %v1234
        %v1236 = vadd.s32 %v1231, 1
        %vm1237 = vcmp.gt.s32.totalorder %v1236, 0
        %v1238 = vsel %vm1237, %v1236, 0
        %v1239 = vshrl.u32 %v1238, 5
        %v1240 = vand.u32 %v1238, 31
        %v1241 = vsub.s32 32, %v1240
        %v1242 = vshrl.u32 683565275, %v1241
        %v1243 = vshll.u32 683565275, %v1240
        %v1244 = vshrl.u32 2475754826, %v1241
        %v1245 = vor.u32 %v1243, %v1244
        %v1246 = vshll.u32 2475754826, %v1240
        %v1247 = vshrl.u32 2131351028, %v1241
        %v1248 = vor.u32 %v1246, %v1247
        %v1249 = vshll.u32 2131351028, %v1240
        %v1250 = vshrl.u32 2102212464, %v1241
        %v1251 = vor.u32 %v1249, %v1250
        %v1252 = vshll.u32 2102212464, %v1240
        %v1253 = vshrl.u32 920167782, %v1241
        %v1254 = vor.u32 %v1252, %v1253
        %v1255 = vshll.u32 920167782, %v1240
        %v1256 = vshrl.u32 1326507024, %v1241
        %v1257 = vor.u32 %v1255, %v1256
        %vm1258 = vcmp.lt.s32.totalorder %v1239, 1
        %vm1259 = vcmp.lt.s32.totalorder %v1239, 2
        %vm1260 = vcmp.lt.s32.totalorder %v1239, 3
        %vm1261 = vcmp.lt.s32.totalorder %v1239, 4
        %v1262 = vsel %vm1258, %v1242, %v1245
        %v1263 = vsel %vm1261, %v1251, 2102212464
        %v1264 = vsel %vm1260, %v1248, %v1263
        %v1265 = vsel %vm1259, %v1262, %v1264
        %v1266 = vsel %vm1258, %v1245, %v1248
        %v1267 = vsel %vm1261, %v1254, 920167782
        %v1268 = vsel %vm1260, %v1251, %v1267
        %v1269 = vsel %vm1259, %v1266, %v1268
        %v1270 = vsel %vm1258, %v1248, %v1251
        %v1271 = vsel %vm1261, %v1257, 1326507024
        %v1272 = vsel %vm1260, %v1254, %v1271
        %v1273 = vsel %vm1259, %v1270, %v1272
        %v1274 = vshll.u32 %v1234, 8
        %v1275 = vmul.u32.u64.compose %v1274, %v1273
        %v1276 = vextract.low.u32 %v1275
        %v1277 = vextract.high.u32 %v1275
        %v1278 = vmul.u32.u64.compose %v1274, %v1269
        %v1279 = vextract.low.u32 %v1278
        %v1280 = vextract.high.u32 %v1278
        %v1281 = vmul.u32 %v1274, %v1265
        %v1282 = vadd.s32 %v1277, %v1279
        %vm1283 = vc.u32 %v1277, %v1279
        %v1284 = vadd.s32 %v1280, 1
        %v1285 = vsel %vm1283, %v1284, %v1280
        %v1286 = vadd.s32 %v1281, %v1285
        %v1287 = vadd.s32 %v1286, 536870912
        %v1288 = vshrl.u32 %v1287, 30
        %v1289 = vshll.u32 %v1288, 30
        %v1290 = vsub.s32 %v1286, %v1289
        %vm1291 = vcmp.lt.s32.totalorder %v1290, 0
        %v1292 = vsub.s32 0, %v1290
        %v1293 = vsel %vm1291, %v1292, %v1290
        %v1294 = vclz %v1293
        %v1295 = vsub.s32 %v1294, 2
        %vm1296 = vcmp.gt.s32.totalorder 0, %v1295
        %v1297 = vsel %vm1296, 0, %v1295
        %v1298 = vsub.s32 32, %v1297
        %v1299 = vshll.u32 %v1290, %v1297
        %v1300 = vshrl.u32 %v1282, %v1298
        %v1301 = vor.u32 %v1299, %v1300
        %v1302 = vsub.s32 4294967266, %v1297
        %v1303 = vadd.s32 %v1302, 127
        %v1304 = vshll.u32 %v1303, 23
        %v1305 = vor.u32 4788187, %v1304
        %v1306 = vand.u32 2147483647, %v1305
        %v1308 = vcvt.s32.f32 %v1301
        %v1309 = vmul.f32 %v1308, %v1306
        %v1310 = vxor.u32 %v1309, 2147483648
        %v1311 = vsel %vm1228, %v1310, %v1309
        %v1312 = vsub.s32 4, %v1288
        %v1313 = vsel %vm1228, %v1312, %v1288
        %v1314 = vsel %vm1227, %v576, %v1311
        %v1315 = vsel %vm1227, 0, %v1313
        %v1316 = vcosq.f32.pop %v1314
        %v1317 = vsinq.f32.pop %v1314
        %vm1318 = vweird.f32 %v576
        %v1319 = vadd.s32 %v1315, 3
        %v1320 = vand.u32 %v1319, 3
        %vm1321 = vcmp.lt.s32.totalorder %v1320, 2
        %vm1322 = vcmp.eq.s32.totalorder %v1320, 0
        %v1323 = vxor.u32 %v1317, 2147483648
        %v1324 = vsel %vm1322, %v1316, %v1323
        %vm1325 = vcmp.eq.s32.totalorder %v1320, 2
        %v1326 = vxor.u32 %v1316, 2147483648
        %v1327 = vsel %vm1325, %v1326, %v1317
        %v1328 = vsel %vm1321, %v1324, %v1327
        %v1329 = vsel %vm1318, nan, %v1328
        %v1330 = vand.u32 2147483647, %v577
        %vm1331 = vcmp.le.f32.partialorder %v1330, 0.7853982
        %vm1332 = vcmp.lt.s32.totalorder %v577, 0
        %v1333 = vand.u32 %v577, 2139095040
        %v1334 = vshrl.u32 %v1333, 23
        %v1335 = vsub.s32 %v1334, 127
        %v1336 = vand.u32 2147483647, %v577
        %v1337 = vand.u32 %v1336, 8388607
        %v1338 = vor.u32 %v1337, 8388608
        %v1339 = vsub.s32 0, %v1338
        %v1340 = vadd.s32 %v1335, 1
        %vm1341 = vcmp.gt.s32.totalorder %v1340, 0
        %v1342 = vsel %vm1341, %v1340, 0
        %v1343 = vshrl.u32 %v1342, 5
        %v1344 = vand.u32 %v1342, 31
        %v1345 = vsub.s32 32, %v1344
        %v1346 = vshrl.u32 683565275, %v1345
        %v1347 = vshll.u32 683565275, %v1344
        %v1348 = vshrl.u32 2475754826, %v1345
        %v1349 = vor.u32 %v1347, %v1348
        %v1350 = vshll.u32 2475754826, %v1344
        %v1351 = vshrl.u32 2131351028, %v1345
        %v1352 = vor.u32 %v1350, %v1351
        %v1353 = vshll.u32 2131351028, %v1344
        %v1354 = vshrl.u32 2102212464, %v1345
        %v1355 = vor.u32 %v1353, %v1354
        %v1356 = vshll.u32 2102212464, %v1344
        %v1357 = vshrl.u32 920167782, %v1345
        %v1358 = vor.u32 %v1356, %v1357
        %v1359 = vshll.u32 920167782, %v1344
        %v1360 = vshrl.u32 1326507024, %v1345
        %v1361 = vor.u32 %v1359, %v1360
        %vm1362 = vcmp.lt.s32.totalorder %v1343, 1
        %vm1363 = vcmp.lt.s32.totalorder %v1343, 2
        %vm1364 = vcmp.lt.s32.totalorder %v1343, 3
        %vm1365 = vcmp.lt.s32.totalorder %v1343, 4
        %v1366 = vsel %vm1362, %v1346, %v1349
        %v1367 = vsel %vm1365, %v1355, 2102212464
        %v1368 = vsel %vm1364, %v1352, %v1367
        %v1369 = vsel %vm1363, %v1366, %v1368
        %v1370 = vsel %vm1362, %v1349, %v1352
        %v1371 = vsel %vm1365, %v1358, 920167782
        %v1372 = vsel %vm1364, %v1355, %v1371
        %v1373 = vsel %vm1363, %v1370, %v1372
        %v1374 = vsel %vm1362, %v1352, %v1355
        %v1375 = vsel %vm1365, %v1361, 1326507024
        %v1376 = vsel %vm1364, %v1358, %v1375
        %v1377 = vsel %vm1363, %v1374, %v1376
        %v1378 = vshll.u32 %v1338, 8
        %v1379 = vmul.u32.u64.compose %v1378, %v1377
        %v1380 = vextract.low.u32 %v1379
        %v1381 = vextract.high.u32 %v1379
        %v1382 = vmul.u32.u64.compose %v1378, %v1373
        %v1383 = vextract.low.u32 %v1382
        %v1384 = vextract.high.u32 %v1382
        %v1385 = vmul.u32 %v1378, %v1369
        %v1386 = vadd.s32 %v1381, %v1383
        %vm1387 = vc.u32 %v1381, %v1383
        %v1388 = vadd.s32 %v1384, 1
        %v1389 = vsel %vm1387, %v1388, %v1384
        %v1390 = vadd.s32 %v1385, %v1389
        %v1391 = vadd.s32 %v1390, 536870912
        %v1392 = vshrl.u32 %v1391, 30
        %v1393 = vshll.u32 %v1392, 30
        %v1394 = vsub.s32 %v1390, %v1393
        %vm1395 = vcmp.lt.s32.totalorder %v1394, 0
        %v1396 = vsub.s32 0, %v1394
        %v1397 = vsel %vm1395, %v1396, %v1394
        %v1398 = vclz %v1397
        %v1399 = vsub.s32 %v1398, 2
        %vm1400 = vcmp.gt.s32.totalorder 0, %v1399
        %v1401 = vsel %vm1400, 0, %v1399
        %v1402 = vsub.s32 32, %v1401
        %v1403 = vshll.u32 %v1394, %v1401
        %v1404 = vshrl.u32 %v1386, %v1402
        %v1405 = vor.u32 %v1403, %v1404
        %v1406 = vsub.s32 4294967266, %v1401
        %v1407 = vadd.s32 %v1406, 127
        %v1408 = vshll.u32 %v1407, 23
        %v1409 = vor.u32 4788187, %v1408
        %v1410 = vand.u32 2147483647, %v1409
        %v1412 = vcvt.s32.f32 %v1405
        %v1413 = vmul.f32 %v1412, %v1410
        %v1414 = vxor.u32 %v1413, 2147483648
        %v1415 = vsel %vm1332, %v1414, %v1413
        %v1416 = vsub.s32 4, %v1392
        %v1417 = vsel %vm1332, %v1416, %v1392
        %v1418 = vsel %vm1331, %v577, %v1415
        %v1419 = vsel %vm1331, 0, %v1417
        %v1420 = vcosq.f32.pop %v1418
        %v1421 = vsinq.f32.pop %v1418
        %vm1422 = vweird.f32 %v577
        %v1423 = vadd.s32 %v1419, 3
        %v1424 = vand.u32 %v1423, 3
        %vm1425 = vcmp.lt.s32.totalorder %v1424, 2
        %vm1426 = vcmp.eq.s32.totalorder %v1424, 0
        %v1427 = vxor.u32 %v1421, 2147483648
        %v1428 = vsel %vm1426, %v1420, %v1427
        %vm1429 = vcmp.eq.s32.totalorder %v1424, 2
        %v1430 = vxor.u32 %v1420, 2147483648
        %v1431 = vsel %vm1429, %v1430, %v1421
        %v1432 = vsel %vm1425, %v1428, %v1431
        %v1433 = vsel %vm1422, nan, %v1432
        %v1434 = vand.u32 2147483647, %v578
        %vm1435 = vcmp.le.f32.partialorder %v1434, 0.7853982
        %vm1436 = vcmp.lt.s32.totalorder %v578, 0
        %v1437 = vand.u32 %v578, 2139095040
        %v1438 = vshrl.u32 %v1437, 23
        %v1439 = vsub.s32 %v1438, 127
        %v1440 = vand.u32 2147483647, %v578
        %v1441 = vand.u32 %v1440, 8388607
        %v1442 = vor.u32 %v1441, 8388608
        %v1443 = vsub.s32 0, %v1442
        %v1444 = vadd.s32 %v1439, 1
        %vm1445 = vcmp.gt.s32.totalorder %v1444, 0
        %v1446 = vsel %vm1445, %v1444, 0
        %v1447 = vshrl.u32 %v1446, 5
        %v1448 = vand.u32 %v1446, 31
        %v1449 = vsub.s32 32, %v1448
        %v1450 = vshrl.u32 683565275, %v1449
        %v1451 = vshll.u32 683565275, %v1448
        %v1452 = vshrl.u32 2475754826, %v1449
        %v1453 = vor.u32 %v1451, %v1452
        %v1454 = vshll.u32 2475754826, %v1448
        %v1455 = vshrl.u32 2131351028, %v1449
        %v1456 = vor.u32 %v1454, %v1455
        %v1457 = vshll.u32 2131351028, %v1448
        %v1458 = vshrl.u32 2102212464, %v1449
        %v1459 = vor.u32 %v1457, %v1458
        %v1460 = vshll.u32 2102212464, %v1448
        %v1461 = vshrl.u32 920167782, %v1449
        %v1462 = vor.u32 %v1460, %v1461
        %v1463 = vshll.u32 920167782, %v1448
        %v1464 = vshrl.u32 1326507024, %v1449
        %v1465 = vor.u32 %v1463, %v1464
        %vm1466 = vcmp.lt.s32.totalorder %v1447, 1
        %vm1467 = vcmp.lt.s32.totalorder %v1447, 2
        %vm1468 = vcmp.lt.s32.totalorder %v1447, 3
        %vm1469 = vcmp.lt.s32.totalorder %v1447, 4
        %v1470 = vsel %vm1466, %v1450, %v1453
        %v1471 = vsel %vm1469, %v1459, 2102212464
        %v1472 = vsel %vm1468, %v1456, %v1471
        %v1473 = vsel %vm1467, %v1470, %v1472
        %v1474 = vsel %vm1466, %v1453, %v1456
        %v1475 = vsel %vm1469, %v1462, 920167782
        %v1476 = vsel %vm1468, %v1459, %v1475
        %v1477 = vsel %vm1467, %v1474, %v1476
        %v1478 = vsel %vm1466, %v1456, %v1459
        %v1479 = vsel %vm1469, %v1465, 1326507024
        %v1480 = vsel %vm1468, %v1462, %v1479
        %v1481 = vsel %vm1467, %v1478, %v1480
        %v1482 = vshll.u32 %v1442, 8
        %v1483 = vmul.u32.u64.compose %v1482, %v1481
        %v1484 = vextract.low.u32 %v1483
        %v1485 = vextract.high.u32 %v1483
        %v1486 = vmul.u32.u64.compose %v1482, %v1477
        %v1487 = vextract.low.u32 %v1486
        %v1488 = vextract.high.u32 %v1486
        %v1489 = vmul.u32 %v1482, %v1473
        %v1490 = vadd.s32 %v1485, %v1487
        %vm1491 = vc.u32 %v1485, %v1487
        %v1492 = vadd.s32 %v1488, 1
        %v1493 = vsel %vm1491, %v1492, %v1488
        %v1494 = vadd.s32 %v1489, %v1493
        %v1495 = vadd.s32 %v1494, 536870912
        %v1496 = vshrl.u32 %v1495, 30
        %v1497 = vshll.u32 %v1496, 30
        %v1498 = vsub.s32 %v1494, %v1497
        %vm1499 = vcmp.lt.s32.totalorder %v1498, 0
        %v1500 = vsub.s32 0, %v1498
        %v1501 = vsel %vm1499, %v1500, %v1498
        %v1502 = vclz %v1501
        %v1503 = vsub.s32 %v1502, 2
        %vm1504 = vcmp.gt.s32.totalorder 0, %v1503
        %v1505 = vsel %vm1504, 0, %v1503
        %v1506 = vsub.s32 32, %v1505
        %v1507 = vshll.u32 %v1498, %v1505
        %v1508 = vshrl.u32 %v1490, %v1506
        %v1509 = vor.u32 %v1507, %v1508
        %v1510 = vsub.s32 4294967266, %v1505
        %v1511 = vadd.s32 %v1510, 127
        %v1512 = vshll.u32 %v1511, 23
        %v1513 = vor.u32 4788187, %v1512
        %v1514 = vand.u32 2147483647, %v1513
        %v1516 = vcvt.s32.f32 %v1509
        %v1517 = vmul.f32 %v1516, %v1514
        %v1518 = vxor.u32 %v1517, 2147483648
        %v1519 = vsel %vm1436, %v1518, %v1517
        %v1520 = vsub.s32 4, %v1496
        %v1521 = vsel %vm1436, %v1520, %v1496
        %v1522 = vsel %vm1435, %v578, %v1519
        %v1523 = vsel %vm1435, 0, %v1521
        %v1524 = vcosq.f32.pop %v1522
        %v1525 = vsinq.f32.pop %v1522
        %vm1526 = vweird.f32 %v578
        %v1527 = vadd.s32 %v1523, 3
        %v1528 = vand.u32 %v1527, 3
        %vm1529 = vcmp.lt.s32.totalorder %v1528, 2
        %vm1530 = vcmp.eq.s32.totalorder %v1528, 0
        %v1531 = vxor.u32 %v1525, 2147483648
        %v1532 = vsel %vm1530, %v1524, %v1531
        %vm1533 = vcmp.eq.s32.totalorder %v1528, 2
        %v1534 = vxor.u32 %v1524, 2147483648
        %v1535 = vsel %vm1533, %v1534, %v1525
        %v1536 = vsel %vm1529, %v1532, %v1535
        %v1537 = vsel %vm1526, nan, %v1536
        %v1538 = vand.u32 2147483647, %v579
        %vm1539 = vcmp.le.f32.partialorder %v1538, 0.7853982
        %vm1540 = vcmp.lt.s32.totalorder %v579, 0
        %v1541 = vand.u32 %v579, 2139095040
        %v1542 = vshrl.u32 %v1541, 23
        %v1543 = vsub.s32 %v1542, 127
        %v1544 = vand.u32 2147483647, %v579
        %v1545 = vand.u32 %v1544, 8388607
        %v1546 = vor.u32 %v1545, 8388608
        %v1547 = vsub.s32 0, %v1546
        %v1548 = vadd.s32 %v1543, 1
        %vm1549 = vcmp.gt.s32.totalorder %v1548, 0
        %v1550 = vsel %vm1549, %v1548, 0
        %v1551 = vshrl.u32 %v1550, 5
        %v1552 = vand.u32 %v1550, 31
        %v1553 = vsub.s32 32, %v1552
        %v1554 = vshrl.u32 683565275, %v1553
        %v1555 = vshll.u32 683565275, %v1552
        %v1556 = vshrl.u32 2475754826, %v1553
        %v1557 = vor.u32 %v1555, %v1556
        %v1558 = vshll.u32 2475754826, %v1552
        %v1559 = vshrl.u32 2131351028, %v1553
        %v1560 = vor.u32 %v1558, %v1559
        %v1561 = vshll.u32 2131351028, %v1552
        %v1562 = vshrl.u32 2102212464, %v1553
        %v1563 = vor.u32 %v1561, %v1562
        %v1564 = vshll.u32 2102212464, %v1552
        %v1565 = vshrl.u32 920167782, %v1553
        %v1566 = vor.u32 %v1564, %v1565
        %v1567 = vshll.u32 920167782, %v1552
        %v1568 = vshrl.u32 1326507024, %v1553
        %v1569 = vor.u32 %v1567, %v1568
        %vm1570 = vcmp.lt.s32.totalorder %v1551, 1
        %vm1571 = vcmp.lt.s32.totalorder %v1551, 2
        %vm1572 = vcmp.lt.s32.totalorder %v1551, 3
        %vm1573 = vcmp.lt.s32.totalorder %v1551, 4
        %v1574 = vsel %vm1570, %v1554, %v1557
        %v1575 = vsel %vm1573, %v1563, 2102212464
        %v1576 = vsel %vm1572, %v1560, %v1575
        %v1577 = vsel %vm1571, %v1574, %v1576
        %v1578 = vsel %vm1570, %v1557, %v1560
        %v1579 = vsel %vm1573, %v1566, 920167782
        %v1580 = vsel %vm1572, %v1563, %v1579
        %v1581 = vsel %vm1571, %v1578, %v1580
        %v1582 = vsel %vm1570, %v1560, %v1563
        %v1583 = vsel %vm1573, %v1569, 1326507024
        %v1584 = vsel %vm1572, %v1566, %v1583
        %v1585 = vsel %vm1571, %v1582, %v1584
        %v1586 = vshll.u32 %v1546, 8
        %v1587 = vmul.u32.u64.compose %v1586, %v1585
        %v1588 = vextract.low.u32 %v1587
        %v1589 = vextract.high.u32 %v1587
        %v1590 = vmul.u32.u64.compose %v1586, %v1581
        %v1591 = vextract.low.u32 %v1590
        %v1592 = vextract.high.u32 %v1590
        %v1593 = vmul.u32 %v1586, %v1577
        %v1594 = vadd.s32 %v1589, %v1591
        %vm1595 = vc.u32 %v1589, %v1591
        %v1596 = vadd.s32 %v1592, 1
        %v1597 = vsel %vm1595, %v1596, %v1592
        %v1598 = vadd.s32 %v1593, %v1597
        %v1599 = vadd.s32 %v1598, 536870912
        %v1600 = vshrl.u32 %v1599, 30
        %v1601 = vshll.u32 %v1600, 30
        %v1602 = vsub.s32 %v1598, %v1601
        %vm1603 = vcmp.lt.s32.totalorder %v1602, 0
        %v1604 = vsub.s32 0, %v1602
        %v1605 = vsel %vm1603, %v1604, %v1602
        %v1606 = vclz %v1605
        %v1607 = vsub.s32 %v1606, 2
        %vm1608 = vcmp.gt.s32.totalorder 0, %v1607
        %v1609 = vsel %vm1608, 0, %v1607
        %v1610 = vsub.s32 32, %v1609
        %v1611 = vshll.u32 %v1602, %v1609
        %v1612 = vshrl.u32 %v1594, %v1610
        %v1613 = vor.u32 %v1611, %v1612
        %v1614 = vsub.s32 4294967266, %v1609
        %v1615 = vadd.s32 %v1614, 127
        %v1616 = vshll.u32 %v1615, 23
        %v1617 = vor.u32 4788187, %v1616
        %v1618 = vand.u32 2147483647, %v1617
        %v1620 = vcvt.s32.f32 %v1613
        %v1621 = vmul.f32 %v1620, %v1618
        %v1622 = vxor.u32 %v1621, 2147483648
        %v1623 = vsel %vm1540, %v1622, %v1621
        %v1624 = vsub.s32 4, %v1600
        %v1625 = vsel %vm1540, %v1624, %v1600
        %v1626 = vsel %vm1539, %v579, %v1623
        %v1627 = vsel %vm1539, 0, %v1625
        %v1628 = vcosq.f32.pop %v1626
        %v1629 = vsinq.f32.pop %v1626
        %vm1630 = vweird.f32 %v579
        %v1631 = vadd.s32 %v1627, 3
        %v1632 = vand.u32 %v1631, 3
        %vm1633 = vcmp.lt.s32.totalorder %v1632, 2
        %vm1634 = vcmp.eq.s32.totalorder %v1632, 0
        %v1635 = vxor.u32 %v1629, 2147483648
        %v1636 = vsel %vm1634, %v1628, %v1635
        %vm1637 = vcmp.eq.s32.totalorder %v1632, 2
        %v1638 = vxor.u32 %v1628, 2147483648
        %v1639 = vsel %vm1637, %v1638, %v1629
        %v1640 = vsel %vm1633, %v1636, %v1639
        %v1641 = vsel %vm1630, nan, %v1640
        %v1642 = vand.u32 2147483647, %v580
        %vm1643 = vcmp.le.f32.partialorder %v1642, 0.7853982
        %vm1644 = vcmp.lt.s32.totalorder %v580, 0
        %v1645 = vand.u32 %v580, 2139095040
        %v1646 = vshrl.u32 %v1645, 23
        %v1647 = vsub.s32 %v1646, 127
        %v1648 = vand.u32 2147483647, %v580
        %v1649 = vand.u32 %v1648, 8388607
        %v1650 = vor.u32 %v1649, 8388608
        %v1651 = vsub.s32 0, %v1650
        %v1652 = vadd.s32 %v1647, 1
        %vm1653 = vcmp.gt.s32.totalorder %v1652, 0
        %v1654 = vsel %vm1653, %v1652, 0
        %v1655 = vshrl.u32 %v1654, 5
        %v1656 = vand.u32 %v1654, 31
        %v1657 = vsub.s32 32, %v1656
        %v1658 = vshrl.u32 683565275, %v1657
        %v1659 = vshll.u32 683565275, %v1656
        %v1660 = vshrl.u32 2475754826, %v1657
        %v1661 = vor.u32 %v1659, %v1660
        %v1662 = vshll.u32 2475754826, %v1656
        %v1663 = vshrl.u32 2131351028, %v1657
        %v1664 = vor.u32 %v1662, %v1663
        %v1665 = vshll.u32 2131351028, %v1656
        %v1666 = vshrl.u32 2102212464, %v1657
        %v1667 = vor.u32 %v1665, %v1666
        %v1668 = vshll.u32 2102212464, %v1656
        %v1669 = vshrl.u32 920167782, %v1657
        %v1670 = vor.u32 %v1668, %v1669
        %v1671 = vshll.u32 920167782, %v1656
        %v1672 = vshrl.u32 1326507024, %v1657
        %v1673 = vor.u32 %v1671, %v1672
        %vm1674 = vcmp.lt.s32.totalorder %v1655, 1
        %vm1675 = vcmp.lt.s32.totalorder %v1655, 2
        %vm1676 = vcmp.lt.s32.totalorder %v1655, 3
        %vm1677 = vcmp.lt.s32.totalorder %v1655, 4
        %v1678 = vsel %vm1674, %v1658, %v1661
        %v1679 = vsel %vm1677, %v1667, 2102212464
        %v1680 = vsel %vm1676, %v1664, %v1679
        %v1681 = vsel %vm1675, %v1678, %v1680
        %v1682 = vsel %vm1674, %v1661, %v1664
        %v1683 = vsel %vm1677, %v1670, 920167782
        %v1684 = vsel %vm1676, %v1667, %v1683
        %v1685 = vsel %vm1675, %v1682, %v1684
        %v1686 = vsel %vm1674, %v1664, %v1667
        %v1687 = vsel %vm1677, %v1673, 1326507024
        %v1688 = vsel %vm1676, %v1670, %v1687
        %v1689 = vsel %vm1675, %v1686, %v1688
        %v1690 = vshll.u32 %v1650, 8
        %v1691 = vmul.u32.u64.compose %v1690, %v1689
        %v1692 = vextract.low.u32 %v1691
        %v1693 = vextract.high.u32 %v1691
        %v1694 = vmul.u32.u64.compose %v1690, %v1685
        %v1695 = vextract.low.u32 %v1694
        %v1696 = vextract.high.u32 %v1694
        %v1697 = vmul.u32 %v1690, %v1681
        %v1698 = vadd.s32 %v1693, %v1695
        %vm1699 = vc.u32 %v1693, %v1695
        %v1700 = vadd.s32 %v1696, 1
        %v1701 = vsel %vm1699, %v1700, %v1696
        %v1702 = vadd.s32 %v1697, %v1701
        %v1703 = vadd.s32 %v1702, 536870912
        %v1704 = vshrl.u32 %v1703, 30
        %v1705 = vshll.u32 %v1704, 30
        %v1706 = vsub.s32 %v1702, %v1705
        %vm1707 = vcmp.lt.s32.totalorder %v1706, 0
        %v1708 = vsub.s32 0, %v1706
        %v1709 = vsel %vm1707, %v1708, %v1706
        %v1710 = vclz %v1709
        %v1711 = vsub.s32 %v1710, 2
        %vm1712 = vcmp.gt.s32.totalorder 0, %v1711
        %v1713 = vsel %vm1712, 0, %v1711
        %v1714 = vsub.s32 32, %v1713
        %v1715 = vshll.u32 %v1706, %v1713
        %v1716 = vshrl.u32 %v1698, %v1714
        %v1717 = vor.u32 %v1715, %v1716
        %v1718 = vsub.s32 4294967266, %v1713
        %v1719 = vadd.s32 %v1718, 127
        %v1720 = vshll.u32 %v1719, 23
        %v1721 = vor.u32 4788187, %v1720
        %v1722 = vand.u32 2147483647, %v1721
        %v1724 = vcvt.s32.f32 %v1717
        %v1725 = vmul.f32 %v1724, %v1722
        %v1726 = vxor.u32 %v1725, 2147483648
        %v1727 = vsel %vm1644, %v1726, %v1725
        %v1728 = vsub.s32 4, %v1704
        %v1729 = vsel %vm1644, %v1728, %v1704
        %v1730 = vsel %vm1643, %v580, %v1727
        %v1731 = vsel %vm1643, 0, %v1729
        %v1732 = vcosq.f32.pop %v1730
        %v1733 = vsinq.f32.pop %v1730
        %vm1734 = vweird.f32 %v580
        %v1735 = vadd.s32 %v1731, 3
        %v1736 = vand.u32 %v1735, 3
        %vm1737 = vcmp.lt.s32.totalorder %v1736, 2
        %vm1738 = vcmp.eq.s32.totalorder %v1736, 0
        %v1739 = vxor.u32 %v1733, 2147483648
        %v1740 = vsel %vm1738, %v1732, %v1739
        %vm1741 = vcmp.eq.s32.totalorder %v1736, 2
        %v1742 = vxor.u32 %v1732, 2147483648
        %v1743 = vsel %vm1741, %v1742, %v1733
        %v1744 = vsel %vm1737, %v1740, %v1743
        %v1745 = vsel %vm1734, nan, %v1744
        %v1746 = vand.u32 2147483647, %v581
        %vm1747 = vcmp.le.f32.partialorder %v1746, 0.7853982
        %vm1748 = vcmp.lt.s32.totalorder %v581, 0
        %v1749 = vand.u32 %v581, 2139095040
        %v1750 = vshrl.u32 %v1749, 23
        %v1751 = vsub.s32 %v1750, 127
        %v1752 = vand.u32 2147483647, %v581
        %v1753 = vand.u32 %v1752, 8388607
        %v1754 = vor.u32 %v1753, 8388608
        %v1755 = vsub.s32 0, %v1754
        %v1756 = vadd.s32 %v1751, 1
        %vm1757 = vcmp.gt.s32.totalorder %v1756, 0
        %v1758 = vsel %vm1757, %v1756, 0
        %v1759 = vshrl.u32 %v1758, 5
        %v1760 = vand.u32 %v1758, 31
        %v1761 = vsub.s32 32, %v1760
        %v1762 = vshrl.u32 683565275, %v1761
        %v1763 = vshll.u32 683565275, %v1760
        %v1764 = vshrl.u32 2475754826, %v1761
        %v1765 = vor.u32 %v1763, %v1764
        %v1766 = vshll.u32 2475754826, %v1760
        %v1767 = vshrl.u32 2131351028, %v1761
        %v1768 = vor.u32 %v1766, %v1767
        %v1769 = vshll.u32 2131351028, %v1760
        %v1770 = vshrl.u32 2102212464, %v1761
        %v1771 = vor.u32 %v1769, %v1770
        %v1772 = vshll.u32 2102212464, %v1760
        %v1773 = vshrl.u32 920167782, %v1761
        %v1774 = vor.u32 %v1772, %v1773
        %v1775 = vshll.u32 920167782, %v1760
        %v1776 = vshrl.u32 1326507024, %v1761
        %v1777 = vor.u32 %v1775, %v1776
        %vm1778 = vcmp.lt.s32.totalorder %v1759, 1
        %vm1779 = vcmp.lt.s32.totalorder %v1759, 2
        %vm1780 = vcmp.lt.s32.totalorder %v1759, 3
        %vm1781 = vcmp.lt.s32.totalorder %v1759, 4
        %v1782 = vsel %vm1778, %v1762, %v1765
        %v1783 = vsel %vm1781, %v1771, 2102212464
        %v1784 = vsel %vm1780, %v1768, %v1783
        %v1785 = vsel %vm1779, %v1782, %v1784
        %v1786 = vsel %vm1778, %v1765, %v1768
        %v1787 = vsel %vm1781, %v1774, 920167782
        %v1788 = vsel %vm1780, %v1771, %v1787
        %v1789 = vsel %vm1779, %v1786, %v1788
        %v1790 = vsel %vm1778, %v1768, %v1771
        %v1791 = vsel %vm1781, %v1777, 1326507024
        %v1792 = vsel %vm1780, %v1774, %v1791
        %v1793 = vsel %vm1779, %v1790, %v1792
        %v1794 = vshll.u32 %v1754, 8
        %v1795 = vmul.u32.u64.compose %v1794, %v1793
        %v1796 = vextract.low.u32 %v1795
        %v1797 = vextract.high.u32 %v1795
        %v1798 = vmul.u32.u64.compose %v1794, %v1789
        %v1799 = vextract.low.u32 %v1798
        %v1800 = vextract.high.u32 %v1798
        %v1801 = vmul.u32 %v1794, %v1785
        %v1802 = vadd.s32 %v1797, %v1799
        %vm1803 = vc.u32 %v1797, %v1799
        %v1804 = vadd.s32 %v1800, 1
        %v1805 = vsel %vm1803, %v1804, %v1800
        %v1806 = vadd.s32 %v1801, %v1805
        %v1807 = vadd.s32 %v1806, 536870912
        %v1808 = vshrl.u32 %v1807, 30
        %v1809 = vshll.u32 %v1808, 30
        %v1810 = vsub.s32 %v1806, %v1809
        %vm1811 = vcmp.lt.s32.totalorder %v1810, 0
        %v1812 = vsub.s32 0, %v1810
        %v1813 = vsel %vm1811, %v1812, %v1810
        %v1814 = vclz %v1813
        %v1815 = vsub.s32 %v1814, 2
        %vm1816 = vcmp.gt.s32.totalorder 0, %v1815
        %v1817 = vsel %vm1816, 0, %v1815
        %v1818 = vsub.s32 32, %v1817
        %v1819 = vshll.u32 %v1810, %v1817
        %v1820 = vshrl.u32 %v1802, %v1818
        %v1821 = vor.u32 %v1819, %v1820
        %v1822 = vsub.s32 4294967266, %v1817
        %v1823 = vadd.s32 %v1822, 127
        %v1824 = vshll.u32 %v1823, 23
        %v1825 = vor.u32 4788187, %v1824
        %v1826 = vand.u32 2147483647, %v1825
        %v1828 = vcvt.s32.f32 %v1821
        %v1829 = vmul.f32 %v1828, %v1826
        %v1830 = vxor.u32 %v1829, 2147483648
        %v1831 = vsel %vm1748, %v1830, %v1829
        %v1832 = vsub.s32 4, %v1808
        %v1833 = vsel %vm1748, %v1832, %v1808
        %v1834 = vsel %vm1747, %v581, %v1831
        %v1835 = vsel %vm1747, 0, %v1833
        %v1836 = vcosq.f32.pop %v1834
        %v1837 = vsinq.f32.pop %v1834
        %vm1838 = vweird.f32 %v581
        %v1839 = vadd.s32 %v1835, 3
        %v1840 = vand.u32 %v1839, 3
        %vm1841 = vcmp.lt.s32.totalorder %v1840, 2
        %vm1842 = vcmp.eq.s32.totalorder %v1840, 0
        %v1843 = vxor.u32 %v1837, 2147483648
        %v1844 = vsel %vm1842, %v1836, %v1843
        %vm1845 = vcmp.eq.s32.totalorder %v1840, 2
        %v1846 = vxor.u32 %v1836, 2147483648
        %v1847 = vsel %vm1845, %v1846, %v1837
        %v1848 = vsel %vm1841, %v1844, %v1847
        %v1849 = vsel %vm1838, nan, %v1848
        %v1850 = vand.u32 2147483647, %v582
        %vm1851 = vcmp.le.f32.partialorder %v1850, 0.7853982
        %vm1852 = vcmp.lt.s32.totalorder %v582, 0
        %v1853 = vand.u32 %v582, 2139095040
        %v1854 = vshrl.u32 %v1853, 23
        %v1855 = vsub.s32 %v1854, 127
        %v1856 = vand.u32 2147483647, %v582
        %v1857 = vand.u32 %v1856, 8388607
        %v1858 = vor.u32 %v1857, 8388608
        %v1859 = vsub.s32 0, %v1858
        %v1860 = vadd.s32 %v1855, 1
        %vm1861 = vcmp.gt.s32.totalorder %v1860, 0
        %v1862 = vsel %vm1861, %v1860, 0
        %v1863 = vshrl.u32 %v1862, 5
        %v1864 = vand.u32 %v1862, 31
        %v1865 = vsub.s32 32, %v1864
        %v1866 = vshrl.u32 683565275, %v1865
        %v1867 = vshll.u32 683565275, %v1864
        %v1868 = vshrl.u32 2475754826, %v1865
        %v1869 = vor.u32 %v1867, %v1868
        %v1870 = vshll.u32 2475754826, %v1864
        %v1871 = vshrl.u32 2131351028, %v1865
        %v1872 = vor.u32 %v1870, %v1871
        %v1873 = vshll.u32 2131351028, %v1864
        %v1874 = vshrl.u32 2102212464, %v1865
        %v1875 = vor.u32 %v1873, %v1874
        %v1876 = vshll.u32 2102212464, %v1864
        %v1877 = vshrl.u32 920167782, %v1865
        %v1878 = vor.u32 %v1876, %v1877
        %v1879 = vshll.u32 920167782, %v1864
        %v1880 = vshrl.u32 1326507024, %v1865
        %v1881 = vor.u32 %v1879, %v1880
        %vm1882 = vcmp.lt.s32.totalorder %v1863, 1
        %vm1883 = vcmp.lt.s32.totalorder %v1863, 2
        %vm1884 = vcmp.lt.s32.totalorder %v1863, 3
        %vm1885 = vcmp.lt.s32.totalorder %v1863, 4
        %v1886 = vsel %vm1882, %v1866, %v1869
        %v1887 = vsel %vm1885, %v1875, 2102212464
        %v1888 = vsel %vm1884, %v1872, %v1887
        %v1889 = vsel %vm1883, %v1886, %v1888
        %v1890 = vsel %vm1882, %v1869, %v1872
        %v1891 = vsel %vm1885, %v1878, 920167782
        %v1892 = vsel %vm1884, %v1875, %v1891
        %v1893 = vsel %vm1883, %v1890, %v1892
        %v1894 = vsel %vm1882, %v1872, %v1875
        %v1895 = vsel %vm1885, %v1881, 1326507024
        %v1896 = vsel %vm1884, %v1878, %v1895
        %v1897 = vsel %vm1883, %v1894, %v1896
        %v1898 = vshll.u32 %v1858, 8
        %v1899 = vmul.u32.u64.compose %v1898, %v1897
        %v1900 = vextract.low.u32 %v1899
        %v1901 = vextract.high.u32 %v1899
        %v1902 = vmul.u32.u64.compose %v1898, %v1893
        %v1903 = vextract.low.u32 %v1902
        %v1904 = vextract.high.u32 %v1902
        %v1905 = vmul.u32 %v1898, %v1889
        %v1906 = vadd.s32 %v1901, %v1903
        %vm1907 = vc.u32 %v1901, %v1903
        %v1908 = vadd.s32 %v1904, 1
        %v1909 = vsel %vm1907, %v1908, %v1904
        %v1910 = vadd.s32 %v1905, %v1909
        %v1911 = vadd.s32 %v1910, 536870912
        %v1912 = vshrl.u32 %v1911, 30
        %v1913 = vshll.u32 %v1912, 30
        %v1914 = vsub.s32 %v1910, %v1913
        %vm1915 = vcmp.lt.s32.totalorder %v1914, 0
        %v1916 = vsub.s32 0, %v1914
        %v1917 = vsel %vm1915, %v1916, %v1914
        %v1918 = vclz %v1917
        %v1919 = vsub.s32 %v1918, 2
        %vm1920 = vcmp.gt.s32.totalorder 0, %v1919
        %v1921 = vsel %vm1920, 0, %v1919
        %v1922 = vsub.s32 32, %v1921
        %v1923 = vshll.u32 %v1914, %v1921
        %v1924 = vshrl.u32 %v1906, %v1922
        %v1925 = vor.u32 %v1923, %v1924
        %v1926 = vsub.s32 4294967266, %v1921
        %v1927 = vadd.s32 %v1926, 127
        %v1928 = vshll.u32 %v1927, 23
        %v1929 = vor.u32 4788187, %v1928
        %v1930 = vand.u32 2147483647, %v1929
        %v1932 = vcvt.s32.f32 %v1925
        %v1933 = vmul.f32 %v1932, %v1930
        %v1934 = vxor.u32 %v1933, 2147483648
        %v1935 = vsel %vm1852, %v1934, %v1933
        %v1936 = vsub.s32 4, %v1912
        %v1937 = vsel %vm1852, %v1936, %v1912
        %v1938 = vsel %vm1851, %v582, %v1935
        %v1939 = vsel %vm1851, 0, %v1937
        %v1940 = vcosq.f32.pop %v1938
        %v1941 = vsinq.f32.pop %v1938
        %vm1942 = vweird.f32 %v582
        %v1943 = vadd.s32 %v1939, 3
        %v1944 = vand.u32 %v1943, 3
        %vm1945 = vcmp.lt.s32.totalorder %v1944, 2
        %vm1946 = vcmp.eq.s32.totalorder %v1944, 0
        %v1947 = vxor.u32 %v1941, 2147483648
        %v1948 = vsel %vm1946, %v1940, %v1947
        %vm1949 = vcmp.eq.s32.totalorder %v1944, 2
        %v1950 = vxor.u32 %v1940, 2147483648
        %v1951 = vsel %vm1949, %v1950, %v1941
        %v1952 = vsel %vm1945, %v1948, %v1951
        %v1953 = vsel %vm1942, nan, %v1952
        %v1954 = vand.u32 2147483647, %v583
        %vm1955 = vcmp.le.f32.partialorder %v1954, 0.7853982
        %vm1956 = vcmp.lt.s32.totalorder %v583, 0
        %v1957 = vand.u32 %v583, 2139095040
        %v1958 = vshrl.u32 %v1957, 23
        %v1959 = vsub.s32 %v1958, 127
        %v1960 = vand.u32 2147483647, %v583
        %v1961 = vand.u32 %v1960, 8388607
        %v1962 = vor.u32 %v1961, 8388608
        %v1963 = vsub.s32 0, %v1962
        %v1964 = vadd.s32 %v1959, 1
        %vm1965 = vcmp.gt.s32.totalorder %v1964, 0
        %v1966 = vsel %vm1965, %v1964, 0
        %v1967 = vshrl.u32 %v1966, 5
        %v1968 = vand.u32 %v1966, 31
        %v1969 = vsub.s32 32, %v1968
        %v1970 = vshrl.u32 683565275, %v1969
        %v1971 = vshll.u32 683565275, %v1968
        %v1972 = vshrl.u32 2475754826, %v1969
        %v1973 = vor.u32 %v1971, %v1972
        %v1974 = vshll.u32 2475754826, %v1968
        %v1975 = vshrl.u32 2131351028, %v1969
        %v1976 = vor.u32 %v1974, %v1975
        %v1977 = vshll.u32 2131351028, %v1968
        %v1978 = vshrl.u32 2102212464, %v1969
        %v1979 = vor.u32 %v1977, %v1978
        %v1980 = vshll.u32 2102212464, %v1968
        %v1981 = vshrl.u32 920167782, %v1969
        %v1982 = vor.u32 %v1980, %v1981
        %v1983 = vshll.u32 920167782, %v1968
        %v1984 = vshrl.u32 1326507024, %v1969
        %v1985 = vor.u32 %v1983, %v1984
        %vm1986 = vcmp.lt.s32.totalorder %v1967, 1
        %vm1987 = vcmp.lt.s32.totalorder %v1967, 2
        %vm1988 = vcmp.lt.s32.totalorder %v1967, 3
        %vm1989 = vcmp.lt.s32.totalorder %v1967, 4
        %v1990 = vsel %vm1986, %v1970, %v1973
        %v1991 = vsel %vm1989, %v1979, 2102212464
        %v1992 = vsel %vm1988, %v1976, %v1991
        %v1993 = vsel %vm1987, %v1990, %v1992
        %v1994 = vsel %vm1986, %v1973, %v1976
        %v1995 = vsel %vm1989, %v1982, 920167782
        %v1996 = vsel %vm1988, %v1979, %v1995
        %v1997 = vsel %vm1987, %v1994, %v1996
        %v1998 = vsel %vm1986, %v1976, %v1979
        %v1999 = vsel %vm1989, %v1985, 1326507024
        %v2000 = vsel %vm1988, %v1982, %v1999
        %v2001 = vsel %vm1987, %v1998, %v2000
        %v2002 = vshll.u32 %v1962, 8
        %v2003 = vmul.u32.u64.compose %v2002, %v2001
        %v2004 = vextract.low.u32 %v2003
        %v2005 = vextract.high.u32 %v2003
        %v2006 = vmul.u32.u64.compose %v2002, %v1997
        %v2007 = vextract.low.u32 %v2006
        %v2008 = vextract.high.u32 %v2006
        %v2009 = vmul.u32 %v2002, %v1993
        %v2010 = vadd.s32 %v2005, %v2007
        %vm2011 = vc.u32 %v2005, %v2007
        %v2012 = vadd.s32 %v2008, 1
        %v2013 = vsel %vm2011, %v2012, %v2008
        %v2014 = vadd.s32 %v2009, %v2013
        %v2015 = vadd.s32 %v2014, 536870912
        %v2016 = vshrl.u32 %v2015, 30
        %v2017 = vshll.u32 %v2016, 30
        %v2018 = vsub.s32 %v2014, %v2017
        %vm2019 = vcmp.lt.s32.totalorder %v2018, 0
        %v2020 = vsub.s32 0, %v2018
        %v2021 = vsel %vm2019, %v2020, %v2018
        %v2022 = vclz %v2021
        %v2023 = vsub.s32 %v2022, 2
        %vm2024 = vcmp.gt.s32.totalorder 0, %v2023
        %v2025 = vsel %vm2024, 0, %v2023
        %v2026 = vsub.s32 32, %v2025
        %v2027 = vshll.u32 %v2018, %v2025
        %v2028 = vshrl.u32 %v2010, %v2026
        %v2029 = vor.u32 %v2027, %v2028
        %v2030 = vsub.s32 4294967266, %v2025
        %v2031 = vadd.s32 %v2030, 127
        %v2032 = vshll.u32 %v2031, 23
        %v2033 = vor.u32 4788187, %v2032
        %v2034 = vand.u32 2147483647, %v2033
        %v2036 = vcvt.s32.f32 %v2029
        %v2037 = vmul.f32 %v2036, %v2034
        %v2038 = vxor.u32 %v2037, 2147483648
        %v2039 = vsel %vm1956, %v2038, %v2037
        %v2040 = vsub.s32 4, %v2016
        %v2041 = vsel %vm1956, %v2040, %v2016
        %v2042 = vsel %vm1955, %v583, %v2039
        %v2043 = vsel %vm1955, 0, %v2041
        %v2044 = vcosq.f32.pop %v2042
        %v2045 = vsinq.f32.pop %v2042
        %vm2046 = vweird.f32 %v583
        %v2047 = vadd.s32 %v2043, 3
        %v2048 = vand.u32 %v2047, 3
        %vm2049 = vcmp.lt.s32.totalorder %v2048, 2
        %vm2050 = vcmp.eq.s32.totalorder %v2048, 0
        %v2051 = vxor.u32 %v2045, 2147483648
        %v2052 = vsel %vm2050, %v2044, %v2051
        %vm2053 = vcmp.eq.s32.totalorder %v2048, 2
        %v2054 = vxor.u32 %v2044, 2147483648
        %v2055 = vsel %vm2053, %v2054, %v2045
        %v2056 = vsel %vm2049, %v2052, %v2055
        %v2057 = vsel %vm2046, nan, %v2056
        %v2058 = vand.u32 2147483647, %v584
        %vm2059 = vcmp.le.f32.partialorder %v2058, 0.7853982
        %vm2060 = vcmp.lt.s32.totalorder %v584, 0
        %v2061 = vand.u32 %v584, 2139095040
        %v2062 = vshrl.u32 %v2061, 23
        %v2063 = vsub.s32 %v2062, 127
        %v2064 = vand.u32 2147483647, %v584
        %v2065 = vand.u32 %v2064, 8388607
        %v2066 = vor.u32 %v2065, 8388608
        %v2067 = vsub.s32 0, %v2066
        %v2068 = vadd.s32 %v2063, 1
        %vm2069 = vcmp.gt.s32.totalorder %v2068, 0
        %v2070 = vsel %vm2069, %v2068, 0
        %v2071 = vshrl.u32 %v2070, 5
        %v2072 = vand.u32 %v2070, 31
        %v2073 = vsub.s32 32, %v2072
        %v2074 = vshrl.u32 683565275, %v2073
        %v2075 = vshll.u32 683565275, %v2072
        %v2076 = vshrl.u32 2475754826, %v2073
        %v2077 = vor.u32 %v2075, %v2076
        %v2078 = vshll.u32 2475754826, %v2072
        %v2079 = vshrl.u32 2131351028, %v2073
        %v2080 = vor.u32 %v2078, %v2079
        %v2081 = vshll.u32 2131351028, %v2072
        %v2082 = vshrl.u32 2102212464, %v2073
        %v2083 = vor.u32 %v2081, %v2082
        %v2084 = vshll.u32 2102212464, %v2072
        %v2085 = vshrl.u32 920167782, %v2073
        %v2086 = vor.u32 %v2084, %v2085
        %v2087 = vshll.u32 920167782, %v2072
        %v2088 = vshrl.u32 1326507024, %v2073
        %v2089 = vor.u32 %v2087, %v2088
        %vm2090 = vcmp.lt.s32.totalorder %v2071, 1
        %vm2091 = vcmp.lt.s32.totalorder %v2071, 2
        %vm2092 = vcmp.lt.s32.totalorder %v2071, 3
        %vm2093 = vcmp.lt.s32.totalorder %v2071, 4
        %v2094 = vsel %vm2090, %v2074, %v2077
        %v2095 = vsel %vm2093, %v2083, 2102212464
        %v2096 = vsel %vm2092, %v2080, %v2095
        %v2097 = vsel %vm2091, %v2094, %v2096
        %v2098 = vsel %vm2090, %v2077, %v2080
        %v2099 = vsel %vm2093, %v2086, 920167782
        %v2100 = vsel %vm2092, %v2083, %v2099
        %v2101 = vsel %vm2091, %v2098, %v2100
        %v2102 = vsel %vm2090, %v2080, %v2083
        %v2103 = vsel %vm2093, %v2089, 1326507024
        %v2104 = vsel %vm2092, %v2086, %v2103
        %v2105 = vsel %vm2091, %v2102, %v2104
        %v2106 = vshll.u32 %v2066, 8
        %v2107 = vmul.u32.u64.compose %v2106, %v2105
        %v2108 = vextract.low.u32 %v2107
        %v2109 = vextract.high.u32 %v2107
        %v2110 = vmul.u32.u64.compose %v2106, %v2101
        %v2111 = vextract.low.u32 %v2110
        %v2112 = vextract.high.u32 %v2110
        %v2113 = vmul.u32 %v2106, %v2097
        %v2114 = vadd.s32 %v2109, %v2111
        %vm2115 = vc.u32 %v2109, %v2111
        %v2116 = vadd.s32 %v2112, 1
        %v2117 = vsel %vm2115, %v2116, %v2112
        %v2118 = vadd.s32 %v2113, %v2117
        %v2119 = vadd.s32 %v2118, 536870912
        %v2120 = vshrl.u32 %v2119, 30
        %v2121 = vshll.u32 %v2120, 30
        %v2122 = vsub.s32 %v2118, %v2121
        %vm2123 = vcmp.lt.s32.totalorder %v2122, 0
        %v2124 = vsub.s32 0, %v2122
        %v2125 = vsel %vm2123, %v2124, %v2122
        %v2126 = vclz %v2125
        %v2127 = vsub.s32 %v2126, 2
        %vm2128 = vcmp.gt.s32.totalorder 0, %v2127
        %v2129 = vsel %vm2128, 0, %v2127
        %v2130 = vsub.s32 32, %v2129
        %v2131 = vshll.u32 %v2122, %v2129
        %v2132 = vshrl.u32 %v2114, %v2130
        %v2133 = vor.u32 %v2131, %v2132
        %v2134 = vsub.s32 4294967266, %v2129
        %v2135 = vadd.s32 %v2134, 127
        %v2136 = vshll.u32 %v2135, 23
        %v2137 = vor.u32 4788187, %v2136
        %v2138 = vand.u32 2147483647, %v2137
        %v2140 = vcvt.s32.f32 %v2133
        %v2141 = vmul.f32 %v2140, %v2138
        %v2142 = vxor.u32 %v2141, 2147483648
        %v2143 = vsel %vm2060, %v2142, %v2141
        %v2144 = vsub.s32 4, %v2120
        %v2145 = vsel %vm2060, %v2144, %v2120
        %v2146 = vsel %vm2059, %v584, %v2143
        %v2147 = vsel %vm2059, 0, %v2145
        %v2148 = vcosq.f32.pop %v2146
        %v2149 = vsinq.f32.pop %v2146
        %vm2150 = vweird.f32 %v584
        %v2151 = vadd.s32 %v2147, 3
        %v2152 = vand.u32 %v2151, 3
        %vm2153 = vcmp.lt.s32.totalorder %v2152, 2
        %vm2154 = vcmp.eq.s32.totalorder %v2152, 0
        %v2155 = vxor.u32 %v2149, 2147483648
        %v2156 = vsel %vm2154, %v2148, %v2155
        %vm2157 = vcmp.eq.s32.totalorder %v2152, 2
        %v2158 = vxor.u32 %v2148, 2147483648
        %v2159 = vsel %vm2157, %v2158, %v2149
        %v2160 = vsel %vm2153, %v2156, %v2159
        %v2161 = vsel %vm2150, nan, %v2160
        %v2162 = vand.u32 2147483647, %v585
        %vm2163 = vcmp.le.f32.partialorder %v2162, 0.7853982
        %vm2164 = vcmp.lt.s32.totalorder %v585, 0
        %v2165 = vand.u32 %v585, 2139095040
        %v2166 = vshrl.u32 %v2165, 23
        %v2167 = vsub.s32 %v2166, 127
        %v2168 = vand.u32 2147483647, %v585
        %v2169 = vand.u32 %v2168, 8388607
        %v2170 = vor.u32 %v2169, 8388608
        %v2171 = vsub.s32 0, %v2170
        %v2172 = vadd.s32 %v2167, 1
        %vm2173 = vcmp.gt.s32.totalorder %v2172, 0
        %v2174 = vsel %vm2173, %v2172, 0
        %v2175 = vshrl.u32 %v2174, 5
        %v2176 = vand.u32 %v2174, 31
        %v2177 = vsub.s32 32, %v2176
        %v2178 = vshrl.u32 683565275, %v2177
        %v2179 = vshll.u32 683565275, %v2176
        %v2180 = vshrl.u32 2475754826, %v2177
        %v2181 = vor.u32 %v2179, %v2180
        %v2182 = vshll.u32 2475754826, %v2176
        %v2183 = vshrl.u32 2131351028, %v2177
        %v2184 = vor.u32 %v2182, %v2183
        %v2185 = vshll.u32 2131351028, %v2176
        %v2186 = vshrl.u32 2102212464, %v2177
        %v2187 = vor.u32 %v2185, %v2186
        %v2188 = vshll.u32 2102212464, %v2176
        %v2189 = vshrl.u32 920167782, %v2177
        %v2190 = vor.u32 %v2188, %v2189
        %v2191 = vshll.u32 920167782, %v2176
        %v2192 = vshrl.u32 1326507024, %v2177
        %v2193 = vor.u32 %v2191, %v2192
        %vm2194 = vcmp.lt.s32.totalorder %v2175, 1
        %vm2195 = vcmp.lt.s32.totalorder %v2175, 2
        %vm2196 = vcmp.lt.s32.totalorder %v2175, 3
        %vm2197 = vcmp.lt.s32.totalorder %v2175, 4
        %v2198 = vsel %vm2194, %v2178, %v2181
        %v2199 = vsel %vm2197, %v2187, 2102212464
        %v2200 = vsel %vm2196, %v2184, %v2199
        %v2201 = vsel %vm2195, %v2198, %v2200
        %v2202 = vsel %vm2194, %v2181, %v2184
        %v2203 = vsel %vm2197, %v2190, 920167782
        %v2204 = vsel %vm2196, %v2187, %v2203
        %v2205 = vsel %vm2195, %v2202, %v2204
        %v2206 = vsel %vm2194, %v2184, %v2187
        %v2207 = vsel %vm2197, %v2193, 1326507024
        %v2208 = vsel %vm2196, %v2190, %v2207
        %v2209 = vsel %vm2195, %v2206, %v2208
        %v2210 = vshll.u32 %v2170, 8
        %v2211 = vmul.u32.u64.compose %v2210, %v2209
        %v2212 = vextract.low.u32 %v2211
        %v2213 = vextract.high.u32 %v2211
        %v2214 = vmul.u32.u64.compose %v2210, %v2205
        %v2215 = vextract.low.u32 %v2214
        %v2216 = vextract.high.u32 %v2214
        %v2217 = vmul.u32 %v2210, %v2201
        %v2218 = vadd.s32 %v2213, %v2215
        %vm2219 = vc.u32 %v2213, %v2215
        %v2220 = vadd.s32 %v2216, 1
        %v2221 = vsel %vm2219, %v2220, %v2216
        %v2222 = vadd.s32 %v2217, %v2221
        %v2223 = vadd.s32 %v2222, 536870912
        %v2224 = vshrl.u32 %v2223, 30
        %v2225 = vshll.u32 %v2224, 30
        %v2226 = vsub.s32 %v2222, %v2225
        %vm2227 = vcmp.lt.s32.totalorder %v2226, 0
        %v2228 = vsub.s32 0, %v2226
        %v2229 = vsel %vm2227, %v2228, %v2226
        %v2230 = vclz %v2229
        %v2231 = vsub.s32 %v2230, 2
        %vm2232 = vcmp.gt.s32.totalorder 0, %v2231
        %v2233 = vsel %vm2232, 0, %v2231
        %v2234 = vsub.s32 32, %v2233
        %v2235 = vshll.u32 %v2226, %v2233
        %v2236 = vshrl.u32 %v2218, %v2234
        %v2237 = vor.u32 %v2235, %v2236
        %v2238 = vsub.s32 4294967266, %v2233
        %v2239 = vadd.s32 %v2238, 127
        %v2240 = vshll.u32 %v2239, 23
        %v2241 = vor.u32 4788187, %v2240
        %v2242 = vand.u32 2147483647, %v2241
        %v2244 = vcvt.s32.f32 %v2237
        %v2245 = vmul.f32 %v2244, %v2242
        %v2246 = vxor.u32 %v2245, 2147483648
        %v2247 = vsel %vm2164, %v2246, %v2245
        %v2248 = vsub.s32 4, %v2224
        %v2249 = vsel %vm2164, %v2248, %v2224
        %v2250 = vsel %vm2163, %v585, %v2247
        %v2251 = vsel %vm2163, 0, %v2249
        %v2252 = vcosq.f32.pop %v2250
        %v2253 = vsinq.f32.pop %v2250
        %vm2254 = vweird.f32 %v585
        %v2255 = vadd.s32 %v2251, 3
        %v2256 = vand.u32 %v2255, 3
        %vm2257 = vcmp.lt.s32.totalorder %v2256, 2
        %vm2258 = vcmp.eq.s32.totalorder %v2256, 0
        %v2259 = vxor.u32 %v2253, 2147483648
        %v2260 = vsel %vm2258, %v2252, %v2259
        %vm2261 = vcmp.eq.s32.totalorder %v2256, 2
        %v2262 = vxor.u32 %v2252, 2147483648
        %v2263 = vsel %vm2261, %v2262, %v2253
        %v2264 = vsel %vm2257, %v2260, %v2263
        %v2265 = vsel %vm2254, nan, %v2264
        %v2266 = vand.u32 2147483647, %v586
        %vm2267 = vcmp.le.f32.partialorder %v2266, 0.7853982
        %vm2268 = vcmp.lt.s32.totalorder %v586, 0
        %v2269 = vand.u32 %v586, 2139095040
        %v2270 = vshrl.u32 %v2269, 23
        %v2271 = vsub.s32 %v2270, 127
        %v2272 = vand.u32 2147483647, %v586
        %v2273 = vand.u32 %v2272, 8388607
        %v2274 = vor.u32 %v2273, 8388608
        %v2275 = vsub.s32 0, %v2274
        %v2276 = vadd.s32 %v2271, 1
        %vm2277 = vcmp.gt.s32.totalorder %v2276, 0
        %v2278 = vsel %vm2277, %v2276, 0
        %v2279 = vshrl.u32 %v2278, 5
        %v2280 = vand.u32 %v2278, 31
        %v2281 = vsub.s32 32, %v2280
        %v2282 = vshrl.u32 683565275, %v2281
        %v2283 = vshll.u32 683565275, %v2280
        %v2284 = vshrl.u32 2475754826, %v2281
        %v2285 = vor.u32 %v2283, %v2284
        %v2286 = vshll.u32 2475754826, %v2280
        %v2287 = vshrl.u32 2131351028, %v2281
        %v2288 = vor.u32 %v2286, %v2287
        %v2289 = vshll.u32 2131351028, %v2280
        %v2290 = vshrl.u32 2102212464, %v2281
        %v2291 = vor.u32 %v2289, %v2290
        %v2292 = vshll.u32 2102212464, %v2280
        %v2293 = vshrl.u32 920167782, %v2281
        %v2294 = vor.u32 %v2292, %v2293
        %v2295 = vshll.u32 920167782, %v2280
        %v2296 = vshrl.u32 1326507024, %v2281
        %v2297 = vor.u32 %v2295, %v2296
        %vm2298 = vcmp.lt.s32.totalorder %v2279, 1
        %vm2299 = vcmp.lt.s32.totalorder %v2279, 2
        %vm2300 = vcmp.lt.s32.totalorder %v2279, 3
        %vm2301 = vcmp.lt.s32.totalorder %v2279, 4
        %v2302 = vsel %vm2298, %v2282, %v2285
        %v2303 = vsel %vm2301, %v2291, 2102212464
        %v2304 = vsel %vm2300, %v2288, %v2303
        %v2305 = vsel %vm2299, %v2302, %v2304
        %v2306 = vsel %vm2298, %v2285, %v2288
        %v2307 = vsel %vm2301, %v2294, 920167782
        %v2308 = vsel %vm2300, %v2291, %v2307
        %v2309 = vsel %vm2299, %v2306, %v2308
        %v2310 = vsel %vm2298, %v2288, %v2291
        %v2311 = vsel %vm2301, %v2297, 1326507024
        %v2312 = vsel %vm2300, %v2294, %v2311
        %v2313 = vsel %vm2299, %v2310, %v2312
        %v2314 = vshll.u32 %v2274, 8
        %v2315 = vmul.u32.u64.compose %v2314, %v2313
        %v2316 = vextract.low.u32 %v2315
        %v2317 = vextract.high.u32 %v2315
        %v2318 = vmul.u32.u64.compose %v2314, %v2309
        %v2319 = vextract.low.u32 %v2318
        %v2320 = vextract.high.u32 %v2318
        %v2321 = vmul.u32 %v2314, %v2305
        %v2322 = vadd.s32 %v2317, %v2319
        %vm2323 = vc.u32 %v2317, %v2319
        %v2324 = vadd.s32 %v2320, 1
        %v2325 = vsel %vm2323, %v2324, %v2320
        %v2326 = vadd.s32 %v2321, %v2325
        %v2327 = vadd.s32 %v2326, 536870912
        %v2328 = vshrl.u32 %v2327, 30
        %v2329 = vshll.u32 %v2328, 30
        %v2330 = vsub.s32 %v2326, %v2329
        %vm2331 = vcmp.lt.s32.totalorder %v2330, 0
        %v2332 = vsub.s32 0, %v2330
        %v2333 = vsel %vm2331, %v2332, %v2330
        %v2334 = vclz %v2333
        %v2335 = vsub.s32 %v2334, 2
        %vm2336 = vcmp.gt.s32.totalorder 0, %v2335
        %v2337 = vsel %vm2336, 0, %v2335
        %v2338 = vsub.s32 32, %v2337
        %v2339 = vshll.u32 %v2330, %v2337
        %v2340 = vshrl.u32 %v2322, %v2338
        %v2341 = vor.u32 %v2339, %v2340
        %v2342 = vsub.s32 4294967266, %v2337
        %v2343 = vadd.s32 %v2342, 127
        %v2344 = vshll.u32 %v2343, 23
        %v2345 = vor.u32 4788187, %v2344
        %v2346 = vand.u32 2147483647, %v2345
        %v2348 = vcvt.s32.f32 %v2341
        %v2349 = vmul.f32 %v2348, %v2346
        %v2350 = vxor.u32 %v2349, 2147483648
        %v2351 = vsel %vm2268, %v2350, %v2349
        %v2352 = vsub.s32 4, %v2328
        %v2353 = vsel %vm2268, %v2352, %v2328
        %v2354 = vsel %vm2267, %v586, %v2351
        %v2355 = vsel %vm2267, 0, %v2353
        %v2356 = vcosq.f32.pop %v2354
        %v2357 = vsinq.f32.pop %v2354
        %vm2358 = vweird.f32 %v586
        %v2359 = vadd.s32 %v2355, 3
        %v2360 = vand.u32 %v2359, 3
        %vm2361 = vcmp.lt.s32.totalorder %v2360, 2
        %vm2362 = vcmp.eq.s32.totalorder %v2360, 0
        %v2363 = vxor.u32 %v2357, 2147483648
        %v2364 = vsel %vm2362, %v2356, %v2363
        %vm2365 = vcmp.eq.s32.totalorder %v2360, 2
        %v2366 = vxor.u32 %v2356, 2147483648
        %v2367 = vsel %vm2365, %v2366, %v2357
        %v2368 = vsel %vm2361, %v2364, %v2367
        %v2369 = vsel %vm2358, nan, %v2368
        %v2370 = vand.u32 2147483647, %v587
        %vm2371 = vcmp.le.f32.partialorder %v2370, 0.7853982
        %vm2372 = vcmp.lt.s32.totalorder %v587, 0
        %v2373 = vand.u32 %v587, 2139095040
        %v2374 = vshrl.u32 %v2373, 23
        %v2375 = vsub.s32 %v2374, 127
        %v2376 = vand.u32 2147483647, %v587
        %v2377 = vand.u32 %v2376, 8388607
        %v2378 = vor.u32 %v2377, 8388608
        %v2379 = vsub.s32 0, %v2378
        %v2380 = vadd.s32 %v2375, 1
        %vm2381 = vcmp.gt.s32.totalorder %v2380, 0
        %v2382 = vsel %vm2381, %v2380, 0
        %v2383 = vshrl.u32 %v2382, 5
        %v2384 = vand.u32 %v2382, 31
        %v2385 = vsub.s32 32, %v2384
        %v2386 = vshrl.u32 683565275, %v2385
        %v2387 = vshll.u32 683565275, %v2384
        %v2388 = vshrl.u32 2475754826, %v2385
        %v2389 = vor.u32 %v2387, %v2388
        %v2390 = vshll.u32 2475754826, %v2384
        %v2391 = vshrl.u32 2131351028, %v2385
        %v2392 = vor.u32 %v2390, %v2391
        %v2393 = vshll.u32 2131351028, %v2384
        %v2394 = vshrl.u32 2102212464, %v2385
        %v2395 = vor.u32 %v2393, %v2394
        %v2396 = vshll.u32 2102212464, %v2384
        %v2397 = vshrl.u32 920167782, %v2385
        %v2398 = vor.u32 %v2396, %v2397
        %v2399 = vshll.u32 920167782, %v2384
        %v2400 = vshrl.u32 1326507024, %v2385
        %v2401 = vor.u32 %v2399, %v2400
        %vm2402 = vcmp.lt.s32.totalorder %v2383, 1
        %vm2403 = vcmp.lt.s32.totalorder %v2383, 2
        %vm2404 = vcmp.lt.s32.totalorder %v2383, 3
        %vm2405 = vcmp.lt.s32.totalorder %v2383, 4
        %v2406 = vsel %vm2402, %v2386, %v2389
        %v2407 = vsel %vm2405, %v2395, 2102212464
        %v2408 = vsel %vm2404, %v2392, %v2407
        %v2409 = vsel %vm2403, %v2406, %v2408
        %v2410 = vsel %vm2402, %v2389, %v2392
        %v2411 = vsel %vm2405, %v2398, 920167782
        %v2412 = vsel %vm2404, %v2395, %v2411
        %v2413 = vsel %vm2403, %v2410, %v2412
        %v2414 = vsel %vm2402, %v2392, %v2395
        %v2415 = vsel %vm2405, %v2401, 1326507024
        %v2416 = vsel %vm2404, %v2398, %v2415
        %v2417 = vsel %vm2403, %v2414, %v2416
        %v2418 = vshll.u32 %v2378, 8
        %v2419 = vmul.u32.u64.compose %v2418, %v2417
        %v2420 = vextract.low.u32 %v2419
        %v2421 = vextract.high.u32 %v2419
        %v2422 = vmul.u32.u64.compose %v2418, %v2413
        %v2423 = vextract.low.u32 %v2422
        %v2424 = vextract.high.u32 %v2422
        %v2425 = vmul.u32 %v2418, %v2409
        %v2426 = vadd.s32 %v2421, %v2423
        %vm2427 = vc.u32 %v2421, %v2423
        %v2428 = vadd.s32 %v2424, 1
        %v2429 = vsel %vm2427, %v2428, %v2424
        %v2430 = vadd.s32 %v2425, %v2429
        %v2431 = vadd.s32 %v2430, 536870912
        %v2432 = vshrl.u32 %v2431, 30
        %v2433 = vshll.u32 %v2432, 30
        %v2434 = vsub.s32 %v2430, %v2433
        %vm2435 = vcmp.lt.s32.totalorder %v2434, 0
        %v2436 = vsub.s32 0, %v2434
        %v2437 = vsel %vm2435, %v2436, %v2434
        %v2438 = vclz %v2437
        %v2439 = vsub.s32 %v2438, 2
        %vm2440 = vcmp.gt.s32.totalorder 0, %v2439
        %v2441 = vsel %vm2440, 0, %v2439
        %v2442 = vsub.s32 32, %v2441
        %v2443 = vshll.u32 %v2434, %v2441
        %v2444 = vshrl.u32 %v2426, %v2442
        %v2445 = vor.u32 %v2443, %v2444
        %v2446 = vsub.s32 4294967266, %v2441
        %v2447 = vadd.s32 %v2446, 127
        %v2448 = vshll.u32 %v2447, 23
        %v2449 = vor.u32 4788187, %v2448
        %v2450 = vand.u32 2147483647, %v2449
        %v2452 = vcvt.s32.f32 %v2445
        %v2453 = vmul.f32 %v2452, %v2450
        %v2454 = vxor.u32 %v2453, 2147483648
        %v2455 = vsel %vm2372, %v2454, %v2453
        %v2456 = vsub.s32 4, %v2432
        %v2457 = vsel %vm2372, %v2456, %v2432
        %v2458 = vsel %vm2371, %v587, %v2455
        %v2459 = vsel %vm2371, 0, %v2457
        %v2460 = vcosq.f32.pop %v2458
        %v2461 = vsinq.f32.pop %v2458
        %vm2462 = vweird.f32 %v587
        %v2463 = vadd.s32 %v2459, 3
        %v2464 = vand.u32 %v2463, 3
        %vm2465 = vcmp.lt.s32.totalorder %v2464, 2
        %vm2466 = vcmp.eq.s32.totalorder %v2464, 0
        %v2467 = vxor.u32 %v2461, 2147483648
        %v2468 = vsel %vm2466, %v2460, %v2467
        %vm2469 = vcmp.eq.s32.totalorder %v2464, 2
        %v2470 = vxor.u32 %v2460, 2147483648
        %v2471 = vsel %vm2469, %v2470, %v2461
        %v2472 = vsel %vm2465, %v2468, %v2471
        %v2473 = vsel %vm2462, nan, %v2472
        %v2474 = vand.u32 2147483647, %v588
        %vm2475 = vcmp.le.f32.partialorder %v2474, 0.7853982
        %vm2476 = vcmp.lt.s32.totalorder %v588, 0
        %v2477 = vand.u32 %v588, 2139095040
        %v2478 = vshrl.u32 %v2477, 23
        %v2479 = vsub.s32 %v2478, 127
        %v2480 = vand.u32 2147483647, %v588
        %v2481 = vand.u32 %v2480, 8388607
        %v2482 = vor.u32 %v2481, 8388608
        %v2483 = vsub.s32 0, %v2482
        %v2484 = vadd.s32 %v2479, 1
        %vm2485 = vcmp.gt.s32.totalorder %v2484, 0
        %v2486 = vsel %vm2485, %v2484, 0
        %v2487 = vshrl.u32 %v2486, 5
        %v2488 = vand.u32 %v2486, 31
        %v2489 = vsub.s32 32, %v2488
        %v2490 = vshrl.u32 683565275, %v2489
        %v2491 = vshll.u32 683565275, %v2488
        %v2492 = vshrl.u32 2475754826, %v2489
        %v2493 = vor.u32 %v2491, %v2492
        %v2494 = vshll.u32 2475754826, %v2488
        %v2495 = vshrl.u32 2131351028, %v2489
        %v2496 = vor.u32 %v2494, %v2495
        %v2497 = vshll.u32 2131351028, %v2488
        %v2498 = vshrl.u32 2102212464, %v2489
        %v2499 = vor.u32 %v2497, %v2498
        %v2500 = vshll.u32 2102212464, %v2488
        %v2501 = vshrl.u32 920167782, %v2489
        %v2502 = vor.u32 %v2500, %v2501
        %v2503 = vshll.u32 920167782, %v2488
        %v2504 = vshrl.u32 1326507024, %v2489
        %v2505 = vor.u32 %v2503, %v2504
        %vm2506 = vcmp.lt.s32.totalorder %v2487, 1
        %vm2507 = vcmp.lt.s32.totalorder %v2487, 2
        %vm2508 = vcmp.lt.s32.totalorder %v2487, 3
        %vm2509 = vcmp.lt.s32.totalorder %v2487, 4
        %v2510 = vsel %vm2506, %v2490, %v2493
        %v2511 = vsel %vm2509, %v2499, 2102212464
        %v2512 = vsel %vm2508, %v2496, %v2511
        %v2513 = vsel %vm2507, %v2510, %v2512
        %v2514 = vsel %vm2506, %v2493, %v2496
        %v2515 = vsel %vm2509, %v2502, 920167782
        %v2516 = vsel %vm2508, %v2499, %v2515
        %v2517 = vsel %vm2507, %v2514, %v2516
        %v2518 = vsel %vm2506, %v2496, %v2499
        %v2519 = vsel %vm2509, %v2505, 1326507024
        %v2520 = vsel %vm2508, %v2502, %v2519
        %v2521 = vsel %vm2507, %v2518, %v2520
        %v2522 = vshll.u32 %v2482, 8
        %v2523 = vmul.u32.u64.compose %v2522, %v2521
        %v2524 = vextract.low.u32 %v2523
        %v2525 = vextract.high.u32 %v2523
        %v2526 = vmul.u32.u64.compose %v2522, %v2517
        %v2527 = vextract.low.u32 %v2526
        %v2528 = vextract.high.u32 %v2526
        %v2529 = vmul.u32 %v2522, %v2513
        %v2530 = vadd.s32 %v2525, %v2527
        %vm2531 = vc.u32 %v2525, %v2527
        %v2532 = vadd.s32 %v2528, 1
        %v2533 = vsel %vm2531, %v2532, %v2528
        %v2534 = vadd.s32 %v2529, %v2533
        %v2535 = vadd.s32 %v2534, 536870912
        %v2536 = vshrl.u32 %v2535, 30
        %v2537 = vshll.u32 %v2536, 30
        %v2538 = vsub.s32 %v2534, %v2537
        %vm2539 = vcmp.lt.s32.totalorder %v2538, 0
        %v2540 = vsub.s32 0, %v2538
        %v2541 = vsel %vm2539, %v2540, %v2538
        %v2542 = vclz %v2541
        %v2543 = vsub.s32 %v2542, 2
        %vm2544 = vcmp.gt.s32.totalorder 0, %v2543
        %v2545 = vsel %vm2544, 0, %v2543
        %v2546 = vsub.s32 32, %v2545
        %v2547 = vshll.u32 %v2538, %v2545
        %v2548 = vshrl.u32 %v2530, %v2546
        %v2549 = vor.u32 %v2547, %v2548
        %v2550 = vsub.s32 4294967266, %v2545
        %v2551 = vadd.s32 %v2550, 127
        %v2552 = vshll.u32 %v2551, 23
        %v2553 = vor.u32 4788187, %v2552
        %v2554 = vand.u32 2147483647, %v2553
        %v2556 = vcvt.s32.f32 %v2549
        %v2557 = vmul.f32 %v2556, %v2554
        %v2558 = vxor.u32 %v2557, 2147483648
        %v2559 = vsel %vm2476, %v2558, %v2557
        %v2560 = vsub.s32 4, %v2536
        %v2561 = vsel %vm2476, %v2560, %v2536
        %v2562 = vsel %vm2475, %v588, %v2559
        %v2563 = vsel %vm2475, 0, %v2561
        %v2564 = vcosq.f32.pop %v2562
        %v2565 = vsinq.f32.pop %v2562
        %vm2566 = vweird.f32 %v588
        %v2567 = vadd.s32 %v2563, 3
        %v2568 = vand.u32 %v2567, 3
        %vm2569 = vcmp.lt.s32.totalorder %v2568, 2
        %vm2570 = vcmp.eq.s32.totalorder %v2568, 0
        %v2571 = vxor.u32 %v2565, 2147483648
        %v2572 = vsel %vm2570, %v2564, %v2571
        %vm2573 = vcmp.eq.s32.totalorder %v2568, 2
        %v2574 = vxor.u32 %v2564, 2147483648
        %v2575 = vsel %vm2573, %v2574, %v2565
        %v2576 = vsel %vm2569, %v2572, %v2575
        %v2577 = vsel %vm2566, nan, %v2576
        %v2578 = vand.u32 2147483647, %v589
        %vm2579 = vcmp.le.f32.partialorder %v2578, 0.7853982
        %vm2580 = vcmp.lt.s32.totalorder %v589, 0
        %v2581 = vand.u32 %v589, 2139095040
        %v2582 = vshrl.u32 %v2581, 23
        %v2583 = vsub.s32 %v2582, 127
        %v2584 = vand.u32 2147483647, %v589
        %v2585 = vand.u32 %v2584, 8388607
        %v2586 = vor.u32 %v2585, 8388608
        %v2587 = vsub.s32 0, %v2586
        %v2588 = vadd.s32 %v2583, 1
        %vm2589 = vcmp.gt.s32.totalorder %v2588, 0
        %v2590 = vsel %vm2589, %v2588, 0
        %v2591 = vshrl.u32 %v2590, 5
        %v2592 = vand.u32 %v2590, 31
        %v2593 = vsub.s32 32, %v2592
        %v2594 = vshrl.u32 683565275, %v2593
        %v2595 = vshll.u32 683565275, %v2592
        %v2596 = vshrl.u32 2475754826, %v2593
        %v2597 = vor.u32 %v2595, %v2596
        %v2598 = vshll.u32 2475754826, %v2592
        %v2599 = vshrl.u32 2131351028, %v2593
        %v2600 = vor.u32 %v2598, %v2599
        %v2601 = vshll.u32 2131351028, %v2592
        %v2602 = vshrl.u32 2102212464, %v2593
        %v2603 = vor.u32 %v2601, %v2602
        %v2604 = vshll.u32 2102212464, %v2592
        %v2605 = vshrl.u32 920167782, %v2593
        %v2606 = vor.u32 %v2604, %v2605
        %v2607 = vshll.u32 920167782, %v2592
        %v2608 = vshrl.u32 1326507024, %v2593
        %v2609 = vor.u32 %v2607, %v2608
        %vm2610 = vcmp.lt.s32.totalorder %v2591, 1
        %vm2611 = vcmp.lt.s32.totalorder %v2591, 2
        %vm2612 = vcmp.lt.s32.totalorder %v2591, 3
        %vm2613 = vcmp.lt.s32.totalorder %v2591, 4
        %v2614 = vsel %vm2610, %v2594, %v2597
        %v2615 = vsel %vm2613, %v2603, 2102212464
        %v2616 = vsel %vm2612, %v2600, %v2615
        %v2617 = vsel %vm2611, %v2614, %v2616
        %v2618 = vsel %vm2610, %v2597, %v2600
        %v2619 = vsel %vm2613, %v2606, 920167782
        %v2620 = vsel %vm2612, %v2603, %v2619
        %v2621 = vsel %vm2611, %v2618, %v2620
        %v2622 = vsel %vm2610, %v2600, %v2603
        %v2623 = vsel %vm2613, %v2609, 1326507024
        %v2624 = vsel %vm2612, %v2606, %v2623
        %v2625 = vsel %vm2611, %v2622, %v2624
        %v2626 = vshll.u32 %v2586, 8
        %v2627 = vmul.u32.u64.compose %v2626, %v2625
        %v2628 = vextract.low.u32 %v2627
        %v2629 = vextract.high.u32 %v2627
        %v2630 = vmul.u32.u64.compose %v2626, %v2621
        %v2631 = vextract.low.u32 %v2630
        %v2632 = vextract.high.u32 %v2630
        %v2633 = vmul.u32 %v2626, %v2617
        %v2634 = vadd.s32 %v2629, %v2631
        %vm2635 = vc.u32 %v2629, %v2631
        %v2636 = vadd.s32 %v2632, 1
        %v2637 = vsel %vm2635, %v2636, %v2632
        %v2638 = vadd.s32 %v2633, %v2637
        %v2639 = vadd.s32 %v2638, 536870912
        %v2640 = vshrl.u32 %v2639, 30
        %v2641 = vshll.u32 %v2640, 30
        %v2642 = vsub.s32 %v2638, %v2641
        %vm2643 = vcmp.lt.s32.totalorder %v2642, 0
        %v2644 = vsub.s32 0, %v2642
        %v2645 = vsel %vm2643, %v2644, %v2642
        %v2646 = vclz %v2645
        %v2647 = vsub.s32 %v2646, 2
        %vm2648 = vcmp.gt.s32.totalorder 0, %v2647
        %v2649 = vsel %vm2648, 0, %v2647
        %v2650 = vsub.s32 32, %v2649
        %v2651 = vshll.u32 %v2642, %v2649
        %v2652 = vshrl.u32 %v2634, %v2650
        %v2653 = vor.u32 %v2651, %v2652
        %v2654 = vsub.s32 4294967266, %v2649
        %v2655 = vadd.s32 %v2654, 127
        %v2656 = vshll.u32 %v2655, 23
        %v2657 = vor.u32 4788187, %v2656
        %v2658 = vand.u32 2147483647, %v2657
        %v2660 = vcvt.s32.f32 %v2653
        %v2661 = vmul.f32 %v2660, %v2658
        %v2662 = vxor.u32 %v2661, 2147483648
        %v2663 = vsel %vm2580, %v2662, %v2661
        %v2664 = vsub.s32 4, %v2640
        %v2665 = vsel %vm2580, %v2664, %v2640
        %v2666 = vsel %vm2579, %v589, %v2663
        %v2667 = vsel %vm2579, 0, %v2665
        %v2668 = vcosq.f32.pop %v2666
        %v2669 = vsinq.f32.pop %v2666
        %vm2670 = vweird.f32 %v589
        %v2671 = vadd.s32 %v2667, 3
        %v2672 = vand.u32 %v2671, 3
        %vm2673 = vcmp.lt.s32.totalorder %v2672, 2
        %vm2674 = vcmp.eq.s32.totalorder %v2672, 0
        %v2675 = vxor.u32 %v2669, 2147483648
        %v2676 = vsel %vm2674, %v2668, %v2675
        %vm2677 = vcmp.eq.s32.totalorder %v2672, 2
        %v2678 = vxor.u32 %v2668, 2147483648
        %v2679 = vsel %vm2677, %v2678, %v2669
        %v2680 = vsel %vm2673, %v2676, %v2679
        %v2681 = vsel %vm2670, nan, %v2680
        %v2682 = vand.u32 2147483647, %v590
        %vm2683 = vcmp.le.f32.partialorder %v2682, 0.7853982
        %vm2684 = vcmp.lt.s32.totalorder %v590, 0
        %v2685 = vand.u32 %v590, 2139095040
        %v2686 = vshrl.u32 %v2685, 23
        %v2687 = vsub.s32 %v2686, 127
        %v2688 = vand.u32 2147483647, %v590
        %v2689 = vand.u32 %v2688, 8388607
        %v2690 = vor.u32 %v2689, 8388608
        %v2691 = vsub.s32 0, %v2690
        %v2692 = vadd.s32 %v2687, 1
        %vm2693 = vcmp.gt.s32.totalorder %v2692, 0
        %v2694 = vsel %vm2693, %v2692, 0
        %v2695 = vshrl.u32 %v2694, 5
        %v2696 = vand.u32 %v2694, 31
        %v2697 = vsub.s32 32, %v2696
        %v2698 = vshrl.u32 683565275, %v2697
        %v2699 = vshll.u32 683565275, %v2696
        %v2700 = vshrl.u32 2475754826, %v2697
        %v2701 = vor.u32 %v2699, %v2700
        %v2702 = vshll.u32 2475754826, %v2696
        %v2703 = vshrl.u32 2131351028, %v2697
        %v2704 = vor.u32 %v2702, %v2703
        %v2705 = vshll.u32 2131351028, %v2696
        %v2706 = vshrl.u32 2102212464, %v2697
        %v2707 = vor.u32 %v2705, %v2706
        %v2708 = vshll.u32 2102212464, %v2696
        %v2709 = vshrl.u32 920167782, %v2697
        %v2710 = vor.u32 %v2708, %v2709
        %v2711 = vshll.u32 920167782, %v2696
        %v2712 = vshrl.u32 1326507024, %v2697
        %v2713 = vor.u32 %v2711, %v2712
        %vm2714 = vcmp.lt.s32.totalorder %v2695, 1
        %vm2715 = vcmp.lt.s32.totalorder %v2695, 2
        %vm2716 = vcmp.lt.s32.totalorder %v2695, 3
        %vm2717 = vcmp.lt.s32.totalorder %v2695, 4
        %v2718 = vsel %vm2714, %v2698, %v2701
        %v2719 = vsel %vm2717, %v2707, 2102212464
        %v2720 = vsel %vm2716, %v2704, %v2719
        %v2721 = vsel %vm2715, %v2718, %v2720
        %v2722 = vsel %vm2714, %v2701, %v2704
        %v2723 = vsel %vm2717, %v2710, 920167782
        %v2724 = vsel %vm2716, %v2707, %v2723
        %v2725 = vsel %vm2715, %v2722, %v2724
        %v2726 = vsel %vm2714, %v2704, %v2707
        %v2727 = vsel %vm2717, %v2713, 1326507024
        %v2728 = vsel %vm2716, %v2710, %v2727
        %v2729 = vsel %vm2715, %v2726, %v2728
        %v2730 = vshll.u32 %v2690, 8
        %v2731 = vmul.u32.u64.compose %v2730, %v2729
        %v2732 = vextract.low.u32 %v2731
        %v2733 = vextract.high.u32 %v2731
        %v2734 = vmul.u32.u64.compose %v2730, %v2725
        %v2735 = vextract.low.u32 %v2734
        %v2736 = vextract.high.u32 %v2734
        %v2737 = vmul.u32 %v2730, %v2721
        %v2738 = vadd.s32 %v2733, %v2735
        %vm2739 = vc.u32 %v2733, %v2735
        %v2740 = vadd.s32 %v2736, 1
        %v2741 = vsel %vm2739, %v2740, %v2736
        %v2742 = vadd.s32 %v2737, %v2741
        %v2743 = vadd.s32 %v2742, 536870912
        %v2744 = vshrl.u32 %v2743, 30
        %v2745 = vshll.u32 %v2744, 30
        %v2746 = vsub.s32 %v2742, %v2745
        %vm2747 = vcmp.lt.s32.totalorder %v2746, 0
        %v2748 = vsub.s32 0, %v2746
        %v2749 = vsel %vm2747, %v2748, %v2746
        %v2750 = vclz %v2749
        %v2751 = vsub.s32 %v2750, 2
        %vm2752 = vcmp.gt.s32.totalorder 0, %v2751
        %v2753 = vsel %vm2752, 0, %v2751
        %v2754 = vsub.s32 32, %v2753
        %v2755 = vshll.u32 %v2746, %v2753
        %v2756 = vshrl.u32 %v2738, %v2754
        %v2757 = vor.u32 %v2755, %v2756
        %v2758 = vsub.s32 4294967266, %v2753
        %v2759 = vadd.s32 %v2758, 127
        %v2760 = vshll.u32 %v2759, 23
        %v2761 = vor.u32 4788187, %v2760
        %v2762 = vand.u32 2147483647, %v2761
        %v2764 = vcvt.s32.f32 %v2757
        %v2765 = vmul.f32 %v2764, %v2762
        %v2766 = vxor.u32 %v2765, 2147483648
        %v2767 = vsel %vm2684, %v2766, %v2765
        %v2768 = vsub.s32 4, %v2744
        %v2769 = vsel %vm2684, %v2768, %v2744
        %v2770 = vsel %vm2683, %v590, %v2767
        %v2771 = vsel %vm2683, 0, %v2769
        %v2772 = vcosq.f32.pop %v2770
        %v2773 = vsinq.f32.pop %v2770
        %vm2774 = vweird.f32 %v590
        %v2775 = vadd.s32 %v2771, 3
        %v2776 = vand.u32 %v2775, 3
        %vm2777 = vcmp.lt.s32.totalorder %v2776, 2
        %vm2778 = vcmp.eq.s32.totalorder %v2776, 0
        %v2779 = vxor.u32 %v2773, 2147483648
        %v2780 = vsel %vm2778, %v2772, %v2779
        %vm2781 = vcmp.eq.s32.totalorder %v2776, 2
        %v2782 = vxor.u32 %v2772, 2147483648
        %v2783 = vsel %vm2781, %v2782, %v2773
        %v2784 = vsel %vm2777, %v2780, %v2783
        %v2785 = vsel %vm2774, nan, %v2784
        %v2786 = vand.u32 2147483647, %v591
        %vm2787 = vcmp.le.f32.partialorder %v2786, 0.7853982
        %vm2788 = vcmp.lt.s32.totalorder %v591, 0
        %v2789 = vand.u32 %v591, 2139095040
        %v2790 = vshrl.u32 %v2789, 23
        %v2791 = vsub.s32 %v2790, 127
        %v2792 = vand.u32 2147483647, %v591
        %v2793 = vand.u32 %v2792, 8388607
        %v2794 = vor.u32 %v2793, 8388608
        %v2795 = vsub.s32 0, %v2794
        %v2796 = vadd.s32 %v2791, 1
        %vm2797 = vcmp.gt.s32.totalorder %v2796, 0
        %v2798 = vsel %vm2797, %v2796, 0
        %v2799 = vshrl.u32 %v2798, 5
        %v2800 = vand.u32 %v2798, 31
        %v2801 = vsub.s32 32, %v2800
        %v2802 = vshrl.u32 683565275, %v2801
        %v2803 = vshll.u32 683565275, %v2800
        %v2804 = vshrl.u32 2475754826, %v2801
        %v2805 = vor.u32 %v2803, %v2804
        %v2806 = vshll.u32 2475754826, %v2800
        %v2807 = vshrl.u32 2131351028, %v2801
        %v2808 = vor.u32 %v2806, %v2807
        %v2809 = vshll.u32 2131351028, %v2800
        %v2810 = vshrl.u32 2102212464, %v2801
        %v2811 = vor.u32 %v2809, %v2810
        %v2812 = vshll.u32 2102212464, %v2800
        %v2813 = vshrl.u32 920167782, %v2801
        %v2814 = vor.u32 %v2812, %v2813
        %v2815 = vshll.u32 920167782, %v2800
        %v2816 = vshrl.u32 1326507024, %v2801
        %v2817 = vor.u32 %v2815, %v2816
        %vm2818 = vcmp.lt.s32.totalorder %v2799, 1
        %vm2819 = vcmp.lt.s32.totalorder %v2799, 2
        %vm2820 = vcmp.lt.s32.totalorder %v2799, 3
        %vm2821 = vcmp.lt.s32.totalorder %v2799, 4
        %v2822 = vsel %vm2818, %v2802, %v2805
        %v2823 = vsel %vm2821, %v2811, 2102212464
        %v2824 = vsel %vm2820, %v2808, %v2823
        %v2825 = vsel %vm2819, %v2822, %v2824
        %v2826 = vsel %vm2818, %v2805, %v2808
        %v2827 = vsel %vm2821, %v2814, 920167782
        %v2828 = vsel %vm2820, %v2811, %v2827
        %v2829 = vsel %vm2819, %v2826, %v2828
        %v2830 = vsel %vm2818, %v2808, %v2811
        %v2831 = vsel %vm2821, %v2817, 1326507024
        %v2832 = vsel %vm2820, %v2814, %v2831
        %v2833 = vsel %vm2819, %v2830, %v2832
        %v2834 = vshll.u32 %v2794, 8
        %v2835 = vmul.u32.u64.compose %v2834, %v2833
        %v2836 = vextract.low.u32 %v2835
        %v2837 = vextract.high.u32 %v2835
        %v2838 = vmul.u32.u64.compose %v2834, %v2829
        %v2839 = vextract.low.u32 %v2838
        %v2840 = vextract.high.u32 %v2838
        %v2841 = vmul.u32 %v2834, %v2825
        %v2842 = vadd.s32 %v2837, %v2839
        %vm2843 = vc.u32 %v2837, %v2839
        %v2844 = vadd.s32 %v2840, 1
        %v2845 = vsel %vm2843, %v2844, %v2840
        %v2846 = vadd.s32 %v2841, %v2845
        %v2847 = vadd.s32 %v2846, 536870912
        %v2848 = vshrl.u32 %v2847, 30
        %v2849 = vshll.u32 %v2848, 30
        %v2850 = vsub.s32 %v2846, %v2849
        %vm2851 = vcmp.lt.s32.totalorder %v2850, 0
        %v2852 = vsub.s32 0, %v2850
        %v2853 = vsel %vm2851, %v2852, %v2850
        %v2854 = vclz %v2853
        %v2855 = vsub.s32 %v2854, 2
        %vm2856 = vcmp.gt.s32.totalorder 0, %v2855
        %v2857 = vsel %vm2856, 0, %v2855
        %v2858 = vsub.s32 32, %v2857
        %v2859 = vshll.u32 %v2850, %v2857
        %v2860 = vshrl.u32 %v2842, %v2858
        %v2861 = vor.u32 %v2859, %v2860
        %v2862 = vsub.s32 4294967266, %v2857
        %v2863 = vadd.s32 %v2862, 127
        %v2864 = vshll.u32 %v2863, 23
        %v2865 = vor.u32 4788187, %v2864
        %v2866 = vand.u32 2147483647, %v2865
        %v2868 = vcvt.s32.f32 %v2861
        %v2869 = vmul.f32 %v2868, %v2866
        %v2870 = vxor.u32 %v2869, 2147483648
        %v2871 = vsel %vm2788, %v2870, %v2869
        %v2872 = vsub.s32 4, %v2848
        %v2873 = vsel %vm2788, %v2872, %v2848
        %v2874 = vsel %vm2787, %v591, %v2871
        %v2875 = vsel %vm2787, 0, %v2873
        %v2876 = vcosq.f32.pop %v2874
        %v2877 = vsinq.f32.pop %v2874
        %vm2878 = vweird.f32 %v591
        %v2879 = vadd.s32 %v2875, 3
        %v2880 = vand.u32 %v2879, 3
        %vm2881 = vcmp.lt.s32.totalorder %v2880, 2
        %vm2882 = vcmp.eq.s32.totalorder %v2880, 0
        %v2883 = vxor.u32 %v2877, 2147483648
        %v2884 = vsel %vm2882, %v2876, %v2883
        %vm2885 = vcmp.eq.s32.totalorder %v2880, 2
        %v2886 = vxor.u32 %v2876, 2147483648
        %v2887 = vsel %vm2885, %v2886, %v2877
        %v2888 = vsel %vm2881, %v2884, %v2887
        %v2889 = vsel %vm2878, nan, %v2888
        %v2890 = vand.u32 2147483647, %v592
        %vm2891 = vcmp.le.f32.partialorder %v2890, 0.7853982
        %vm2892 = vcmp.lt.s32.totalorder %v592, 0
        %v2893 = vand.u32 %v592, 2139095040
        %v2894 = vshrl.u32 %v2893, 23
        %v2895 = vsub.s32 %v2894, 127
        %v2896 = vand.u32 2147483647, %v592
        %v2897 = vand.u32 %v2896, 8388607
        %v2898 = vor.u32 %v2897, 8388608
        %v2899 = vsub.s32 0, %v2898
        %v2900 = vadd.s32 %v2895, 1
        %vm2901 = vcmp.gt.s32.totalorder %v2900, 0
        %v2902 = vsel %vm2901, %v2900, 0
        %v2903 = vshrl.u32 %v2902, 5
        %v2904 = vand.u32 %v2902, 31
        %v2905 = vsub.s32 32, %v2904
        %v2906 = vshrl.u32 683565275, %v2905
        %v2907 = vshll.u32 683565275, %v2904
        %v2908 = vshrl.u32 2475754826, %v2905
        %v2909 = vor.u32 %v2907, %v2908
        %v2910 = vshll.u32 2475754826, %v2904
        %v2911 = vshrl.u32 2131351028, %v2905
        %v2912 = vor.u32 %v2910, %v2911
        %v2913 = vshll.u32 2131351028, %v2904
        %v2914 = vshrl.u32 2102212464, %v2905
        %v2915 = vor.u32 %v2913, %v2914
        %v2916 = vshll.u32 2102212464, %v2904
        %v2917 = vshrl.u32 920167782, %v2905
        %v2918 = vor.u32 %v2916, %v2917
        %v2919 = vshll.u32 920167782, %v2904
        %v2920 = vshrl.u32 1326507024, %v2905
        %v2921 = vor.u32 %v2919, %v2920
        %vm2922 = vcmp.lt.s32.totalorder %v2903, 1
        %vm2923 = vcmp.lt.s32.totalorder %v2903, 2
        %vm2924 = vcmp.lt.s32.totalorder %v2903, 3
        %vm2925 = vcmp.lt.s32.totalorder %v2903, 4
        %v2926 = vsel %vm2922, %v2906, %v2909
        %v2927 = vsel %vm2925, %v2915, 2102212464
        %v2928 = vsel %vm2924, %v2912, %v2927
        %v2929 = vsel %vm2923, %v2926, %v2928
        %v2930 = vsel %vm2922, %v2909, %v2912
        %v2931 = vsel %vm2925, %v2918, 920167782
        %v2932 = vsel %vm2924, %v2915, %v2931
        %v2933 = vsel %vm2923, %v2930, %v2932
        %v2934 = vsel %vm2922, %v2912, %v2915
        %v2935 = vsel %vm2925, %v2921, 1326507024
        %v2936 = vsel %vm2924, %v2918, %v2935
        %v2937 = vsel %vm2923, %v2934, %v2936
        %v2938 = vshll.u32 %v2898, 8
        %v2939 = vmul.u32.u64.compose %v2938, %v2937
        %v2940 = vextract.low.u32 %v2939
        %v2941 = vextract.high.u32 %v2939
        %v2942 = vmul.u32.u64.compose %v2938, %v2933
        %v2943 = vextract.low.u32 %v2942
        %v2944 = vextract.high.u32 %v2942
        %v2945 = vmul.u32 %v2938, %v2929
        %v2946 = vadd.s32 %v2941, %v2943
        %vm2947 = vc.u32 %v2941, %v2943
        %v2948 = vadd.s32 %v2944, 1
        %v2949 = vsel %vm2947, %v2948, %v2944
        %v2950 = vadd.s32 %v2945, %v2949
        %v2951 = vadd.s32 %v2950, 536870912
        %v2952 = vshrl.u32 %v2951, 30
        %v2953 = vshll.u32 %v2952, 30
        %v2954 = vsub.s32 %v2950, %v2953
        %vm2955 = vcmp.lt.s32.totalorder %v2954, 0
        %v2956 = vsub.s32 0, %v2954
        %v2957 = vsel %vm2955, %v2956, %v2954
        %v2958 = vclz %v2957
        %v2959 = vsub.s32 %v2958, 2
        %vm2960 = vcmp.gt.s32.totalorder 0, %v2959
        %v2961 = vsel %vm2960, 0, %v2959
        %v2962 = vsub.s32 32, %v2961
        %v2963 = vshll.u32 %v2954, %v2961
        %v2964 = vshrl.u32 %v2946, %v2962
        %v2965 = vor.u32 %v2963, %v2964
        %v2966 = vsub.s32 4294967266, %v2961
        %v2967 = vadd.s32 %v2966, 127
        %v2968 = vshll.u32 %v2967, 23
        %v2969 = vor.u32 4788187, %v2968
        %v2970 = vand.u32 2147483647, %v2969
        %v2972 = vcvt.s32.f32 %v2965
        %v2973 = vmul.f32 %v2972, %v2970
        %v2974 = vxor.u32 %v2973, 2147483648
        %v2975 = vsel %vm2892, %v2974, %v2973
        %v2976 = vsub.s32 4, %v2952
        %v2977 = vsel %vm2892, %v2976, %v2952
        %v2978 = vsel %vm2891, %v592, %v2975
        %v2979 = vsel %vm2891, 0, %v2977
        %v2980 = vcosq.f32.pop %v2978
        %v2981 = vsinq.f32.pop %v2978
        %vm2982 = vweird.f32 %v592
        %v2983 = vadd.s32 %v2979, 3
        %v2984 = vand.u32 %v2983, 3
        %vm2985 = vcmp.lt.s32.totalorder %v2984, 2
        %vm2986 = vcmp.eq.s32.totalorder %v2984, 0
        %v2987 = vxor.u32 %v2981, 2147483648
        %v2988 = vsel %vm2986, %v2980, %v2987
        %vm2989 = vcmp.eq.s32.totalorder %v2984, 2
        %v2990 = vxor.u32 %v2980, 2147483648
        %v2991 = vsel %vm2989, %v2990, %v2981
        %v2992 = vsel %vm2985, %v2988, %v2991
        %v2993 = vsel %vm2982, nan, %v2992
        %v2994 = vand.u32 2147483647, %v593
        %vm2995 = vcmp.le.f32.partialorder %v2994, 0.7853982
        %vm2996 = vcmp.lt.s32.totalorder %v593, 0
        %v2997 = vand.u32 %v593, 2139095040
        %v2998 = vshrl.u32 %v2997, 23
        %v2999 = vsub.s32 %v2998, 127
        %v3000 = vand.u32 2147483647, %v593
        %v3001 = vand.u32 %v3000, 8388607
        %v3002 = vor.u32 %v3001, 8388608
        %v3003 = vsub.s32 0, %v3002
        %v3004 = vadd.s32 %v2999, 1
        %vm3005 = vcmp.gt.s32.totalorder %v3004, 0
        %v3006 = vsel %vm3005, %v3004, 0
        %v3007 = vshrl.u32 %v3006, 5
        %v3008 = vand.u32 %v3006, 31
        %v3009 = vsub.s32 32, %v3008
        %v3010 = vshrl.u32 683565275, %v3009
        %v3011 = vshll.u32 683565275, %v3008
        %v3012 = vshrl.u32 2475754826, %v3009
        %v3013 = vor.u32 %v3011, %v3012
        %v3014 = vshll.u32 2475754826, %v3008
        %v3015 = vshrl.u32 2131351028, %v3009
        %v3016 = vor.u32 %v3014, %v3015
        %v3017 = vshll.u32 2131351028, %v3008
        %v3018 = vshrl.u32 2102212464, %v3009
        %v3019 = vor.u32 %v3017, %v3018
        %v3020 = vshll.u32 2102212464, %v3008
        %v3021 = vshrl.u32 920167782, %v3009
        %v3022 = vor.u32 %v3020, %v3021
        %v3023 = vshll.u32 920167782, %v3008
        %v3024 = vshrl.u32 1326507024, %v3009
        %v3025 = vor.u32 %v3023, %v3024
        %vm3026 = vcmp.lt.s32.totalorder %v3007, 1
        %vm3027 = vcmp.lt.s32.totalorder %v3007, 2
        %vm3028 = vcmp.lt.s32.totalorder %v3007, 3
        %vm3029 = vcmp.lt.s32.totalorder %v3007, 4
        %v3030 = vsel %vm3026, %v3010, %v3013
        %v3031 = vsel %vm3029, %v3019, 2102212464
        %v3032 = vsel %vm3028, %v3016, %v3031
        %v3033 = vsel %vm3027, %v3030, %v3032
        %v3034 = vsel %vm3026, %v3013, %v3016
        %v3035 = vsel %vm3029, %v3022, 920167782
        %v3036 = vsel %vm3028, %v3019, %v3035
        %v3037 = vsel %vm3027, %v3034, %v3036
        %v3038 = vsel %vm3026, %v3016, %v3019
        %v3039 = vsel %vm3029, %v3025, 1326507024
        %v3040 = vsel %vm3028, %v3022, %v3039
        %v3041 = vsel %vm3027, %v3038, %v3040
        %v3042 = vshll.u32 %v3002, 8
        %v3043 = vmul.u32.u64.compose %v3042, %v3041
        %v3044 = vextract.low.u32 %v3043
        %v3045 = vextract.high.u32 %v3043
        %v3046 = vmul.u32.u64.compose %v3042, %v3037
        %v3047 = vextract.low.u32 %v3046
        %v3048 = vextract.high.u32 %v3046
        %v3049 = vmul.u32 %v3042, %v3033
        %v3050 = vadd.s32 %v3045, %v3047
        %vm3051 = vc.u32 %v3045, %v3047
        %v3052 = vadd.s32 %v3048, 1
        %v3053 = vsel %vm3051, %v3052, %v3048
        %v3054 = vadd.s32 %v3049, %v3053
        %v3055 = vadd.s32 %v3054, 536870912
        %v3056 = vshrl.u32 %v3055, 30
        %v3057 = vshll.u32 %v3056, 30
        %v3058 = vsub.s32 %v3054, %v3057
        %vm3059 = vcmp.lt.s32.totalorder %v3058, 0
        %v3060 = vsub.s32 0, %v3058
        %v3061 = vsel %vm3059, %v3060, %v3058
        %v3062 = vclz %v3061
        %v3063 = vsub.s32 %v3062, 2
        %vm3064 = vcmp.gt.s32.totalorder 0, %v3063
        %v3065 = vsel %vm3064, 0, %v3063
        %v3066 = vsub.s32 32, %v3065
        %v3067 = vshll.u32 %v3058, %v3065
        %v3068 = vshrl.u32 %v3050, %v3066
        %v3069 = vor.u32 %v3067, %v3068
        %v3070 = vsub.s32 4294967266, %v3065
        %v3071 = vadd.s32 %v3070, 127
        %v3072 = vshll.u32 %v3071, 23
        %v3073 = vor.u32 4788187, %v3072
        %v3074 = vand.u32 2147483647, %v3073
        %v3076 = vcvt.s32.f32 %v3069
        %v3077 = vmul.f32 %v3076, %v3074
        %v3078 = vxor.u32 %v3077, 2147483648
        %v3079 = vsel %vm2996, %v3078, %v3077
        %v3080 = vsub.s32 4, %v3056
        %v3081 = vsel %vm2996, %v3080, %v3056
        %v3082 = vsel %vm2995, %v593, %v3079
        %v3083 = vsel %vm2995, 0, %v3081
        %v3084 = vcosq.f32.pop %v3082
        %v3085 = vsinq.f32.pop %v3082
        %vm3086 = vweird.f32 %v593
        %v3087 = vadd.s32 %v3083, 3
        %v3088 = vand.u32 %v3087, 3
        %vm3089 = vcmp.lt.s32.totalorder %v3088, 2
        %vm3090 = vcmp.eq.s32.totalorder %v3088, 0
        %v3091 = vxor.u32 %v3085, 2147483648
        %v3092 = vsel %vm3090, %v3084, %v3091
        %vm3093 = vcmp.eq.s32.totalorder %v3088, 2
        %v3094 = vxor.u32 %v3084, 2147483648
        %v3095 = vsel %vm3093, %v3094, %v3085
        %v3096 = vsel %vm3089, %v3092, %v3095
        %v3097 = vsel %vm3086, nan, %v3096
        %v3098 = vand.u32 2147483647, %v594
        %vm3099 = vcmp.le.f32.partialorder %v3098, 0.7853982
        %vm3100 = vcmp.lt.s32.totalorder %v594, 0
        %v3101 = vand.u32 %v594, 2139095040
        %v3102 = vshrl.u32 %v3101, 23
        %v3103 = vsub.s32 %v3102, 127
        %v3104 = vand.u32 2147483647, %v594
        %v3105 = vand.u32 %v3104, 8388607
        %v3106 = vor.u32 %v3105, 8388608
        %v3107 = vsub.s32 0, %v3106
        %v3108 = vadd.s32 %v3103, 1
        %vm3109 = vcmp.gt.s32.totalorder %v3108, 0
        %v3110 = vsel %vm3109, %v3108, 0
        %v3111 = vshrl.u32 %v3110, 5
        %v3112 = vand.u32 %v3110, 31
        %v3113 = vsub.s32 32, %v3112
        %v3114 = vshrl.u32 683565275, %v3113
        %v3115 = vshll.u32 683565275, %v3112
        %v3116 = vshrl.u32 2475754826, %v3113
        %v3117 = vor.u32 %v3115, %v3116
        %v3118 = vshll.u32 2475754826, %v3112
        %v3119 = vshrl.u32 2131351028, %v3113
        %v3120 = vor.u32 %v3118, %v3119
        %v3121 = vshll.u32 2131351028, %v3112
        %v3122 = vshrl.u32 2102212464, %v3113
        %v3123 = vor.u32 %v3121, %v3122
        %v3124 = vshll.u32 2102212464, %v3112
        %v3125 = vshrl.u32 920167782, %v3113
        %v3126 = vor.u32 %v3124, %v3125
        %v3127 = vshll.u32 920167782, %v3112
        %v3128 = vshrl.u32 1326507024, %v3113
        %v3129 = vor.u32 %v3127, %v3128
        %vm3130 = vcmp.lt.s32.totalorder %v3111, 1
        %vm3131 = vcmp.lt.s32.totalorder %v3111, 2
        %vm3132 = vcmp.lt.s32.totalorder %v3111, 3
        %vm3133 = vcmp.lt.s32.totalorder %v3111, 4
        %v3134 = vsel %vm3130, %v3114, %v3117
        %v3135 = vsel %vm3133, %v3123, 2102212464
        %v3136 = vsel %vm3132, %v3120, %v3135
        %v3137 = vsel %vm3131, %v3134, %v3136
        %v3138 = vsel %vm3130, %v3117, %v3120
        %v3139 = vsel %vm3133, %v3126, 920167782
        %v3140 = vsel %vm3132, %v3123, %v3139
        %v3141 = vsel %vm3131, %v3138, %v3140
        %v3142 = vsel %vm3130, %v3120, %v3123
        %v3143 = vsel %vm3133, %v3129, 1326507024
        %v3144 = vsel %vm3132, %v3126, %v3143
        %v3145 = vsel %vm3131, %v3142, %v3144
        %v3146 = vshll.u32 %v3106, 8
        %v3147 = vmul.u32.u64.compose %v3146, %v3145
        %v3148 = vextract.low.u32 %v3147
        %v3149 = vextract.high.u32 %v3147
        %v3150 = vmul.u32.u64.compose %v3146, %v3141
        %v3151 = vextract.low.u32 %v3150
        %v3152 = vextract.high.u32 %v3150
        %v3153 = vmul.u32 %v3146, %v3137
        %v3154 = vadd.s32 %v3149, %v3151
        %vm3155 = vc.u32 %v3149, %v3151
        %v3156 = vadd.s32 %v3152, 1
        %v3157 = vsel %vm3155, %v3156, %v3152
        %v3158 = vadd.s32 %v3153, %v3157
        %v3159 = vadd.s32 %v3158, 536870912
        %v3160 = vshrl.u32 %v3159, 30
        %v3161 = vshll.u32 %v3160, 30
        %v3162 = vsub.s32 %v3158, %v3161
        %vm3163 = vcmp.lt.s32.totalorder %v3162, 0
        %v3164 = vsub.s32 0, %v3162
        %v3165 = vsel %vm3163, %v3164, %v3162
        %v3166 = vclz %v3165
        %v3167 = vsub.s32 %v3166, 2
        %vm3168 = vcmp.gt.s32.totalorder 0, %v3167
        %v3169 = vsel %vm3168, 0, %v3167
        %v3170 = vsub.s32 32, %v3169
        %v3171 = vshll.u32 %v3162, %v3169
        %v3172 = vshrl.u32 %v3154, %v3170
        %v3173 = vor.u32 %v3171, %v3172
        %v3174 = vsub.s32 4294967266, %v3169
        %v3175 = vadd.s32 %v3174, 127
        %v3176 = vshll.u32 %v3175, 23
        %v3177 = vor.u32 4788187, %v3176
        %v3178 = vand.u32 2147483647, %v3177
        %v3180 = vcvt.s32.f32 %v3173
        %v3181 = vmul.f32 %v3180, %v3178
        %v3182 = vxor.u32 %v3181, 2147483648
        %v3183 = vsel %vm3100, %v3182, %v3181
        %v3184 = vsub.s32 4, %v3160
        %v3185 = vsel %vm3100, %v3184, %v3160
        %v3186 = vsel %vm3099, %v594, %v3183
        %v3187 = vsel %vm3099, 0, %v3185
        %v3188 = vcosq.f32.pop %v3186
        %v3189 = vsinq.f32.pop %v3186
        %vm3190 = vweird.f32 %v594
        %v3191 = vadd.s32 %v3187, 3
        %v3192 = vand.u32 %v3191, 3
        %vm3193 = vcmp.lt.s32.totalorder %v3192, 2
        %vm3194 = vcmp.eq.s32.totalorder %v3192, 0
        %v3195 = vxor.u32 %v3189, 2147483648
        %v3196 = vsel %vm3194, %v3188, %v3195
        %vm3197 = vcmp.eq.s32.totalorder %v3192, 2
        %v3198 = vxor.u32 %v3188, 2147483648
        %v3199 = vsel %vm3197, %v3198, %v3189
        %v3200 = vsel %vm3193, %v3196, %v3199
        %v3201 = vsel %vm3190, nan, %v3200
        %v3202 = vand.u32 2147483647, %v595
        %vm3203 = vcmp.le.f32.partialorder %v3202, 0.7853982
        %vm3204 = vcmp.lt.s32.totalorder %v595, 0
        %v3205 = vand.u32 %v595, 2139095040
        %v3206 = vshrl.u32 %v3205, 23
        %v3207 = vsub.s32 %v3206, 127
        %v3208 = vand.u32 2147483647, %v595
        %v3209 = vand.u32 %v3208, 8388607
        %v3210 = vor.u32 %v3209, 8388608
        %v3211 = vsub.s32 0, %v3210
        %v3212 = vadd.s32 %v3207, 1
        %vm3213 = vcmp.gt.s32.totalorder %v3212, 0
        %v3214 = vsel %vm3213, %v3212, 0
        %v3215 = vshrl.u32 %v3214, 5
        %v3216 = vand.u32 %v3214, 31
        %v3217 = vsub.s32 32, %v3216
        %v3218 = vshrl.u32 683565275, %v3217
        %v3219 = vshll.u32 683565275, %v3216
        %v3220 = vshrl.u32 2475754826, %v3217
        %v3221 = vor.u32 %v3219, %v3220
        %v3222 = vshll.u32 2475754826, %v3216
        %v3223 = vshrl.u32 2131351028, %v3217
        %v3224 = vor.u32 %v3222, %v3223
        %v3225 = vshll.u32 2131351028, %v3216
        %v3226 = vshrl.u32 2102212464, %v3217
        %v3227 = vor.u32 %v3225, %v3226
        %v3228 = vshll.u32 2102212464, %v3216
        %v3229 = vshrl.u32 920167782, %v3217
        %v3230 = vor.u32 %v3228, %v3229
        %v3231 = vshll.u32 920167782, %v3216
        %v3232 = vshrl.u32 1326507024, %v3217
        %v3233 = vor.u32 %v3231, %v3232
        %vm3234 = vcmp.lt.s32.totalorder %v3215, 1
        %vm3235 = vcmp.lt.s32.totalorder %v3215, 2
        %vm3236 = vcmp.lt.s32.totalorder %v3215, 3
        %vm3237 = vcmp.lt.s32.totalorder %v3215, 4
        %v3238 = vsel %vm3234, %v3218, %v3221
        %v3239 = vsel %vm3237, %v3227, 2102212464
        %v3240 = vsel %vm3236, %v3224, %v3239
        %v3241 = vsel %vm3235, %v3238, %v3240
        %v3242 = vsel %vm3234, %v3221, %v3224
        %v3243 = vsel %vm3237, %v3230, 920167782
        %v3244 = vsel %vm3236, %v3227, %v3243
        %v3245 = vsel %vm3235, %v3242, %v3244
        %v3246 = vsel %vm3234, %v3224, %v3227
        %v3247 = vsel %vm3237, %v3233, 1326507024
        %v3248 = vsel %vm3236, %v3230, %v3247
        %v3249 = vsel %vm3235, %v3246, %v3248
        %v3250 = vshll.u32 %v3210, 8
        %v3251 = vmul.u32.u64.compose %v3250, %v3249
        %v3252 = vextract.low.u32 %v3251
        %v3253 = vextract.high.u32 %v3251
        %v3254 = vmul.u32.u64.compose %v3250, %v3245
        %v3255 = vextract.low.u32 %v3254
        %v3256 = vextract.high.u32 %v3254
        %v3257 = vmul.u32 %v3250, %v3241
        %v3258 = vadd.s32 %v3253, %v3255
        %vm3259 = vc.u32 %v3253, %v3255
        %v3260 = vadd.s32 %v3256, 1
        %v3261 = vsel %vm3259, %v3260, %v3256
        %v3262 = vadd.s32 %v3257, %v3261
        %v3263 = vadd.s32 %v3262, 536870912
        %v3264 = vshrl.u32 %v3263, 30
        %v3265 = vshll.u32 %v3264, 30
        %v3266 = vsub.s32 %v3262, %v3265
        %vm3267 = vcmp.lt.s32.totalorder %v3266, 0
        %v3268 = vsub.s32 0, %v3266
        %v3269 = vsel %vm3267, %v3268, %v3266
        %v3270 = vclz %v3269
        %v3271 = vsub.s32 %v3270, 2
        %vm3272 = vcmp.gt.s32.totalorder 0, %v3271
        %v3273 = vsel %vm3272, 0, %v3271
        %v3274 = vsub.s32 32, %v3273
        %v3275 = vshll.u32 %v3266, %v3273
        %v3276 = vshrl.u32 %v3258, %v3274
        %v3277 = vor.u32 %v3275, %v3276
        %v3278 = vsub.s32 4294967266, %v3273
        %v3279 = vadd.s32 %v3278, 127
        %v3280 = vshll.u32 %v3279, 23
        %v3281 = vor.u32 4788187, %v3280
        %v3282 = vand.u32 2147483647, %v3281
        %v3284 = vcvt.s32.f32 %v3277
        %v3285 = vmul.f32 %v3284, %v3282
        %v3286 = vxor.u32 %v3285, 2147483648
        %v3287 = vsel %vm3204, %v3286, %v3285
        %v3288 = vsub.s32 4, %v3264
        %v3289 = vsel %vm3204, %v3288, %v3264
        %v3290 = vsel %vm3203, %v595, %v3287
        %v3291 = vsel %vm3203, 0, %v3289
        %v3292 = vcosq.f32.pop %v3290
        %v3293 = vsinq.f32.pop %v3290
        %vm3294 = vweird.f32 %v595
        %v3295 = vadd.s32 %v3291, 3
        %v3296 = vand.u32 %v3295, 3
        %vm3297 = vcmp.lt.s32.totalorder %v3296, 2
        %vm3298 = vcmp.eq.s32.totalorder %v3296, 0
        %v3299 = vxor.u32 %v3293, 2147483648
        %v3300 = vsel %vm3298, %v3292, %v3299
        %vm3301 = vcmp.eq.s32.totalorder %v3296, 2
        %v3302 = vxor.u32 %v3292, 2147483648
        %v3303 = vsel %vm3301, %v3302, %v3293
        %v3304 = vsel %vm3297, %v3300, %v3303
        %v3305 = vsel %vm3294, nan, %v3304
        %v3306 = vand.u32 2147483647, %v596
        %vm3307 = vcmp.le.f32.partialorder %v3306, 0.7853982
        %vm3308 = vcmp.lt.s32.totalorder %v596, 0
        %v3309 = vand.u32 %v596, 2139095040
        %v3310 = vshrl.u32 %v3309, 23
        %v3311 = vsub.s32 %v3310, 127
        %v3312 = vand.u32 2147483647, %v596
        %v3313 = vand.u32 %v3312, 8388607
        %v3314 = vor.u32 %v3313, 8388608
        %v3315 = vsub.s32 0, %v3314
        %v3316 = vadd.s32 %v3311, 1
        %vm3317 = vcmp.gt.s32.totalorder %v3316, 0
        %v3318 = vsel %vm3317, %v3316, 0
        %v3319 = vshrl.u32 %v3318, 5
        %v3320 = vand.u32 %v3318, 31
        %v3321 = vsub.s32 32, %v3320
        %v3322 = vshrl.u32 683565275, %v3321
        %v3323 = vshll.u32 683565275, %v3320
        %v3324 = vshrl.u32 2475754826, %v3321
        %v3325 = vor.u32 %v3323, %v3324
        %v3326 = vshll.u32 2475754826, %v3320
        %v3327 = vshrl.u32 2131351028, %v3321
        %v3328 = vor.u32 %v3326, %v3327
        %v3329 = vshll.u32 2131351028, %v3320
        %v3330 = vshrl.u32 2102212464, %v3321
        %v3331 = vor.u32 %v3329, %v3330
        %v3332 = vshll.u32 2102212464, %v3320
        %v3333 = vshrl.u32 920167782, %v3321
        %v3334 = vor.u32 %v3332, %v3333
        %v3335 = vshll.u32 920167782, %v3320
        %v3336 = vshrl.u32 1326507024, %v3321
        %v3337 = vor.u32 %v3335, %v3336
        %vm3338 = vcmp.lt.s32.totalorder %v3319, 1
        %vm3339 = vcmp.lt.s32.totalorder %v3319, 2
        %vm3340 = vcmp.lt.s32.totalorder %v3319, 3
        %vm3341 = vcmp.lt.s32.totalorder %v3319, 4
        %v3342 = vsel %vm3338, %v3322, %v3325
        %v3343 = vsel %vm3341, %v3331, 2102212464
        %v3344 = vsel %vm3340, %v3328, %v3343
        %v3345 = vsel %vm3339, %v3342, %v3344
        %v3346 = vsel %vm3338, %v3325, %v3328
        %v3347 = vsel %vm3341, %v3334, 920167782
        %v3348 = vsel %vm3340, %v3331, %v3347
        %v3349 = vsel %vm3339, %v3346, %v3348
        %v3350 = vsel %vm3338, %v3328, %v3331
        %v3351 = vsel %vm3341, %v3337, 1326507024
        %v3352 = vsel %vm3340, %v3334, %v3351
        %v3353 = vsel %vm3339, %v3350, %v3352
        %v3354 = vshll.u32 %v3314, 8
        %v3355 = vmul.u32.u64.compose %v3354, %v3353
        %v3356 = vextract.low.u32 %v3355
        %v3357 = vextract.high.u32 %v3355
        %v3358 = vmul.u32.u64.compose %v3354, %v3349
        %v3359 = vextract.low.u32 %v3358
        %v3360 = vextract.high.u32 %v3358
        %v3361 = vmul.u32 %v3354, %v3345
        %v3362 = vadd.s32 %v3357, %v3359
        %vm3363 = vc.u32 %v3357, %v3359
        %v3364 = vadd.s32 %v3360, 1
        %v3365 = vsel %vm3363, %v3364, %v3360
        %v3366 = vadd.s32 %v3361, %v3365
        %v3367 = vadd.s32 %v3366, 536870912
        %v3368 = vshrl.u32 %v3367, 30
        %v3369 = vshll.u32 %v3368, 30
        %v3370 = vsub.s32 %v3366, %v3369
        %vm3371 = vcmp.lt.s32.totalorder %v3370, 0
        %v3372 = vsub.s32 0, %v3370
        %v3373 = vsel %vm3371, %v3372, %v3370
        %v3374 = vclz %v3373
        %v3375 = vsub.s32 %v3374, 2
        %vm3376 = vcmp.gt.s32.totalorder 0, %v3375
        %v3377 = vsel %vm3376, 0, %v3375
        %v3378 = vsub.s32 32, %v3377
        %v3379 = vshll.u32 %v3370, %v3377
        %v3380 = vshrl.u32 %v3362, %v3378
        %v3381 = vor.u32 %v3379, %v3380
        %v3382 = vsub.s32 4294967266, %v3377
        %v3383 = vadd.s32 %v3382, 127
        %v3384 = vshll.u32 %v3383, 23
        %v3385 = vor.u32 4788187, %v3384
        %v3386 = vand.u32 2147483647, %v3385
        %v3388 = vcvt.s32.f32 %v3381
        %v3389 = vmul.f32 %v3388, %v3386
        %v3390 = vxor.u32 %v3389, 2147483648
        %v3391 = vsel %vm3308, %v3390, %v3389
        %v3392 = vsub.s32 4, %v3368
        %v3393 = vsel %vm3308, %v3392, %v3368
        %v3394 = vsel %vm3307, %v596, %v3391
        %v3395 = vsel %vm3307, 0, %v3393
        %v3396 = vcosq.f32.pop %v3394
        %v3397 = vsinq.f32.pop %v3394
        %vm3398 = vweird.f32 %v596
        %v3399 = vadd.s32 %v3395, 3
        %v3400 = vand.u32 %v3399, 3
        %vm3401 = vcmp.lt.s32.totalorder %v3400, 2
        %vm3402 = vcmp.eq.s32.totalorder %v3400, 0
        %v3403 = vxor.u32 %v3397, 2147483648
        %v3404 = vsel %vm3402, %v3396, %v3403
        %vm3405 = vcmp.eq.s32.totalorder %v3400, 2
        %v3406 = vxor.u32 %v3396, 2147483648
        %v3407 = vsel %vm3405, %v3406, %v3397
        %v3408 = vsel %vm3401, %v3404, %v3407
        %v3409 = vsel %vm3398, nan, %v3408
        %v3410 = vand.u32 2147483647, %v597
        %vm3411 = vcmp.le.f32.partialorder %v3410, 0.7853982
        %vm3412 = vcmp.lt.s32.totalorder %v597, 0
        %v3413 = vand.u32 %v597, 2139095040
        %v3414 = vshrl.u32 %v3413, 23
        %v3415 = vsub.s32 %v3414, 127
        %v3416 = vand.u32 2147483647, %v597
        %v3417 = vand.u32 %v3416, 8388607
        %v3418 = vor.u32 %v3417, 8388608
        %v3419 = vsub.s32 0, %v3418
        %v3420 = vadd.s32 %v3415, 1
        %vm3421 = vcmp.gt.s32.totalorder %v3420, 0
        %v3422 = vsel %vm3421, %v3420, 0
        %v3423 = vshrl.u32 %v3422, 5
        %v3424 = vand.u32 %v3422, 31
        %v3425 = vsub.s32 32, %v3424
        %v3426 = vshrl.u32 683565275, %v3425
        %v3427 = vshll.u32 683565275, %v3424
        %v3428 = vshrl.u32 2475754826, %v3425
        %v3429 = vor.u32 %v3427, %v3428
        %v3430 = vshll.u32 2475754826, %v3424
        %v3431 = vshrl.u32 2131351028, %v3425
        %v3432 = vor.u32 %v3430, %v3431
        %v3433 = vshll.u32 2131351028, %v3424
        %v3434 = vshrl.u32 2102212464, %v3425
        %v3435 = vor.u32 %v3433, %v3434
        %v3436 = vshll.u32 2102212464, %v3424
        %v3437 = vshrl.u32 920167782, %v3425
        %v3438 = vor.u32 %v3436, %v3437
        %v3439 = vshll.u32 920167782, %v3424
        %v3440 = vshrl.u32 1326507024, %v3425
        %v3441 = vor.u32 %v3439, %v3440
        %vm3442 = vcmp.lt.s32.totalorder %v3423, 1
        %vm3443 = vcmp.lt.s32.totalorder %v3423, 2
        %vm3444 = vcmp.lt.s32.totalorder %v3423, 3
        %vm3445 = vcmp.lt.s32.totalorder %v3423, 4
        %v3446 = vsel %vm3442, %v3426, %v3429
        %v3447 = vsel %vm3445, %v3435, 2102212464
        %v3448 = vsel %vm3444, %v3432, %v3447
        %v3449 = vsel %vm3443, %v3446, %v3448
        %v3450 = vsel %vm3442, %v3429, %v3432
        %v3451 = vsel %vm3445, %v3438, 920167782
        %v3452 = vsel %vm3444, %v3435, %v3451
        %v3453 = vsel %vm3443, %v3450, %v3452
        %v3454 = vsel %vm3442, %v3432, %v3435
        %v3455 = vsel %vm3445, %v3441, 1326507024
        %v3456 = vsel %vm3444, %v3438, %v3455
        %v3457 = vsel %vm3443, %v3454, %v3456
        %v3458 = vshll.u32 %v3418, 8
        %v3459 = vmul.u32.u64.compose %v3458, %v3457
        %v3460 = vextract.low.u32 %v3459
        %v3461 = vextract.high.u32 %v3459
        %v3462 = vmul.u32.u64.compose %v3458, %v3453
        %v3463 = vextract.low.u32 %v3462
        %v3464 = vextract.high.u32 %v3462
        %v3465 = vmul.u32 %v3458, %v3449
        %v3466 = vadd.s32 %v3461, %v3463
        %vm3467 = vc.u32 %v3461, %v3463
        %v3468 = vadd.s32 %v3464, 1
        %v3469 = vsel %vm3467, %v3468, %v3464
        %v3470 = vadd.s32 %v3465, %v3469
        %v3471 = vadd.s32 %v3470, 536870912
        %v3472 = vshrl.u32 %v3471, 30
        %v3473 = vshll.u32 %v3472, 30
        %v3474 = vsub.s32 %v3470, %v3473
        %vm3475 = vcmp.lt.s32.totalorder %v3474, 0
        %v3476 = vsub.s32 0, %v3474
        %v3477 = vsel %vm3475, %v3476, %v3474
        %v3478 = vclz %v3477
        %v3479 = vsub.s32 %v3478, 2
        %vm3480 = vcmp.gt.s32.totalorder 0, %v3479
        %v3481 = vsel %vm3480, 0, %v3479
        %v3482 = vsub.s32 32, %v3481
        %v3483 = vshll.u32 %v3474, %v3481
        %v3484 = vshrl.u32 %v3466, %v3482
        %v3485 = vor.u32 %v3483, %v3484
        %v3486 = vsub.s32 4294967266, %v3481
        %v3487 = vadd.s32 %v3486, 127
        %v3488 = vshll.u32 %v3487, 23
        %v3489 = vor.u32 4788187, %v3488
        %v3490 = vand.u32 2147483647, %v3489
        %v3492 = vcvt.s32.f32 %v3485
        %v3493 = vmul.f32 %v3492, %v3490
        %v3494 = vxor.u32 %v3493, 2147483648
        %v3495 = vsel %vm3412, %v3494, %v3493
        %v3496 = vsub.s32 4, %v3472
        %v3497 = vsel %vm3412, %v3496, %v3472
        %v3498 = vsel %vm3411, %v597, %v3495
        %v3499 = vsel %vm3411, 0, %v3497
        %v3500 = vcosq.f32.pop %v3498
        %v3501 = vsinq.f32.pop %v3498
        %vm3502 = vweird.f32 %v597
        %v3503 = vadd.s32 %v3499, 3
        %v3504 = vand.u32 %v3503, 3
        %vm3505 = vcmp.lt.s32.totalorder %v3504, 2
        %vm3506 = vcmp.eq.s32.totalorder %v3504, 0
        %v3507 = vxor.u32 %v3501, 2147483648
        %v3508 = vsel %vm3506, %v3500, %v3507
        %vm3509 = vcmp.eq.s32.totalorder %v3504, 2
        %v3510 = vxor.u32 %v3500, 2147483648
        %v3511 = vsel %vm3509, %v3510, %v3501
        %v3512 = vsel %vm3505, %v3508, %v3511
        %v3513 = vsel %vm3502, nan, %v3512
        %v3514 = vand.u32 2147483647, %v598
        %vm3515 = vcmp.le.f32.partialorder %v3514, 0.7853982
        %vm3516 = vcmp.lt.s32.totalorder %v598, 0
        %v3517 = vand.u32 %v598, 2139095040
        %v3518 = vshrl.u32 %v3517, 23
        %v3519 = vsub.s32 %v3518, 127
        %v3520 = vand.u32 2147483647, %v598
        %v3521 = vand.u32 %v3520, 8388607
        %v3522 = vor.u32 %v3521, 8388608
        %v3523 = vsub.s32 0, %v3522
        %v3524 = vadd.s32 %v3519, 1
        %vm3525 = vcmp.gt.s32.totalorder %v3524, 0
        %v3526 = vsel %vm3525, %v3524, 0
        %v3527 = vshrl.u32 %v3526, 5
        %v3528 = vand.u32 %v3526, 31
        %v3529 = vsub.s32 32, %v3528
        %v3530 = vshrl.u32 683565275, %v3529
        %v3531 = vshll.u32 683565275, %v3528
        %v3532 = vshrl.u32 2475754826, %v3529
        %v3533 = vor.u32 %v3531, %v3532
        %v3534 = vshll.u32 2475754826, %v3528
        %v3535 = vshrl.u32 2131351028, %v3529
        %v3536 = vor.u32 %v3534, %v3535
        %v3537 = vshll.u32 2131351028, %v3528
        %v3538 = vshrl.u32 2102212464, %v3529
        %v3539 = vor.u32 %v3537, %v3538
        %v3540 = vshll.u32 2102212464, %v3528
        %v3541 = vshrl.u32 920167782, %v3529
        %v3542 = vor.u32 %v3540, %v3541
        %v3543 = vshll.u32 920167782, %v3528
        %v3544 = vshrl.u32 1326507024, %v3529
        %v3545 = vor.u32 %v3543, %v3544
        %vm3546 = vcmp.lt.s32.totalorder %v3527, 1
        %vm3547 = vcmp.lt.s32.totalorder %v3527, 2
        %vm3548 = vcmp.lt.s32.totalorder %v3527, 3
        %vm3549 = vcmp.lt.s32.totalorder %v3527, 4
        %v3550 = vsel %vm3546, %v3530, %v3533
        %v3551 = vsel %vm3549, %v3539, 2102212464
        %v3552 = vsel %vm3548, %v3536, %v3551
        %v3553 = vsel %vm3547, %v3550, %v3552
        %v3554 = vsel %vm3546, %v3533, %v3536
        %v3555 = vsel %vm3549, %v3542, 920167782
        %v3556 = vsel %vm3548, %v3539, %v3555
        %v3557 = vsel %vm3547, %v3554, %v3556
        %v3558 = vsel %vm3546, %v3536, %v3539
        %v3559 = vsel %vm3549, %v3545, 1326507024
        %v3560 = vsel %vm3548, %v3542, %v3559
        %v3561 = vsel %vm3547, %v3558, %v3560
        %v3562 = vshll.u32 %v3522, 8
        %v3563 = vmul.u32.u64.compose %v3562, %v3561
        %v3564 = vextract.low.u32 %v3563
        %v3565 = vextract.high.u32 %v3563
        %v3566 = vmul.u32.u64.compose %v3562, %v3557
        %v3567 = vextract.low.u32 %v3566
        %v3568 = vextract.high.u32 %v3566
        %v3569 = vmul.u32 %v3562, %v3553
        %v3570 = vadd.s32 %v3565, %v3567
        %vm3571 = vc.u32 %v3565, %v3567
        %v3572 = vadd.s32 %v3568, 1
        %v3573 = vsel %vm3571, %v3572, %v3568
        %v3574 = vadd.s32 %v3569, %v3573
        %v3575 = vadd.s32 %v3574, 536870912
        %v3576 = vshrl.u32 %v3575, 30
        %v3577 = vshll.u32 %v3576, 30
        %v3578 = vsub.s32 %v3574, %v3577
        %vm3579 = vcmp.lt.s32.totalorder %v3578, 0
        %v3580 = vsub.s32 0, %v3578
        %v3581 = vsel %vm3579, %v3580, %v3578
        %v3582 = vclz %v3581
        %v3583 = vsub.s32 %v3582, 2
        %vm3584 = vcmp.gt.s32.totalorder 0, %v3583
        %v3585 = vsel %vm3584, 0, %v3583
        %v3586 = vsub.s32 32, %v3585
        %v3587 = vshll.u32 %v3578, %v3585
        %v3588 = vshrl.u32 %v3570, %v3586
        %v3589 = vor.u32 %v3587, %v3588
        %v3590 = vsub.s32 4294967266, %v3585
        %v3591 = vadd.s32 %v3590, 127
        %v3592 = vshll.u32 %v3591, 23
        %v3593 = vor.u32 4788187, %v3592
        %v3594 = vand.u32 2147483647, %v3593
        %v3596 = vcvt.s32.f32 %v3589
        %v3597 = vmul.f32 %v3596, %v3594
        %v3598 = vxor.u32 %v3597, 2147483648
        %v3599 = vsel %vm3516, %v3598, %v3597
        %v3600 = vsub.s32 4, %v3576
        %v3601 = vsel %vm3516, %v3600, %v3576
        %v3602 = vsel %vm3515, %v598, %v3599
        %v3603 = vsel %vm3515, 0, %v3601
        %v3604 = vcosq.f32.pop %v3602
        %v3605 = vsinq.f32.pop %v3602
        %vm3606 = vweird.f32 %v598
        %v3607 = vadd.s32 %v3603, 3
        %v3608 = vand.u32 %v3607, 3
        %vm3609 = vcmp.lt.s32.totalorder %v3608, 2
        %vm3610 = vcmp.eq.s32.totalorder %v3608, 0
        %v3611 = vxor.u32 %v3605, 2147483648
        %v3612 = vsel %vm3610, %v3604, %v3611
        %vm3613 = vcmp.eq.s32.totalorder %v3608, 2
        %v3614 = vxor.u32 %v3604, 2147483648
        %v3615 = vsel %vm3613, %v3614, %v3605
        %v3616 = vsel %vm3609, %v3612, %v3615
        %v3617 = vsel %vm3606, nan, %v3616
        %v3618 = vand.u32 2147483647, %v599
        %vm3619 = vcmp.le.f32.partialorder %v3618, 0.7853982
        %vm3620 = vcmp.lt.s32.totalorder %v599, 0
        %v3621 = vand.u32 %v599, 2139095040
        %v3622 = vshrl.u32 %v3621, 23
        %v3623 = vsub.s32 %v3622, 127
        %v3624 = vand.u32 2147483647, %v599
        %v3625 = vand.u32 %v3624, 8388607
        %v3626 = vor.u32 %v3625, 8388608
        %v3627 = vsub.s32 0, %v3626
        %v3628 = vadd.s32 %v3623, 1
        %vm3629 = vcmp.gt.s32.totalorder %v3628, 0
        %v3630 = vsel %vm3629, %v3628, 0
        %v3631 = vshrl.u32 %v3630, 5
        %v3632 = vand.u32 %v3630, 31
        %v3633 = vsub.s32 32, %v3632
        %v3634 = vshrl.u32 683565275, %v3633
        %v3635 = vshll.u32 683565275, %v3632
        %v3636 = vshrl.u32 2475754826, %v3633
        %v3637 = vor.u32 %v3635, %v3636
        %v3638 = vshll.u32 2475754826, %v3632
        %v3639 = vshrl.u32 2131351028, %v3633
        %v3640 = vor.u32 %v3638, %v3639
        %v3641 = vshll.u32 2131351028, %v3632
        %v3642 = vshrl.u32 2102212464, %v3633
        %v3643 = vor.u32 %v3641, %v3642
        %v3644 = vshll.u32 2102212464, %v3632
        %v3645 = vshrl.u32 920167782, %v3633
        %v3646 = vor.u32 %v3644, %v3645
        %v3647 = vshll.u32 920167782, %v3632
        %v3648 = vshrl.u32 1326507024, %v3633
        %v3649 = vor.u32 %v3647, %v3648
        %vm3650 = vcmp.lt.s32.totalorder %v3631, 1
        %vm3651 = vcmp.lt.s32.totalorder %v3631, 2
        %vm3652 = vcmp.lt.s32.totalorder %v3631, 3
        %vm3653 = vcmp.lt.s32.totalorder %v3631, 4
        %v3654 = vsel %vm3650, %v3634, %v3637
        %v3655 = vsel %vm3653, %v3643, 2102212464
        %v3656 = vsel %vm3652, %v3640, %v3655
        %v3657 = vsel %vm3651, %v3654, %v3656
        %v3658 = vsel %vm3650, %v3637, %v3640
        %v3659 = vsel %vm3653, %v3646, 920167782
        %v3660 = vsel %vm3652, %v3643, %v3659
        %v3661 = vsel %vm3651, %v3658, %v3660
        %v3662 = vsel %vm3650, %v3640, %v3643
        %v3663 = vsel %vm3653, %v3649, 1326507024
        %v3664 = vsel %vm3652, %v3646, %v3663
        %v3665 = vsel %vm3651, %v3662, %v3664
        %v3666 = vshll.u32 %v3626, 8
        %v3667 = vmul.u32.u64.compose %v3666, %v3665
        %v3668 = vextract.low.u32 %v3667
        %v3669 = vextract.high.u32 %v3667
        %v3670 = vmul.u32.u64.compose %v3666, %v3661
        %v3671 = vextract.low.u32 %v3670
        %v3672 = vextract.high.u32 %v3670
        %v3673 = vmul.u32 %v3666, %v3657
        %v3674 = vadd.s32 %v3669, %v3671
        %vm3675 = vc.u32 %v3669, %v3671
        %v3676 = vadd.s32 %v3672, 1
        %v3677 = vsel %vm3675, %v3676, %v3672
        %v3678 = vadd.s32 %v3673, %v3677
        %v3679 = vadd.s32 %v3678, 536870912
        %v3680 = vshrl.u32 %v3679, 30
        %v3681 = vshll.u32 %v3680, 30
        %v3682 = vsub.s32 %v3678, %v3681
        %vm3683 = vcmp.lt.s32.totalorder %v3682, 0
        %v3684 = vsub.s32 0, %v3682
        %v3685 = vsel %vm3683, %v3684, %v3682
        %v3686 = vclz %v3685
        %v3687 = vsub.s32 %v3686, 2
        %vm3688 = vcmp.gt.s32.totalorder 0, %v3687
        %v3689 = vsel %vm3688, 0, %v3687
        %v3690 = vsub.s32 32, %v3689
        %v3691 = vshll.u32 %v3682, %v3689
        %v3692 = vshrl.u32 %v3674, %v3690
        %v3693 = vor.u32 %v3691, %v3692
        %v3694 = vsub.s32 4294967266, %v3689
        %v3695 = vadd.s32 %v3694, 127
        %v3696 = vshll.u32 %v3695, 23
        %v3697 = vor.u32 4788187, %v3696
        %v3698 = vand.u32 2147483647, %v3697
        %v3700 = vcvt.s32.f32 %v3693
        %v3701 = vmul.f32 %v3700, %v3698
        %v3702 = vxor.u32 %v3701, 2147483648
        %v3703 = vsel %vm3620, %v3702, %v3701
        %v3704 = vsub.s32 4, %v3680
        %v3705 = vsel %vm3620, %v3704, %v3680
        %v3706 = vsel %vm3619, %v599, %v3703
        %v3707 = vsel %vm3619, 0, %v3705
        %v3708 = vcosq.f32.pop %v3706
        %v3709 = vsinq.f32.pop %v3706
        %vm3710 = vweird.f32 %v599
        %v3711 = vadd.s32 %v3707, 3
        %v3712 = vand.u32 %v3711, 3
        %vm3713 = vcmp.lt.s32.totalorder %v3712, 2
        %vm3714 = vcmp.eq.s32.totalorder %v3712, 0
        %v3715 = vxor.u32 %v3709, 2147483648
        %v3716 = vsel %vm3714, %v3708, %v3715
        %vm3717 = vcmp.eq.s32.totalorder %v3712, 2
        %v3718 = vxor.u32 %v3708, 2147483648
        %v3719 = vsel %vm3717, %v3718, %v3709
        %v3720 = vsel %vm3713, %v3716, %v3719
        %v3721 = vsel %vm3710, nan, %v3720
        %v3722 = vand.u32 2147483647, %v600
        %vm3723 = vcmp.le.f32.partialorder %v3722, 0.7853982
        %vm3724 = vcmp.lt.s32.totalorder %v600, 0
        %v3725 = vand.u32 %v600, 2139095040
        %v3726 = vshrl.u32 %v3725, 23
        %v3727 = vsub.s32 %v3726, 127
        %v3728 = vand.u32 2147483647, %v600
        %v3729 = vand.u32 %v3728, 8388607
        %v3730 = vor.u32 %v3729, 8388608
        %v3731 = vsub.s32 0, %v3730
        %v3732 = vadd.s32 %v3727, 1
        %vm3733 = vcmp.gt.s32.totalorder %v3732, 0
        %v3734 = vsel %vm3733, %v3732, 0
        %v3735 = vshrl.u32 %v3734, 5
        %v3736 = vand.u32 %v3734, 31
        %v3737 = vsub.s32 32, %v3736
        %v3738 = vshrl.u32 683565275, %v3737
        %v3739 = vshll.u32 683565275, %v3736
        %v3740 = vshrl.u32 2475754826, %v3737
        %v3741 = vor.u32 %v3739, %v3740
        %v3742 = vshll.u32 2475754826, %v3736
        %v3743 = vshrl.u32 2131351028, %v3737
        %v3744 = vor.u32 %v3742, %v3743
        %v3745 = vshll.u32 2131351028, %v3736
        %v3746 = vshrl.u32 2102212464, %v3737
        %v3747 = vor.u32 %v3745, %v3746
        %v3748 = vshll.u32 2102212464, %v3736
        %v3749 = vshrl.u32 920167782, %v3737
        %v3750 = vor.u32 %v3748, %v3749
        %v3751 = vshll.u32 920167782, %v3736
        %v3752 = vshrl.u32 1326507024, %v3737
        %v3753 = vor.u32 %v3751, %v3752
        %vm3754 = vcmp.lt.s32.totalorder %v3735, 1
        %vm3755 = vcmp.lt.s32.totalorder %v3735, 2
        %vm3756 = vcmp.lt.s32.totalorder %v3735, 3
        %vm3757 = vcmp.lt.s32.totalorder %v3735, 4
        %v3758 = vsel %vm3754, %v3738, %v3741
        %v3759 = vsel %vm3757, %v3747, 2102212464
        %v3760 = vsel %vm3756, %v3744, %v3759
        %v3761 = vsel %vm3755, %v3758, %v3760
        %v3762 = vsel %vm3754, %v3741, %v3744
        %v3763 = vsel %vm3757, %v3750, 920167782
        %v3764 = vsel %vm3756, %v3747, %v3763
        %v3765 = vsel %vm3755, %v3762, %v3764
        %v3766 = vsel %vm3754, %v3744, %v3747
        %v3767 = vsel %vm3757, %v3753, 1326507024
        %v3768 = vsel %vm3756, %v3750, %v3767
        %v3769 = vsel %vm3755, %v3766, %v3768
        %v3770 = vshll.u32 %v3730, 8
        %v3771 = vmul.u32.u64.compose %v3770, %v3769
        %v3772 = vextract.low.u32 %v3771
        %v3773 = vextract.high.u32 %v3771
        %v3774 = vmul.u32.u64.compose %v3770, %v3765
        %v3775 = vextract.low.u32 %v3774
        %v3776 = vextract.high.u32 %v3774
        %v3777 = vmul.u32 %v3770, %v3761
        %v3778 = vadd.s32 %v3773, %v3775
        %vm3779 = vc.u32 %v3773, %v3775
        %v3780 = vadd.s32 %v3776, 1
        %v3781 = vsel %vm3779, %v3780, %v3776
        %v3782 = vadd.s32 %v3777, %v3781
        %v3783 = vadd.s32 %v3782, 536870912
        %v3784 = vshrl.u32 %v3783, 30
        %v3785 = vshll.u32 %v3784, 30
        %v3786 = vsub.s32 %v3782, %v3785
        %vm3787 = vcmp.lt.s32.totalorder %v3786, 0
        %v3788 = vsub.s32 0, %v3786
        %v3789 = vsel %vm3787, %v3788, %v3786
        %v3790 = vclz %v3789
        %v3791 = vsub.s32 %v3790, 2
        %vm3792 = vcmp.gt.s32.totalorder 0, %v3791
        %v3793 = vsel %vm3792, 0, %v3791
        %v3794 = vsub.s32 32, %v3793
        %v3795 = vshll.u32 %v3786, %v3793
        %v3796 = vshrl.u32 %v3778, %v3794
        %v3797 = vor.u32 %v3795, %v3796
        %v3798 = vsub.s32 4294967266, %v3793
        %v3799 = vadd.s32 %v3798, 127
        %v3800 = vshll.u32 %v3799, 23
        %v3801 = vor.u32 4788187, %v3800
        %v3802 = vand.u32 2147483647, %v3801
        %v3804 = vcvt.s32.f32 %v3797
        %v3805 = vmul.f32 %v3804, %v3802
        %v3806 = vxor.u32 %v3805, 2147483648
        %v3807 = vsel %vm3724, %v3806, %v3805
        %v3808 = vsub.s32 4, %v3784
        %v3809 = vsel %vm3724, %v3808, %v3784
        %v3810 = vsel %vm3723, %v600, %v3807
        %v3811 = vsel %vm3723, 0, %v3809
        %v3812 = vcosq.f32.pop %v3810
        %v3813 = vsinq.f32.pop %v3810
        %vm3814 = vweird.f32 %v600
        %v3815 = vadd.s32 %v3811, 3
        %v3816 = vand.u32 %v3815, 3
        %vm3817 = vcmp.lt.s32.totalorder %v3816, 2
        %vm3818 = vcmp.eq.s32.totalorder %v3816, 0
        %v3819 = vxor.u32 %v3813, 2147483648
        %v3820 = vsel %vm3818, %v3812, %v3819
        %vm3821 = vcmp.eq.s32.totalorder %v3816, 2
        %v3822 = vxor.u32 %v3812, 2147483648
        %v3823 = vsel %vm3821, %v3822, %v3813
        %v3824 = vsel %vm3817, %v3820, %v3823
        %v3825 = vsel %vm3814, nan, %v3824
        %v3826 = vand.u32 2147483647, %v601
        %vm3827 = vcmp.le.f32.partialorder %v3826, 0.7853982
        %vm3828 = vcmp.lt.s32.totalorder %v601, 0
        %v3829 = vand.u32 %v601, 2139095040
        %v3830 = vshrl.u32 %v3829, 23
        %v3831 = vsub.s32 %v3830, 127
        %v3832 = vand.u32 2147483647, %v601
        %v3833 = vand.u32 %v3832, 8388607
        %v3834 = vor.u32 %v3833, 8388608
        %v3835 = vsub.s32 0, %v3834
        %v3836 = vadd.s32 %v3831, 1
        %vm3837 = vcmp.gt.s32.totalorder %v3836, 0
        %v3838 = vsel %vm3837, %v3836, 0
        %v3839 = vshrl.u32 %v3838, 5
        %v3840 = vand.u32 %v3838, 31
        %v3841 = vsub.s32 32, %v3840
        %v3842 = vshrl.u32 683565275, %v3841
        %v3843 = vshll.u32 683565275, %v3840
        %v3844 = vshrl.u32 2475754826, %v3841
        %v3845 = vor.u32 %v3843, %v3844
        %v3846 = vshll.u32 2475754826, %v3840
        %v3847 = vshrl.u32 2131351028, %v3841
        %v3848 = vor.u32 %v3846, %v3847
        %v3849 = vshll.u32 2131351028, %v3840
        %v3850 = vshrl.u32 2102212464, %v3841
        %v3851 = vor.u32 %v3849, %v3850
        %v3852 = vshll.u32 2102212464, %v3840
        %v3853 = vshrl.u32 920167782, %v3841
        %v3854 = vor.u32 %v3852, %v3853
        %v3855 = vshll.u32 920167782, %v3840
        %v3856 = vshrl.u32 1326507024, %v3841
        %v3857 = vor.u32 %v3855, %v3856
        %vm3858 = vcmp.lt.s32.totalorder %v3839, 1
        %vm3859 = vcmp.lt.s32.totalorder %v3839, 2
        %vm3860 = vcmp.lt.s32.totalorder %v3839, 3
        %vm3861 = vcmp.lt.s32.totalorder %v3839, 4
        %v3862 = vsel %vm3858, %v3842, %v3845
        %v3863 = vsel %vm3861, %v3851, 2102212464
        %v3864 = vsel %vm3860, %v3848, %v3863
        %v3865 = vsel %vm3859, %v3862, %v3864
        %v3866 = vsel %vm3858, %v3845, %v3848
        %v3867 = vsel %vm3861, %v3854, 920167782
        %v3868 = vsel %vm3860, %v3851, %v3867
        %v3869 = vsel %vm3859, %v3866, %v3868
        %v3870 = vsel %vm3858, %v3848, %v3851
        %v3871 = vsel %vm3861, %v3857, 1326507024
        %v3872 = vsel %vm3860, %v3854, %v3871
        %v3873 = vsel %vm3859, %v3870, %v3872
        %v3874 = vshll.u32 %v3834, 8
        %v3875 = vmul.u32.u64.compose %v3874, %v3873
        %v3876 = vextract.low.u32 %v3875
        %v3877 = vextract.high.u32 %v3875
        %v3878 = vmul.u32.u64.compose %v3874, %v3869
        %v3879 = vextract.low.u32 %v3878
        %v3880 = vextract.high.u32 %v3878
        %v3881 = vmul.u32 %v3874, %v3865
        %v3882 = vadd.s32 %v3877, %v3879
        %vm3883 = vc.u32 %v3877, %v3879
        %v3884 = vadd.s32 %v3880, 1
        %v3885 = vsel %vm3883, %v3884, %v3880
        %v3886 = vadd.s32 %v3881, %v3885
        %v3887 = vadd.s32 %v3886, 536870912
        %v3888 = vshrl.u32 %v3887, 30
        %v3889 = vshll.u32 %v3888, 30
        %v3890 = vsub.s32 %v3886, %v3889
        %vm3891 = vcmp.lt.s32.totalorder %v3890, 0
        %v3892 = vsub.s32 0, %v3890
        %v3893 = vsel %vm3891, %v3892, %v3890
        %v3894 = vclz %v3893
        %v3895 = vsub.s32 %v3894, 2
        %vm3896 = vcmp.gt.s32.totalorder 0, %v3895
        %v3897 = vsel %vm3896, 0, %v3895
        %v3898 = vsub.s32 32, %v3897
        %v3899 = vshll.u32 %v3890, %v3897
        %v3900 = vshrl.u32 %v3882, %v3898
        %v3901 = vor.u32 %v3899, %v3900
        %v3902 = vsub.s32 4294967266, %v3897
        %v3903 = vadd.s32 %v3902, 127
        %v3904 = vshll.u32 %v3903, 23
        %v3905 = vor.u32 4788187, %v3904
        %v3906 = vand.u32 2147483647, %v3905
        %v3908 = vcvt.s32.f32 %v3901
        %v3909 = vmul.f32 %v3908, %v3906
        %v3910 = vxor.u32 %v3909, 2147483648
        %v3911 = vsel %vm3828, %v3910, %v3909
        %v3912 = vsub.s32 4, %v3888
        %v3913 = vsel %vm3828, %v3912, %v3888
        %v3914 = vsel %vm3827, %v601, %v3911
        %v3915 = vsel %vm3827, 0, %v3913
        %v3916 = vcosq.f32.pop %v3914
        %v3917 = vsinq.f32.pop %v3914
        %vm3918 = vweird.f32 %v601
        %v3919 = vadd.s32 %v3915, 3
        %v3920 = vand.u32 %v3919, 3
        %vm3921 = vcmp.lt.s32.totalorder %v3920, 2
        %vm3922 = vcmp.eq.s32.totalorder %v3920, 0
        %v3923 = vxor.u32 %v3917, 2147483648
        %v3924 = vsel %vm3922, %v3916, %v3923
        %vm3925 = vcmp.eq.s32.totalorder %v3920, 2
        %v3926 = vxor.u32 %v3916, 2147483648
        %v3927 = vsel %vm3925, %v3926, %v3917
        %v3928 = vsel %vm3921, %v3924, %v3927
        %v3929 = vsel %vm3918, nan, %v3928
        %v3930 = vand.u32 2147483647, %v570
        %vm3931 = vcmp.le.f32.partialorder %v3930, 0.7853982
        %vm3932 = vcmp.lt.s32.totalorder %v570, 0
        %v3933 = vand.u32 %v570, 2139095040
        %v3934 = vshrl.u32 %v3933, 23
        %v3935 = vsub.s32 %v3934, 127
        %v3936 = vand.u32 2147483647, %v570
        %v3937 = vand.u32 %v3936, 8388607
        %v3938 = vor.u32 %v3937, 8388608
        %v3939 = vsub.s32 0, %v3938
        %v3940 = vadd.s32 %v3935, 1
        %vm3941 = vcmp.gt.s32.totalorder %v3940, 0
        %v3942 = vsel %vm3941, %v3940, 0
        %v3943 = vshrl.u32 %v3942, 5
        %v3944 = vand.u32 %v3942, 31
        %v3945 = vsub.s32 32, %v3944
        %v3946 = vshrl.u32 683565275, %v3945
        %v3947 = vshll.u32 683565275, %v3944
        %v3948 = vshrl.u32 2475754826, %v3945
        %v3949 = vor.u32 %v3947, %v3948
        %v3950 = vshll.u32 2475754826, %v3944
        %v3951 = vshrl.u32 2131351028, %v3945
        %v3952 = vor.u32 %v3950, %v3951
        %v3953 = vshll.u32 2131351028, %v3944
        %v3954 = vshrl.u32 2102212464, %v3945
        %v3955 = vor.u32 %v3953, %v3954
        %v3956 = vshll.u32 2102212464, %v3944
        %v3957 = vshrl.u32 920167782, %v3945
        %v3958 = vor.u32 %v3956, %v3957
        %v3959 = vshll.u32 920167782, %v3944
        %v3960 = vshrl.u32 1326507024, %v3945
        %v3961 = vor.u32 %v3959, %v3960
        %vm3962 = vcmp.lt.s32.totalorder %v3943, 1
        %vm3963 = vcmp.lt.s32.totalorder %v3943, 2
        %vm3964 = vcmp.lt.s32.totalorder %v3943, 3
        %vm3965 = vcmp.lt.s32.totalorder %v3943, 4
        %v3966 = vsel %vm3962, %v3946, %v3949
        %v3967 = vsel %vm3965, %v3955, 2102212464
        %v3968 = vsel %vm3964, %v3952, %v3967
        %v3969 = vsel %vm3963, %v3966, %v3968
        %v3970 = vsel %vm3962, %v3949, %v3952
        %v3971 = vsel %vm3965, %v3958, 920167782
        %v3972 = vsel %vm3964, %v3955, %v3971
        %v3973 = vsel %vm3963, %v3970, %v3972
        %v3974 = vsel %vm3962, %v3952, %v3955
        %v3975 = vsel %vm3965, %v3961, 1326507024
        %v3976 = vsel %vm3964, %v3958, %v3975
        %v3977 = vsel %vm3963, %v3974, %v3976
        %v3978 = vshll.u32 %v3938, 8
        %v3979 = vmul.u32.u64.compose %v3978, %v3977
        %v3980 = vextract.low.u32 %v3979
        %v3981 = vextract.high.u32 %v3979
        %v3982 = vmul.u32.u64.compose %v3978, %v3973
        %v3983 = vextract.low.u32 %v3982
        %v3984 = vextract.high.u32 %v3982
        %v3985 = vmul.u32 %v3978, %v3969
        %v3986 = vadd.s32 %v3981, %v3983
        %vm3987 = vc.u32 %v3981, %v3983
        %v3988 = vadd.s32 %v3984, 1
        %v3989 = vsel %vm3987, %v3988, %v3984
        %v3990 = vadd.s32 %v3985, %v3989
        %v3991 = vadd.s32 %v3990, 536870912
        %v3992 = vshrl.u32 %v3991, 30
        %v3993 = vshll.u32 %v3992, 30
        %v3994 = vsub.s32 %v3990, %v3993
        %vm3995 = vcmp.lt.s32.totalorder %v3994, 0
        %v3996 = vsub.s32 0, %v3994
        %v3997 = vsel %vm3995, %v3996, %v3994
        %v3998 = vclz %v3997
        %v3999 = vsub.s32 %v3998, 2
        %vm4000 = vcmp.gt.s32.totalorder 0, %v3999
        %v4001 = vsel %vm4000, 0, %v3999
        %v4002 = vsub.s32 32, %v4001
        %v4003 = vshll.u32 %v3994, %v4001
        %v4004 = vshrl.u32 %v3986, %v4002
        %v4005 = vor.u32 %v4003, %v4004
        %v4006 = vsub.s32 4294967266, %v4001
        %v4007 = vadd.s32 %v4006, 127
        %v4008 = vshll.u32 %v4007, 23
        %v4009 = vor.u32 4788187, %v4008
        %v4010 = vand.u32 2147483647, %v4009
        %v4012 = vcvt.s32.f32 %v4005
        %v4013 = vmul.f32 %v4012, %v4010
        %v4014 = vxor.u32 %v4013, 2147483648
        %v4015 = vsel %vm3932, %v4014, %v4013
        %v4016 = vsub.s32 4, %v3992
        %v4017 = vsel %vm3932, %v4016, %v3992
        %v4018 = vsel %vm3931, %v570, %v4015
        %v4019 = vsel %vm3931, 0, %v4017
        %v4020 = vcosq.f32.pop %v4018
        %v4021 = vsinq.f32.pop %v4018
        %vm4022 = vweird.f32 %v570
        %v4023 = vand.u32 %v4019, 3
        %vm4024 = vcmp.lt.s32.totalorder %v4023, 2
        %vm4025 = vcmp.eq.s32.totalorder %v4023, 0
        %v4026 = vxor.u32 %v4021, 2147483648
        %v4027 = vsel %vm4025, %v4020, %v4026
        %vm4028 = vcmp.eq.s32.totalorder %v4023, 2
        %v4029 = vxor.u32 %v4020, 2147483648
        %v4030 = vsel %vm4028, %v4029, %v4021
        %v4031 = vsel %vm4024, %v4027, %v4030
        %v4032 = vsel %vm4022, nan, %v4031
        %v4033 = vand.u32 2147483647, %v571
        %vm4034 = vcmp.le.f32.partialorder %v4033, 0.7853982
        %vm4035 = vcmp.lt.s32.totalorder %v571, 0
        %v4036 = vand.u32 %v571, 2139095040
        %v4037 = vshrl.u32 %v4036, 23
        %v4038 = vsub.s32 %v4037, 127
        %v4039 = vand.u32 2147483647, %v571
        %v4040 = vand.u32 %v4039, 8388607
        %v4041 = vor.u32 %v4040, 8388608
        %v4042 = vsub.s32 0, %v4041
        %v4043 = vadd.s32 %v4038, 1
        %vm4044 = vcmp.gt.s32.totalorder %v4043, 0
        %v4045 = vsel %vm4044, %v4043, 0
        %v4046 = vshrl.u32 %v4045, 5
        %v4047 = vand.u32 %v4045, 31
        %v4048 = vsub.s32 32, %v4047
        %v4049 = vshrl.u32 683565275, %v4048
        %v4050 = vshll.u32 683565275, %v4047
        %v4051 = vshrl.u32 2475754826, %v4048
        %v4052 = vor.u32 %v4050, %v4051
        %v4053 = vshll.u32 2475754826, %v4047
        %v4054 = vshrl.u32 2131351028, %v4048
        %v4055 = vor.u32 %v4053, %v4054
        %v4056 = vshll.u32 2131351028, %v4047
        %v4057 = vshrl.u32 2102212464, %v4048
        %v4058 = vor.u32 %v4056, %v4057
        %v4059 = vshll.u32 2102212464, %v4047
        %v4060 = vshrl.u32 920167782, %v4048
        %v4061 = vor.u32 %v4059, %v4060
        %v4062 = vshll.u32 920167782, %v4047
        %v4063 = vshrl.u32 1326507024, %v4048
        %v4064 = vor.u32 %v4062, %v4063
        %vm4065 = vcmp.lt.s32.totalorder %v4046, 1
        %vm4066 = vcmp.lt.s32.totalorder %v4046, 2
        %vm4067 = vcmp.lt.s32.totalorder %v4046, 3
        %vm4068 = vcmp.lt.s32.totalorder %v4046, 4
        %v4069 = vsel %vm4065, %v4049, %v4052
        %v4070 = vsel %vm4068, %v4058, 2102212464
        %v4071 = vsel %vm4067, %v4055, %v4070
        %v4072 = vsel %vm4066, %v4069, %v4071
        %v4073 = vsel %vm4065, %v4052, %v4055
        %v4074 = vsel %vm4068, %v4061, 920167782
        %v4075 = vsel %vm4067, %v4058, %v4074
        %v4076 = vsel %vm4066, %v4073, %v4075
        %v4077 = vsel %vm4065, %v4055, %v4058
        %v4078 = vsel %vm4068, %v4064, 1326507024
        %v4079 = vsel %vm4067, %v4061, %v4078
        %v4080 = vsel %vm4066, %v4077, %v4079
        %v4081 = vshll.u32 %v4041, 8
        %v4082 = vmul.u32.u64.compose %v4081, %v4080
        %v4083 = vextract.low.u32 %v4082
        %v4084 = vextract.high.u32 %v4082
        %v4085 = vmul.u32.u64.compose %v4081, %v4076
        %v4086 = vextract.low.u32 %v4085
        %v4087 = vextract.high.u32 %v4085
        %v4088 = vmul.u32 %v4081, %v4072
        %v4089 = vadd.s32 %v4084, %v4086
        %vm4090 = vc.u32 %v4084, %v4086
        %v4091 = vadd.s32 %v4087, 1
        %v4092 = vsel %vm4090, %v4091, %v4087
        %v4093 = vadd.s32 %v4088, %v4092
        %v4094 = vadd.s32 %v4093, 536870912
        %v4095 = vshrl.u32 %v4094, 30
        %v4096 = vshll.u32 %v4095, 30
        %v4097 = vsub.s32 %v4093, %v4096
        %vm4098 = vcmp.lt.s32.totalorder %v4097, 0
        %v4099 = vsub.s32 0, %v4097
        %v4100 = vsel %vm4098, %v4099, %v4097
        %v4101 = vclz %v4100
        %v4102 = vsub.s32 %v4101, 2
        %vm4103 = vcmp.gt.s32.totalorder 0, %v4102
        %v4104 = vsel %vm4103, 0, %v4102
        %v4105 = vsub.s32 32, %v4104
        %v4106 = vshll.u32 %v4097, %v4104
        %v4107 = vshrl.u32 %v4089, %v4105
        %v4108 = vor.u32 %v4106, %v4107
        %v4109 = vsub.s32 4294967266, %v4104
        %v4110 = vadd.s32 %v4109, 127
        %v4111 = vshll.u32 %v4110, 23
        %v4112 = vor.u32 4788187, %v4111
        %v4113 = vand.u32 2147483647, %v4112
        %v4115 = vcvt.s32.f32 %v4108
        %v4116 = vmul.f32 %v4115, %v4113
        %v4117 = vxor.u32 %v4116, 2147483648
        %v4118 = vsel %vm4035, %v4117, %v4116
        %v4119 = vsub.s32 4, %v4095
        %v4120 = vsel %vm4035, %v4119, %v4095
        %v4121 = vsel %vm4034, %v571, %v4118
        %v4122 = vsel %vm4034, 0, %v4120
        %v4123 = vcosq.f32.pop %v4121
        %v4124 = vsinq.f32.pop %v4121
        %vm4125 = vweird.f32 %v571
        %v4126 = vand.u32 %v4122, 3
        %vm4127 = vcmp.lt.s32.totalorder %v4126, 2
        %vm4128 = vcmp.eq.s32.totalorder %v4126, 0
        %v4129 = vxor.u32 %v4124, 2147483648
        %v4130 = vsel %vm4128, %v4123, %v4129
        %vm4131 = vcmp.eq.s32.totalorder %v4126, 2
        %v4132 = vxor.u32 %v4123, 2147483648
        %v4133 = vsel %vm4131, %v4132, %v4124
        %v4134 = vsel %vm4127, %v4130, %v4133
        %v4135 = vsel %vm4125, nan, %v4134
        %v4136 = vand.u32 2147483647, %v572
        %vm4137 = vcmp.le.f32.partialorder %v4136, 0.7853982
        %vm4138 = vcmp.lt.s32.totalorder %v572, 0
        %v4139 = vand.u32 %v572, 2139095040
        %v4140 = vshrl.u32 %v4139, 23
        %v4141 = vsub.s32 %v4140, 127
        %v4142 = vand.u32 2147483647, %v572
        %v4143 = vand.u32 %v4142, 8388607
        %v4144 = vor.u32 %v4143, 8388608
        %v4145 = vsub.s32 0, %v4144
        %v4146 = vadd.s32 %v4141, 1
        %vm4147 = vcmp.gt.s32.totalorder %v4146, 0
        %v4148 = vsel %vm4147, %v4146, 0
        %v4149 = vshrl.u32 %v4148, 5
        %v4150 = vand.u32 %v4148, 31
        %v4151 = vsub.s32 32, %v4150
        %v4152 = vshrl.u32 683565275, %v4151
        %v4153 = vshll.u32 683565275, %v4150
        %v4154 = vshrl.u32 2475754826, %v4151
        %v4155 = vor.u32 %v4153, %v4154
        %v4156 = vshll.u32 2475754826, %v4150
        %v4157 = vshrl.u32 2131351028, %v4151
        %v4158 = vor.u32 %v4156, %v4157
        %v4159 = vshll.u32 2131351028, %v4150
        %v4160 = vshrl.u32 2102212464, %v4151
        %v4161 = vor.u32 %v4159, %v4160
        %v4162 = vshll.u32 2102212464, %v4150
        %v4163 = vshrl.u32 920167782, %v4151
        %v4164 = vor.u32 %v4162, %v4163
        %v4165 = vshll.u32 920167782, %v4150
        %v4166 = vshrl.u32 1326507024, %v4151
        %v4167 = vor.u32 %v4165, %v4166
        %vm4168 = vcmp.lt.s32.totalorder %v4149, 1
        %vm4169 = vcmp.lt.s32.totalorder %v4149, 2
        %vm4170 = vcmp.lt.s32.totalorder %v4149, 3
        %vm4171 = vcmp.lt.s32.totalorder %v4149, 4
        %v4172 = vsel %vm4168, %v4152, %v4155
        %v4173 = vsel %vm4171, %v4161, 2102212464
        %v4174 = vsel %vm4170, %v4158, %v4173
        %v4175 = vsel %vm4169, %v4172, %v4174
        %v4176 = vsel %vm4168, %v4155, %v4158
        %v4177 = vsel %vm4171, %v4164, 920167782
        %v4178 = vsel %vm4170, %v4161, %v4177
        %v4179 = vsel %vm4169, %v4176, %v4178
        %v4180 = vsel %vm4168, %v4158, %v4161
        %v4181 = vsel %vm4171, %v4167, 1326507024
        %v4182 = vsel %vm4170, %v4164, %v4181
        %v4183 = vsel %vm4169, %v4180, %v4182
        %v4184 = vshll.u32 %v4144, 8
        %v4185 = vmul.u32.u64.compose %v4184, %v4183
        %v4186 = vextract.low.u32 %v4185
        %v4187 = vextract.high.u32 %v4185
        %v4188 = vmul.u32.u64.compose %v4184, %v4179
        %v4189 = vextract.low.u32 %v4188
        %v4190 = vextract.high.u32 %v4188
        %v4191 = vmul.u32 %v4184, %v4175
        %v4192 = vadd.s32 %v4187, %v4189
        %vm4193 = vc.u32 %v4187, %v4189
        %v4194 = vadd.s32 %v4190, 1
        %v4195 = vsel %vm4193, %v4194, %v4190
        %v4196 = vadd.s32 %v4191, %v4195
        %v4197 = vadd.s32 %v4196, 536870912
        %v4198 = vshrl.u32 %v4197, 30
        %v4199 = vshll.u32 %v4198, 30
        %v4200 = vsub.s32 %v4196, %v4199
        %vm4201 = vcmp.lt.s32.totalorder %v4200, 0
        %v4202 = vsub.s32 0, %v4200
        %v4203 = vsel %vm4201, %v4202, %v4200
        %v4204 = vclz %v4203
        %v4205 = vsub.s32 %v4204, 2
        %vm4206 = vcmp.gt.s32.totalorder 0, %v4205
        %v4207 = vsel %vm4206, 0, %v4205
        %v4208 = vsub.s32 32, %v4207
        %v4209 = vshll.u32 %v4200, %v4207
        %v4210 = vshrl.u32 %v4192, %v4208
        %v4211 = vor.u32 %v4209, %v4210
        %v4212 = vsub.s32 4294967266, %v4207
        %v4213 = vadd.s32 %v4212, 127
        %v4214 = vshll.u32 %v4213, 23
        %v4215 = vor.u32 4788187, %v4214
        %v4216 = vand.u32 2147483647, %v4215
        %v4218 = vcvt.s32.f32 %v4211
        %v4219 = vmul.f32 %v4218, %v4216
        %v4220 = vxor.u32 %v4219, 2147483648
        %v4221 = vsel %vm4138, %v4220, %v4219
        %v4222 = vsub.s32 4, %v4198
        %v4223 = vsel %vm4138, %v4222, %v4198
        %v4224 = vsel %vm4137, %v572, %v4221
        %v4225 = vsel %vm4137, 0, %v4223
        %v4226 = vcosq.f32.pop %v4224
        %v4227 = vsinq.f32.pop %v4224
        %vm4228 = vweird.f32 %v572
        %v4229 = vand.u32 %v4225, 3
        %vm4230 = vcmp.lt.s32.totalorder %v4229, 2
        %vm4231 = vcmp.eq.s32.totalorder %v4229, 0
        %v4232 = vxor.u32 %v4227, 2147483648
        %v4233 = vsel %vm4231, %v4226, %v4232
        %vm4234 = vcmp.eq.s32.totalorder %v4229, 2
        %v4235 = vxor.u32 %v4226, 2147483648
        %v4236 = vsel %vm4234, %v4235, %v4227
        %v4237 = vsel %vm4230, %v4233, %v4236
        %v4238 = vsel %vm4228, nan, %v4237
        %v4239 = vand.u32 2147483647, %v573
        %vm4240 = vcmp.le.f32.partialorder %v4239, 0.7853982
        %vm4241 = vcmp.lt.s32.totalorder %v573, 0
        %v4242 = vand.u32 %v573, 2139095040
        %v4243 = vshrl.u32 %v4242, 23
        %v4244 = vsub.s32 %v4243, 127
        %v4245 = vand.u32 2147483647, %v573
        %v4246 = vand.u32 %v4245, 8388607
        %v4247 = vor.u32 %v4246, 8388608
        %v4248 = vsub.s32 0, %v4247
        %v4249 = vadd.s32 %v4244, 1
        %vm4250 = vcmp.gt.s32.totalorder %v4249, 0
        %v4251 = vsel %vm4250, %v4249, 0
        %v4252 = vshrl.u32 %v4251, 5
        %v4253 = vand.u32 %v4251, 31
        %v4254 = vsub.s32 32, %v4253
        %v4255 = vshrl.u32 683565275, %v4254
        %v4256 = vshll.u32 683565275, %v4253
        %v4257 = vshrl.u32 2475754826, %v4254
        %v4258 = vor.u32 %v4256, %v4257
        %v4259 = vshll.u32 2475754826, %v4253
        %v4260 = vshrl.u32 2131351028, %v4254
        %v4261 = vor.u32 %v4259, %v4260
        %v4262 = vshll.u32 2131351028, %v4253
        %v4263 = vshrl.u32 2102212464, %v4254
        %v4264 = vor.u32 %v4262, %v4263
        %v4265 = vshll.u32 2102212464, %v4253
        %v4266 = vshrl.u32 920167782, %v4254
        %v4267 = vor.u32 %v4265, %v4266
        %v4268 = vshll.u32 920167782, %v4253
        %v4269 = vshrl.u32 1326507024, %v4254
        %v4270 = vor.u32 %v4268, %v4269
        %vm4271 = vcmp.lt.s32.totalorder %v4252, 1
        %vm4272 = vcmp.lt.s32.totalorder %v4252, 2
        %vm4273 = vcmp.lt.s32.totalorder %v4252, 3
        %vm4274 = vcmp.lt.s32.totalorder %v4252, 4
        %v4275 = vsel %vm4271, %v4255, %v4258
        %v4276 = vsel %vm4274, %v4264, 2102212464
        %v4277 = vsel %vm4273, %v4261, %v4276
        %v4278 = vsel %vm4272, %v4275, %v4277
        %v4279 = vsel %vm4271, %v4258, %v4261
        %v4280 = vsel %vm4274, %v4267, 920167782
        %v4281 = vsel %vm4273, %v4264, %v4280
        %v4282 = vsel %vm4272, %v4279, %v4281
        %v4283 = vsel %vm4271, %v4261, %v4264
        %v4284 = vsel %vm4274, %v4270, 1326507024
        %v4285 = vsel %vm4273, %v4267, %v4284
        %v4286 = vsel %vm4272, %v4283, %v4285
        %v4287 = vshll.u32 %v4247, 8
        %v4288 = vmul.u32.u64.compose %v4287, %v4286
        %v4289 = vextract.low.u32 %v4288
        %v4290 = vextract.high.u32 %v4288
        %v4291 = vmul.u32.u64.compose %v4287, %v4282
        %v4292 = vextract.low.u32 %v4291
        %v4293 = vextract.high.u32 %v4291
        %v4294 = vmul.u32 %v4287, %v4278
        %v4295 = vadd.s32 %v4290, %v4292
        %vm4296 = vc.u32 %v4290, %v4292
        %v4297 = vadd.s32 %v4293, 1
        %v4298 = vsel %vm4296, %v4297, %v4293
        %v4299 = vadd.s32 %v4294, %v4298
        %v4300 = vadd.s32 %v4299, 536870912
        %v4301 = vshrl.u32 %v4300, 30
        %v4302 = vshll.u32 %v4301, 30
        %v4303 = vsub.s32 %v4299, %v4302
        %vm4304 = vcmp.lt.s32.totalorder %v4303, 0
        %v4305 = vsub.s32 0, %v4303
        %v4306 = vsel %vm4304, %v4305, %v4303
        %v4307 = vclz %v4306
        %v4308 = vsub.s32 %v4307, 2
        %vm4309 = vcmp.gt.s32.totalorder 0, %v4308
        %v4310 = vsel %vm4309, 0, %v4308
        %v4311 = vsub.s32 32, %v4310
        %v4312 = vshll.u32 %v4303, %v4310
        %v4313 = vshrl.u32 %v4295, %v4311
        %v4314 = vor.u32 %v4312, %v4313
        %v4315 = vsub.s32 4294967266, %v4310
        %v4316 = vadd.s32 %v4315, 127
        %v4317 = vshll.u32 %v4316, 23
        %v4318 = vor.u32 4788187, %v4317
        %v4319 = vand.u32 2147483647, %v4318
        %v4321 = vcvt.s32.f32 %v4314
        %v4322 = vmul.f32 %v4321, %v4319
        %v4323 = vxor.u32 %v4322, 2147483648
        %v4324 = vsel %vm4241, %v4323, %v4322
        %v4325 = vsub.s32 4, %v4301
        %v4326 = vsel %vm4241, %v4325, %v4301
        %v4327 = vsel %vm4240, %v573, %v4324
        %v4328 = vsel %vm4240, 0, %v4326
        %v4329 = vcosq.f32.pop %v4327
        %v4330 = vsinq.f32.pop %v4327
        %vm4331 = vweird.f32 %v573
        %v4332 = vand.u32 %v4328, 3
        %vm4333 = vcmp.lt.s32.totalorder %v4332, 2
        %vm4334 = vcmp.eq.s32.totalorder %v4332, 0
        %v4335 = vxor.u32 %v4330, 2147483648
        %v4336 = vsel %vm4334, %v4329, %v4335
        %vm4337 = vcmp.eq.s32.totalorder %v4332, 2
        %v4338 = vxor.u32 %v4329, 2147483648
        %v4339 = vsel %vm4337, %v4338, %v4330
        %v4340 = vsel %vm4333, %v4336, %v4339
        %v4341 = vsel %vm4331, nan, %v4340
        %v4342 = vand.u32 2147483647, %v574
        %vm4343 = vcmp.le.f32.partialorder %v4342, 0.7853982
        %vm4344 = vcmp.lt.s32.totalorder %v574, 0
        %v4345 = vand.u32 %v574, 2139095040
        %v4346 = vshrl.u32 %v4345, 23
        %v4347 = vsub.s32 %v4346, 127
        %v4348 = vand.u32 2147483647, %v574
        %v4349 = vand.u32 %v4348, 8388607
        %v4350 = vor.u32 %v4349, 8388608
        %v4351 = vsub.s32 0, %v4350
        %v4352 = vadd.s32 %v4347, 1
        %vm4353 = vcmp.gt.s32.totalorder %v4352, 0
        %v4354 = vsel %vm4353, %v4352, 0
        %v4355 = vshrl.u32 %v4354, 5
        %v4356 = vand.u32 %v4354, 31
        %v4357 = vsub.s32 32, %v4356
        %v4358 = vshrl.u32 683565275, %v4357
        %v4359 = vshll.u32 683565275, %v4356
        %v4360 = vshrl.u32 2475754826, %v4357
        %v4361 = vor.u32 %v4359, %v4360
        %v4362 = vshll.u32 2475754826, %v4356
        %v4363 = vshrl.u32 2131351028, %v4357
        %v4364 = vor.u32 %v4362, %v4363
        %v4365 = vshll.u32 2131351028, %v4356
        %v4366 = vshrl.u32 2102212464, %v4357
        %v4367 = vor.u32 %v4365, %v4366
        %v4368 = vshll.u32 2102212464, %v4356
        %v4369 = vshrl.u32 920167782, %v4357
        %v4370 = vor.u32 %v4368, %v4369
        %v4371 = vshll.u32 920167782, %v4356
        %v4372 = vshrl.u32 1326507024, %v4357
        %v4373 = vor.u32 %v4371, %v4372
        %vm4374 = vcmp.lt.s32.totalorder %v4355, 1
        %vm4375 = vcmp.lt.s32.totalorder %v4355, 2
        %vm4376 = vcmp.lt.s32.totalorder %v4355, 3
        %vm4377 = vcmp.lt.s32.totalorder %v4355, 4
        %v4378 = vsel %vm4374, %v4358, %v4361
        %v4379 = vsel %vm4377, %v4367, 2102212464
        %v4380 = vsel %vm4376, %v4364, %v4379
        %v4381 = vsel %vm4375, %v4378, %v4380
        %v4382 = vsel %vm4374, %v4361, %v4364
        %v4383 = vsel %vm4377, %v4370, 920167782
        %v4384 = vsel %vm4376, %v4367, %v4383
        %v4385 = vsel %vm4375, %v4382, %v4384
        %v4386 = vsel %vm4374, %v4364, %v4367
        %v4387 = vsel %vm4377, %v4373, 1326507024
        %v4388 = vsel %vm4376, %v4370, %v4387
        %v4389 = vsel %vm4375, %v4386, %v4388
        %v4390 = vshll.u32 %v4350, 8
        %v4391 = vmul.u32.u64.compose %v4390, %v4389
        %v4392 = vextract.low.u32 %v4391
        %v4393 = vextract.high.u32 %v4391
        %v4394 = vmul.u32.u64.compose %v4390, %v4385
        %v4395 = vextract.low.u32 %v4394
        %v4396 = vextract.high.u32 %v4394
        %v4397 = vmul.u32 %v4390, %v4381
        %v4398 = vadd.s32 %v4393, %v4395
        %vm4399 = vc.u32 %v4393, %v4395
        %v4400 = vadd.s32 %v4396, 1
        %v4401 = vsel %vm4399, %v4400, %v4396
        %v4402 = vadd.s32 %v4397, %v4401
        %v4403 = vadd.s32 %v4402, 536870912
        %v4404 = vshrl.u32 %v4403, 30
        %v4405 = vshll.u32 %v4404, 30
        %v4406 = vsub.s32 %v4402, %v4405
        %vm4407 = vcmp.lt.s32.totalorder %v4406, 0
        %v4408 = vsub.s32 0, %v4406
        %v4409 = vsel %vm4407, %v4408, %v4406
        %v4410 = vclz %v4409
        %v4411 = vsub.s32 %v4410, 2
        %vm4412 = vcmp.gt.s32.totalorder 0, %v4411
        %v4413 = vsel %vm4412, 0, %v4411
        %v4414 = vsub.s32 32, %v4413
        %v4415 = vshll.u32 %v4406, %v4413
        %v4416 = vshrl.u32 %v4398, %v4414
        %v4417 = vor.u32 %v4415, %v4416
        %v4418 = vsub.s32 4294967266, %v4413
        %v4419 = vadd.s32 %v4418, 127
        %v4420 = vshll.u32 %v4419, 23
        %v4421 = vor.u32 4788187, %v4420
        %v4422 = vand.u32 2147483647, %v4421
        %v4424 = vcvt.s32.f32 %v4417
        %v4425 = vmul.f32 %v4424, %v4422
        %v4426 = vxor.u32 %v4425, 2147483648
        %v4427 = vsel %vm4344, %v4426, %v4425
        %v4428 = vsub.s32 4, %v4404
        %v4429 = vsel %vm4344, %v4428, %v4404
        %v4430 = vsel %vm4343, %v574, %v4427
        %v4431 = vsel %vm4343, 0, %v4429
        %v4432 = vcosq.f32.pop %v4430
        %v4433 = vsinq.f32.pop %v4430
        %vm4434 = vweird.f32 %v574
        %v4435 = vand.u32 %v4431, 3
        %vm4436 = vcmp.lt.s32.totalorder %v4435, 2
        %vm4437 = vcmp.eq.s32.totalorder %v4435, 0
        %v4438 = vxor.u32 %v4433, 2147483648
        %v4439 = vsel %vm4437, %v4432, %v4438
        %vm4440 = vcmp.eq.s32.totalorder %v4435, 2
        %v4441 = vxor.u32 %v4432, 2147483648
        %v4442 = vsel %vm4440, %v4441, %v4433
        %v4443 = vsel %vm4436, %v4439, %v4442
        %v4444 = vsel %vm4434, nan, %v4443
        %v4445 = vand.u32 2147483647, %v575
        %vm4446 = vcmp.le.f32.partialorder %v4445, 0.7853982
        %vm4447 = vcmp.lt.s32.totalorder %v575, 0
        %v4448 = vand.u32 %v575, 2139095040
        %v4449 = vshrl.u32 %v4448, 23
        %v4450 = vsub.s32 %v4449, 127
        %v4451 = vand.u32 2147483647, %v575
        %v4452 = vand.u32 %v4451, 8388607
        %v4453 = vor.u32 %v4452, 8388608
        %v4454 = vsub.s32 0, %v4453
        %v4455 = vadd.s32 %v4450, 1
        %vm4456 = vcmp.gt.s32.totalorder %v4455, 0
        %v4457 = vsel %vm4456, %v4455, 0
        %v4458 = vshrl.u32 %v4457, 5
        %v4459 = vand.u32 %v4457, 31
        %v4460 = vsub.s32 32, %v4459
        %v4461 = vshrl.u32 683565275, %v4460
        %v4462 = vshll.u32 683565275, %v4459
        %v4463 = vshrl.u32 2475754826, %v4460
        %v4464 = vor.u32 %v4462, %v4463
        %v4465 = vshll.u32 2475754826, %v4459
        %v4466 = vshrl.u32 2131351028, %v4460
        %v4467 = vor.u32 %v4465, %v4466
        %v4468 = vshll.u32 2131351028, %v4459
        %v4469 = vshrl.u32 2102212464, %v4460
        %v4470 = vor.u32 %v4468, %v4469
        %v4471 = vshll.u32 2102212464, %v4459
        %v4472 = vshrl.u32 920167782, %v4460
        %v4473 = vor.u32 %v4471, %v4472
        %v4474 = vshll.u32 920167782, %v4459
        %v4475 = vshrl.u32 1326507024, %v4460
        %v4476 = vor.u32 %v4474, %v4475
        %vm4477 = vcmp.lt.s32.totalorder %v4458, 1
        %vm4478 = vcmp.lt.s32.totalorder %v4458, 2
        %vm4479 = vcmp.lt.s32.totalorder %v4458, 3
        %vm4480 = vcmp.lt.s32.totalorder %v4458, 4
        %v4481 = vsel %vm4477, %v4461, %v4464
        %v4482 = vsel %vm4480, %v4470, 2102212464
        %v4483 = vsel %vm4479, %v4467, %v4482
        %v4484 = vsel %vm4478, %v4481, %v4483
        %v4485 = vsel %vm4477, %v4464, %v4467
        %v4486 = vsel %vm4480, %v4473, 920167782
        %v4487 = vsel %vm4479, %v4470, %v4486
        %v4488 = vsel %vm4478, %v4485, %v4487
        %v4489 = vsel %vm4477, %v4467, %v4470
        %v4490 = vsel %vm4480, %v4476, 1326507024
        %v4491 = vsel %vm4479, %v4473, %v4490
        %v4492 = vsel %vm4478, %v4489, %v4491
        %v4493 = vshll.u32 %v4453, 8
        %v4494 = vmul.u32.u64.compose %v4493, %v4492
        %v4495 = vextract.low.u32 %v4494
        %v4496 = vextract.high.u32 %v4494
        %v4497 = vmul.u32.u64.compose %v4493, %v4488
        %v4498 = vextract.low.u32 %v4497
        %v4499 = vextract.high.u32 %v4497
        %v4500 = vmul.u32 %v4493, %v4484
        %v4501 = vadd.s32 %v4496, %v4498
        %vm4502 = vc.u32 %v4496, %v4498
        %v4503 = vadd.s32 %v4499, 1
        %v4504 = vsel %vm4502, %v4503, %v4499
        %v4505 = vadd.s32 %v4500, %v4504
        %v4506 = vadd.s32 %v4505, 536870912
        %v4507 = vshrl.u32 %v4506, 30
        %v4508 = vshll.u32 %v4507, 30
        %v4509 = vsub.s32 %v4505, %v4508
        %vm4510 = vcmp.lt.s32.totalorder %v4509, 0
        %v4511 = vsub.s32 0, %v4509
        %v4512 = vsel %vm4510, %v4511, %v4509
        %v4513 = vclz %v4512
        %v4514 = vsub.s32 %v4513, 2
        %vm4515 = vcmp.gt.s32.totalorder 0, %v4514
        %v4516 = vsel %vm4515, 0, %v4514
        %v4517 = vsub.s32 32, %v4516
        %v4518 = vshll.u32 %v4509, %v4516
        %v4519 = vshrl.u32 %v4501, %v4517
        %v4520 = vor.u32 %v4518, %v4519
        %v4521 = vsub.s32 4294967266, %v4516
        %v4522 = vadd.s32 %v4521, 127
        %v4523 = vshll.u32 %v4522, 23
        %v4524 = vor.u32 4788187, %v4523
        %v4525 = vand.u32 2147483647, %v4524
        %v4527 = vcvt.s32.f32 %v4520
        %v4528 = vmul.f32 %v4527, %v4525
        %v4529 = vxor.u32 %v4528, 2147483648
        %v4530 = vsel %vm4447, %v4529, %v4528
        %v4531 = vsub.s32 4, %v4507
        %v4532 = vsel %vm4447, %v4531, %v4507
        %v4533 = vsel %vm4446, %v575, %v4530
        %v4534 = vsel %vm4446, 0, %v4532
        %v4535 = vcosq.f32.pop %v4533
        %v4536 = vsinq.f32.pop %v4533
        %vm4537 = vweird.f32 %v575
        %v4538 = vand.u32 %v4534, 3
        %vm4539 = vcmp.lt.s32.totalorder %v4538, 2
        %vm4540 = vcmp.eq.s32.totalorder %v4538, 0
        %v4541 = vxor.u32 %v4536, 2147483648
        %v4542 = vsel %vm4540, %v4535, %v4541
        %vm4543 = vcmp.eq.s32.totalorder %v4538, 2
        %v4544 = vxor.u32 %v4535, 2147483648
        %v4545 = vsel %vm4543, %v4544, %v4536
        %v4546 = vsel %vm4539, %v4542, %v4545
        %v4547 = vsel %vm4537, nan, %v4546
        %v4548 = vand.u32 2147483647, %v576
        %vm4549 = vcmp.le.f32.partialorder %v4548, 0.7853982
        %vm4550 = vcmp.lt.s32.totalorder %v576, 0
        %v4551 = vand.u32 %v576, 2139095040
        %v4552 = vshrl.u32 %v4551, 23
        %v4553 = vsub.s32 %v4552, 127
        %v4554 = vand.u32 2147483647, %v576
        %v4555 = vand.u32 %v4554, 8388607
        %v4556 = vor.u32 %v4555, 8388608
        %v4557 = vsub.s32 0, %v4556
        %v4558 = vadd.s32 %v4553, 1
        %vm4559 = vcmp.gt.s32.totalorder %v4558, 0
        %v4560 = vsel %vm4559, %v4558, 0
        %v4561 = vshrl.u32 %v4560, 5
        %v4562 = vand.u32 %v4560, 31
        %v4563 = vsub.s32 32, %v4562
        %v4564 = vshrl.u32 683565275, %v4563
        %v4565 = vshll.u32 683565275, %v4562
        %v4566 = vshrl.u32 2475754826, %v4563
        %v4567 = vor.u32 %v4565, %v4566
        %v4568 = vshll.u32 2475754826, %v4562
        %v4569 = vshrl.u32 2131351028, %v4563
        %v4570 = vor.u32 %v4568, %v4569
        %v4571 = vshll.u32 2131351028, %v4562
        %v4572 = vshrl.u32 2102212464, %v4563
        %v4573 = vor.u32 %v4571, %v4572
        %v4574 = vshll.u32 2102212464, %v4562
        %v4575 = vshrl.u32 920167782, %v4563
        %v4576 = vor.u32 %v4574, %v4575
        %v4577 = vshll.u32 920167782, %v4562
        %v4578 = vshrl.u32 1326507024, %v4563
        %v4579 = vor.u32 %v4577, %v4578
        %vm4580 = vcmp.lt.s32.totalorder %v4561, 1
        %vm4581 = vcmp.lt.s32.totalorder %v4561, 2
        %vm4582 = vcmp.lt.s32.totalorder %v4561, 3
        %vm4583 = vcmp.lt.s32.totalorder %v4561, 4
        %v4584 = vsel %vm4580, %v4564, %v4567
        %v4585 = vsel %vm4583, %v4573, 2102212464
        %v4586 = vsel %vm4582, %v4570, %v4585
        %v4587 = vsel %vm4581, %v4584, %v4586
        %v4588 = vsel %vm4580, %v4567, %v4570
        %v4589 = vsel %vm4583, %v4576, 920167782
        %v4590 = vsel %vm4582, %v4573, %v4589
        %v4591 = vsel %vm4581, %v4588, %v4590
        %v4592 = vsel %vm4580, %v4570, %v4573
        %v4593 = vsel %vm4583, %v4579, 1326507024
        %v4594 = vsel %vm4582, %v4576, %v4593
        %v4595 = vsel %vm4581, %v4592, %v4594
        %v4596 = vshll.u32 %v4556, 8
        %v4597 = vmul.u32.u64.compose %v4596, %v4595
        %v4598 = vextract.low.u32 %v4597
        %v4599 = vextract.high.u32 %v4597
        %v4600 = vmul.u32.u64.compose %v4596, %v4591
        %v4601 = vextract.low.u32 %v4600
        %v4602 = vextract.high.u32 %v4600
        %v4603 = vmul.u32 %v4596, %v4587
        %v4604 = vadd.s32 %v4599, %v4601
        %vm4605 = vc.u32 %v4599, %v4601
        %v4606 = vadd.s32 %v4602, 1
        %v4607 = vsel %vm4605, %v4606, %v4602
        %v4608 = vadd.s32 %v4603, %v4607
        %v4609 = vadd.s32 %v4608, 536870912
        %v4610 = vshrl.u32 %v4609, 30
        %v4611 = vshll.u32 %v4610, 30
        %v4612 = vsub.s32 %v4608, %v4611
        %vm4613 = vcmp.lt.s32.totalorder %v4612, 0
        %v4614 = vsub.s32 0, %v4612
        %v4615 = vsel %vm4613, %v4614, %v4612
        %v4616 = vclz %v4615
        %v4617 = vsub.s32 %v4616, 2
        %vm4618 = vcmp.gt.s32.totalorder 0, %v4617
        %v4619 = vsel %vm4618, 0, %v4617
        %v4620 = vsub.s32 32, %v4619
        %v4621 = vshll.u32 %v4612, %v4619
        %v4622 = vshrl.u32 %v4604, %v4620
        %v4623 = vor.u32 %v4621, %v4622
        %v4624 = vsub.s32 4294967266, %v4619
        %v4625 = vadd.s32 %v4624, 127
        %v4626 = vshll.u32 %v4625, 23
        %v4627 = vor.u32 4788187, %v4626
        %v4628 = vand.u32 2147483647, %v4627
        %v4630 = vcvt.s32.f32 %v4623
        %v4631 = vmul.f32 %v4630, %v4628
        %v4632 = vxor.u32 %v4631, 2147483648
        %v4633 = vsel %vm4550, %v4632, %v4631
        %v4634 = vsub.s32 4, %v4610
        %v4635 = vsel %vm4550, %v4634, %v4610
        %v4636 = vsel %vm4549, %v576, %v4633
        %v4637 = vsel %vm4549, 0, %v4635
        %v4638 = vcosq.f32.pop %v4636
        %v4639 = vsinq.f32.pop %v4636
        %vm4640 = vweird.f32 %v576
        %v4641 = vand.u32 %v4637, 3
        %vm4642 = vcmp.lt.s32.totalorder %v4641, 2
        %vm4643 = vcmp.eq.s32.totalorder %v4641, 0
        %v4644 = vxor.u32 %v4639, 2147483648
        %v4645 = vsel %vm4643, %v4638, %v4644
        %vm4646 = vcmp.eq.s32.totalorder %v4641, 2
        %v4647 = vxor.u32 %v4638, 2147483648
        %v4648 = vsel %vm4646, %v4647, %v4639
        %v4649 = vsel %vm4642, %v4645, %v4648
        %v4650 = vsel %vm4640, nan, %v4649
        %v4651 = vand.u32 2147483647, %v577
        %vm4652 = vcmp.le.f32.partialorder %v4651, 0.7853982
        %vm4653 = vcmp.lt.s32.totalorder %v577, 0
        %v4654 = vand.u32 %v577, 2139095040
        %v4655 = vshrl.u32 %v4654, 23
        %v4656 = vsub.s32 %v4655, 127
        %v4657 = vand.u32 2147483647, %v577
        %v4658 = vand.u32 %v4657, 8388607
        %v4659 = vor.u32 %v4658, 8388608
        %v4660 = vsub.s32 0, %v4659
        %v4661 = vadd.s32 %v4656, 1
        %vm4662 = vcmp.gt.s32.totalorder %v4661, 0
        %v4663 = vsel %vm4662, %v4661, 0
        %v4664 = vshrl.u32 %v4663, 5
        %v4665 = vand.u32 %v4663, 31
        %v4666 = vsub.s32 32, %v4665
        %v4667 = vshrl.u32 683565275, %v4666
        %v4668 = vshll.u32 683565275, %v4665
        %v4669 = vshrl.u32 2475754826, %v4666
        %v4670 = vor.u32 %v4668, %v4669
        %v4671 = vshll.u32 2475754826, %v4665
        %v4672 = vshrl.u32 2131351028, %v4666
        %v4673 = vor.u32 %v4671, %v4672
        %v4674 = vshll.u32 2131351028, %v4665
        %v4675 = vshrl.u32 2102212464, %v4666
        %v4676 = vor.u32 %v4674, %v4675
        %v4677 = vshll.u32 2102212464, %v4665
        %v4678 = vshrl.u32 920167782, %v4666
        %v4679 = vor.u32 %v4677, %v4678
        %v4680 = vshll.u32 920167782, %v4665
        %v4681 = vshrl.u32 1326507024, %v4666
        %v4682 = vor.u32 %v4680, %v4681
        %vm4683 = vcmp.lt.s32.totalorder %v4664, 1
        %vm4684 = vcmp.lt.s32.totalorder %v4664, 2
        %vm4685 = vcmp.lt.s32.totalorder %v4664, 3
        %vm4686 = vcmp.lt.s32.totalorder %v4664, 4
        %v4687 = vsel %vm4683, %v4667, %v4670
        %v4688 = vsel %vm4686, %v4676, 2102212464
        %v4689 = vsel %vm4685, %v4673, %v4688
        %v4690 = vsel %vm4684, %v4687, %v4689
        %v4691 = vsel %vm4683, %v4670, %v4673
        %v4692 = vsel %vm4686, %v4679, 920167782
        %v4693 = vsel %vm4685, %v4676, %v4692
        %v4694 = vsel %vm4684, %v4691, %v4693
        %v4695 = vsel %vm4683, %v4673, %v4676
        %v4696 = vsel %vm4686, %v4682, 1326507024
        %v4697 = vsel %vm4685, %v4679, %v4696
        %v4698 = vsel %vm4684, %v4695, %v4697
        %v4699 = vshll.u32 %v4659, 8
        %v4700 = vmul.u32.u64.compose %v4699, %v4698
        %v4701 = vextract.low.u32 %v4700
        %v4702 = vextract.high.u32 %v4700
        %v4703 = vmul.u32.u64.compose %v4699, %v4694
        %v4704 = vextract.low.u32 %v4703
        %v4705 = vextract.high.u32 %v4703
        %v4706 = vmul.u32 %v4699, %v4690
        %v4707 = vadd.s32 %v4702, %v4704
        %vm4708 = vc.u32 %v4702, %v4704
        %v4709 = vadd.s32 %v4705, 1
        %v4710 = vsel %vm4708, %v4709, %v4705
        %v4711 = vadd.s32 %v4706, %v4710
        %v4712 = vadd.s32 %v4711, 536870912
        %v4713 = vshrl.u32 %v4712, 30
        %v4714 = vshll.u32 %v4713, 30
        %v4715 = vsub.s32 %v4711, %v4714
        %vm4716 = vcmp.lt.s32.totalorder %v4715, 0
        %v4717 = vsub.s32 0, %v4715
        %v4718 = vsel %vm4716, %v4717, %v4715
        %v4719 = vclz %v4718
        %v4720 = vsub.s32 %v4719, 2
        %vm4721 = vcmp.gt.s32.totalorder 0, %v4720
        %v4722 = vsel %vm4721, 0, %v4720
        %v4723 = vsub.s32 32, %v4722
        %v4724 = vshll.u32 %v4715, %v4722
        %v4725 = vshrl.u32 %v4707, %v4723
        %v4726 = vor.u32 %v4724, %v4725
        %v4727 = vsub.s32 4294967266, %v4722
        %v4728 = vadd.s32 %v4727, 127
        %v4729 = vshll.u32 %v4728, 23
        %v4730 = vor.u32 4788187, %v4729
        %v4731 = vand.u32 2147483647, %v4730
        %v4733 = vcvt.s32.f32 %v4726
        %v4734 = vmul.f32 %v4733, %v4731
        %v4735 = vxor.u32 %v4734, 2147483648
        %v4736 = vsel %vm4653, %v4735, %v4734
        %v4737 = vsub.s32 4, %v4713
        %v4738 = vsel %vm4653, %v4737, %v4713
        %v4739 = vsel %vm4652, %v577, %v4736
        %v4740 = vsel %vm4652, 0, %v4738
        %v4741 = vcosq.f32.pop %v4739
        %v4742 = vsinq.f32.pop %v4739
        %vm4743 = vweird.f32 %v577
        %v4744 = vand.u32 %v4740, 3
        %vm4745 = vcmp.lt.s32.totalorder %v4744, 2
        %vm4746 = vcmp.eq.s32.totalorder %v4744, 0
        %v4747 = vxor.u32 %v4742, 2147483648
        %v4748 = vsel %vm4746, %v4741, %v4747
        %vm4749 = vcmp.eq.s32.totalorder %v4744, 2
        %v4750 = vxor.u32 %v4741, 2147483648
        %v4751 = vsel %vm4749, %v4750, %v4742
        %v4752 = vsel %vm4745, %v4748, %v4751
        %v4753 = vsel %vm4743, nan, %v4752
        %v4754 = vand.u32 2147483647, %v578
        %vm4755 = vcmp.le.f32.partialorder %v4754, 0.7853982
        %vm4756 = vcmp.lt.s32.totalorder %v578, 0
        %v4757 = vand.u32 %v578, 2139095040
        %v4758 = vshrl.u32 %v4757, 23
        %v4759 = vsub.s32 %v4758, 127
        %v4760 = vand.u32 2147483647, %v578
        %v4761 = vand.u32 %v4760, 8388607
        %v4762 = vor.u32 %v4761, 8388608
        %v4763 = vsub.s32 0, %v4762
        %v4764 = vadd.s32 %v4759, 1
        %vm4765 = vcmp.gt.s32.totalorder %v4764, 0
        %v4766 = vsel %vm4765, %v4764, 0
        %v4767 = vshrl.u32 %v4766, 5
        %v4768 = vand.u32 %v4766, 31
        %v4769 = vsub.s32 32, %v4768
        %v4770 = vshrl.u32 683565275, %v4769
        %v4771 = vshll.u32 683565275, %v4768
        %v4772 = vshrl.u32 2475754826, %v4769
        %v4773 = vor.u32 %v4771, %v4772
        %v4774 = vshll.u32 2475754826, %v4768
        %v4775 = vshrl.u32 2131351028, %v4769
        %v4776 = vor.u32 %v4774, %v4775
        %v4777 = vshll.u32 2131351028, %v4768
        %v4778 = vshrl.u32 2102212464, %v4769
        %v4779 = vor.u32 %v4777, %v4778
        %v4780 = vshll.u32 2102212464, %v4768
        %v4781 = vshrl.u32 920167782, %v4769
        %v4782 = vor.u32 %v4780, %v4781
        %v4783 = vshll.u32 920167782, %v4768
        %v4784 = vshrl.u32 1326507024, %v4769
        %v4785 = vor.u32 %v4783, %v4784
        %vm4786 = vcmp.lt.s32.totalorder %v4767, 1
        %vm4787 = vcmp.lt.s32.totalorder %v4767, 2
        %vm4788 = vcmp.lt.s32.totalorder %v4767, 3
        %vm4789 = vcmp.lt.s32.totalorder %v4767, 4
        %v4790 = vsel %vm4786, %v4770, %v4773
        %v4791 = vsel %vm4789, %v4779, 2102212464
        %v4792 = vsel %vm4788, %v4776, %v4791
        %v4793 = vsel %vm4787, %v4790, %v4792
        %v4794 = vsel %vm4786, %v4773, %v4776
        %v4795 = vsel %vm4789, %v4782, 920167782
        %v4796 = vsel %vm4788, %v4779, %v4795
        %v4797 = vsel %vm4787, %v4794, %v4796
        %v4798 = vsel %vm4786, %v4776, %v4779
        %v4799 = vsel %vm4789, %v4785, 1326507024
        %v4800 = vsel %vm4788, %v4782, %v4799
        %v4801 = vsel %vm4787, %v4798, %v4800
        %v4802 = vshll.u32 %v4762, 8
        %v4803 = vmul.u32.u64.compose %v4802, %v4801
        %v4804 = vextract.low.u32 %v4803
        %v4805 = vextract.high.u32 %v4803
        %v4806 = vmul.u32.u64.compose %v4802, %v4797
        %v4807 = vextract.low.u32 %v4806
        %v4808 = vextract.high.u32 %v4806
        %v4809 = vmul.u32 %v4802, %v4793
        %v4810 = vadd.s32 %v4805, %v4807
        %vm4811 = vc.u32 %v4805, %v4807
        %v4812 = vadd.s32 %v4808, 1
        %v4813 = vsel %vm4811, %v4812, %v4808
        %v4814 = vadd.s32 %v4809, %v4813
        %v4815 = vadd.s32 %v4814, 536870912
        %v4816 = vshrl.u32 %v4815, 30
        %v4817 = vshll.u32 %v4816, 30
        %v4818 = vsub.s32 %v4814, %v4817
        %vm4819 = vcmp.lt.s32.totalorder %v4818, 0
        %v4820 = vsub.s32 0, %v4818
        %v4821 = vsel %vm4819, %v4820, %v4818
        %v4822 = vclz %v4821
        %v4823 = vsub.s32 %v4822, 2
        %vm4824 = vcmp.gt.s32.totalorder 0, %v4823
        %v4825 = vsel %vm4824, 0, %v4823
        %v4826 = vsub.s32 32, %v4825
        %v4827 = vshll.u32 %v4818, %v4825
        %v4828 = vshrl.u32 %v4810, %v4826
        %v4829 = vor.u32 %v4827, %v4828
        %v4830 = vsub.s32 4294967266, %v4825
        %v4831 = vadd.s32 %v4830, 127
        %v4832 = vshll.u32 %v4831, 23
        %v4833 = vor.u32 4788187, %v4832
        %v4834 = vand.u32 2147483647, %v4833
        %v4836 = vcvt.s32.f32 %v4829
        %v4837 = vmul.f32 %v4836, %v4834
        %v4838 = vxor.u32 %v4837, 2147483648
        %v4839 = vsel %vm4756, %v4838, %v4837
        %v4840 = vsub.s32 4, %v4816
        %v4841 = vsel %vm4756, %v4840, %v4816
        %v4842 = vsel %vm4755, %v578, %v4839
        %v4843 = vsel %vm4755, 0, %v4841
        %v4844 = vcosq.f32.pop %v4842
        %v4845 = vsinq.f32.pop %v4842
        %vm4846 = vweird.f32 %v578
        %v4847 = vand.u32 %v4843, 3
        %vm4848 = vcmp.lt.s32.totalorder %v4847, 2
        %vm4849 = vcmp.eq.s32.totalorder %v4847, 0
        %v4850 = vxor.u32 %v4845, 2147483648
        %v4851 = vsel %vm4849, %v4844, %v4850
        %vm4852 = vcmp.eq.s32.totalorder %v4847, 2
        %v4853 = vxor.u32 %v4844, 2147483648
        %v4854 = vsel %vm4852, %v4853, %v4845
        %v4855 = vsel %vm4848, %v4851, %v4854
        %v4856 = vsel %vm4846, nan, %v4855
        %v4857 = vand.u32 2147483647, %v579
        %vm4858 = vcmp.le.f32.partialorder %v4857, 0.7853982
        %vm4859 = vcmp.lt.s32.totalorder %v579, 0
        %v4860 = vand.u32 %v579, 2139095040
        %v4861 = vshrl.u32 %v4860, 23
        %v4862 = vsub.s32 %v4861, 127
        %v4863 = vand.u32 2147483647, %v579
        %v4864 = vand.u32 %v4863, 8388607
        %v4865 = vor.u32 %v4864, 8388608
        %v4866 = vsub.s32 0, %v4865
        %v4867 = vadd.s32 %v4862, 1
        %vm4868 = vcmp.gt.s32.totalorder %v4867, 0
        %v4869 = vsel %vm4868, %v4867, 0
        %v4870 = vshrl.u32 %v4869, 5
        %v4871 = vand.u32 %v4869, 31
        %v4872 = vsub.s32 32, %v4871
        %v4873 = vshrl.u32 683565275, %v4872
        %v4874 = vshll.u32 683565275, %v4871
        %v4875 = vshrl.u32 2475754826, %v4872
        %v4876 = vor.u32 %v4874, %v4875
        %v4877 = vshll.u32 2475754826, %v4871
        %v4878 = vshrl.u32 2131351028, %v4872
        %v4879 = vor.u32 %v4877, %v4878
        %v4880 = vshll.u32 2131351028, %v4871
        %v4881 = vshrl.u32 2102212464, %v4872
        %v4882 = vor.u32 %v4880, %v4881
        %v4883 = vshll.u32 2102212464, %v4871
        %v4884 = vshrl.u32 920167782, %v4872
        %v4885 = vor.u32 %v4883, %v4884
        %v4886 = vshll.u32 920167782, %v4871
        %v4887 = vshrl.u32 1326507024, %v4872
        %v4888 = vor.u32 %v4886, %v4887
        %vm4889 = vcmp.lt.s32.totalorder %v4870, 1
        %vm4890 = vcmp.lt.s32.totalorder %v4870, 2
        %vm4891 = vcmp.lt.s32.totalorder %v4870, 3
        %vm4892 = vcmp.lt.s32.totalorder %v4870, 4
        %v4893 = vsel %vm4889, %v4873, %v4876
        %v4894 = vsel %vm4892, %v4882, 2102212464
        %v4895 = vsel %vm4891, %v4879, %v4894
        %v4896 = vsel %vm4890, %v4893, %v4895
        %v4897 = vsel %vm4889, %v4876, %v4879
        %v4898 = vsel %vm4892, %v4885, 920167782
        %v4899 = vsel %vm4891, %v4882, %v4898
        %v4900 = vsel %vm4890, %v4897, %v4899
        %v4901 = vsel %vm4889, %v4879, %v4882
        %v4902 = vsel %vm4892, %v4888, 1326507024
        %v4903 = vsel %vm4891, %v4885, %v4902
        %v4904 = vsel %vm4890, %v4901, %v4903
        %v4905 = vshll.u32 %v4865, 8
        %v4906 = vmul.u32.u64.compose %v4905, %v4904
        %v4907 = vextract.low.u32 %v4906
        %v4908 = vextract.high.u32 %v4906
        %v4909 = vmul.u32.u64.compose %v4905, %v4900
        %v4910 = vextract.low.u32 %v4909
        %v4911 = vextract.high.u32 %v4909
        %v4912 = vmul.u32 %v4905, %v4896
        %v4913 = vadd.s32 %v4908, %v4910
        %vm4914 = vc.u32 %v4908, %v4910
        %v4915 = vadd.s32 %v4911, 1
        %v4916 = vsel %vm4914, %v4915, %v4911
        %v4917 = vadd.s32 %v4912, %v4916
        %v4918 = vadd.s32 %v4917, 536870912
        %v4919 = vshrl.u32 %v4918, 30
        %v4920 = vshll.u32 %v4919, 30
        %v4921 = vsub.s32 %v4917, %v4920
        %vm4922 = vcmp.lt.s32.totalorder %v4921, 0
        %v4923 = vsub.s32 0, %v4921
        %v4924 = vsel %vm4922, %v4923, %v4921
        %v4925 = vclz %v4924
        %v4926 = vsub.s32 %v4925, 2
        %vm4927 = vcmp.gt.s32.totalorder 0, %v4926
        %v4928 = vsel %vm4927, 0, %v4926
        %v4929 = vsub.s32 32, %v4928
        %v4930 = vshll.u32 %v4921, %v4928
        %v4931 = vshrl.u32 %v4913, %v4929
        %v4932 = vor.u32 %v4930, %v4931
        %v4933 = vsub.s32 4294967266, %v4928
        %v4934 = vadd.s32 %v4933, 127
        %v4935 = vshll.u32 %v4934, 23
        %v4936 = vor.u32 4788187, %v4935
        %v4937 = vand.u32 2147483647, %v4936
        %v4939 = vcvt.s32.f32 %v4932
        %v4940 = vmul.f32 %v4939, %v4937
        %v4941 = vxor.u32 %v4940, 2147483648
        %v4942 = vsel %vm4859, %v4941, %v4940
        %v4943 = vsub.s32 4, %v4919
        %v4944 = vsel %vm4859, %v4943, %v4919
        %v4945 = vsel %vm4858, %v579, %v4942
        %v4946 = vsel %vm4858, 0, %v4944
        %v4947 = vcosq.f32.pop %v4945
        %v4948 = vsinq.f32.pop %v4945
        %vm4949 = vweird.f32 %v579
        %v4950 = vand.u32 %v4946, 3
        %vm4951 = vcmp.lt.s32.totalorder %v4950, 2
        %vm4952 = vcmp.eq.s32.totalorder %v4950, 0
        %v4953 = vxor.u32 %v4948, 2147483648
        %v4954 = vsel %vm4952, %v4947, %v4953
        %vm4955 = vcmp.eq.s32.totalorder %v4950, 2
        %v4956 = vxor.u32 %v4947, 2147483648
        %v4957 = vsel %vm4955, %v4956, %v4948
        %v4958 = vsel %vm4951, %v4954, %v4957
        %v4959 = vsel %vm4949, nan, %v4958
        %v4960 = vand.u32 2147483647, %v580
        %vm4961 = vcmp.le.f32.partialorder %v4960, 0.7853982
        %vm4962 = vcmp.lt.s32.totalorder %v580, 0
        %v4963 = vand.u32 %v580, 2139095040
        %v4964 = vshrl.u32 %v4963, 23
        %v4965 = vsub.s32 %v4964, 127
        %v4966 = vand.u32 2147483647, %v580
        %v4967 = vand.u32 %v4966, 8388607
        %v4968 = vor.u32 %v4967, 8388608
        %v4969 = vsub.s32 0, %v4968
        %v4970 = vadd.s32 %v4965, 1
        %vm4971 = vcmp.gt.s32.totalorder %v4970, 0
        %v4972 = vsel %vm4971, %v4970, 0
        %v4973 = vshrl.u32 %v4972, 5
        %v4974 = vand.u32 %v4972, 31
        %v4975 = vsub.s32 32, %v4974
        %v4976 = vshrl.u32 683565275, %v4975
        %v4977 = vshll.u32 683565275, %v4974
        %v4978 = vshrl.u32 2475754826, %v4975
        %v4979 = vor.u32 %v4977, %v4978
        %v4980 = vshll.u32 2475754826, %v4974
        %v4981 = vshrl.u32 2131351028, %v4975
        %v4982 = vor.u32 %v4980, %v4981
        %v4983 = vshll.u32 2131351028, %v4974
        %v4984 = vshrl.u32 2102212464, %v4975
        %v4985 = vor.u32 %v4983, %v4984
        %v4986 = vshll.u32 2102212464, %v4974
        %v4987 = vshrl.u32 920167782, %v4975
        %v4988 = vor.u32 %v4986, %v4987
        %v4989 = vshll.u32 920167782, %v4974
        %v4990 = vshrl.u32 1326507024, %v4975
        %v4991 = vor.u32 %v4989, %v4990
        %vm4992 = vcmp.lt.s32.totalorder %v4973, 1
        %vm4993 = vcmp.lt.s32.totalorder %v4973, 2
        %vm4994 = vcmp.lt.s32.totalorder %v4973, 3
        %vm4995 = vcmp.lt.s32.totalorder %v4973, 4
        %v4996 = vsel %vm4992, %v4976, %v4979
        %v4997 = vsel %vm4995, %v4985, 2102212464
        %v4998 = vsel %vm4994, %v4982, %v4997
        %v4999 = vsel %vm4993, %v4996, %v4998
        %v5000 = vsel %vm4992, %v4979, %v4982
        %v5001 = vsel %vm4995, %v4988, 920167782
        %v5002 = vsel %vm4994, %v4985, %v5001
        %v5003 = vsel %vm4993, %v5000, %v5002
        %v5004 = vsel %vm4992, %v4982, %v4985
        %v5005 = vsel %vm4995, %v4991, 1326507024
        %v5006 = vsel %vm4994, %v4988, %v5005
        %v5007 = vsel %vm4993, %v5004, %v5006
        %v5008 = vshll.u32 %v4968, 8
        %v5009 = vmul.u32.u64.compose %v5008, %v5007
        %v5010 = vextract.low.u32 %v5009
        %v5011 = vextract.high.u32 %v5009
        %v5012 = vmul.u32.u64.compose %v5008, %v5003
        %v5013 = vextract.low.u32 %v5012
        %v5014 = vextract.high.u32 %v5012
        %v5015 = vmul.u32 %v5008, %v4999
        %v5016 = vadd.s32 %v5011, %v5013
        %vm5017 = vc.u32 %v5011, %v5013
        %v5018 = vadd.s32 %v5014, 1
        %v5019 = vsel %vm5017, %v5018, %v5014
        %v5020 = vadd.s32 %v5015, %v5019
        %v5021 = vadd.s32 %v5020, 536870912
        %v5022 = vshrl.u32 %v5021, 30
        %v5023 = vshll.u32 %v5022, 30
        %v5024 = vsub.s32 %v5020, %v5023
        %vm5025 = vcmp.lt.s32.totalorder %v5024, 0
        %v5026 = vsub.s32 0, %v5024
        %v5027 = vsel %vm5025, %v5026, %v5024
        %v5028 = vclz %v5027
        %v5029 = vsub.s32 %v5028, 2
        %vm5030 = vcmp.gt.s32.totalorder 0, %v5029
        %v5031 = vsel %vm5030, 0, %v5029
        %v5032 = vsub.s32 32, %v5031
        %v5033 = vshll.u32 %v5024, %v5031
        %v5034 = vshrl.u32 %v5016, %v5032
        %v5035 = vor.u32 %v5033, %v5034
        %v5036 = vsub.s32 4294967266, %v5031
        %v5037 = vadd.s32 %v5036, 127
        %v5038 = vshll.u32 %v5037, 23
        %v5039 = vor.u32 4788187, %v5038
        %v5040 = vand.u32 2147483647, %v5039
        %v5042 = vcvt.s32.f32 %v5035
        %v5043 = vmul.f32 %v5042, %v5040
        %v5044 = vxor.u32 %v5043, 2147483648
        %v5045 = vsel %vm4962, %v5044, %v5043
        %v5046 = vsub.s32 4, %v5022
        %v5047 = vsel %vm4962, %v5046, %v5022
        %v5048 = vsel %vm4961, %v580, %v5045
        %v5049 = vsel %vm4961, 0, %v5047
        %v5050 = vcosq.f32.pop %v5048
        %v5051 = vsinq.f32.pop %v5048
        %vm5052 = vweird.f32 %v580
        %v5053 = vand.u32 %v5049, 3
        %vm5054 = vcmp.lt.s32.totalorder %v5053, 2
        %vm5055 = vcmp.eq.s32.totalorder %v5053, 0
        %v5056 = vxor.u32 %v5051, 2147483648
        %v5057 = vsel %vm5055, %v5050, %v5056
        %vm5058 = vcmp.eq.s32.totalorder %v5053, 2
        %v5059 = vxor.u32 %v5050, 2147483648
        %v5060 = vsel %vm5058, %v5059, %v5051
        %v5061 = vsel %vm5054, %v5057, %v5060
        %v5062 = vsel %vm5052, nan, %v5061
        %v5063 = vand.u32 2147483647, %v581
        %vm5064 = vcmp.le.f32.partialorder %v5063, 0.7853982
        %vm5065 = vcmp.lt.s32.totalorder %v581, 0
        %v5066 = vand.u32 %v581, 2139095040
        %v5067 = vshrl.u32 %v5066, 23
        %v5068 = vsub.s32 %v5067, 127
        %v5069 = vand.u32 2147483647, %v581
        %v5070 = vand.u32 %v5069, 8388607
        %v5071 = vor.u32 %v5070, 8388608
        %v5072 = vsub.s32 0, %v5071
        %v5073 = vadd.s32 %v5068, 1
        %vm5074 = vcmp.gt.s32.totalorder %v5073, 0
        %v5075 = vsel %vm5074, %v5073, 0
        %v5076 = vshrl.u32 %v5075, 5
        %v5077 = vand.u32 %v5075, 31
        %v5078 = vsub.s32 32, %v5077
        %v5079 = vshrl.u32 683565275, %v5078
        %v5080 = vshll.u32 683565275, %v5077
        %v5081 = vshrl.u32 2475754826, %v5078
        %v5082 = vor.u32 %v5080, %v5081
        %v5083 = vshll.u32 2475754826, %v5077
        %v5084 = vshrl.u32 2131351028, %v5078
        %v5085 = vor.u32 %v5083, %v5084
        %v5086 = vshll.u32 2131351028, %v5077
        %v5087 = vshrl.u32 2102212464, %v5078
        %v5088 = vor.u32 %v5086, %v5087
        %v5089 = vshll.u32 2102212464, %v5077
        %v5090 = vshrl.u32 920167782, %v5078
        %v5091 = vor.u32 %v5089, %v5090
        %v5092 = vshll.u32 920167782, %v5077
        %v5093 = vshrl.u32 1326507024, %v5078
        %v5094 = vor.u32 %v5092, %v5093
        %vm5095 = vcmp.lt.s32.totalorder %v5076, 1
        %vm5096 = vcmp.lt.s32.totalorder %v5076, 2
        %vm5097 = vcmp.lt.s32.totalorder %v5076, 3
        %vm5098 = vcmp.lt.s32.totalorder %v5076, 4
        %v5099 = vsel %vm5095, %v5079, %v5082
        %v5100 = vsel %vm5098, %v5088, 2102212464
        %v5101 = vsel %vm5097, %v5085, %v5100
        %v5102 = vsel %vm5096, %v5099, %v5101
        %v5103 = vsel %vm5095, %v5082, %v5085
        %v5104 = vsel %vm5098, %v5091, 920167782
        %v5105 = vsel %vm5097, %v5088, %v5104
        %v5106 = vsel %vm5096, %v5103, %v5105
        %v5107 = vsel %vm5095, %v5085, %v5088
        %v5108 = vsel %vm5098, %v5094, 1326507024
        %v5109 = vsel %vm5097, %v5091, %v5108
        %v5110 = vsel %vm5096, %v5107, %v5109
        %v5111 = vshll.u32 %v5071, 8
        %v5112 = vmul.u32.u64.compose %v5111, %v5110
        %v5113 = vextract.low.u32 %v5112
        %v5114 = vextract.high.u32 %v5112
        %v5115 = vmul.u32.u64.compose %v5111, %v5106
        %v5116 = vextract.low.u32 %v5115
        %v5117 = vextract.high.u32 %v5115
        %v5118 = vmul.u32 %v5111, %v5102
        %v5119 = vadd.s32 %v5114, %v5116
        %vm5120 = vc.u32 %v5114, %v5116
        %v5121 = vadd.s32 %v5117, 1
        %v5122 = vsel %vm5120, %v5121, %v5117
        %v5123 = vadd.s32 %v5118, %v5122
        %v5124 = vadd.s32 %v5123, 536870912
        %v5125 = vshrl.u32 %v5124, 30
        %v5126 = vshll.u32 %v5125, 30
        %v5127 = vsub.s32 %v5123, %v5126
        %vm5128 = vcmp.lt.s32.totalorder %v5127, 0
        %v5129 = vsub.s32 0, %v5127
        %v5130 = vsel %vm5128, %v5129, %v5127
        %v5131 = vclz %v5130
        %v5132 = vsub.s32 %v5131, 2
        %vm5133 = vcmp.gt.s32.totalorder 0, %v5132
        %v5134 = vsel %vm5133, 0, %v5132
        %v5135 = vsub.s32 32, %v5134
        %v5136 = vshll.u32 %v5127, %v5134
        %v5137 = vshrl.u32 %v5119, %v5135
        %v5138 = vor.u32 %v5136, %v5137
        %v5139 = vsub.s32 4294967266, %v5134
        %v5140 = vadd.s32 %v5139, 127
        %v5141 = vshll.u32 %v5140, 23
        %v5142 = vor.u32 4788187, %v5141
        %v5143 = vand.u32 2147483647, %v5142
        %v5145 = vcvt.s32.f32 %v5138
        %v5146 = vmul.f32 %v5145, %v5143
        %v5147 = vxor.u32 %v5146, 2147483648
        %v5148 = vsel %vm5065, %v5147, %v5146
        %v5149 = vsub.s32 4, %v5125
        %v5150 = vsel %vm5065, %v5149, %v5125
        %v5151 = vsel %vm5064, %v581, %v5148
        %v5152 = vsel %vm5064, 0, %v5150
        %v5153 = vcosq.f32.pop %v5151
        %v5154 = vsinq.f32.pop %v5151
        %vm5155 = vweird.f32 %v581
        %v5156 = vand.u32 %v5152, 3
        %vm5157 = vcmp.lt.s32.totalorder %v5156, 2
        %vm5158 = vcmp.eq.s32.totalorder %v5156, 0
        %v5159 = vxor.u32 %v5154, 2147483648
        %v5160 = vsel %vm5158, %v5153, %v5159
        %vm5161 = vcmp.eq.s32.totalorder %v5156, 2
        %v5162 = vxor.u32 %v5153, 2147483648
        %v5163 = vsel %vm5161, %v5162, %v5154
        %v5164 = vsel %vm5157, %v5160, %v5163
        %v5165 = vsel %vm5155, nan, %v5164
        %v5166 = vand.u32 2147483647, %v582
        %vm5167 = vcmp.le.f32.partialorder %v5166, 0.7853982
        %vm5168 = vcmp.lt.s32.totalorder %v582, 0
        %v5169 = vand.u32 %v582, 2139095040
        %v5170 = vshrl.u32 %v5169, 23
        %v5171 = vsub.s32 %v5170, 127
        %v5172 = vand.u32 2147483647, %v582
        %v5173 = vand.u32 %v5172, 8388607
        %v5174 = vor.u32 %v5173, 8388608
        %v5175 = vsub.s32 0, %v5174
        %v5176 = vadd.s32 %v5171, 1
        %vm5177 = vcmp.gt.s32.totalorder %v5176, 0
        %v5178 = vsel %vm5177, %v5176, 0
        %v5179 = vshrl.u32 %v5178, 5
        %v5180 = vand.u32 %v5178, 31
        %v5181 = vsub.s32 32, %v5180
        %v5182 = vshrl.u32 683565275, %v5181
        %v5183 = vshll.u32 683565275, %v5180
        %v5184 = vshrl.u32 2475754826, %v5181
        %v5185 = vor.u32 %v5183, %v5184
        %v5186 = vshll.u32 2475754826, %v5180
        %v5187 = vshrl.u32 2131351028, %v5181
        %v5188 = vor.u32 %v5186, %v5187
        %v5189 = vshll.u32 2131351028, %v5180
        %v5190 = vshrl.u32 2102212464, %v5181
        %v5191 = vor.u32 %v5189, %v5190
        %v5192 = vshll.u32 2102212464, %v5180
        %v5193 = vshrl.u32 920167782, %v5181
        %v5194 = vor.u32 %v5192, %v5193
        %v5195 = vshll.u32 920167782, %v5180
        %v5196 = vshrl.u32 1326507024, %v5181
        %v5197 = vor.u32 %v5195, %v5196
        %vm5198 = vcmp.lt.s32.totalorder %v5179, 1
        %vm5199 = vcmp.lt.s32.totalorder %v5179, 2
        %vm5200 = vcmp.lt.s32.totalorder %v5179, 3
        %vm5201 = vcmp.lt.s32.totalorder %v5179, 4
        %v5202 = vsel %vm5198, %v5182, %v5185
        %v5203 = vsel %vm5201, %v5191, 2102212464
        %v5204 = vsel %vm5200, %v5188, %v5203
        %v5205 = vsel %vm5199, %v5202, %v5204
        %v5206 = vsel %vm5198, %v5185, %v5188
        %v5207 = vsel %vm5201, %v5194, 920167782
        %v5208 = vsel %vm5200, %v5191, %v5207
        %v5209 = vsel %vm5199, %v5206, %v5208
        %v5210 = vsel %vm5198, %v5188, %v5191
        %v5211 = vsel %vm5201, %v5197, 1326507024
        %v5212 = vsel %vm5200, %v5194, %v5211
        %v5213 = vsel %vm5199, %v5210, %v5212
        %v5214 = vshll.u32 %v5174, 8
        %v5215 = vmul.u32.u64.compose %v5214, %v5213
        %v5216 = vextract.low.u32 %v5215
        %v5217 = vextract.high.u32 %v5215
        %v5218 = vmul.u32.u64.compose %v5214, %v5209
        %v5219 = vextract.low.u32 %v5218
        %v5220 = vextract.high.u32 %v5218
        %v5221 = vmul.u32 %v5214, %v5205
        %v5222 = vadd.s32 %v5217, %v5219
        %vm5223 = vc.u32 %v5217, %v5219
        %v5224 = vadd.s32 %v5220, 1
        %v5225 = vsel %vm5223, %v5224, %v5220
        %v5226 = vadd.s32 %v5221, %v5225
        %v5227 = vadd.s32 %v5226, 536870912
        %v5228 = vshrl.u32 %v5227, 30
        %v5229 = vshll.u32 %v5228, 30
        %v5230 = vsub.s32 %v5226, %v5229
        %vm5231 = vcmp.lt.s32.totalorder %v5230, 0
        %v5232 = vsub.s32 0, %v5230
        %v5233 = vsel %vm5231, %v5232, %v5230
        %v5234 = vclz %v5233
        %v5235 = vsub.s32 %v5234, 2
        %vm5236 = vcmp.gt.s32.totalorder 0, %v5235
        %v5237 = vsel %vm5236, 0, %v5235
        %v5238 = vsub.s32 32, %v5237
        %v5239 = vshll.u32 %v5230, %v5237
        %v5240 = vshrl.u32 %v5222, %v5238
        %v5241 = vor.u32 %v5239, %v5240
        %v5242 = vsub.s32 4294967266, %v5237
        %v5243 = vadd.s32 %v5242, 127
        %v5244 = vshll.u32 %v5243, 23
        %v5245 = vor.u32 4788187, %v5244
        %v5246 = vand.u32 2147483647, %v5245
        %v5248 = vcvt.s32.f32 %v5241
        %v5249 = vmul.f32 %v5248, %v5246
        %v5250 = vxor.u32 %v5249, 2147483648
        %v5251 = vsel %vm5168, %v5250, %v5249
        %v5252 = vsub.s32 4, %v5228
        %v5253 = vsel %vm5168, %v5252, %v5228
        %v5254 = vsel %vm5167, %v582, %v5251
        %v5255 = vsel %vm5167, 0, %v5253
        %v5256 = vcosq.f32.pop %v5254
        %v5257 = vsinq.f32.pop %v5254
        %vm5258 = vweird.f32 %v582
        %v5259 = vand.u32 %v5255, 3
        %vm5260 = vcmp.lt.s32.totalorder %v5259, 2
        %vm5261 = vcmp.eq.s32.totalorder %v5259, 0
        %v5262 = vxor.u32 %v5257, 2147483648
        %v5263 = vsel %vm5261, %v5256, %v5262
        %vm5264 = vcmp.eq.s32.totalorder %v5259, 2
        %v5265 = vxor.u32 %v5256, 2147483648
        %v5266 = vsel %vm5264, %v5265, %v5257
        %v5267 = vsel %vm5260, %v5263, %v5266
        %v5268 = vsel %vm5258, nan, %v5267
        %v5269 = vand.u32 2147483647, %v583
        %vm5270 = vcmp.le.f32.partialorder %v5269, 0.7853982
        %vm5271 = vcmp.lt.s32.totalorder %v583, 0
        %v5272 = vand.u32 %v583, 2139095040
        %v5273 = vshrl.u32 %v5272, 23
        %v5274 = vsub.s32 %v5273, 127
        %v5275 = vand.u32 2147483647, %v583
        %v5276 = vand.u32 %v5275, 8388607
        %v5277 = vor.u32 %v5276, 8388608
        %v5278 = vsub.s32 0, %v5277
        %v5279 = vadd.s32 %v5274, 1
        %vm5280 = vcmp.gt.s32.totalorder %v5279, 0
        %v5281 = vsel %vm5280, %v5279, 0
        %v5282 = vshrl.u32 %v5281, 5
        %v5283 = vand.u32 %v5281, 31
        %v5284 = vsub.s32 32, %v5283
        %v5285 = vshrl.u32 683565275, %v5284
        %v5286 = vshll.u32 683565275, %v5283
        %v5287 = vshrl.u32 2475754826, %v5284
        %v5288 = vor.u32 %v5286, %v5287
        %v5289 = vshll.u32 2475754826, %v5283
        %v5290 = vshrl.u32 2131351028, %v5284
        %v5291 = vor.u32 %v5289, %v5290
        %v5292 = vshll.u32 2131351028, %v5283
        %v5293 = vshrl.u32 2102212464, %v5284
        %v5294 = vor.u32 %v5292, %v5293
        %v5295 = vshll.u32 2102212464, %v5283
        %v5296 = vshrl.u32 920167782, %v5284
        %v5297 = vor.u32 %v5295, %v5296
        %v5298 = vshll.u32 920167782, %v5283
        %v5299 = vshrl.u32 1326507024, %v5284
        %v5300 = vor.u32 %v5298, %v5299
        %vm5301 = vcmp.lt.s32.totalorder %v5282, 1
        %vm5302 = vcmp.lt.s32.totalorder %v5282, 2
        %vm5303 = vcmp.lt.s32.totalorder %v5282, 3
        %vm5304 = vcmp.lt.s32.totalorder %v5282, 4
        %v5305 = vsel %vm5301, %v5285, %v5288
        %v5306 = vsel %vm5304, %v5294, 2102212464
        %v5307 = vsel %vm5303, %v5291, %v5306
        %v5308 = vsel %vm5302, %v5305, %v5307
        %v5309 = vsel %vm5301, %v5288, %v5291
        %v5310 = vsel %vm5304, %v5297, 920167782
        %v5311 = vsel %vm5303, %v5294, %v5310
        %v5312 = vsel %vm5302, %v5309, %v5311
        %v5313 = vsel %vm5301, %v5291, %v5294
        %v5314 = vsel %vm5304, %v5300, 1326507024
        %v5315 = vsel %vm5303, %v5297, %v5314
        %v5316 = vsel %vm5302, %v5313, %v5315
        %v5317 = vshll.u32 %v5277, 8
        %v5318 = vmul.u32.u64.compose %v5317, %v5316
        %v5319 = vextract.low.u32 %v5318
        %v5320 = vextract.high.u32 %v5318
        %v5321 = vmul.u32.u64.compose %v5317, %v5312
        %v5322 = vextract.low.u32 %v5321
        %v5323 = vextract.high.u32 %v5321
        %v5324 = vmul.u32 %v5317, %v5308
        %v5325 = vadd.s32 %v5320, %v5322
        %vm5326 = vc.u32 %v5320, %v5322
        %v5327 = vadd.s32 %v5323, 1
        %v5328 = vsel %vm5326, %v5327, %v5323
        %v5329 = vadd.s32 %v5324, %v5328
        %v5330 = vadd.s32 %v5329, 536870912
        %v5331 = vshrl.u32 %v5330, 30
        %v5332 = vshll.u32 %v5331, 30
        %v5333 = vsub.s32 %v5329, %v5332
        %vm5334 = vcmp.lt.s32.totalorder %v5333, 0
        %v5335 = vsub.s32 0, %v5333
        %v5336 = vsel %vm5334, %v5335, %v5333
        %v5337 = vclz %v5336
        %v5338 = vsub.s32 %v5337, 2
        %vm5339 = vcmp.gt.s32.totalorder 0, %v5338
        %v5340 = vsel %vm5339, 0, %v5338
        %v5341 = vsub.s32 32, %v5340
        %v5342 = vshll.u32 %v5333, %v5340
        %v5343 = vshrl.u32 %v5325, %v5341
        %v5344 = vor.u32 %v5342, %v5343
        %v5345 = vsub.s32 4294967266, %v5340
        %v5346 = vadd.s32 %v5345, 127
        %v5347 = vshll.u32 %v5346, 23
        %v5348 = vor.u32 4788187, %v5347
        %v5349 = vand.u32 2147483647, %v5348
        %v5351 = vcvt.s32.f32 %v5344
        %v5352 = vmul.f32 %v5351, %v5349
        %v5353 = vxor.u32 %v5352, 2147483648
        %v5354 = vsel %vm5271, %v5353, %v5352
        %v5355 = vsub.s32 4, %v5331
        %v5356 = vsel %vm5271, %v5355, %v5331
        %v5357 = vsel %vm5270, %v583, %v5354
        %v5358 = vsel %vm5270, 0, %v5356
        %v5359 = vcosq.f32.pop %v5357
        %v5360 = vsinq.f32.pop %v5357
        %vm5361 = vweird.f32 %v583
        %v5362 = vand.u32 %v5358, 3
        %vm5363 = vcmp.lt.s32.totalorder %v5362, 2
        %vm5364 = vcmp.eq.s32.totalorder %v5362, 0
        %v5365 = vxor.u32 %v5360, 2147483648
        %v5366 = vsel %vm5364, %v5359, %v5365
        %vm5367 = vcmp.eq.s32.totalorder %v5362, 2
        %v5368 = vxor.u32 %v5359, 2147483648
        %v5369 = vsel %vm5367, %v5368, %v5360
        %v5370 = vsel %vm5363, %v5366, %v5369
        %v5371 = vsel %vm5361, nan, %v5370
        %v5372 = vand.u32 2147483647, %v584
        %vm5373 = vcmp.le.f32.partialorder %v5372, 0.7853982
        %vm5374 = vcmp.lt.s32.totalorder %v584, 0
        %v5375 = vand.u32 %v584, 2139095040
        %v5376 = vshrl.u32 %v5375, 23
        %v5377 = vsub.s32 %v5376, 127
        %v5378 = vand.u32 2147483647, %v584
        %v5379 = vand.u32 %v5378, 8388607
        %v5380 = vor.u32 %v5379, 8388608
        %v5381 = vsub.s32 0, %v5380
        %v5382 = vadd.s32 %v5377, 1
        %vm5383 = vcmp.gt.s32.totalorder %v5382, 0
        %v5384 = vsel %vm5383, %v5382, 0
        %v5385 = vshrl.u32 %v5384, 5
        %v5386 = vand.u32 %v5384, 31
        %v5387 = vsub.s32 32, %v5386
        %v5388 = vshrl.u32 683565275, %v5387
        %v5389 = vshll.u32 683565275, %v5386
        %v5390 = vshrl.u32 2475754826, %v5387
        %v5391 = vor.u32 %v5389, %v5390
        %v5392 = vshll.u32 2475754826, %v5386
        %v5393 = vshrl.u32 2131351028, %v5387
        %v5394 = vor.u32 %v5392, %v5393
        %v5395 = vshll.u32 2131351028, %v5386
        %v5396 = vshrl.u32 2102212464, %v5387
        %v5397 = vor.u32 %v5395, %v5396
        %v5398 = vshll.u32 2102212464, %v5386
        %v5399 = vshrl.u32 920167782, %v5387
        %v5400 = vor.u32 %v5398, %v5399
        %v5401 = vshll.u32 920167782, %v5386
        %v5402 = vshrl.u32 1326507024, %v5387
        %v5403 = vor.u32 %v5401, %v5402
        %vm5404 = vcmp.lt.s32.totalorder %v5385, 1
        %vm5405 = vcmp.lt.s32.totalorder %v5385, 2
        %vm5406 = vcmp.lt.s32.totalorder %v5385, 3
        %vm5407 = vcmp.lt.s32.totalorder %v5385, 4
        %v5408 = vsel %vm5404, %v5388, %v5391
        %v5409 = vsel %vm5407, %v5397, 2102212464
        %v5410 = vsel %vm5406, %v5394, %v5409
        %v5411 = vsel %vm5405, %v5408, %v5410
        %v5412 = vsel %vm5404, %v5391, %v5394
        %v5413 = vsel %vm5407, %v5400, 920167782
        %v5414 = vsel %vm5406, %v5397, %v5413
        %v5415 = vsel %vm5405, %v5412, %v5414
        %v5416 = vsel %vm5404, %v5394, %v5397
        %v5417 = vsel %vm5407, %v5403, 1326507024
        %v5418 = vsel %vm5406, %v5400, %v5417
        %v5419 = vsel %vm5405, %v5416, %v5418
        %v5420 = vshll.u32 %v5380, 8
        %v5421 = vmul.u32.u64.compose %v5420, %v5419
        %v5422 = vextract.low.u32 %v5421
        %v5423 = vextract.high.u32 %v5421
        %v5424 = vmul.u32.u64.compose %v5420, %v5415
        %v5425 = vextract.low.u32 %v5424
        %v5426 = vextract.high.u32 %v5424
        %v5427 = vmul.u32 %v5420, %v5411
        %v5428 = vadd.s32 %v5423, %v5425
        %vm5429 = vc.u32 %v5423, %v5425
        %v5430 = vadd.s32 %v5426, 1
        %v5431 = vsel %vm5429, %v5430, %v5426
        %v5432 = vadd.s32 %v5427, %v5431
        %v5433 = vadd.s32 %v5432, 536870912
        %v5434 = vshrl.u32 %v5433, 30
        %v5435 = vshll.u32 %v5434, 30
        %v5436 = vsub.s32 %v5432, %v5435
        %vm5437 = vcmp.lt.s32.totalorder %v5436, 0
        %v5438 = vsub.s32 0, %v5436
        %v5439 = vsel %vm5437, %v5438, %v5436
        %v5440 = vclz %v5439
        %v5441 = vsub.s32 %v5440, 2
        %vm5442 = vcmp.gt.s32.totalorder 0, %v5441
        %v5443 = vsel %vm5442, 0, %v5441
        %v5444 = vsub.s32 32, %v5443
        %v5445 = vshll.u32 %v5436, %v5443
        %v5446 = vshrl.u32 %v5428, %v5444
        %v5447 = vor.u32 %v5445, %v5446
        %v5448 = vsub.s32 4294967266, %v5443
        %v5449 = vadd.s32 %v5448, 127
        %v5450 = vshll.u32 %v5449, 23
        %v5451 = vor.u32 4788187, %v5450
        %v5452 = vand.u32 2147483647, %v5451
        %v5454 = vcvt.s32.f32 %v5447
        %v5455 = vmul.f32 %v5454, %v5452
        %v5456 = vxor.u32 %v5455, 2147483648
        %v5457 = vsel %vm5374, %v5456, %v5455
        %v5458 = vsub.s32 4, %v5434
        %v5459 = vsel %vm5374, %v5458, %v5434
        %v5460 = vsel %vm5373, %v584, %v5457
        %v5461 = vsel %vm5373, 0, %v5459
        %v5462 = vcosq.f32.pop %v5460
        %v5463 = vsinq.f32.pop %v5460
        %vm5464 = vweird.f32 %v584
        %v5465 = vand.u32 %v5461, 3
        %vm5466 = vcmp.lt.s32.totalorder %v5465, 2
        %vm5467 = vcmp.eq.s32.totalorder %v5465, 0
        %v5468 = vxor.u32 %v5463, 2147483648
        %v5469 = vsel %vm5467, %v5462, %v5468
        %vm5470 = vcmp.eq.s32.totalorder %v5465, 2
        %v5471 = vxor.u32 %v5462, 2147483648
        %v5472 = vsel %vm5470, %v5471, %v5463
        %v5473 = vsel %vm5466, %v5469, %v5472
        %v5474 = vsel %vm5464, nan, %v5473
        %v5475 = vand.u32 2147483647, %v585
        %vm5476 = vcmp.le.f32.partialorder %v5475, 0.7853982
        %vm5477 = vcmp.lt.s32.totalorder %v585, 0
        %v5478 = vand.u32 %v585, 2139095040
        %v5479 = vshrl.u32 %v5478, 23
        %v5480 = vsub.s32 %v5479, 127
        %v5481 = vand.u32 2147483647, %v585
        %v5482 = vand.u32 %v5481, 8388607
        %v5483 = vor.u32 %v5482, 8388608
        %v5484 = vsub.s32 0, %v5483
        %v5485 = vadd.s32 %v5480, 1
        %vm5486 = vcmp.gt.s32.totalorder %v5485, 0
        %v5487 = vsel %vm5486, %v5485, 0
        %v5488 = vshrl.u32 %v5487, 5
        %v5489 = vand.u32 %v5487, 31
        %v5490 = vsub.s32 32, %v5489
        %v5491 = vshrl.u32 683565275, %v5490
        %v5492 = vshll.u32 683565275, %v5489
        %v5493 = vshrl.u32 2475754826, %v5490
        %v5494 = vor.u32 %v5492, %v5493
        %v5495 = vshll.u32 2475754826, %v5489
        %v5496 = vshrl.u32 2131351028, %v5490
        %v5497 = vor.u32 %v5495, %v5496
        %v5498 = vshll.u32 2131351028, %v5489
        %v5499 = vshrl.u32 2102212464, %v5490
        %v5500 = vor.u32 %v5498, %v5499
        %v5501 = vshll.u32 2102212464, %v5489
        %v5502 = vshrl.u32 920167782, %v5490
        %v5503 = vor.u32 %v5501, %v5502
        %v5504 = vshll.u32 920167782, %v5489
        %v5505 = vshrl.u32 1326507024, %v5490
        %v5506 = vor.u32 %v5504, %v5505
        %vm5507 = vcmp.lt.s32.totalorder %v5488, 1
        %vm5508 = vcmp.lt.s32.totalorder %v5488, 2
        %vm5509 = vcmp.lt.s32.totalorder %v5488, 3
        %vm5510 = vcmp.lt.s32.totalorder %v5488, 4
        %v5511 = vsel %vm5507, %v5491, %v5494
        %v5512 = vsel %vm5510, %v5500, 2102212464
        %v5513 = vsel %vm5509, %v5497, %v5512
        %v5514 = vsel %vm5508, %v5511, %v5513
        %v5515 = vsel %vm5507, %v5494, %v5497
        %v5516 = vsel %vm5510, %v5503, 920167782
        %v5517 = vsel %vm5509, %v5500, %v5516
        %v5518 = vsel %vm5508, %v5515, %v5517
        %v5519 = vsel %vm5507, %v5497, %v5500
        %v5520 = vsel %vm5510, %v5506, 1326507024
        %v5521 = vsel %vm5509, %v5503, %v5520
        %v5522 = vsel %vm5508, %v5519, %v5521
        %v5523 = vshll.u32 %v5483, 8
        %v5524 = vmul.u32.u64.compose %v5523, %v5522
        %v5525 = vextract.low.u32 %v5524
        %v5526 = vextract.high.u32 %v5524
        %v5527 = vmul.u32.u64.compose %v5523, %v5518
        %v5528 = vextract.low.u32 %v5527
        %v5529 = vextract.high.u32 %v5527
        %v5530 = vmul.u32 %v5523, %v5514
        %v5531 = vadd.s32 %v5526, %v5528
        %vm5532 = vc.u32 %v5526, %v5528
        %v5533 = vadd.s32 %v5529, 1
        %v5534 = vsel %vm5532, %v5533, %v5529
        %v5535 = vadd.s32 %v5530, %v5534
        %v5536 = vadd.s32 %v5535, 536870912
        %v5537 = vshrl.u32 %v5536, 30
        %v5538 = vshll.u32 %v5537, 30
        %v5539 = vsub.s32 %v5535, %v5538
        %vm5540 = vcmp.lt.s32.totalorder %v5539, 0
        %v5541 = vsub.s32 0, %v5539
        %v5542 = vsel %vm5540, %v5541, %v5539
        %v5543 = vclz %v5542
        %v5544 = vsub.s32 %v5543, 2
        %vm5545 = vcmp.gt.s32.totalorder 0, %v5544
        %v5546 = vsel %vm5545, 0, %v5544
        %v5547 = vsub.s32 32, %v5546
        %v5548 = vshll.u32 %v5539, %v5546
        %v5549 = vshrl.u32 %v5531, %v5547
        %v5550 = vor.u32 %v5548, %v5549
        %v5551 = vsub.s32 4294967266, %v5546
        %v5552 = vadd.s32 %v5551, 127
        %v5553 = vshll.u32 %v5552, 23
        %v5554 = vor.u32 4788187, %v5553
        %v5555 = vand.u32 2147483647, %v5554
        %v5557 = vcvt.s32.f32 %v5550
        %v5558 = vmul.f32 %v5557, %v5555
        %v5559 = vxor.u32 %v5558, 2147483648
        %v5560 = vsel %vm5477, %v5559, %v5558
        %v5561 = vsub.s32 4, %v5537
        %v5562 = vsel %vm5477, %v5561, %v5537
        %v5563 = vsel %vm5476, %v585, %v5560
        %v5564 = vsel %vm5476, 0, %v5562
        %v5565 = vcosq.f32.pop %v5563
        %v5566 = vsinq.f32.pop %v5563
        %vm5567 = vweird.f32 %v585
        %v5568 = vand.u32 %v5564, 3
        %vm5569 = vcmp.lt.s32.totalorder %v5568, 2
        %vm5570 = vcmp.eq.s32.totalorder %v5568, 0
        %v5571 = vxor.u32 %v5566, 2147483648
        %v5572 = vsel %vm5570, %v5565, %v5571
        %vm5573 = vcmp.eq.s32.totalorder %v5568, 2
        %v5574 = vxor.u32 %v5565, 2147483648
        %v5575 = vsel %vm5573, %v5574, %v5566
        %v5576 = vsel %vm5569, %v5572, %v5575
        %v5577 = vsel %vm5567, nan, %v5576
        %v5578 = vand.u32 2147483647, %v586
        %vm5579 = vcmp.le.f32.partialorder %v5578, 0.7853982
        %vm5580 = vcmp.lt.s32.totalorder %v586, 0
        %v5581 = vand.u32 %v586, 2139095040
        %v5582 = vshrl.u32 %v5581, 23
        %v5583 = vsub.s32 %v5582, 127
        %v5584 = vand.u32 2147483647, %v586
        %v5585 = vand.u32 %v5584, 8388607
        %v5586 = vor.u32 %v5585, 8388608
        %v5587 = vsub.s32 0, %v5586
        %v5588 = vadd.s32 %v5583, 1
        %vm5589 = vcmp.gt.s32.totalorder %v5588, 0
        %v5590 = vsel %vm5589, %v5588, 0
        %v5591 = vshrl.u32 %v5590, 5
        %v5592 = vand.u32 %v5590, 31
        %v5593 = vsub.s32 32, %v5592
        %v5594 = vshrl.u32 683565275, %v5593
        %v5595 = vshll.u32 683565275, %v5592
        %v5596 = vshrl.u32 2475754826, %v5593
        %v5597 = vor.u32 %v5595, %v5596
        %v5598 = vshll.u32 2475754826, %v5592
        %v5599 = vshrl.u32 2131351028, %v5593
        %v5600 = vor.u32 %v5598, %v5599
        %v5601 = vshll.u32 2131351028, %v5592
        %v5602 = vshrl.u32 2102212464, %v5593
        %v5603 = vor.u32 %v5601, %v5602
        %v5604 = vshll.u32 2102212464, %v5592
        %v5605 = vshrl.u32 920167782, %v5593
        %v5606 = vor.u32 %v5604, %v5605
        %v5607 = vshll.u32 920167782, %v5592
        %v5608 = vshrl.u32 1326507024, %v5593
        %v5609 = vor.u32 %v5607, %v5608
        %vm5610 = vcmp.lt.s32.totalorder %v5591, 1
        %vm5611 = vcmp.lt.s32.totalorder %v5591, 2
        %vm5612 = vcmp.lt.s32.totalorder %v5591, 3
        %vm5613 = vcmp.lt.s32.totalorder %v5591, 4
        %v5614 = vsel %vm5610, %v5594, %v5597
        %v5615 = vsel %vm5613, %v5603, 2102212464
        %v5616 = vsel %vm5612, %v5600, %v5615
        %v5617 = vsel %vm5611, %v5614, %v5616
        %v5618 = vsel %vm5610, %v5597, %v5600
        %v5619 = vsel %vm5613, %v5606, 920167782
        %v5620 = vsel %vm5612, %v5603, %v5619
        %v5621 = vsel %vm5611, %v5618, %v5620
        %v5622 = vsel %vm5610, %v5600, %v5603
        %v5623 = vsel %vm5613, %v5609, 1326507024
        %v5624 = vsel %vm5612, %v5606, %v5623
        %v5625 = vsel %vm5611, %v5622, %v5624
        %v5626 = vshll.u32 %v5586, 8
        %v5627 = vmul.u32.u64.compose %v5626, %v5625
        %v5628 = vextract.low.u32 %v5627
        %v5629 = vextract.high.u32 %v5627
        %v5630 = vmul.u32.u64.compose %v5626, %v5621
        %v5631 = vextract.low.u32 %v5630
        %v5632 = vextract.high.u32 %v5630
        %v5633 = vmul.u32 %v5626, %v5617
        %v5634 = vadd.s32 %v5629, %v5631
        %vm5635 = vc.u32 %v5629, %v5631
        %v5636 = vadd.s32 %v5632, 1
        %v5637 = vsel %vm5635, %v5636, %v5632
        %v5638 = vadd.s32 %v5633, %v5637
        %v5639 = vadd.s32 %v5638, 536870912
        %v5640 = vshrl.u32 %v5639, 30
        %v5641 = vshll.u32 %v5640, 30
        %v5642 = vsub.s32 %v5638, %v5641
        %vm5643 = vcmp.lt.s32.totalorder %v5642, 0
        %v5644 = vsub.s32 0, %v5642
        %v5645 = vsel %vm5643, %v5644, %v5642
        %v5646 = vclz %v5645
        %v5647 = vsub.s32 %v5646, 2
        %vm5648 = vcmp.gt.s32.totalorder 0, %v5647
        %v5649 = vsel %vm5648, 0, %v5647
        %v5650 = vsub.s32 32, %v5649
        %v5651 = vshll.u32 %v5642, %v5649
        %v5652 = vshrl.u32 %v5634, %v5650
        %v5653 = vor.u32 %v5651, %v5652
        %v5654 = vsub.s32 4294967266, %v5649
        %v5655 = vadd.s32 %v5654, 127
        %v5656 = vshll.u32 %v5655, 23
        %v5657 = vor.u32 4788187, %v5656
        %v5658 = vand.u32 2147483647, %v5657
        %v5660 = vcvt.s32.f32 %v5653
        %v5661 = vmul.f32 %v5660, %v5658
        %v5662 = vxor.u32 %v5661, 2147483648
        %v5663 = vsel %vm5580, %v5662, %v5661
        %v5664 = vsub.s32 4, %v5640
        %v5665 = vsel %vm5580, %v5664, %v5640
        %v5666 = vsel %vm5579, %v586, %v5663
        %v5667 = vsel %vm5579, 0, %v5665
        %v5668 = vcosq.f32.pop %v5666
        %v5669 = vsinq.f32.pop %v5666
        %vm5670 = vweird.f32 %v586
        %v5671 = vand.u32 %v5667, 3
        %vm5672 = vcmp.lt.s32.totalorder %v5671, 2
        %vm5673 = vcmp.eq.s32.totalorder %v5671, 0
        %v5674 = vxor.u32 %v5669, 2147483648
        %v5675 = vsel %vm5673, %v5668, %v5674
        %vm5676 = vcmp.eq.s32.totalorder %v5671, 2
        %v5677 = vxor.u32 %v5668, 2147483648
        %v5678 = vsel %vm5676, %v5677, %v5669
        %v5679 = vsel %vm5672, %v5675, %v5678
        %v5680 = vsel %vm5670, nan, %v5679
        %v5681 = vand.u32 2147483647, %v587
        %vm5682 = vcmp.le.f32.partialorder %v5681, 0.7853982
        %vm5683 = vcmp.lt.s32.totalorder %v587, 0
        %v5684 = vand.u32 %v587, 2139095040
        %v5685 = vshrl.u32 %v5684, 23
        %v5686 = vsub.s32 %v5685, 127
        %v5687 = vand.u32 2147483647, %v587
        %v5688 = vand.u32 %v5687, 8388607
        %v5689 = vor.u32 %v5688, 8388608
        %v5690 = vsub.s32 0, %v5689
        %v5691 = vadd.s32 %v5686, 1
        %vm5692 = vcmp.gt.s32.totalorder %v5691, 0
        %v5693 = vsel %vm5692, %v5691, 0
        %v5694 = vshrl.u32 %v5693, 5
        %v5695 = vand.u32 %v5693, 31
        %v5696 = vsub.s32 32, %v5695
        %v5697 = vshrl.u32 683565275, %v5696
        %v5698 = vshll.u32 683565275, %v5695
        %v5699 = vshrl.u32 2475754826, %v5696
        %v5700 = vor.u32 %v5698, %v5699
        %v5701 = vshll.u32 2475754826, %v5695
        %v5702 = vshrl.u32 2131351028, %v5696
        %v5703 = vor.u32 %v5701, %v5702
        %v5704 = vshll.u32 2131351028, %v5695
        %v5705 = vshrl.u32 2102212464, %v5696
        %v5706 = vor.u32 %v5704, %v5705
        %v5707 = vshll.u32 2102212464, %v5695
        %v5708 = vshrl.u32 920167782, %v5696
        %v5709 = vor.u32 %v5707, %v5708
        %v5710 = vshll.u32 920167782, %v5695
        %v5711 = vshrl.u32 1326507024, %v5696
        %v5712 = vor.u32 %v5710, %v5711
        %vm5713 = vcmp.lt.s32.totalorder %v5694, 1
        %vm5714 = vcmp.lt.s32.totalorder %v5694, 2
        %vm5715 = vcmp.lt.s32.totalorder %v5694, 3
        %vm5716 = vcmp.lt.s32.totalorder %v5694, 4
        %v5717 = vsel %vm5713, %v5697, %v5700
        %v5718 = vsel %vm5716, %v5706, 2102212464
        %v5719 = vsel %vm5715, %v5703, %v5718
        %v5720 = vsel %vm5714, %v5717, %v5719
        %v5721 = vsel %vm5713, %v5700, %v5703
        %v5722 = vsel %vm5716, %v5709, 920167782
        %v5723 = vsel %vm5715, %v5706, %v5722
        %v5724 = vsel %vm5714, %v5721, %v5723
        %v5725 = vsel %vm5713, %v5703, %v5706
        %v5726 = vsel %vm5716, %v5712, 1326507024
        %v5727 = vsel %vm5715, %v5709, %v5726
        %v5728 = vsel %vm5714, %v5725, %v5727
        %v5729 = vshll.u32 %v5689, 8
        %v5730 = vmul.u32.u64.compose %v5729, %v5728
        %v5731 = vextract.low.u32 %v5730
        %v5732 = vextract.high.u32 %v5730
        %v5733 = vmul.u32.u64.compose %v5729, %v5724
        %v5734 = vextract.low.u32 %v5733
        %v5735 = vextract.high.u32 %v5733
        %v5736 = vmul.u32 %v5729, %v5720
        %v5737 = vadd.s32 %v5732, %v5734
        %vm5738 = vc.u32 %v5732, %v5734
        %v5739 = vadd.s32 %v5735, 1
        %v5740 = vsel %vm5738, %v5739, %v5735
        %v5741 = vadd.s32 %v5736, %v5740
        %v5742 = vadd.s32 %v5741, 536870912
        %v5743 = vshrl.u32 %v5742, 30
        %v5744 = vshll.u32 %v5743, 30
        %v5745 = vsub.s32 %v5741, %v5744
        %vm5746 = vcmp.lt.s32.totalorder %v5745, 0
        %v5747 = vsub.s32 0, %v5745
        %v5748 = vsel %vm5746, %v5747, %v5745
        %v5749 = vclz %v5748
        %v5750 = vsub.s32 %v5749, 2
        %vm5751 = vcmp.gt.s32.totalorder 0, %v5750
        %v5752 = vsel %vm5751, 0, %v5750
        %v5753 = vsub.s32 32, %v5752
        %v5754 = vshll.u32 %v5745, %v5752
        %v5755 = vshrl.u32 %v5737, %v5753
        %v5756 = vor.u32 %v5754, %v5755
        %v5757 = vsub.s32 4294967266, %v5752
        %v5758 = vadd.s32 %v5757, 127
        %v5759 = vshll.u32 %v5758, 23
        %v5760 = vor.u32 4788187, %v5759
        %v5761 = vand.u32 2147483647, %v5760
        %v5763 = vcvt.s32.f32 %v5756
        %v5764 = vmul.f32 %v5763, %v5761
        %v5765 = vxor.u32 %v5764, 2147483648
        %v5766 = vsel %vm5683, %v5765, %v5764
        %v5767 = vsub.s32 4, %v5743
        %v5768 = vsel %vm5683, %v5767, %v5743
        %v5769 = vsel %vm5682, %v587, %v5766
        %v5770 = vsel %vm5682, 0, %v5768
        %v5771 = vcosq.f32.pop %v5769
        %v5772 = vsinq.f32.pop %v5769
        %vm5773 = vweird.f32 %v587
        %v5774 = vand.u32 %v5770, 3
        %vm5775 = vcmp.lt.s32.totalorder %v5774, 2
        %vm5776 = vcmp.eq.s32.totalorder %v5774, 0
        %v5777 = vxor.u32 %v5772, 2147483648
        %v5778 = vsel %vm5776, %v5771, %v5777
        %vm5779 = vcmp.eq.s32.totalorder %v5774, 2
        %v5780 = vxor.u32 %v5771, 2147483648
        %v5781 = vsel %vm5779, %v5780, %v5772
        %v5782 = vsel %vm5775, %v5778, %v5781
        %v5783 = vsel %vm5773, nan, %v5782
        %v5784 = vand.u32 2147483647, %v588
        %vm5785 = vcmp.le.f32.partialorder %v5784, 0.7853982
        %vm5786 = vcmp.lt.s32.totalorder %v588, 0
        %v5787 = vand.u32 %v588, 2139095040
        %v5788 = vshrl.u32 %v5787, 23
        %v5789 = vsub.s32 %v5788, 127
        %v5790 = vand.u32 2147483647, %v588
        %v5791 = vand.u32 %v5790, 8388607
        %v5792 = vor.u32 %v5791, 8388608
        %v5793 = vsub.s32 0, %v5792
        %v5794 = vadd.s32 %v5789, 1
        %vm5795 = vcmp.gt.s32.totalorder %v5794, 0
        %v5796 = vsel %vm5795, %v5794, 0
        %v5797 = vshrl.u32 %v5796, 5
        %v5798 = vand.u32 %v5796, 31
        %v5799 = vsub.s32 32, %v5798
        %v5800 = vshrl.u32 683565275, %v5799
        %v5801 = vshll.u32 683565275, %v5798
        %v5802 = vshrl.u32 2475754826, %v5799
        %v5803 = vor.u32 %v5801, %v5802
        %v5804 = vshll.u32 2475754826, %v5798
        %v5805 = vshrl.u32 2131351028, %v5799
        %v5806 = vor.u32 %v5804, %v5805
        %v5807 = vshll.u32 2131351028, %v5798
        %v5808 = vshrl.u32 2102212464, %v5799
        %v5809 = vor.u32 %v5807, %v5808
        %v5810 = vshll.u32 2102212464, %v5798
        %v5811 = vshrl.u32 920167782, %v5799
        %v5812 = vor.u32 %v5810, %v5811
        %v5813 = vshll.u32 920167782, %v5798
        %v5814 = vshrl.u32 1326507024, %v5799
        %v5815 = vor.u32 %v5813, %v5814
        %vm5816 = vcmp.lt.s32.totalorder %v5797, 1
        %vm5817 = vcmp.lt.s32.totalorder %v5797, 2
        %vm5818 = vcmp.lt.s32.totalorder %v5797, 3
        %vm5819 = vcmp.lt.s32.totalorder %v5797, 4
        %v5820 = vsel %vm5816, %v5800, %v5803
        %v5821 = vsel %vm5819, %v5809, 2102212464
        %v5822 = vsel %vm5818, %v5806, %v5821
        %v5823 = vsel %vm5817, %v5820, %v5822
        %v5824 = vsel %vm5816, %v5803, %v5806
        %v5825 = vsel %vm5819, %v5812, 920167782
        %v5826 = vsel %vm5818, %v5809, %v5825
        %v5827 = vsel %vm5817, %v5824, %v5826
        %v5828 = vsel %vm5816, %v5806, %v5809
        %v5829 = vsel %vm5819, %v5815, 1326507024
        %v5830 = vsel %vm5818, %v5812, %v5829
        %v5831 = vsel %vm5817, %v5828, %v5830
        %v5832 = vshll.u32 %v5792, 8
        %v5833 = vmul.u32.u64.compose %v5832, %v5831
        %v5834 = vextract.low.u32 %v5833
        %v5835 = vextract.high.u32 %v5833
        %v5836 = vmul.u32.u64.compose %v5832, %v5827
        %v5837 = vextract.low.u32 %v5836
        %v5838 = vextract.high.u32 %v5836
        %v5839 = vmul.u32 %v5832, %v5823
        %v5840 = vadd.s32 %v5835, %v5837
        %vm5841 = vc.u32 %v5835, %v5837
        %v5842 = vadd.s32 %v5838, 1
        %v5843 = vsel %vm5841, %v5842, %v5838
        %v5844 = vadd.s32 %v5839, %v5843
        %v5845 = vadd.s32 %v5844, 536870912
        %v5846 = vshrl.u32 %v5845, 30
        %v5847 = vshll.u32 %v5846, 30
        %v5848 = vsub.s32 %v5844, %v5847
        %vm5849 = vcmp.lt.s32.totalorder %v5848, 0
        %v5850 = vsub.s32 0, %v5848
        %v5851 = vsel %vm5849, %v5850, %v5848
        %v5852 = vclz %v5851
        %v5853 = vsub.s32 %v5852, 2
        %vm5854 = vcmp.gt.s32.totalorder 0, %v5853
        %v5855 = vsel %vm5854, 0, %v5853
        %v5856 = vsub.s32 32, %v5855
        %v5857 = vshll.u32 %v5848, %v5855
        %v5858 = vshrl.u32 %v5840, %v5856
        %v5859 = vor.u32 %v5857, %v5858
        %v5860 = vsub.s32 4294967266, %v5855
        %v5861 = vadd.s32 %v5860, 127
        %v5862 = vshll.u32 %v5861, 23
        %v5863 = vor.u32 4788187, %v5862
        %v5864 = vand.u32 2147483647, %v5863
        %v5866 = vcvt.s32.f32 %v5859
        %v5867 = vmul.f32 %v5866, %v5864
        %v5868 = vxor.u32 %v5867, 2147483648
        %v5869 = vsel %vm5786, %v5868, %v5867
        %v5870 = vsub.s32 4, %v5846
        %v5871 = vsel %vm5786, %v5870, %v5846
        %v5872 = vsel %vm5785, %v588, %v5869
        %v5873 = vsel %vm5785, 0, %v5871
        %v5874 = vcosq.f32.pop %v5872
        %v5875 = vsinq.f32.pop %v5872
        %vm5876 = vweird.f32 %v588
        %v5877 = vand.u32 %v5873, 3
        %vm5878 = vcmp.lt.s32.totalorder %v5877, 2
        %vm5879 = vcmp.eq.s32.totalorder %v5877, 0
        %v5880 = vxor.u32 %v5875, 2147483648
        %v5881 = vsel %vm5879, %v5874, %v5880
        %vm5882 = vcmp.eq.s32.totalorder %v5877, 2
        %v5883 = vxor.u32 %v5874, 2147483648
        %v5884 = vsel %vm5882, %v5883, %v5875
        %v5885 = vsel %vm5878, %v5881, %v5884
        %v5886 = vsel %vm5876, nan, %v5885
        %v5887 = vand.u32 2147483647, %v589
        %vm5888 = vcmp.le.f32.partialorder %v5887, 0.7853982
        %vm5889 = vcmp.lt.s32.totalorder %v589, 0
        %v5890 = vand.u32 %v589, 2139095040
        %v5891 = vshrl.u32 %v5890, 23
        %v5892 = vsub.s32 %v5891, 127
        %v5893 = vand.u32 2147483647, %v589
        %v5894 = vand.u32 %v5893, 8388607
        %v5895 = vor.u32 %v5894, 8388608
        %v5896 = vsub.s32 0, %v5895
        %v5897 = vadd.s32 %v5892, 1
        %vm5898 = vcmp.gt.s32.totalorder %v5897, 0
        %v5899 = vsel %vm5898, %v5897, 0
        %v5900 = vshrl.u32 %v5899, 5
        %v5901 = vand.u32 %v5899, 31
        %v5902 = vsub.s32 32, %v5901
        %v5903 = vshrl.u32 683565275, %v5902
        %v5904 = vshll.u32 683565275, %v5901
        %v5905 = vshrl.u32 2475754826, %v5902
        %v5906 = vor.u32 %v5904, %v5905
        %v5907 = vshll.u32 2475754826, %v5901
        %v5908 = vshrl.u32 2131351028, %v5902
        %v5909 = vor.u32 %v5907, %v5908
        %v5910 = vshll.u32 2131351028, %v5901
        %v5911 = vshrl.u32 2102212464, %v5902
        %v5912 = vor.u32 %v5910, %v5911
        %v5913 = vshll.u32 2102212464, %v5901
        %v5914 = vshrl.u32 920167782, %v5902
        %v5915 = vor.u32 %v5913, %v5914
        %v5916 = vshll.u32 920167782, %v5901
        %v5917 = vshrl.u32 1326507024, %v5902
        %v5918 = vor.u32 %v5916, %v5917
        %vm5919 = vcmp.lt.s32.totalorder %v5900, 1
        %vm5920 = vcmp.lt.s32.totalorder %v5900, 2
        %vm5921 = vcmp.lt.s32.totalorder %v5900, 3
        %vm5922 = vcmp.lt.s32.totalorder %v5900, 4
        %v5923 = vsel %vm5919, %v5903, %v5906
        %v5924 = vsel %vm5922, %v5912, 2102212464
        %v5925 = vsel %vm5921, %v5909, %v5924
        %v5926 = vsel %vm5920, %v5923, %v5925
        %v5927 = vsel %vm5919, %v5906, %v5909
        %v5928 = vsel %vm5922, %v5915, 920167782
        %v5929 = vsel %vm5921, %v5912, %v5928
        %v5930 = vsel %vm5920, %v5927, %v5929
        %v5931 = vsel %vm5919, %v5909, %v5912
        %v5932 = vsel %vm5922, %v5918, 1326507024
        %v5933 = vsel %vm5921, %v5915, %v5932
        %v5934 = vsel %vm5920, %v5931, %v5933
        %v5935 = vshll.u32 %v5895, 8
        %v5936 = vmul.u32.u64.compose %v5935, %v5934
        %v5937 = vextract.low.u32 %v5936
        %v5938 = vextract.high.u32 %v5936
        %v5939 = vmul.u32.u64.compose %v5935, %v5930
        %v5940 = vextract.low.u32 %v5939
        %v5941 = vextract.high.u32 %v5939
        %v5942 = vmul.u32 %v5935, %v5926
        %v5943 = vadd.s32 %v5938, %v5940
        %vm5944 = vc.u32 %v5938, %v5940
        %v5945 = vadd.s32 %v5941, 1
        %v5946 = vsel %vm5944, %v5945, %v5941
        %v5947 = vadd.s32 %v5942, %v5946
        %v5948 = vadd.s32 %v5947, 536870912
        %v5949 = vshrl.u32 %v5948, 30
        %v5950 = vshll.u32 %v5949, 30
        %v5951 = vsub.s32 %v5947, %v5950
        %vm5952 = vcmp.lt.s32.totalorder %v5951, 0
        %v5953 = vsub.s32 0, %v5951
        %v5954 = vsel %vm5952, %v5953, %v5951
        %v5955 = vclz %v5954
        %v5956 = vsub.s32 %v5955, 2
        %vm5957 = vcmp.gt.s32.totalorder 0, %v5956
        %v5958 = vsel %vm5957, 0, %v5956
        %v5959 = vsub.s32 32, %v5958
        %v5960 = vshll.u32 %v5951, %v5958
        %v5961 = vshrl.u32 %v5943, %v5959
        %v5962 = vor.u32 %v5960, %v5961
        %v5963 = vsub.s32 4294967266, %v5958
        %v5964 = vadd.s32 %v5963, 127
        %v5965 = vshll.u32 %v5964, 23
        %v5966 = vor.u32 4788187, %v5965
        %v5967 = vand.u32 2147483647, %v5966
        %v5969 = vcvt.s32.f32 %v5962
        %v5970 = vmul.f32 %v5969, %v5967
        %v5971 = vxor.u32 %v5970, 2147483648
        %v5972 = vsel %vm5889, %v5971, %v5970
        %v5973 = vsub.s32 4, %v5949
        %v5974 = vsel %vm5889, %v5973, %v5949
        %v5975 = vsel %vm5888, %v589, %v5972
        %v5976 = vsel %vm5888, 0, %v5974
        %v5977 = vcosq.f32.pop %v5975
        %v5978 = vsinq.f32.pop %v5975
        %vm5979 = vweird.f32 %v589
        %v5980 = vand.u32 %v5976, 3
        %vm5981 = vcmp.lt.s32.totalorder %v5980, 2
        %vm5982 = vcmp.eq.s32.totalorder %v5980, 0
        %v5983 = vxor.u32 %v5978, 2147483648
        %v5984 = vsel %vm5982, %v5977, %v5983
        %vm5985 = vcmp.eq.s32.totalorder %v5980, 2
        %v5986 = vxor.u32 %v5977, 2147483648
        %v5987 = vsel %vm5985, %v5986, %v5978
        %v5988 = vsel %vm5981, %v5984, %v5987
        %v5989 = vsel %vm5979, nan, %v5988
        %v5990 = vand.u32 2147483647, %v590
        %vm5991 = vcmp.le.f32.partialorder %v5990, 0.7853982
        %vm5992 = vcmp.lt.s32.totalorder %v590, 0
        %v5993 = vand.u32 %v590, 2139095040
        %v5994 = vshrl.u32 %v5993, 23
        %v5995 = vsub.s32 %v5994, 127
        %v5996 = vand.u32 2147483647, %v590
        %v5997 = vand.u32 %v5996, 8388607
        %v5998 = vor.u32 %v5997, 8388608
        %v5999 = vsub.s32 0, %v5998
        %v6000 = vadd.s32 %v5995, 1
        %vm6001 = vcmp.gt.s32.totalorder %v6000, 0
        %v6002 = vsel %vm6001, %v6000, 0
        %v6003 = vshrl.u32 %v6002, 5
        %v6004 = vand.u32 %v6002, 31
        %v6005 = vsub.s32 32, %v6004
        %v6006 = vshrl.u32 683565275, %v6005
        %v6007 = vshll.u32 683565275, %v6004
        %v6008 = vshrl.u32 2475754826, %v6005
        %v6009 = vor.u32 %v6007, %v6008
        %v6010 = vshll.u32 2475754826, %v6004
        %v6011 = vshrl.u32 2131351028, %v6005
        %v6012 = vor.u32 %v6010, %v6011
        %v6013 = vshll.u32 2131351028, %v6004
        %v6014 = vshrl.u32 2102212464, %v6005
        %v6015 = vor.u32 %v6013, %v6014
        %v6016 = vshll.u32 2102212464, %v6004
        %v6017 = vshrl.u32 920167782, %v6005
        %v6018 = vor.u32 %v6016, %v6017
        %v6019 = vshll.u32 920167782, %v6004
        %v6020 = vshrl.u32 1326507024, %v6005
        %v6021 = vor.u32 %v6019, %v6020
        %vm6022 = vcmp.lt.s32.totalorder %v6003, 1
        %vm6023 = vcmp.lt.s32.totalorder %v6003, 2
        %vm6024 = vcmp.lt.s32.totalorder %v6003, 3
        %vm6025 = vcmp.lt.s32.totalorder %v6003, 4
        %v6026 = vsel %vm6022, %v6006, %v6009
        %v6027 = vsel %vm6025, %v6015, 2102212464
        %v6028 = vsel %vm6024, %v6012, %v6027
        %v6029 = vsel %vm6023, %v6026, %v6028
        %v6030 = vsel %vm6022, %v6009, %v6012
        %v6031 = vsel %vm6025, %v6018, 920167782
        %v6032 = vsel %vm6024, %v6015, %v6031
        %v6033 = vsel %vm6023, %v6030, %v6032
        %v6034 = vsel %vm6022, %v6012, %v6015
        %v6035 = vsel %vm6025, %v6021, 1326507024
        %v6036 = vsel %vm6024, %v6018, %v6035
        %v6037 = vsel %vm6023, %v6034, %v6036
        %v6038 = vshll.u32 %v5998, 8
        %v6039 = vmul.u32.u64.compose %v6038, %v6037
        %v6040 = vextract.low.u32 %v6039
        %v6041 = vextract.high.u32 %v6039
        %v6042 = vmul.u32.u64.compose %v6038, %v6033
        %v6043 = vextract.low.u32 %v6042
        %v6044 = vextract.high.u32 %v6042
        %v6045 = vmul.u32 %v6038, %v6029
        %v6046 = vadd.s32 %v6041, %v6043
        %vm6047 = vc.u32 %v6041, %v6043
        %v6048 = vadd.s32 %v6044, 1
        %v6049 = vsel %vm6047, %v6048, %v6044
        %v6050 = vadd.s32 %v6045, %v6049
        %v6051 = vadd.s32 %v6050, 536870912
        %v6052 = vshrl.u32 %v6051, 30
        %v6053 = vshll.u32 %v6052, 30
        %v6054 = vsub.s32 %v6050, %v6053
        %vm6055 = vcmp.lt.s32.totalorder %v6054, 0
        %v6056 = vsub.s32 0, %v6054
        %v6057 = vsel %vm6055, %v6056, %v6054
        %v6058 = vclz %v6057
        %v6059 = vsub.s32 %v6058, 2
        %vm6060 = vcmp.gt.s32.totalorder 0, %v6059
        %v6061 = vsel %vm6060, 0, %v6059
        %v6062 = vsub.s32 32, %v6061
        %v6063 = vshll.u32 %v6054, %v6061
        %v6064 = vshrl.u32 %v6046, %v6062
        %v6065 = vor.u32 %v6063, %v6064
        %v6066 = vsub.s32 4294967266, %v6061
        %v6067 = vadd.s32 %v6066, 127
        %v6068 = vshll.u32 %v6067, 23
        %v6069 = vor.u32 4788187, %v6068
        %v6070 = vand.u32 2147483647, %v6069
        %v6072 = vcvt.s32.f32 %v6065
        %v6073 = vmul.f32 %v6072, %v6070
        %v6074 = vxor.u32 %v6073, 2147483648
        %v6075 = vsel %vm5992, %v6074, %v6073
        %v6076 = vsub.s32 4, %v6052
        %v6077 = vsel %vm5992, %v6076, %v6052
        %v6078 = vsel %vm5991, %v590, %v6075
        %v6079 = vsel %vm5991, 0, %v6077
        %v6080 = vcosq.f32.pop %v6078
        %v6081 = vsinq.f32.pop %v6078
        %vm6082 = vweird.f32 %v590
        %v6083 = vand.u32 %v6079, 3
        %vm6084 = vcmp.lt.s32.totalorder %v6083, 2
        %vm6085 = vcmp.eq.s32.totalorder %v6083, 0
        %v6086 = vxor.u32 %v6081, 2147483648
        %v6087 = vsel %vm6085, %v6080, %v6086
        %vm6088 = vcmp.eq.s32.totalorder %v6083, 2
        %v6089 = vxor.u32 %v6080, 2147483648
        %v6090 = vsel %vm6088, %v6089, %v6081
        %v6091 = vsel %vm6084, %v6087, %v6090
        %v6092 = vsel %vm6082, nan, %v6091
        %v6093 = vand.u32 2147483647, %v591
        %vm6094 = vcmp.le.f32.partialorder %v6093, 0.7853982
        %vm6095 = vcmp.lt.s32.totalorder %v591, 0
        %v6096 = vand.u32 %v591, 2139095040
        %v6097 = vshrl.u32 %v6096, 23
        %v6098 = vsub.s32 %v6097, 127
        %v6099 = vand.u32 2147483647, %v591
        %v6100 = vand.u32 %v6099, 8388607
        %v6101 = vor.u32 %v6100, 8388608
        %v6102 = vsub.s32 0, %v6101
        %v6103 = vadd.s32 %v6098, 1
        %vm6104 = vcmp.gt.s32.totalorder %v6103, 0
        %v6105 = vsel %vm6104, %v6103, 0
        %v6106 = vshrl.u32 %v6105, 5
        %v6107 = vand.u32 %v6105, 31
        %v6108 = vsub.s32 32, %v6107
        %v6109 = vshrl.u32 683565275, %v6108
        %v6110 = vshll.u32 683565275, %v6107
        %v6111 = vshrl.u32 2475754826, %v6108
        %v6112 = vor.u32 %v6110, %v6111
        %v6113 = vshll.u32 2475754826, %v6107
        %v6114 = vshrl.u32 2131351028, %v6108
        %v6115 = vor.u32 %v6113, %v6114
        %v6116 = vshll.u32 2131351028, %v6107
        %v6117 = vshrl.u32 2102212464, %v6108
        %v6118 = vor.u32 %v6116, %v6117
        %v6119 = vshll.u32 2102212464, %v6107
        %v6120 = vshrl.u32 920167782, %v6108
        %v6121 = vor.u32 %v6119, %v6120
        %v6122 = vshll.u32 920167782, %v6107
        %v6123 = vshrl.u32 1326507024, %v6108
        %v6124 = vor.u32 %v6122, %v6123
        %vm6125 = vcmp.lt.s32.totalorder %v6106, 1
        %vm6126 = vcmp.lt.s32.totalorder %v6106, 2
        %vm6127 = vcmp.lt.s32.totalorder %v6106, 3
        %vm6128 = vcmp.lt.s32.totalorder %v6106, 4
        %v6129 = vsel %vm6125, %v6109, %v6112
        %v6130 = vsel %vm6128, %v6118, 2102212464
        %v6131 = vsel %vm6127, %v6115, %v6130
        %v6132 = vsel %vm6126, %v6129, %v6131
        %v6133 = vsel %vm6125, %v6112, %v6115
        %v6134 = vsel %vm6128, %v6121, 920167782
        %v6135 = vsel %vm6127, %v6118, %v6134
        %v6136 = vsel %vm6126, %v6133, %v6135
        %v6137 = vsel %vm6125, %v6115, %v6118
        %v6138 = vsel %vm6128, %v6124, 1326507024
        %v6139 = vsel %vm6127, %v6121, %v6138
        %v6140 = vsel %vm6126, %v6137, %v6139
        %v6141 = vshll.u32 %v6101, 8
        %v6142 = vmul.u32.u64.compose %v6141, %v6140
        %v6143 = vextract.low.u32 %v6142
        %v6144 = vextract.high.u32 %v6142
        %v6145 = vmul.u32.u64.compose %v6141, %v6136
        %v6146 = vextract.low.u32 %v6145
        %v6147 = vextract.high.u32 %v6145
        %v6148 = vmul.u32 %v6141, %v6132
        %v6149 = vadd.s32 %v6144, %v6146
        %vm6150 = vc.u32 %v6144, %v6146
        %v6151 = vadd.s32 %v6147, 1
        %v6152 = vsel %vm6150, %v6151, %v6147
        %v6153 = vadd.s32 %v6148, %v6152
        %v6154 = vadd.s32 %v6153, 536870912
        %v6155 = vshrl.u32 %v6154, 30
        %v6156 = vshll.u32 %v6155, 30
        %v6157 = vsub.s32 %v6153, %v6156
        %vm6158 = vcmp.lt.s32.totalorder %v6157, 0
        %v6159 = vsub.s32 0, %v6157
        %v6160 = vsel %vm6158, %v6159, %v6157
        %v6161 = vclz %v6160
        %v6162 = vsub.s32 %v6161, 2
        %vm6163 = vcmp.gt.s32.totalorder 0, %v6162
        %v6164 = vsel %vm6163, 0, %v6162
        %v6165 = vsub.s32 32, %v6164
        %v6166 = vshll.u32 %v6157, %v6164
        %v6167 = vshrl.u32 %v6149, %v6165
        %v6168 = vor.u32 %v6166, %v6167
        %v6169 = vsub.s32 4294967266, %v6164
        %v6170 = vadd.s32 %v6169, 127
        %v6171 = vshll.u32 %v6170, 23
        %v6172 = vor.u32 4788187, %v6171
        %v6173 = vand.u32 2147483647, %v6172
        %v6175 = vcvt.s32.f32 %v6168
        %v6176 = vmul.f32 %v6175, %v6173
        %v6177 = vxor.u32 %v6176, 2147483648
        %v6178 = vsel %vm6095, %v6177, %v6176
        %v6179 = vsub.s32 4, %v6155
        %v6180 = vsel %vm6095, %v6179, %v6155
        %v6181 = vsel %vm6094, %v591, %v6178
        %v6182 = vsel %vm6094, 0, %v6180
        %v6183 = vcosq.f32.pop %v6181
        %v6184 = vsinq.f32.pop %v6181
        %vm6185 = vweird.f32 %v591
        %v6186 = vand.u32 %v6182, 3
        %vm6187 = vcmp.lt.s32.totalorder %v6186, 2
        %vm6188 = vcmp.eq.s32.totalorder %v6186, 0
        %v6189 = vxor.u32 %v6184, 2147483648
        %v6190 = vsel %vm6188, %v6183, %v6189
        %vm6191 = vcmp.eq.s32.totalorder %v6186, 2
        %v6192 = vxor.u32 %v6183, 2147483648
        %v6193 = vsel %vm6191, %v6192, %v6184
        %v6194 = vsel %vm6187, %v6190, %v6193
        %v6195 = vsel %vm6185, nan, %v6194
        %v6196 = vand.u32 2147483647, %v592
        %vm6197 = vcmp.le.f32.partialorder %v6196, 0.7853982
        %vm6198 = vcmp.lt.s32.totalorder %v592, 0
        %v6199 = vand.u32 %v592, 2139095040
        %v6200 = vshrl.u32 %v6199, 23
        %v6201 = vsub.s32 %v6200, 127
        %v6202 = vand.u32 2147483647, %v592
        %v6203 = vand.u32 %v6202, 8388607
        %v6204 = vor.u32 %v6203, 8388608
        %v6205 = vsub.s32 0, %v6204
        %v6206 = vadd.s32 %v6201, 1
        %vm6207 = vcmp.gt.s32.totalorder %v6206, 0
        %v6208 = vsel %vm6207, %v6206, 0
        %v6209 = vshrl.u32 %v6208, 5
        %v6210 = vand.u32 %v6208, 31
        %v6211 = vsub.s32 32, %v6210
        %v6212 = vshrl.u32 683565275, %v6211
        %v6213 = vshll.u32 683565275, %v6210
        %v6214 = vshrl.u32 2475754826, %v6211
        %v6215 = vor.u32 %v6213, %v6214
        %v6216 = vshll.u32 2475754826, %v6210
        %v6217 = vshrl.u32 2131351028, %v6211
        %v6218 = vor.u32 %v6216, %v6217
        %v6219 = vshll.u32 2131351028, %v6210
        %v6220 = vshrl.u32 2102212464, %v6211
        %v6221 = vor.u32 %v6219, %v6220
        %v6222 = vshll.u32 2102212464, %v6210
        %v6223 = vshrl.u32 920167782, %v6211
        %v6224 = vor.u32 %v6222, %v6223
        %v6225 = vshll.u32 920167782, %v6210
        %v6226 = vshrl.u32 1326507024, %v6211
        %v6227 = vor.u32 %v6225, %v6226
        %vm6228 = vcmp.lt.s32.totalorder %v6209, 1
        %vm6229 = vcmp.lt.s32.totalorder %v6209, 2
        %vm6230 = vcmp.lt.s32.totalorder %v6209, 3
        %vm6231 = vcmp.lt.s32.totalorder %v6209, 4
        %v6232 = vsel %vm6228, %v6212, %v6215
        %v6233 = vsel %vm6231, %v6221, 2102212464
        %v6234 = vsel %vm6230, %v6218, %v6233
        %v6235 = vsel %vm6229, %v6232, %v6234
        %v6236 = vsel %vm6228, %v6215, %v6218
        %v6237 = vsel %vm6231, %v6224, 920167782
        %v6238 = vsel %vm6230, %v6221, %v6237
        %v6239 = vsel %vm6229, %v6236, %v6238
        %v6240 = vsel %vm6228, %v6218, %v6221
        %v6241 = vsel %vm6231, %v6227, 1326507024
        %v6242 = vsel %vm6230, %v6224, %v6241
        %v6243 = vsel %vm6229, %v6240, %v6242
        %v6244 = vshll.u32 %v6204, 8
        %v6245 = vmul.u32.u64.compose %v6244, %v6243
        %v6246 = vextract.low.u32 %v6245
        %v6247 = vextract.high.u32 %v6245
        %v6248 = vmul.u32.u64.compose %v6244, %v6239
        %v6249 = vextract.low.u32 %v6248
        %v6250 = vextract.high.u32 %v6248
        %v6251 = vmul.u32 %v6244, %v6235
        %v6252 = vadd.s32 %v6247, %v6249
        %vm6253 = vc.u32 %v6247, %v6249
        %v6254 = vadd.s32 %v6250, 1
        %v6255 = vsel %vm6253, %v6254, %v6250
        %v6256 = vadd.s32 %v6251, %v6255
        %v6257 = vadd.s32 %v6256, 536870912
        %v6258 = vshrl.u32 %v6257, 30
        %v6259 = vshll.u32 %v6258, 30
        %v6260 = vsub.s32 %v6256, %v6259
        %vm6261 = vcmp.lt.s32.totalorder %v6260, 0
        %v6262 = vsub.s32 0, %v6260
        %v6263 = vsel %vm6261, %v6262, %v6260
        %v6264 = vclz %v6263
        %v6265 = vsub.s32 %v6264, 2
        %vm6266 = vcmp.gt.s32.totalorder 0, %v6265
        %v6267 = vsel %vm6266, 0, %v6265
        %v6268 = vsub.s32 32, %v6267
        %v6269 = vshll.u32 %v6260, %v6267
        %v6270 = vshrl.u32 %v6252, %v6268
        %v6271 = vor.u32 %v6269, %v6270
        %v6272 = vsub.s32 4294967266, %v6267
        %v6273 = vadd.s32 %v6272, 127
        %v6274 = vshll.u32 %v6273, 23
        %v6275 = vor.u32 4788187, %v6274
        %v6276 = vand.u32 2147483647, %v6275
        %v6278 = vcvt.s32.f32 %v6271
        %v6279 = vmul.f32 %v6278, %v6276
        %v6280 = vxor.u32 %v6279, 2147483648
        %v6281 = vsel %vm6198, %v6280, %v6279
        %v6282 = vsub.s32 4, %v6258
        %v6283 = vsel %vm6198, %v6282, %v6258
        %v6284 = vsel %vm6197, %v592, %v6281
        %v6285 = vsel %vm6197, 0, %v6283
        %v6286 = vcosq.f32.pop %v6284
        %v6287 = vsinq.f32.pop %v6284
        %vm6288 = vweird.f32 %v592
        %v6289 = vand.u32 %v6285, 3
        %vm6290 = vcmp.lt.s32.totalorder %v6289, 2
        %vm6291 = vcmp.eq.s32.totalorder %v6289, 0
        %v6292 = vxor.u32 %v6287, 2147483648
        %v6293 = vsel %vm6291, %v6286, %v6292
        %vm6294 = vcmp.eq.s32.totalorder %v6289, 2
        %v6295 = vxor.u32 %v6286, 2147483648
        %v6296 = vsel %vm6294, %v6295, %v6287
        %v6297 = vsel %vm6290, %v6293, %v6296
        %v6298 = vsel %vm6288, nan, %v6297
        %v6299 = vand.u32 2147483647, %v593
        %vm6300 = vcmp.le.f32.partialorder %v6299, 0.7853982
        %vm6301 = vcmp.lt.s32.totalorder %v593, 0
        %v6302 = vand.u32 %v593, 2139095040
        %v6303 = vshrl.u32 %v6302, 23
        %v6304 = vsub.s32 %v6303, 127
        %v6305 = vand.u32 2147483647, %v593
        %v6306 = vand.u32 %v6305, 8388607
        %v6307 = vor.u32 %v6306, 8388608
        %v6308 = vsub.s32 0, %v6307
        %v6309 = vadd.s32 %v6304, 1
        %vm6310 = vcmp.gt.s32.totalorder %v6309, 0
        %v6311 = vsel %vm6310, %v6309, 0
        %v6312 = vshrl.u32 %v6311, 5
        %v6313 = vand.u32 %v6311, 31
        %v6314 = vsub.s32 32, %v6313
        %v6315 = vshrl.u32 683565275, %v6314
        %v6316 = vshll.u32 683565275, %v6313
        %v6317 = vshrl.u32 2475754826, %v6314
        %v6318 = vor.u32 %v6316, %v6317
        %v6319 = vshll.u32 2475754826, %v6313
        %v6320 = vshrl.u32 2131351028, %v6314
        %v6321 = vor.u32 %v6319, %v6320
        %v6322 = vshll.u32 2131351028, %v6313
        %v6323 = vshrl.u32 2102212464, %v6314
        %v6324 = vor.u32 %v6322, %v6323
        %v6325 = vshll.u32 2102212464, %v6313
        %v6326 = vshrl.u32 920167782, %v6314
        %v6327 = vor.u32 %v6325, %v6326
        %v6328 = vshll.u32 920167782, %v6313
        %v6329 = vshrl.u32 1326507024, %v6314
        %v6330 = vor.u32 %v6328, %v6329
        %vm6331 = vcmp.lt.s32.totalorder %v6312, 1
        %vm6332 = vcmp.lt.s32.totalorder %v6312, 2
        %vm6333 = vcmp.lt.s32.totalorder %v6312, 3
        %vm6334 = vcmp.lt.s32.totalorder %v6312, 4
        %v6335 = vsel %vm6331, %v6315, %v6318
        %v6336 = vsel %vm6334, %v6324, 2102212464
        %v6337 = vsel %vm6333, %v6321, %v6336
        %v6338 = vsel %vm6332, %v6335, %v6337
        %v6339 = vsel %vm6331, %v6318, %v6321
        %v6340 = vsel %vm6334, %v6327, 920167782
        %v6341 = vsel %vm6333, %v6324, %v6340
        %v6342 = vsel %vm6332, %v6339, %v6341
        %v6343 = vsel %vm6331, %v6321, %v6324
        %v6344 = vsel %vm6334, %v6330, 1326507024
        %v6345 = vsel %vm6333, %v6327, %v6344
        %v6346 = vsel %vm6332, %v6343, %v6345
        %v6347 = vshll.u32 %v6307, 8
        %v6348 = vmul.u32.u64.compose %v6347, %v6346
        %v6349 = vextract.low.u32 %v6348
        %v6350 = vextract.high.u32 %v6348
        %v6351 = vmul.u32.u64.compose %v6347, %v6342
        %v6352 = vextract.low.u32 %v6351
        %v6353 = vextract.high.u32 %v6351
        %v6354 = vmul.u32 %v6347, %v6338
        %v6355 = vadd.s32 %v6350, %v6352
        %vm6356 = vc.u32 %v6350, %v6352
        %v6357 = vadd.s32 %v6353, 1
        %v6358 = vsel %vm6356, %v6357, %v6353
        %v6359 = vadd.s32 %v6354, %v6358
        %v6360 = vadd.s32 %v6359, 536870912
        %v6361 = vshrl.u32 %v6360, 30
        %v6362 = vshll.u32 %v6361, 30
        %v6363 = vsub.s32 %v6359, %v6362
        %vm6364 = vcmp.lt.s32.totalorder %v6363, 0
        %v6365 = vsub.s32 0, %v6363
        %v6366 = vsel %vm6364, %v6365, %v6363
        %v6367 = vclz %v6366
        %v6368 = vsub.s32 %v6367, 2
        %vm6369 = vcmp.gt.s32.totalorder 0, %v6368
        %v6370 = vsel %vm6369, 0, %v6368
        %v6371 = vsub.s32 32, %v6370
        %v6372 = vshll.u32 %v6363, %v6370
        %v6373 = vshrl.u32 %v6355, %v6371
        %v6374 = vor.u32 %v6372, %v6373
        %v6375 = vsub.s32 4294967266, %v6370
        %v6376 = vadd.s32 %v6375, 127
        %v6377 = vshll.u32 %v6376, 23
        %v6378 = vor.u32 4788187, %v6377
        %v6379 = vand.u32 2147483647, %v6378
        %v6381 = vcvt.s32.f32 %v6374
        %v6382 = vmul.f32 %v6381, %v6379
        %v6383 = vxor.u32 %v6382, 2147483648
        %v6384 = vsel %vm6301, %v6383, %v6382
        %v6385 = vsub.s32 4, %v6361
        %v6386 = vsel %vm6301, %v6385, %v6361
        %v6387 = vsel %vm6300, %v593, %v6384
        %v6388 = vsel %vm6300, 0, %v6386
        %v6389 = vcosq.f32.pop %v6387
        %v6390 = vsinq.f32.pop %v6387
        %vm6391 = vweird.f32 %v593
        %v6392 = vand.u32 %v6388, 3
        %vm6393 = vcmp.lt.s32.totalorder %v6392, 2
        %vm6394 = vcmp.eq.s32.totalorder %v6392, 0
        %v6395 = vxor.u32 %v6390, 2147483648
        %v6396 = vsel %vm6394, %v6389, %v6395
        %vm6397 = vcmp.eq.s32.totalorder %v6392, 2
        %v6398 = vxor.u32 %v6389, 2147483648
        %v6399 = vsel %vm6397, %v6398, %v6390
        %v6400 = vsel %vm6393, %v6396, %v6399
        %v6401 = vsel %vm6391, nan, %v6400
        %v6402 = vand.u32 2147483647, %v594
        %vm6403 = vcmp.le.f32.partialorder %v6402, 0.7853982
        %vm6404 = vcmp.lt.s32.totalorder %v594, 0
        %v6405 = vand.u32 %v594, 2139095040
        %v6406 = vshrl.u32 %v6405, 23
        %v6407 = vsub.s32 %v6406, 127
        %v6408 = vand.u32 2147483647, %v594
        %v6409 = vand.u32 %v6408, 8388607
        %v6410 = vor.u32 %v6409, 8388608
        %v6411 = vsub.s32 0, %v6410
        %v6412 = vadd.s32 %v6407, 1
        %vm6413 = vcmp.gt.s32.totalorder %v6412, 0
        %v6414 = vsel %vm6413, %v6412, 0
        %v6415 = vshrl.u32 %v6414, 5
        %v6416 = vand.u32 %v6414, 31
        %v6417 = vsub.s32 32, %v6416
        %v6418 = vshrl.u32 683565275, %v6417
        %v6419 = vshll.u32 683565275, %v6416
        %v6420 = vshrl.u32 2475754826, %v6417
        %v6421 = vor.u32 %v6419, %v6420
        %v6422 = vshll.u32 2475754826, %v6416
        %v6423 = vshrl.u32 2131351028, %v6417
        %v6424 = vor.u32 %v6422, %v6423
        %v6425 = vshll.u32 2131351028, %v6416
        %v6426 = vshrl.u32 2102212464, %v6417
        %v6427 = vor.u32 %v6425, %v6426
        %v6428 = vshll.u32 2102212464, %v6416
        %v6429 = vshrl.u32 920167782, %v6417
        %v6430 = vor.u32 %v6428, %v6429
        %v6431 = vshll.u32 920167782, %v6416
        %v6432 = vshrl.u32 1326507024, %v6417
        %v6433 = vor.u32 %v6431, %v6432
        %vm6434 = vcmp.lt.s32.totalorder %v6415, 1
        %vm6435 = vcmp.lt.s32.totalorder %v6415, 2
        %vm6436 = vcmp.lt.s32.totalorder %v6415, 3
        %vm6437 = vcmp.lt.s32.totalorder %v6415, 4
        %v6438 = vsel %vm6434, %v6418, %v6421
        %v6439 = vsel %vm6437, %v6427, 2102212464
        %v6440 = vsel %vm6436, %v6424, %v6439
        %v6441 = vsel %vm6435, %v6438, %v6440
        %v6442 = vsel %vm6434, %v6421, %v6424
        %v6443 = vsel %vm6437, %v6430, 920167782
        %v6444 = vsel %vm6436, %v6427, %v6443
        %v6445 = vsel %vm6435, %v6442, %v6444
        %v6446 = vsel %vm6434, %v6424, %v6427
        %v6447 = vsel %vm6437, %v6433, 1326507024
        %v6448 = vsel %vm6436, %v6430, %v6447
        %v6449 = vsel %vm6435, %v6446, %v6448
        %v6450 = vshll.u32 %v6410, 8
        %v6451 = vmul.u32.u64.compose %v6450, %v6449
        %v6452 = vextract.low.u32 %v6451
        %v6453 = vextract.high.u32 %v6451
        %v6454 = vmul.u32.u64.compose %v6450, %v6445
        %v6455 = vextract.low.u32 %v6454
        %v6456 = vextract.high.u32 %v6454
        %v6457 = vmul.u32 %v6450, %v6441
        %v6458 = vadd.s32 %v6453, %v6455
        %vm6459 = vc.u32 %v6453, %v6455
        %v6460 = vadd.s32 %v6456, 1
        %v6461 = vsel %vm6459, %v6460, %v6456
        %v6462 = vadd.s32 %v6457, %v6461
        %v6463 = vadd.s32 %v6462, 536870912
        %v6464 = vshrl.u32 %v6463, 30
        %v6465 = vshll.u32 %v6464, 30
        %v6466 = vsub.s32 %v6462, %v6465
        %vm6467 = vcmp.lt.s32.totalorder %v6466, 0
        %v6468 = vsub.s32 0, %v6466
        %v6469 = vsel %vm6467, %v6468, %v6466
        %v6470 = vclz %v6469
        %v6471 = vsub.s32 %v6470, 2
        %vm6472 = vcmp.gt.s32.totalorder 0, %v6471
        %v6473 = vsel %vm6472, 0, %v6471
        %v6474 = vsub.s32 32, %v6473
        %v6475 = vshll.u32 %v6466, %v6473
        %v6476 = vshrl.u32 %v6458, %v6474
        %v6477 = vor.u32 %v6475, %v6476
        %v6478 = vsub.s32 4294967266, %v6473
        %v6479 = vadd.s32 %v6478, 127
        %v6480 = vshll.u32 %v6479, 23
        %v6481 = vor.u32 4788187, %v6480
        %v6482 = vand.u32 2147483647, %v6481
        %v6484 = vcvt.s32.f32 %v6477
        %v6485 = vmul.f32 %v6484, %v6482
        %v6486 = vxor.u32 %v6485, 2147483648
        %v6487 = vsel %vm6404, %v6486, %v6485
        %v6488 = vsub.s32 4, %v6464
        %v6489 = vsel %vm6404, %v6488, %v6464
        %v6490 = vsel %vm6403, %v594, %v6487
        %v6491 = vsel %vm6403, 0, %v6489
        %v6492 = vcosq.f32.pop %v6490
        %v6493 = vsinq.f32.pop %v6490
        %vm6494 = vweird.f32 %v594
        %v6495 = vand.u32 %v6491, 3
        %vm6496 = vcmp.lt.s32.totalorder %v6495, 2
        %vm6497 = vcmp.eq.s32.totalorder %v6495, 0
        %v6498 = vxor.u32 %v6493, 2147483648
        %v6499 = vsel %vm6497, %v6492, %v6498
        %vm6500 = vcmp.eq.s32.totalorder %v6495, 2
        %v6501 = vxor.u32 %v6492, 2147483648
        %v6502 = vsel %vm6500, %v6501, %v6493
        %v6503 = vsel %vm6496, %v6499, %v6502
        %v6504 = vsel %vm6494, nan, %v6503
        %v6505 = vand.u32 2147483647, %v595
        %vm6506 = vcmp.le.f32.partialorder %v6505, 0.7853982
        %vm6507 = vcmp.lt.s32.totalorder %v595, 0
        %v6508 = vand.u32 %v595, 2139095040
        %v6509 = vshrl.u32 %v6508, 23
        %v6510 = vsub.s32 %v6509, 127
        %v6511 = vand.u32 2147483647, %v595
        %v6512 = vand.u32 %v6511, 8388607
        %v6513 = vor.u32 %v6512, 8388608
        %v6514 = vsub.s32 0, %v6513
        %v6515 = vadd.s32 %v6510, 1
        %vm6516 = vcmp.gt.s32.totalorder %v6515, 0
        %v6517 = vsel %vm6516, %v6515, 0
        %v6518 = vshrl.u32 %v6517, 5
        %v6519 = vand.u32 %v6517, 31
        %v6520 = vsub.s32 32, %v6519
        %v6521 = vshrl.u32 683565275, %v6520
        %v6522 = vshll.u32 683565275, %v6519
        %v6523 = vshrl.u32 2475754826, %v6520
        %v6524 = vor.u32 %v6522, %v6523
        %v6525 = vshll.u32 2475754826, %v6519
        %v6526 = vshrl.u32 2131351028, %v6520
        %v6527 = vor.u32 %v6525, %v6526
        %v6528 = vshll.u32 2131351028, %v6519
        %v6529 = vshrl.u32 2102212464, %v6520
        %v6530 = vor.u32 %v6528, %v6529
        %v6531 = vshll.u32 2102212464, %v6519
        %v6532 = vshrl.u32 920167782, %v6520
        %v6533 = vor.u32 %v6531, %v6532
        %v6534 = vshll.u32 920167782, %v6519
        %v6535 = vshrl.u32 1326507024, %v6520
        %v6536 = vor.u32 %v6534, %v6535
        %vm6537 = vcmp.lt.s32.totalorder %v6518, 1
        %vm6538 = vcmp.lt.s32.totalorder %v6518, 2
        %vm6539 = vcmp.lt.s32.totalorder %v6518, 3
        %vm6540 = vcmp.lt.s32.totalorder %v6518, 4
        %v6541 = vsel %vm6537, %v6521, %v6524
        %v6542 = vsel %vm6540, %v6530, 2102212464
        %v6543 = vsel %vm6539, %v6527, %v6542
        %v6544 = vsel %vm6538, %v6541, %v6543
        %v6545 = vsel %vm6537, %v6524, %v6527
        %v6546 = vsel %vm6540, %v6533, 920167782
        %v6547 = vsel %vm6539, %v6530, %v6546
        %v6548 = vsel %vm6538, %v6545, %v6547
        %v6549 = vsel %vm6537, %v6527, %v6530
        %v6550 = vsel %vm6540, %v6536, 1326507024
        %v6551 = vsel %vm6539, %v6533, %v6550
        %v6552 = vsel %vm6538, %v6549, %v6551
        %v6553 = vshll.u32 %v6513, 8
        %v6554 = vmul.u32.u64.compose %v6553, %v6552
        %v6555 = vextract.low.u32 %v6554
        %v6556 = vextract.high.u32 %v6554
        %v6557 = vmul.u32.u64.compose %v6553, %v6548
        %v6558 = vextract.low.u32 %v6557
        %v6559 = vextract.high.u32 %v6557
        %v6560 = vmul.u32 %v6553, %v6544
        %v6561 = vadd.s32 %v6556, %v6558
        %vm6562 = vc.u32 %v6556, %v6558
        %v6563 = vadd.s32 %v6559, 1
        %v6564 = vsel %vm6562, %v6563, %v6559
        %v6565 = vadd.s32 %v6560, %v6564
        %v6566 = vadd.s32 %v6565, 536870912
        %v6567 = vshrl.u32 %v6566, 30
        %v6568 = vshll.u32 %v6567, 30
        %v6569 = vsub.s32 %v6565, %v6568
        %vm6570 = vcmp.lt.s32.totalorder %v6569, 0
        %v6571 = vsub.s32 0, %v6569
        %v6572 = vsel %vm6570, %v6571, %v6569
        %v6573 = vclz %v6572
        %v6574 = vsub.s32 %v6573, 2
        %vm6575 = vcmp.gt.s32.totalorder 0, %v6574
        %v6576 = vsel %vm6575, 0, %v6574
        %v6577 = vsub.s32 32, %v6576
        %v6578 = vshll.u32 %v6569, %v6576
        %v6579 = vshrl.u32 %v6561, %v6577
        %v6580 = vor.u32 %v6578, %v6579
        %v6581 = vsub.s32 4294967266, %v6576
        %v6582 = vadd.s32 %v6581, 127
        %v6583 = vshll.u32 %v6582, 23
        %v6584 = vor.u32 4788187, %v6583
        %v6585 = vand.u32 2147483647, %v6584
        %v6587 = vcvt.s32.f32 %v6580
        %v6588 = vmul.f32 %v6587, %v6585
        %v6589 = vxor.u32 %v6588, 2147483648
        %v6590 = vsel %vm6507, %v6589, %v6588
        %v6591 = vsub.s32 4, %v6567
        %v6592 = vsel %vm6507, %v6591, %v6567
        %v6593 = vsel %vm6506, %v595, %v6590
        %v6594 = vsel %vm6506, 0, %v6592
        %v6595 = vcosq.f32.pop %v6593
        %v6596 = vsinq.f32.pop %v6593
        %vm6597 = vweird.f32 %v595
        %v6598 = vand.u32 %v6594, 3
        %vm6599 = vcmp.lt.s32.totalorder %v6598, 2
        %vm6600 = vcmp.eq.s32.totalorder %v6598, 0
        %v6601 = vxor.u32 %v6596, 2147483648
        %v6602 = vsel %vm6600, %v6595, %v6601
        %vm6603 = vcmp.eq.s32.totalorder %v6598, 2
        %v6604 = vxor.u32 %v6595, 2147483648
        %v6605 = vsel %vm6603, %v6604, %v6596
        %v6606 = vsel %vm6599, %v6602, %v6605
        %v6607 = vsel %vm6597, nan, %v6606
        %v6608 = vand.u32 2147483647, %v596
        %vm6609 = vcmp.le.f32.partialorder %v6608, 0.7853982
        %vm6610 = vcmp.lt.s32.totalorder %v596, 0
        %v6611 = vand.u32 %v596, 2139095040
        %v6612 = vshrl.u32 %v6611, 23
        %v6613 = vsub.s32 %v6612, 127
        %v6614 = vand.u32 2147483647, %v596
        %v6615 = vand.u32 %v6614, 8388607
        %v6616 = vor.u32 %v6615, 8388608
        %v6617 = vsub.s32 0, %v6616
        %v6618 = vadd.s32 %v6613, 1
        %vm6619 = vcmp.gt.s32.totalorder %v6618, 0
        %v6620 = vsel %vm6619, %v6618, 0
        %v6621 = vshrl.u32 %v6620, 5
        %v6622 = vand.u32 %v6620, 31
        %v6623 = vsub.s32 32, %v6622
        %v6624 = vshrl.u32 683565275, %v6623
        %v6625 = vshll.u32 683565275, %v6622
        %v6626 = vshrl.u32 2475754826, %v6623
        %v6627 = vor.u32 %v6625, %v6626
        %v6628 = vshll.u32 2475754826, %v6622
        %v6629 = vshrl.u32 2131351028, %v6623
        %v6630 = vor.u32 %v6628, %v6629
        %v6631 = vshll.u32 2131351028, %v6622
        %v6632 = vshrl.u32 2102212464, %v6623
        %v6633 = vor.u32 %v6631, %v6632
        %v6634 = vshll.u32 2102212464, %v6622
        %v6635 = vshrl.u32 920167782, %v6623
        %v6636 = vor.u32 %v6634, %v6635
        %v6637 = vshll.u32 920167782, %v6622
        %v6638 = vshrl.u32 1326507024, %v6623
        %v6639 = vor.u32 %v6637, %v6638
        %vm6640 = vcmp.lt.s32.totalorder %v6621, 1
        %vm6641 = vcmp.lt.s32.totalorder %v6621, 2
        %vm6642 = vcmp.lt.s32.totalorder %v6621, 3
        %vm6643 = vcmp.lt.s32.totalorder %v6621, 4
        %v6644 = vsel %vm6640, %v6624, %v6627
        %v6645 = vsel %vm6643, %v6633, 2102212464
        %v6646 = vsel %vm6642, %v6630, %v6645
        %v6647 = vsel %vm6641, %v6644, %v6646
        %v6648 = vsel %vm6640, %v6627, %v6630
        %v6649 = vsel %vm6643, %v6636, 920167782
        %v6650 = vsel %vm6642, %v6633, %v6649
        %v6651 = vsel %vm6641, %v6648, %v6650
        %v6652 = vsel %vm6640, %v6630, %v6633
        %v6653 = vsel %vm6643, %v6639, 1326507024
        %v6654 = vsel %vm6642, %v6636, %v6653
        %v6655 = vsel %vm6641, %v6652, %v6654
        %v6656 = vshll.u32 %v6616, 8
        %v6657 = vmul.u32.u64.compose %v6656, %v6655
        %v6658 = vextract.low.u32 %v6657
        %v6659 = vextract.high.u32 %v6657
        %v6660 = vmul.u32.u64.compose %v6656, %v6651
        %v6661 = vextract.low.u32 %v6660
        %v6662 = vextract.high.u32 %v6660
        %v6663 = vmul.u32 %v6656, %v6647
        %v6664 = vadd.s32 %v6659, %v6661
        %vm6665 = vc.u32 %v6659, %v6661
        %v6666 = vadd.s32 %v6662, 1
        %v6667 = vsel %vm6665, %v6666, %v6662
        %v6668 = vadd.s32 %v6663, %v6667
        %v6669 = vadd.s32 %v6668, 536870912
        %v6670 = vshrl.u32 %v6669, 30
        %v6671 = vshll.u32 %v6670, 30
        %v6672 = vsub.s32 %v6668, %v6671
        %vm6673 = vcmp.lt.s32.totalorder %v6672, 0
        %v6674 = vsub.s32 0, %v6672
        %v6675 = vsel %vm6673, %v6674, %v6672
        %v6676 = vclz %v6675
        %v6677 = vsub.s32 %v6676, 2
        %vm6678 = vcmp.gt.s32.totalorder 0, %v6677
        %v6679 = vsel %vm6678, 0, %v6677
        %v6680 = vsub.s32 32, %v6679
        %v6681 = vshll.u32 %v6672, %v6679
        %v6682 = vshrl.u32 %v6664, %v6680
        %v6683 = vor.u32 %v6681, %v6682
        %v6684 = vsub.s32 4294967266, %v6679
        %v6685 = vadd.s32 %v6684, 127
        %v6686 = vshll.u32 %v6685, 23
        %v6687 = vor.u32 4788187, %v6686
        %v6688 = vand.u32 2147483647, %v6687
        %v6690 = vcvt.s32.f32 %v6683
        %v6691 = vmul.f32 %v6690, %v6688
        %v6692 = vxor.u32 %v6691, 2147483648
        %v6693 = vsel %vm6610, %v6692, %v6691
        %v6694 = vsub.s32 4, %v6670
        %v6695 = vsel %vm6610, %v6694, %v6670
        %v6696 = vsel %vm6609, %v596, %v6693
        %v6697 = vsel %vm6609, 0, %v6695
        %v6698 = vcosq.f32.pop %v6696
        %v6699 = vsinq.f32.pop %v6696
        %vm6700 = vweird.f32 %v596
        %v6701 = vand.u32 %v6697, 3
        %vm6702 = vcmp.lt.s32.totalorder %v6701, 2
        %vm6703 = vcmp.eq.s32.totalorder %v6701, 0
        %v6704 = vxor.u32 %v6699, 2147483648
        %v6705 = vsel %vm6703, %v6698, %v6704
        %vm6706 = vcmp.eq.s32.totalorder %v6701, 2
        %v6707 = vxor.u32 %v6698, 2147483648
        %v6708 = vsel %vm6706, %v6707, %v6699
        %v6709 = vsel %vm6702, %v6705, %v6708
        %v6710 = vsel %vm6700, nan, %v6709
        %v6711 = vand.u32 2147483647, %v597
        %vm6712 = vcmp.le.f32.partialorder %v6711, 0.7853982
        %vm6713 = vcmp.lt.s32.totalorder %v597, 0
        %v6714 = vand.u32 %v597, 2139095040
        %v6715 = vshrl.u32 %v6714, 23
        %v6716 = vsub.s32 %v6715, 127
        %v6717 = vand.u32 2147483647, %v597
        %v6718 = vand.u32 %v6717, 8388607
        %v6719 = vor.u32 %v6718, 8388608
        %v6720 = vsub.s32 0, %v6719
        %v6721 = vadd.s32 %v6716, 1
        %vm6722 = vcmp.gt.s32.totalorder %v6721, 0
        %v6723 = vsel %vm6722, %v6721, 0
        %v6724 = vshrl.u32 %v6723, 5
        %v6725 = vand.u32 %v6723, 31
        %v6726 = vsub.s32 32, %v6725
        %v6727 = vshrl.u32 683565275, %v6726
        %v6728 = vshll.u32 683565275, %v6725
        %v6729 = vshrl.u32 2475754826, %v6726
        %v6730 = vor.u32 %v6728, %v6729
        %v6731 = vshll.u32 2475754826, %v6725
        %v6732 = vshrl.u32 2131351028, %v6726
        %v6733 = vor.u32 %v6731, %v6732
        %v6734 = vshll.u32 2131351028, %v6725
        %v6735 = vshrl.u32 2102212464, %v6726
        %v6736 = vor.u32 %v6734, %v6735
        %v6737 = vshll.u32 2102212464, %v6725
        %v6738 = vshrl.u32 920167782, %v6726
        %v6739 = vor.u32 %v6737, %v6738
        %v6740 = vshll.u32 920167782, %v6725
        %v6741 = vshrl.u32 1326507024, %v6726
        %v6742 = vor.u32 %v6740, %v6741
        %vm6743 = vcmp.lt.s32.totalorder %v6724, 1
        %vm6744 = vcmp.lt.s32.totalorder %v6724, 2
        %vm6745 = vcmp.lt.s32.totalorder %v6724, 3
        %vm6746 = vcmp.lt.s32.totalorder %v6724, 4
        %v6747 = vsel %vm6743, %v6727, %v6730
        %v6748 = vsel %vm6746, %v6736, 2102212464
        %v6749 = vsel %vm6745, %v6733, %v6748
        %v6750 = vsel %vm6744, %v6747, %v6749
        %v6751 = vsel %vm6743, %v6730, %v6733
        %v6752 = vsel %vm6746, %v6739, 920167782
        %v6753 = vsel %vm6745, %v6736, %v6752
        %v6754 = vsel %vm6744, %v6751, %v6753
        %v6755 = vsel %vm6743, %v6733, %v6736
        %v6756 = vsel %vm6746, %v6742, 1326507024
        %v6757 = vsel %vm6745, %v6739, %v6756
        %v6758 = vsel %vm6744, %v6755, %v6757
        %v6759 = vshll.u32 %v6719, 8
        %v6760 = vmul.u32.u64.compose %v6759, %v6758
        %v6761 = vextract.low.u32 %v6760
        %v6762 = vextract.high.u32 %v6760
        %v6763 = vmul.u32.u64.compose %v6759, %v6754
        %v6764 = vextract.low.u32 %v6763
        %v6765 = vextract.high.u32 %v6763
        %v6766 = vmul.u32 %v6759, %v6750
        %v6767 = vadd.s32 %v6762, %v6764
        %vm6768 = vc.u32 %v6762, %v6764
        %v6769 = vadd.s32 %v6765, 1
        %v6770 = vsel %vm6768, %v6769, %v6765
        %v6771 = vadd.s32 %v6766, %v6770
        %v6772 = vadd.s32 %v6771, 536870912
        %v6773 = vshrl.u32 %v6772, 30
        %v6774 = vshll.u32 %v6773, 30
        %v6775 = vsub.s32 %v6771, %v6774
        %vm6776 = vcmp.lt.s32.totalorder %v6775, 0
        %v6777 = vsub.s32 0, %v6775
        %v6778 = vsel %vm6776, %v6777, %v6775
        %v6779 = vclz %v6778
        %v6780 = vsub.s32 %v6779, 2
        %vm6781 = vcmp.gt.s32.totalorder 0, %v6780
        %v6782 = vsel %vm6781, 0, %v6780
        %v6783 = vsub.s32 32, %v6782
        %v6784 = vshll.u32 %v6775, %v6782
        %v6785 = vshrl.u32 %v6767, %v6783
        %v6786 = vor.u32 %v6784, %v6785
        %v6787 = vsub.s32 4294967266, %v6782
        %v6788 = vadd.s32 %v6787, 127
        %v6789 = vshll.u32 %v6788, 23
        %v6790 = vor.u32 4788187, %v6789
        %v6791 = vand.u32 2147483647, %v6790
        %v6793 = vcvt.s32.f32 %v6786
        %v6794 = vmul.f32 %v6793, %v6791
        %v6795 = vxor.u32 %v6794, 2147483648
        %v6796 = vsel %vm6713, %v6795, %v6794
        %v6797 = vsub.s32 4, %v6773
        %v6798 = vsel %vm6713, %v6797, %v6773
        %v6799 = vsel %vm6712, %v597, %v6796
        %v6800 = vsel %vm6712, 0, %v6798
        %v6801 = vcosq.f32.pop %v6799
        %v6802 = vsinq.f32.pop %v6799
        %vm6803 = vweird.f32 %v597
        %v6804 = vand.u32 %v6800, 3
        %vm6805 = vcmp.lt.s32.totalorder %v6804, 2
        %vm6806 = vcmp.eq.s32.totalorder %v6804, 0
        %v6807 = vxor.u32 %v6802, 2147483648
        %v6808 = vsel %vm6806, %v6801, %v6807
        %vm6809 = vcmp.eq.s32.totalorder %v6804, 2
        %v6810 = vxor.u32 %v6801, 2147483648
        %v6811 = vsel %vm6809, %v6810, %v6802
        %v6812 = vsel %vm6805, %v6808, %v6811
        %v6813 = vsel %vm6803, nan, %v6812
        %v6814 = vand.u32 2147483647, %v598
        %vm6815 = vcmp.le.f32.partialorder %v6814, 0.7853982
        %vm6816 = vcmp.lt.s32.totalorder %v598, 0
        %v6817 = vand.u32 %v598, 2139095040
        %v6818 = vshrl.u32 %v6817, 23
        %v6819 = vsub.s32 %v6818, 127
        %v6820 = vand.u32 2147483647, %v598
        %v6821 = vand.u32 %v6820, 8388607
        %v6822 = vor.u32 %v6821, 8388608
        %v6823 = vsub.s32 0, %v6822
        %v6824 = vadd.s32 %v6819, 1
        %vm6825 = vcmp.gt.s32.totalorder %v6824, 0
        %v6826 = vsel %vm6825, %v6824, 0
        %v6827 = vshrl.u32 %v6826, 5
        %v6828 = vand.u32 %v6826, 31
        %v6829 = vsub.s32 32, %v6828
        %v6830 = vshrl.u32 683565275, %v6829
        %v6831 = vshll.u32 683565275, %v6828
        %v6832 = vshrl.u32 2475754826, %v6829
        %v6833 = vor.u32 %v6831, %v6832
        %v6834 = vshll.u32 2475754826, %v6828
        %v6835 = vshrl.u32 2131351028, %v6829
        %v6836 = vor.u32 %v6834, %v6835
        %v6837 = vshll.u32 2131351028, %v6828
        %v6838 = vshrl.u32 2102212464, %v6829
        %v6839 = vor.u32 %v6837, %v6838
        %v6840 = vshll.u32 2102212464, %v6828
        %v6841 = vshrl.u32 920167782, %v6829
        %v6842 = vor.u32 %v6840, %v6841
        %v6843 = vshll.u32 920167782, %v6828
        %v6844 = vshrl.u32 1326507024, %v6829
        %v6845 = vor.u32 %v6843, %v6844
        %vm6846 = vcmp.lt.s32.totalorder %v6827, 1
        %vm6847 = vcmp.lt.s32.totalorder %v6827, 2
        %vm6848 = vcmp.lt.s32.totalorder %v6827, 3
        %vm6849 = vcmp.lt.s32.totalorder %v6827, 4
        %v6850 = vsel %vm6846, %v6830, %v6833
        %v6851 = vsel %vm6849, %v6839, 2102212464
        %v6852 = vsel %vm6848, %v6836, %v6851
        %v6853 = vsel %vm6847, %v6850, %v6852
        %v6854 = vsel %vm6846, %v6833, %v6836
        %v6855 = vsel %vm6849, %v6842, 920167782
        %v6856 = vsel %vm6848, %v6839, %v6855
        %v6857 = vsel %vm6847, %v6854, %v6856
        %v6858 = vsel %vm6846, %v6836, %v6839
        %v6859 = vsel %vm6849, %v6845, 1326507024
        %v6860 = vsel %vm6848, %v6842, %v6859
        %v6861 = vsel %vm6847, %v6858, %v6860
        %v6862 = vshll.u32 %v6822, 8
        %v6863 = vmul.u32.u64.compose %v6862, %v6861
        %v6864 = vextract.low.u32 %v6863
        %v6865 = vextract.high.u32 %v6863
        %v6866 = vmul.u32.u64.compose %v6862, %v6857
        %v6867 = vextract.low.u32 %v6866
        %v6868 = vextract.high.u32 %v6866
        %v6869 = vmul.u32 %v6862, %v6853
        %v6870 = vadd.s32 %v6865, %v6867
        %vm6871 = vc.u32 %v6865, %v6867
        %v6872 = vadd.s32 %v6868, 1
        %v6873 = vsel %vm6871, %v6872, %v6868
        %v6874 = vadd.s32 %v6869, %v6873
        %v6875 = vadd.s32 %v6874, 536870912
        %v6876 = vshrl.u32 %v6875, 30
        %v6877 = vshll.u32 %v6876, 30
        %v6878 = vsub.s32 %v6874, %v6877
        %vm6879 = vcmp.lt.s32.totalorder %v6878, 0
        %v6880 = vsub.s32 0, %v6878
        %v6881 = vsel %vm6879, %v6880, %v6878
        %v6882 = vclz %v6881
        %v6883 = vsub.s32 %v6882, 2
        %vm6884 = vcmp.gt.s32.totalorder 0, %v6883
        %v6885 = vsel %vm6884, 0, %v6883
        %v6886 = vsub.s32 32, %v6885
        %v6887 = vshll.u32 %v6878, %v6885
        %v6888 = vshrl.u32 %v6870, %v6886
        %v6889 = vor.u32 %v6887, %v6888
        %v6890 = vsub.s32 4294967266, %v6885
        %v6891 = vadd.s32 %v6890, 127
        %v6892 = vshll.u32 %v6891, 23
        %v6893 = vor.u32 4788187, %v6892
        %v6894 = vand.u32 2147483647, %v6893
        %v6896 = vcvt.s32.f32 %v6889
        %v6897 = vmul.f32 %v6896, %v6894
        %v6898 = vxor.u32 %v6897, 2147483648
        %v6899 = vsel %vm6816, %v6898, %v6897
        %v6900 = vsub.s32 4, %v6876
        %v6901 = vsel %vm6816, %v6900, %v6876
        %v6902 = vsel %vm6815, %v598, %v6899
        %v6903 = vsel %vm6815, 0, %v6901
        %v6904 = vcosq.f32.pop %v6902
        %v6905 = vsinq.f32.pop %v6902
        %vm6906 = vweird.f32 %v598
        %v6907 = vand.u32 %v6903, 3
        %vm6908 = vcmp.lt.s32.totalorder %v6907, 2
        %vm6909 = vcmp.eq.s32.totalorder %v6907, 0
        %v6910 = vxor.u32 %v6905, 2147483648
        %v6911 = vsel %vm6909, %v6904, %v6910
        %vm6912 = vcmp.eq.s32.totalorder %v6907, 2
        %v6913 = vxor.u32 %v6904, 2147483648
        %v6914 = vsel %vm6912, %v6913, %v6905
        %v6915 = vsel %vm6908, %v6911, %v6914
        %v6916 = vsel %vm6906, nan, %v6915
        %v6917 = vand.u32 2147483647, %v599
        %vm6918 = vcmp.le.f32.partialorder %v6917, 0.7853982
        %vm6919 = vcmp.lt.s32.totalorder %v599, 0
        %v6920 = vand.u32 %v599, 2139095040
        %v6921 = vshrl.u32 %v6920, 23
        %v6922 = vsub.s32 %v6921, 127
        %v6923 = vand.u32 2147483647, %v599
        %v6924 = vand.u32 %v6923, 8388607
        %v6925 = vor.u32 %v6924, 8388608
        %v6926 = vsub.s32 0, %v6925
        %v6927 = vadd.s32 %v6922, 1
        %vm6928 = vcmp.gt.s32.totalorder %v6927, 0
        %v6929 = vsel %vm6928, %v6927, 0
        %v6930 = vshrl.u32 %v6929, 5
        %v6931 = vand.u32 %v6929, 31
        %v6932 = vsub.s32 32, %v6931
        %v6933 = vshrl.u32 683565275, %v6932
        %v6934 = vshll.u32 683565275, %v6931
        %v6935 = vshrl.u32 2475754826, %v6932
        %v6936 = vor.u32 %v6934, %v6935
        %v6937 = vshll.u32 2475754826, %v6931
        %v6938 = vshrl.u32 2131351028, %v6932
        %v6939 = vor.u32 %v6937, %v6938
        %v6940 = vshll.u32 2131351028, %v6931
        %v6941 = vshrl.u32 2102212464, %v6932
        %v6942 = vor.u32 %v6940, %v6941
        %v6943 = vshll.u32 2102212464, %v6931
        %v6944 = vshrl.u32 920167782, %v6932
        %v6945 = vor.u32 %v6943, %v6944
        %v6946 = vshll.u32 920167782, %v6931
        %v6947 = vshrl.u32 1326507024, %v6932
        %v6948 = vor.u32 %v6946, %v6947
        %vm6949 = vcmp.lt.s32.totalorder %v6930, 1
        %vm6950 = vcmp.lt.s32.totalorder %v6930, 2
        %vm6951 = vcmp.lt.s32.totalorder %v6930, 3
        %vm6952 = vcmp.lt.s32.totalorder %v6930, 4
        %v6953 = vsel %vm6949, %v6933, %v6936
        %v6954 = vsel %vm6952, %v6942, 2102212464
        %v6955 = vsel %vm6951, %v6939, %v6954
        %v6956 = vsel %vm6950, %v6953, %v6955
        %v6957 = vsel %vm6949, %v6936, %v6939
        %v6958 = vsel %vm6952, %v6945, 920167782
        %v6959 = vsel %vm6951, %v6942, %v6958
        %v6960 = vsel %vm6950, %v6957, %v6959
        %v6961 = vsel %vm6949, %v6939, %v6942
        %v6962 = vsel %vm6952, %v6948, 1326507024
        %v6963 = vsel %vm6951, %v6945, %v6962
        %v6964 = vsel %vm6950, %v6961, %v6963
        %v6965 = vshll.u32 %v6925, 8
        %v6966 = vmul.u32.u64.compose %v6965, %v6964
        %v6967 = vextract.low.u32 %v6966
        %v6968 = vextract.high.u32 %v6966
        %v6969 = vmul.u32.u64.compose %v6965, %v6960
        %v6970 = vextract.low.u32 %v6969
        %v6971 = vextract.high.u32 %v6969
        %v6972 = vmul.u32 %v6965, %v6956
        %v6973 = vadd.s32 %v6968, %v6970
        %vm6974 = vc.u32 %v6968, %v6970
        %v6975 = vadd.s32 %v6971, 1
        %v6976 = vsel %vm6974, %v6975, %v6971
        %v6977 = vadd.s32 %v6972, %v6976
        %v6978 = vadd.s32 %v6977, 536870912
        %v6979 = vshrl.u32 %v6978, 30
        %v6980 = vshll.u32 %v6979, 30
        %v6981 = vsub.s32 %v6977, %v6980
        %vm6982 = vcmp.lt.s32.totalorder %v6981, 0
        %v6983 = vsub.s32 0, %v6981
        %v6984 = vsel %vm6982, %v6983, %v6981
        %v6985 = vclz %v6984
        %v6986 = vsub.s32 %v6985, 2
        %vm6987 = vcmp.gt.s32.totalorder 0, %v6986
        %v6988 = vsel %vm6987, 0, %v6986
        %v6989 = vsub.s32 32, %v6988
        %v6990 = vshll.u32 %v6981, %v6988
        %v6991 = vshrl.u32 %v6973, %v6989
        %v6992 = vor.u32 %v6990, %v6991
        %v6993 = vsub.s32 4294967266, %v6988
        %v6994 = vadd.s32 %v6993, 127
        %v6995 = vshll.u32 %v6994, 23
        %v6996 = vor.u32 4788187, %v6995
        %v6997 = vand.u32 2147483647, %v6996
        %v6999 = vcvt.s32.f32 %v6992
        %v7000 = vmul.f32 %v6999, %v6997
        %v7001 = vxor.u32 %v7000, 2147483648
        %v7002 = vsel %vm6919, %v7001, %v7000
        %v7003 = vsub.s32 4, %v6979
        %v7004 = vsel %vm6919, %v7003, %v6979
        %v7005 = vsel %vm6918, %v599, %v7002
        %v7006 = vsel %vm6918, 0, %v7004
        %v7007 = vcosq.f32.pop %v7005
        %v7008 = vsinq.f32.pop %v7005
        %vm7009 = vweird.f32 %v599
        %v7010 = vand.u32 %v7006, 3
        %vm7011 = vcmp.lt.s32.totalorder %v7010, 2
        %vm7012 = vcmp.eq.s32.totalorder %v7010, 0
        %v7013 = vxor.u32 %v7008, 2147483648
        %v7014 = vsel %vm7012, %v7007, %v7013
        %vm7015 = vcmp.eq.s32.totalorder %v7010, 2
        %v7016 = vxor.u32 %v7007, 2147483648
        %v7017 = vsel %vm7015, %v7016, %v7008
        %v7018 = vsel %vm7011, %v7014, %v7017
        %v7019 = vsel %vm7009, nan, %v7018
        %v7020 = vand.u32 2147483647, %v600
        %vm7021 = vcmp.le.f32.partialorder %v7020, 0.7853982
        %vm7022 = vcmp.lt.s32.totalorder %v600, 0
        %v7023 = vand.u32 %v600, 2139095040
        %v7024 = vshrl.u32 %v7023, 23
        %v7025 = vsub.s32 %v7024, 127
        %v7026 = vand.u32 2147483647, %v600
        %v7027 = vand.u32 %v7026, 8388607
        %v7028 = vor.u32 %v7027, 8388608
        %v7029 = vsub.s32 0, %v7028
        %v7030 = vadd.s32 %v7025, 1
        %vm7031 = vcmp.gt.s32.totalorder %v7030, 0
        %v7032 = vsel %vm7031, %v7030, 0
        %v7033 = vshrl.u32 %v7032, 5
        %v7034 = vand.u32 %v7032, 31
        %v7035 = vsub.s32 32, %v7034
        %v7036 = vshrl.u32 683565275, %v7035
        %v7037 = vshll.u32 683565275, %v7034
        %v7038 = vshrl.u32 2475754826, %v7035
        %v7039 = vor.u32 %v7037, %v7038
        %v7040 = vshll.u32 2475754826, %v7034
        %v7041 = vshrl.u32 2131351028, %v7035
        %v7042 = vor.u32 %v7040, %v7041
        %v7043 = vshll.u32 2131351028, %v7034
        %v7044 = vshrl.u32 2102212464, %v7035
        %v7045 = vor.u32 %v7043, %v7044
        %v7046 = vshll.u32 2102212464, %v7034
        %v7047 = vshrl.u32 920167782, %v7035
        %v7048 = vor.u32 %v7046, %v7047
        %v7049 = vshll.u32 920167782, %v7034
        %v7050 = vshrl.u32 1326507024, %v7035
        %v7051 = vor.u32 %v7049, %v7050
        %vm7052 = vcmp.lt.s32.totalorder %v7033, 1
        %vm7053 = vcmp.lt.s32.totalorder %v7033, 2
        %vm7054 = vcmp.lt.s32.totalorder %v7033, 3
        %vm7055 = vcmp.lt.s32.totalorder %v7033, 4
        %v7056 = vsel %vm7052, %v7036, %v7039
        %v7057 = vsel %vm7055, %v7045, 2102212464
        %v7058 = vsel %vm7054, %v7042, %v7057
        %v7059 = vsel %vm7053, %v7056, %v7058
        %v7060 = vsel %vm7052, %v7039, %v7042
        %v7061 = vsel %vm7055, %v7048, 920167782
        %v7062 = vsel %vm7054, %v7045, %v7061
        %v7063 = vsel %vm7053, %v7060, %v7062
        %v7064 = vsel %vm7052, %v7042, %v7045
        %v7065 = vsel %vm7055, %v7051, 1326507024
        %v7066 = vsel %vm7054, %v7048, %v7065
        %v7067 = vsel %vm7053, %v7064, %v7066
        %v7068 = vshll.u32 %v7028, 8
        %v7069 = vmul.u32.u64.compose %v7068, %v7067
        %v7070 = vextract.low.u32 %v7069
        %v7071 = vextract.high.u32 %v7069
        %v7072 = vmul.u32.u64.compose %v7068, %v7063
        %v7073 = vextract.low.u32 %v7072
        %v7074 = vextract.high.u32 %v7072
        %v7075 = vmul.u32 %v7068, %v7059
        %v7076 = vadd.s32 %v7071, %v7073
        %vm7077 = vc.u32 %v7071, %v7073
        %v7078 = vadd.s32 %v7074, 1
        %v7079 = vsel %vm7077, %v7078, %v7074
        %v7080 = vadd.s32 %v7075, %v7079
        %v7081 = vadd.s32 %v7080, 536870912
        %v7082 = vshrl.u32 %v7081, 30
        %v7083 = vshll.u32 %v7082, 30
        %v7084 = vsub.s32 %v7080, %v7083
        %vm7085 = vcmp.lt.s32.totalorder %v7084, 0
        %v7086 = vsub.s32 0, %v7084
        %v7087 = vsel %vm7085, %v7086, %v7084
        %v7088 = vclz %v7087
        %v7089 = vsub.s32 %v7088, 2
        %vm7090 = vcmp.gt.s32.totalorder 0, %v7089
        %v7091 = vsel %vm7090, 0, %v7089
        %v7092 = vsub.s32 32, %v7091
        %v7093 = vshll.u32 %v7084, %v7091
        %v7094 = vshrl.u32 %v7076, %v7092
        %v7095 = vor.u32 %v7093, %v7094
        %v7096 = vsub.s32 4294967266, %v7091
        %v7097 = vadd.s32 %v7096, 127
        %v7098 = vshll.u32 %v7097, 23
        %v7099 = vor.u32 4788187, %v7098
        %v7100 = vand.u32 2147483647, %v7099
        %v7102 = vcvt.s32.f32 %v7095
        %v7103 = vmul.f32 %v7102, %v7100
        %v7104 = vxor.u32 %v7103, 2147483648
        %v7105 = vsel %vm7022, %v7104, %v7103
        %v7106 = vsub.s32 4, %v7082
        %v7107 = vsel %vm7022, %v7106, %v7082
        %v7108 = vsel %vm7021, %v600, %v7105
        %v7109 = vsel %vm7021, 0, %v7107
        %v7110 = vcosq.f32.pop %v7108
        %v7111 = vsinq.f32.pop %v7108
        %vm7112 = vweird.f32 %v600
        %v7113 = vand.u32 %v7109, 3
        %vm7114 = vcmp.lt.s32.totalorder %v7113, 2
        %vm7115 = vcmp.eq.s32.totalorder %v7113, 0
        %v7116 = vxor.u32 %v7111, 2147483648
        %v7117 = vsel %vm7115, %v7110, %v7116
        %vm7118 = vcmp.eq.s32.totalorder %v7113, 2
        %v7119 = vxor.u32 %v7110, 2147483648
        %v7120 = vsel %vm7118, %v7119, %v7111
        %v7121 = vsel %vm7114, %v7117, %v7120
        %v7122 = vsel %vm7112, nan, %v7121
        %v7123 = vand.u32 2147483647, %v601
        %vm7124 = vcmp.le.f32.partialorder %v7123, 0.7853982
        %vm7125 = vcmp.lt.s32.totalorder %v601, 0
        %v7126 = vand.u32 %v601, 2139095040
        %v7127 = vshrl.u32 %v7126, 23
        %v7128 = vsub.s32 %v7127, 127
        %v7129 = vand.u32 2147483647, %v601
        %v7130 = vand.u32 %v7129, 8388607
        %v7131 = vor.u32 %v7130, 8388608
        %v7132 = vsub.s32 0, %v7131
        %v7133 = vadd.s32 %v7128, 1
        %vm7134 = vcmp.gt.s32.totalorder %v7133, 0
        %v7135 = vsel %vm7134, %v7133, 0
        %v7136 = vshrl.u32 %v7135, 5
        %v7137 = vand.u32 %v7135, 31
        %v7138 = vsub.s32 32, %v7137
        %v7139 = vshrl.u32 683565275, %v7138
        %v7140 = vshll.u32 683565275, %v7137
        %v7141 = vshrl.u32 2475754826, %v7138
        %v7142 = vor.u32 %v7140, %v7141
        %v7143 = vshll.u32 2475754826, %v7137
        %v7144 = vshrl.u32 2131351028, %v7138
        %v7145 = vor.u32 %v7143, %v7144
        %v7146 = vshll.u32 2131351028, %v7137
        %v7147 = vshrl.u32 2102212464, %v7138
        %v7148 = vor.u32 %v7146, %v7147
        %v7149 = vshll.u32 2102212464, %v7137
        %v7150 = vshrl.u32 920167782, %v7138
        %v7151 = vor.u32 %v7149, %v7150
        %v7152 = vshll.u32 920167782, %v7137
        %v7153 = vshrl.u32 1326507024, %v7138
        %v7154 = vor.u32 %v7152, %v7153
        %vm7155 = vcmp.lt.s32.totalorder %v7136, 1
        %vm7156 = vcmp.lt.s32.totalorder %v7136, 2
        %vm7157 = vcmp.lt.s32.totalorder %v7136, 3
        %vm7158 = vcmp.lt.s32.totalorder %v7136, 4
        %v7159 = vsel %vm7155, %v7139, %v7142
        %v7160 = vsel %vm7158, %v7148, 2102212464
        %v7161 = vsel %vm7157, %v7145, %v7160
        %v7162 = vsel %vm7156, %v7159, %v7161
        %v7163 = vsel %vm7155, %v7142, %v7145
        %v7164 = vsel %vm7158, %v7151, 920167782
        %v7165 = vsel %vm7157, %v7148, %v7164
        %v7166 = vsel %vm7156, %v7163, %v7165
        %v7167 = vsel %vm7155, %v7145, %v7148
        %v7168 = vsel %vm7158, %v7154, 1326507024
        %v7169 = vsel %vm7157, %v7151, %v7168
        %v7170 = vsel %vm7156, %v7167, %v7169
        %v7171 = vshll.u32 %v7131, 8
        %v7172 = vmul.u32.u64.compose %v7171, %v7170
        %v7173 = vextract.low.u32 %v7172
        %v7174 = vextract.high.u32 %v7172
        %v7175 = vmul.u32.u64.compose %v7171, %v7166
        %v7176 = vextract.low.u32 %v7175
        %v7177 = vextract.high.u32 %v7175
        %v7178 = vmul.u32 %v7171, %v7162
        %v7179 = vadd.s32 %v7174, %v7176
        %vm7180 = vc.u32 %v7174, %v7176
        %v7181 = vadd.s32 %v7177, 1
        %v7182 = vsel %vm7180, %v7181, %v7177
        %v7183 = vadd.s32 %v7178, %v7182
        %v7184 = vadd.s32 %v7183, 536870912
        %v7185 = vshrl.u32 %v7184, 30
        %v7186 = vshll.u32 %v7185, 30
        %v7187 = vsub.s32 %v7183, %v7186
        %vm7188 = vcmp.lt.s32.totalorder %v7187, 0
        %v7189 = vsub.s32 0, %v7187
        %v7190 = vsel %vm7188, %v7189, %v7187
        %v7191 = vclz %v7190
        %v7192 = vsub.s32 %v7191, 2
        %vm7193 = vcmp.gt.s32.totalorder 0, %v7192
        %v7194 = vsel %vm7193, 0, %v7192
        %v7195 = vsub.s32 32, %v7194
        %v7196 = vshll.u32 %v7187, %v7194
        %v7197 = vshrl.u32 %v7179, %v7195
        %v7198 = vor.u32 %v7196, %v7197
        %v7199 = vsub.s32 4294967266, %v7194
        %v7200 = vadd.s32 %v7199, 127
        %v7201 = vshll.u32 %v7200, 23
        %v7202 = vor.u32 4788187, %v7201
        %v7203 = vand.u32 2147483647, %v7202
        %v7205 = vcvt.s32.f32 %v7198
        %v7206 = vmul.f32 %v7205, %v7203
        %v7207 = vxor.u32 %v7206, 2147483648
        %v7208 = vsel %vm7125, %v7207, %v7206
        %v7209 = vsub.s32 4, %v7185
        %v7210 = vsel %vm7125, %v7209, %v7185
        %v7211 = vsel %vm7124, %v601, %v7208
        %v7212 = vsel %vm7124, 0, %v7210
        %v7213 = vcosq.f32.pop %v7211
        %v7214 = vsinq.f32.pop %v7211
        %vm7215 = vweird.f32 %v601
        %v7216 = vand.u32 %v7212, 3
        %vm7217 = vcmp.lt.s32.totalorder %v7216, 2
        %vm7218 = vcmp.eq.s32.totalorder %v7216, 0
        %v7219 = vxor.u32 %v7214, 2147483648
        %v7220 = vsel %vm7218, %v7213, %v7219
        %vm7221 = vcmp.eq.s32.totalorder %v7216, 2
        %v7222 = vxor.u32 %v7213, 2147483648
        %v7223 = vsel %vm7221, %v7222, %v7214
        %v7224 = vsel %vm7217, %v7220, %v7223
        %v7225 = vsel %vm7215, nan, %v7224
        %7226 = vst [vmem:[%s137] sm:$0xff] %v705
        %7227 = vst [vmem:[%s137 + $0x10] sm:$0xff] %v809
        %7228 = vst [vmem:[%s137 + $0x20] sm:$0xff] %v913
        %7229 = vst [vmem:[%s137 + $0x30] sm:$0xff] %v1017
        %7230 = vst [vmem:[%s137 + $0x40] sm:$0xff] %v1121
        %7231 = vst [vmem:[%s137 + $0x50] sm:$0xff] %v1225
        %7232 = vst [vmem:[%s137 + $0x60] sm:$0xff] %v1329
        %7233 = vst [vmem:[%s137 + $0x70] sm:$0xff] %v1433
        %7234 = vst [vmem:[%s137 + $0x80] sm:$0xff] %v1537
        %7235 = vst [vmem:[%s137 + $0x90] sm:$0xff] %v1641
        %7236 = vst [vmem:[%s137 + $0xa0] sm:$0xff] %v1745
        %7237 = vst [vmem:[%s137 + $0xb0] sm:$0xff] %v1849
        %7238 = vst [vmem:[%s137 + $0xc0] sm:$0xff] %v1953
        %7239 = vst [vmem:[%s137 + $0xd0] sm:$0xff] %v2057
        %7240 = vst [vmem:[%s137 + $0xe0] sm:$0xff] %v2161
        %7241 = vst [vmem:[%s137 + $0xf0] sm:$0xff] %v2265
        %7242 = vst [vmem:[%s137 + $0x100] sm:$0xff] %v2369
        %7243 = vst [vmem:[%s137 + $0x110] sm:$0xff] %v2473
        %7244 = vst [vmem:[%s137 + $0x120] sm:$0xff] %v2577
        %7245 = vst [vmem:[%s137 + $0x130] sm:$0xff] %v2681
        %7246 = vst [vmem:[%s137 + $0x140] sm:$0xff] %v2785
        %7247 = vst [vmem:[%s137 + $0x150] sm:$0xff] %v2889
        %7248 = vst [vmem:[%s137 + $0x160] sm:$0xff] %v2993
        %7249 = vst [vmem:[%s137 + $0x170] sm:$0xff] %v3097
        %7250 = vst [vmem:[%s137 + $0x180] sm:$0xff] %v3201
        %7251 = vst [vmem:[%s137 + $0x190] sm:$0xff] %v3305
        %7252 = vst [vmem:[%s137 + $0x1a0] sm:$0xff] %v3409
        %7253 = vst [vmem:[%s137 + $0x1b0] sm:$0xff] %v3513
        %7254 = vst [vmem:[%s137 + $0x1c0] sm:$0xff] %v3617
        %7255 = vst [vmem:[%s137 + $0x1d0] sm:$0xff] %v3721
        %7256 = vst [vmem:[%s137 + $0x1e0] sm:$0xff] %v3825
        %7257 = vst [vmem:[%s137 + $0x1f0] sm:$0xff] %v3929
        %7258 = vst [vmem:[%s137 + $0x8] sm:$0xff] %v4032
        %7259 = vst [vmem:[%s137 + $0x18] sm:$0xff] %v4135
        %7260 = vst [vmem:[%s137 + $0x28] sm:$0xff] %v4238
        %7261 = vst [vmem:[%s137 + $0x38] sm:$0xff] %v4341
        %7262 = vst [vmem:[%s137 + $0x48] sm:$0xff] %v4444
        %7263 = vst [vmem:[%s137 + $0x58] sm:$0xff] %v4547
        %7264 = vst [vmem:[%s137 + $0x68] sm:$0xff] %v4650
        %7265 = vst [vmem:[%s137 + $0x78] sm:$0xff] %v4753
        %7266 = vst [vmem:[%s137 + $0x88] sm:$0xff] %v4856
        %7267 = vst [vmem:[%s137 + $0x98] sm:$0xff] %v4959
        %7268 = vst [vmem:[%s137 + $0xa8] sm:$0xff] %v5062
        %7269 = vst [vmem:[%s137 + $0xb8] sm:$0xff] %v5165
        %7270 = vst [vmem:[%s137 + $0xc8] sm:$0xff] %v5268
        %7271 = vst [vmem:[%s137 + $0xd8] sm:$0xff] %v5371
        %7272 = vst [vmem:[%s137 + $0xe8] sm:$0xff] %v5474
        %7273 = vst [vmem:[%s137 + $0xf8] sm:$0xff] %v5577
        %7274 = vst [vmem:[%s137 + $0x108] sm:$0xff] %v5680
        %7275 = vst [vmem:[%s137 + $0x118] sm:$0xff] %v5783
        %7276 = vst [vmem:[%s137 + $0x128] sm:$0xff] %v5886
        %7277 = vst [vmem:[%s137 + $0x138] sm:$0xff] %v5989
        %7278 = vst [vmem:[%s137 + $0x148] sm:$0xff] %v6092
        %7279 = vst [vmem:[%s137 + $0x158] sm:$0xff] %v6195
        %7280 = vst [vmem:[%s137 + $0x168] sm:$0xff] %v6298
        %7281 = vst [vmem:[%s137 + $0x178] sm:$0xff] %v6401
        %7282 = vst [vmem:[%s137 + $0x188] sm:$0xff] %v6504
        %7283 = vst [vmem:[%s137 + $0x198] sm:$0xff] %v6607
        %7284 = vst [vmem:[%s137 + $0x1a8] sm:$0xff] %v6710
        %7285 = vst [vmem:[%s137 + $0x1b8] sm:$0xff] %v6813
        %7286 = vst [vmem:[%s137 + $0x1c8] sm:$0xff] %v6916
        %7287 = vst [vmem:[%s137 + $0x1d8] sm:$0xff] %v7019
        %7288 = vst [vmem:[%s137 + $0x1e8] sm:$0xff] %v7122
        %7289 = vst [vmem:[%s137 + $0x1f8] sm:$0xff] %v7225
        %s7290 = sand.u32 %s71, 1
        %s7291 = scalar_lea.sflag [#allocation3], %s7290
        %s7292 = sand.u32 %s71, 1
        %s7293 = smul.addr %s7292, 512
        %s7294 = scalar_lea.vmem [#allocation2], %s7293
        // Predicated region
        $region29: #{input_mapping_forward.1} parent=27 // pred_check
          %p7295 = pneg %p81
        $region30: #{input_mapping_forward.1} parent=27 // pred_check_branch
          %7297 = sbr.rel (%p7295) target = $region32
        $region31: #{input_mapping_forward.1} parent=27 // pred_region
          %s7298 = smul.u32 32, %s16
          %s7300 = ssub.s32 8192, 8192
          %7301 = vsyncadd %s7291, %s7300
          %s7302 = smul.addr %s7298, 2
          %s7303 = smul.addr %s7302, 128
          %s7304 = scalar_lea.hbm %s2, %s7303
          %s7305 = sshll.u32 %s7294, 4
          %s7306 = int_to_ptr.vmem [resolvable:$true] %s7305
          %7311 = dma.vmem_to_hbm [thread:$0]  %s7306, 8192, %s7304, %s7291, 256, 256, 16
        $region32: #{input_mapping_forward.1} parent=27 // pred_fallthru
          _
      $region28: #{input_mapping_forward.1} parent=5 // pred_fallthru
        _
      %p7312 = scmp.le.s32.totalorder 2, %s11
      // Predicated region
      $region33: #{input_mapping_forward.1} parent=5 // pred_check
        %p7313 = pneg %p7312
      $region34: #{input_mapping_forward.1} parent=5 // pred_check_branch
        %7315 = sbr.rel (%p7313) target = $region36
      $region35: #{input_mapping_forward.1} parent=5 // pred_region
        %s7316 = ssub.s32 %s11, 2
        // Predicated region
        $region37: #{input_mapping_forward.1} parent=35 // pred_check
          %p7317 = pneg %p87
        $region38: #{input_mapping_forward.1} parent=35 // pred_check_branch
          %7319 = sbr.rel (%p7317) target = $region40
        $region39: #{input_mapping_forward.1} parent=35 // pred_region
          %s7320 = sand.u32 %s72, 1
          %s7321 = scalar_lea.sflag [#allocation3], %s7320
          %s7322 = sand.u32 %s72, 1
          %s7323 = smul.addr %s7322, 512
          %s7324 = scalar_lea.vmem [#allocation2], %s7323
          %7325 = dma.done %s7321, 8192
        $region40: #{input_mapping_forward.1} parent=35 // pred_fallthru
          _
      $region36: #{input_mapping_forward.1} parent=5 // pred_fallthru
        _
    $region6: #{input_mapping_forward.1} parent=1 // loop_footer
      %s15 = sadd.s32 1, %s11
    $region7: #{input_mapping_forward.1} parent=1 // loop_footer_branch
      %10 = sbr.rel target = $region3
    $region8: #{input_mapping_forward.1} parent=1 // loop_exit
      _
    %7326 = vsyncpa [#allocation3], 1
    %s7327 = scalar_lea.sflag [#allocation3], 1
    %7328 = vsyncpa %s7327, 1

</llo_original>
